<compile_context>
chip_gen: v7x
topology: tpu7x:2x2x1
jax: 0.10.0
libtpu: 0.0.40
codegen_flags: <defaults>
</compile_context>

<pallas_src>
import functools

import jax
import jax.numpy as jnp
from jax import lax
from jax.experimental import pallas as pl
from jax.experimental.pallas import tpu as pltpu


# ----------------------------------------------------------------------------
# Pallas kernel: ALL BFGS iterations for one BE tile.
# ----------------------------------------------------------------------------
def _bfgs_solve_kernel(a_ref, b_ref, x0_ref, x_ref, err_ref,
                       g_scr, h_scr, mask_scr,
                       *, max_iterations, max_step, min_step, epsilon):
    """Layouts (T = BE tile on the lane axis):
      a_ref  : [N, N, T]  A with contraction index leading: a_ref[j, i, t] = A[i, j]
      b_ref  : [N, T]
      x0_ref : [N, T]
      x_ref  : [N, T]  output / working parameters
      err_ref: [1, T]  output error (lane dense)
      g_scr  : [N, T]  gradient at the current (masked) point
      h_scr  : [N, N, T]  inverse-Hessian estimate (symmetric)
      mask_scr:[1, T]  1.0 = still updating
    """
    A = a_ref[...]
    bvec = b_ref[...]
    n = A.shape[0]
    tile = A.shape[-1]

    def matvec(M, v):
        # (M v)[i, t] = sum_j M[j, i, t] * v[j, t]
        # Reduction over the leading axis -> pure VALU adds, no cross-lane work.
        return jnp.sum(M * v[:, None, :], axis=0)

    def bfgs_iteration(x, g, H, mask, first):
        # --- search direction -------------------------------------------
        if first:
            d = -1.0 * g
        else:
            d = -1.0 * matvec(H, g)

        # --- clamp_search_direction --------------------------------------
        largest = jnp.maximum(jnp.max(jnp.abs(d), axis=0, keepdims=True), 1e-8)
        scale = jnp.ones_like(largest)
        scale = jnp.where(largest > max_step, max_step / largest, scale)
        scale = jnp.where(largest < min_step, min_step / largest, scale)
        scale = jnp.maximum(scale, 1e-16)
        d = scale * d

        # --- line search ---------------------------------------------------
        # TODO(synk): the PyTorch module delegates to an abstract `line_search`
        # nn.Module; here we use the exact line search for the quadratic
        # objective (satisfies the Wolfe conditions for SPD A):
        #   alpha = -(g.d) / (d^T A d)
        Ad = matvec(A, d)
        gd = jnp.sum(g * d, axis=0, keepdims=True)                  # [1, T]
        dAd = jnp.sum(d * Ad, axis=0, keepdims=True)                # [1, T]
        alpha = -gd / jnp.maximum(dAd, 1e-8)
        step = alpha * d                                            # [N, T]
        x_next = x + step
        # gradient at x_next: A x_next - b = g + alpha * (A d); reuses Ad.
        g_next = g + alpha * Ad
        y = g_next - g                                              # delta_gradient

        # --- estimate_initial_inverse_hessian (first iteration only) -----
        if first:
            denom0 = jnp.maximum(jnp.sum(y * y, axis=0, keepdims=True), 1e-5)
            scale0 = jnp.sum(step * y, axis=0, keepdims=True) / denom0   # [1, T]
            p_idx = lax.broadcasted_iota(jnp.int32, (n, n, tile), 0)
            q_idx = lax.broadcasted_iota(jnp.int32, (n, n, tile), 1)
            H = jnp.where(p_idx == q_idx, scale0[None, :, :], 0.0)       # [N, N, T]

        # --- update_inverse_hessian ---------------------------------------
        # TODO(synk): `inverse_curvature` is not defined in the spec;
        # implemented as 1 / clamp(y^T s, 1e-5).
        rho = jnp.sum(step * y, axis=0, keepdims=True)               # [1, T]
        inv_c = 1.0 / jnp.maximum(rho, 1e-5)
        # H is symmetric by BFGS construction, so y^T H == H y: one matvec.
        g_post = matvec(H, y)                                        # [N, T]
        g_inner = jnp.sum(g_post * y, axis=0, keepdims=True) * inv_c  # [1, T]
        s_on_c = step * inv_c                                        # [N, T]
        # Fused (step_outer - step_grad) = s_on_c (x) (step*(1+g_inner) - g_post)
        v = step * (1.0 + g_inner) - g_post
        H_new = (H
                 + s_on_c[:, None, :] * v[None, :, :]
                 - g_post[:, None, :] * s_on_c[None, :, :])

        # --- masked_update + error + convergence mask ---------------------
        upd = mask > 0.5                                             # [1, T] bool
        x_out = jnp.where(upd, x_next, x)
        g_out = jnp.where(upd, g_next, g)
        # TODO(synk): IOptimisableFunction.get_error() is abstract; use
        # ||grad f||^2 as the nonnegative convergence measure.
        err = jnp.sum(g_out * g_out, axis=0, keepdims=True)          # [1, T]
        new_mask = jnp.where(jnp.logical_and(upd, err > epsilon), 1.0, 0.0)
        return x_out, g_out, H_new, new_mask.astype(jnp.float32), err

    # ---- first iteration (peeled: direction = -g, builds H0 once) --------
    x0 = x0_ref[...]
    g0 = matvec(A, x0) - bvec
    mask0 = jnp.ones((1, tile), jnp.float32)
    x1, g1, H1, m1, e1 = bfgs_iteration(x0, g0, None, mask0, first=True)
    x_ref[...] = x1
    g_scr[...] = g1
    h_scr[...] = H1
    mask_scr[...] = m1
    err_ref[...] = e1

    # ---- remaining iterations, state held resident in VMEM ---------------
    if max_iterations > 1:
        def body(_, carry):
            x = x_ref[...]
            g = g_scr[...]
            H = h_scr[...]
            mask = mask_scr[...]
            xn, gn, Hn, mn, en = bfgs_iteration(x, g, H, mask, first=False)
            x_ref[...] = xn
            g_scr[...] = gn
            h_scr[...] = Hn
            mask_scr[...] = mn
            err_ref[...] = en
            return carry

        lax.fori_loop(1, max_iterations, body, 0)


# ----------------------------------------------------------------------------
# pallas_call wrapper
# ----------------------------------------------------------------------------
def _bfgs_solve(A_t, b_t, x_t, *, max_iterations, epsilon, max_step,
                min_step, tile_be):
    n = A_t.shape[0]
    be_pad = A_t.shape[-1]
    num_tiles = be_pad // tile_be

    kernel = functools.partial(
        _bfgs_solve_kernel,
        max_iterations=int(max_iterations),
        max_step=float(max_step),
        min_step=float(min_step),
        epsilon=float(epsilon),
    )

    grid_spec = pltpu.PrefetchScalarGridSpec(
        num_scalar_prefetch=0,
        grid=(num_tiles,),
        in_specs=[
            pl.BlockSpec((n, n, tile_be), lambda i: (0, 0, i)),   # A
            pl.BlockSpec((n, tile_be), lambda i: (0, i)),          # b
            pl.BlockSpec((n, tile_be), lambda i: (0, i)),          # x0
        ],
        out_specs=(
            pl.BlockSpec((n, tile_be), lambda i: (0, i)),          # x_final
            pl.BlockSpec((1, tile_be), lambda i: (0, i)),          # error
        ),
        scratch_shapes=[
            pltpu.VMEM((n, tile_be), jnp.float32),       # gradient
            pltpu.VMEM((n, n, tile_be), jnp.float32),    # inverse Hessian
            pltpu.VMEM((1, tile_be), jnp.float32),       # updating mask
        ],
    )

    return pl.pallas_call(
        kernel,
        out_shape=(
            jax.ShapeDtypeStruct((n, be_pad), jnp.float32),
            jax.ShapeDtypeStruct((1, be_pad), jnp.float32),
        ),
        grid_spec=grid_spec,
        compiler_params=pltpu.CompilerParams(
            dimension_semantics=("parallel",),
        ),
    )(A_t, b_t, x_t)


def _solve_impl(A, bvec, x0, *, max_iterations, epsilon, max_step, min_step,
                tile_be):
    B, E, N = x0.shape
    BE = B * E
    # Flatten (batch, num_estimates) and put it on the lane axis; matrices get
    # the contraction index leading: A_t[j, i, be] = A[be, i, j].
    A_t = jnp.transpose(A.reshape(BE, N, N).astype(jnp.float32), (2, 1, 0))
    b_t = jnp.transpose(bvec.reshape(BE, N).astype(jnp.float32), (1, 0))
    x_t = jnp.transpose(x0.reshape(BE, N).astype(jnp.float32), (1, 0))

    be_pad = ((BE + tile_be - 1) // tile_be) * tile_be
    pad = be_pad - BE
    if pad:
        A_t = jnp.pad(A_t, ((0, 0), (0, 0), (0, pad)))
        b_t = jnp.pad(b_t, ((0, 0), (0, pad)))
        x_t = jnp.pad(x_t, ((0, 0), (0, pad)))

    x_out, err = _bfgs_solve(
        A_t, b_t, x_t,
        max_iterations=max_iterations, epsilon=epsilon,
        max_step=max_step, min_step=min_step, tile_be=tile_be)

    x_final = jnp.transpose(x_out[:, :BE], (1, 0)).reshape(B, E, N)
    err_final = err[0, :BE].reshape(B, E)
    return x_final, err_final


# ----------------------------------------------------------------------------
# Python-side driver mirroring BFGSCameraSolver.forward
# ----------------------------------------------------------------------------
class BFGSCameraSolver:
    def __init__(self, max_iterations, epsilon, max_step_distance,
                 min_step_distance, line_search=None,
                 search_direction_network=None, tile_be=128):
        # TODO(synk): `line_search` / `search_direction_network` are abstract
        # nn.Modules in the original; the exact quadratic line search lives in
        # the kernel and the direction network is treated as None.
        self.max_iterations = int(max_iterations)
        self.epsilon = float(epsilon)
        self.max_step_distance = float(max_step_distance)
        self.min_step_distance = float(min_step_distance)
        self.tile_be = int(tile_be)
        self._solve = jax.jit(functools.partial(
            _solve_impl,
            max_iterations=self.max_iterations,
            epsilon=self.epsilon,
            max_step=self.max_step_distance,
            min_step=self.min_step_distance,
            tile_be=self.tile_be,
        ))

    def __call__(self, A, bvec, x0):
        """A: [B,E,N,N] SPD, bvec: [B,E,N], x0: [B,E,N] -> (x_final, error)."""
        return self._solve(A, bvec, x0)


if __name__ == "__main__":
    key = jax.random.PRNGKey(0)
    B, E, N = 2, 4, 32
    k1, k2, k3 = jax.random.split(key, 3)

    # Deterministic synthetic quadratic problem (SPD A per batch/estimate).
    M = jax.random.normal(k1, (B, E, N, N), dtype=jnp.float32)
    A = jnp.einsum("beij,bekj->beik", M, M) / N \
        + 0.5 * jnp.eye(N, dtype=jnp.float32)[None, None]
    bvec = jax.random.normal(k2, (B, E, N), dtype=jnp.float32)
    x0 = jax.random.normal(k3, (B, E, N), dtype=jnp.float32)

    solver = BFGSCameraSolver(
        max_iterations=5,
        epsilon=1e-6,
        max_step_distance=2.0,
        min_step_distance=1e-4,
    )
    x_final, err = solver(A, bvec, x0)
    jax.block_until_ready(x_final)
    jax.block_until_ready(err)
    print("KERNEL_OK")
</pallas_src>

<mosaic_0001>
module attributes {stable_mosaic.version = 11 : i64} {
  func.func @_bfgs_solve_kernel(%arg0: i32, %arg1: memref<32x32x128xf32, #tpu.memory_space<vmem>>, %arg2: memref<32x128xf32, #tpu.memory_space<vmem>>, %arg3: memref<32x128xf32, #tpu.memory_space<vmem>>, %arg4: memref<32x128xf32, #tpu.memory_space<vmem>>, %arg5: memref<1x128xf32, #tpu.memory_space<vmem>>, %arg6: memref<32x128xf32, #tpu.memory_space<vmem>>, %arg7: memref<32x32x128xf32, #tpu.memory_space<vmem>>, %arg8: memref<1x128xf32, #tpu.memory_space<vmem>>) attributes {dimension_semantics = [#tpu.dimension_semantics<parallel>], iteration_bounds = array<i64: 1>, scalar_prefetch = 0 : i64, scratch_operands = 3 : i64, tpu.core_type = #tpu.core_type<tc>, window_params = [{transform_indices = @transform_0, window_bounds = array<i64: 32, 32, 128>}, {transform_indices = @transform_1, window_bounds = array<i64: 32, 128>}, {transform_indices = @transform_2, window_bounds = array<i64: 32, 128>}, {transform_indices = @transform_3, window_bounds = array<i64: 32, 128>}, {transform_indices = @transform_4, window_bounds = array<i64: 1, 128>}]} {
    %c0 = arith.constant 0 : index
    %c0_0 = arith.constant 0 : index
    %c0_1 = arith.constant 0 : index
    %0 = vector.load %arg1[%c0, %c0_0, %c0_1] : memref<32x32x128xf32, #tpu.memory_space<vmem>>, vector<32x32x128xf32>
    %c0_2 = arith.constant 0 : index
    %c0_3 = arith.constant 0 : index
    %1 = vector.load %arg2[%c0_2, %c0_3] : memref<32x128xf32, #tpu.memory_space<vmem>>, vector<32x128xf32>
    %c0_4 = arith.constant 0 : index
    %c0_5 = arith.constant 0 : index
    %2 = vector.load %arg3[%c0_4, %c0_5] : memref<32x128xf32, #tpu.memory_space<vmem>>, vector<32x128xf32>
    %3 = vector.shape_cast %2 : vector<32x128xf32> to vector<32x1x128xf32>
    %4 = vector.broadcast %3 : vector<32x1x128xf32> to vector<32x32x128xf32>
    %5 = arith.mulf %0, %4 : vector<32x32x128xf32>
    %cst = arith.constant dense<0.000000e+00> : vector<32x128xf32>
    %6 = vector.multi_reduction <add>, %5, %cst [0] : vector<32x32x128xf32> to vector<32x128xf32>
    %7 = arith.subf %6, %1 : vector<32x128xf32>
    %cst_6 = arith.constant 1.000000e+00 : f32
    %8 = vector.broadcast %cst_6 : f32 to vector<1x128xf32>
    %cst_7 = arith.constant -1.000000e+00 : f32
    %9 = vector.broadcast %cst_7 : f32 to vector<32x128xf32>
    %10 = arith.mulf %9, %7 : vector<32x128xf32>
    %11 = math.absf %10 : vector<32x128xf32>
    %cst_8 = arith.constant dense<0xFF800000> : vector<128xf32>
    %12 = vector.multi_reduction <maximumf>, %11, %cst_8 [0] : vector<32x128xf32> to vector<128xf32>
    %13 = vector.shape_cast %12 : vector<128xf32> to vector<1x128xf32>
    %cst_9 = arith.constant 9.99999993E-9 : f32
    %14 = vector.broadcast %cst_9 : f32 to vector<1x128xf32>
    %15 = arith.maximumf %13, %14 : vector<1x128xf32>
    %cst_10 = arith.constant 1.000000e+00 : f32
    %16 = vector.broadcast %cst_10 : f32 to vector<1x128xf32>
    %cst_11 = arith.constant 2.000000e+00 : f32
    %17 = vector.broadcast %cst_11 : f32 to vector<1x128xf32>
    %18 = arith.cmpf ogt, %15, %17 : vector<1x128xf32>
    %cst_12 = arith.constant 2.000000e+00 : f32
    %19 = vector.broadcast %cst_12 : f32 to vector<1x128xf32>
    %20 = arith.divf %19, %15 : vector<1x128xf32>
    %21 = arith.select %18, %20, %16 : vector<1x128xi1>, vector<1x128xf32>
    %cst_13 = arith.constant 9.99999974E-5 : f32
    %22 = vector.broadcast %cst_13 : f32 to vector<1x128xf32>
    %23 = arith.cmpf olt, %15, %22 : vector<1x128xf32>
    %cst_14 = arith.constant 9.99999974E-5 : f32
    %24 = vector.broadcast %cst_14 : f32 to vector<1x128xf32>
    %25 = arith.divf %24, %15 : vector<1x128xf32>
    %26 = arith.select %23, %25, %21 : vector<1x128xi1>, vector<1x128xf32>
    %cst_15 = arith.constant 1.000000e-16 : f32
    %27 = vector.broadcast %cst_15 : f32 to vector<1x128xf32>
    %28 = arith.maximumf %26, %27 : vector<1x128xf32>
    %29 = vector.broadcast %28 : vector<1x128xf32> to vector<32x128xf32>
    %30 = arith.mulf %29, %10 : vector<32x128xf32>
    %31 = vector.shape_cast %30 : vector<32x128xf32> to vector<32x1x128xf32>
    %32 = vector.broadcast %31 : vector<32x1x128xf32> to vector<32x32x128xf32>
    %33 = arith.mulf %0, %32 : vector<32x32x128xf32>
    %cst_16 = arith.constant dense<0.000000e+00> : vector<32x128xf32>
    %34 = vector.multi_reduction <add>, %33, %cst_16 [0] : vector<32x32x128xf32> to vector<32x128xf32>
    %35 = arith.mulf %7, %30 : vector<32x128xf32>
    %cst_17 = arith.constant dense<0.000000e+00> : vector<128xf32>
    %36 = vector.multi_reduction <add>, %35, %cst_17 [0] : vector<32x128xf32> to vector<128xf32>
    %37 = vector.shape_cast %36 : vector<128xf32> to vector<1x128xf32>
    %38 = arith.mulf %30, %34 : vector<32x128xf32>
    %cst_18 = arith.constant dense<0.000000e+00> : vector<128xf32>
    %39 = vector.multi_reduction <add>, %38, %cst_18 [0] : vector<32x128xf32> to vector<128xf32>
    %40 = vector.shape_cast %39 : vector<128xf32> to vector<1x128xf32>
    %cst_19 = arith.constant 0.000000e+00 : f32
    %41 = vector.broadcast %cst_19 : f32 to vector<1x128xf32>
    %42 = arith.subf %41, %37 : vector<1x128xf32>
    %cst_20 = arith.constant 9.99999993E-9 : f32
    %43 = vector.broadcast %cst_20 : f32 to vector<1x128xf32>
    %44 = arith.maximumf %40, %43 : vector<1x128xf32>
    %45 = arith.divf %42, %44 : vector<1x128xf32>
    %46 = vector.broadcast %45 : vector<1x128xf32> to vector<32x128xf32>
    %47 = arith.mulf %46, %30 : vector<32x128xf32>
    %48 = arith.addf %2, %47 : vector<32x128xf32>
    %49 = vector.broadcast %45 : vector<1x128xf32> to vector<32x128xf32>
    %50 = arith.mulf %49, %34 : vector<32x128xf32>
    %51 = arith.addf %7, %50 : vector<32x128xf32>
    %52 = arith.subf %51, %7 : vector<32x128xf32>
    %53 = arith.mulf %52, %52 : vector<32x128xf32>
    %cst_21 = arith.constant dense<0.000000e+00> : vector<128xf32>
    %54 = vector.multi_reduction <add>, %53, %cst_21 [0] : vector<32x128xf32> to vector<128xf32>
    %55 = vector.shape_cast %54 : vector<128xf32> to vector<1x128xf32>
    %cst_22 = arith.constant 9.99999974E-6 : f32
    %56 = vector.broadcast %cst_22 : f32 to vector<1x128xf32>
    %57 = arith.maximumf %55, %56 : vector<1x128xf32>
    %58 = arith.mulf %47, %52 : vector<32x128xf32>
    %cst_23 = arith.constant dense<0.000000e+00> : vector<128xf32>
    %59 = vector.multi_reduction <add>, %58, %cst_23 [0] : vector<32x128xf32> to vector<128xf32>
    %60 = vector.shape_cast %59 : vector<128xf32> to vector<1x128xf32>
    %61 = arith.divf %60, %57 : vector<1x128xf32>
    %62 = tpu.iota {dimensions = array<i32: 0>} : vector<32x32x128xi32>
    %63 = tpu.iota {dimensions = array<i32: 1>} : vector<32x32x128xi32>
    %64 = arith.cmpi eq, %62, %63 : vector<32x32x128xi32>
    %65 = vector.shape_cast %61 : vector<1x128xf32> to vector<1x1x128xf32>
    %cst_24 = arith.constant 0.000000e+00 : f32
    %66 = vector.shape_cast %65 : vector<1x1x128xf32> to vector<1x1x128xf32>
    %67 = vector.broadcast %66 : vector<1x1x128xf32> to vector<32x32x128xf32>
    %68 = vector.broadcast %cst_24 : f32 to vector<32x32x128xf32>
    %69 = arith.select %64, %67, %68 : vector<32x32x128xi1>, vector<32x32x128xf32>
    %70 = arith.mulf %47, %52 : vector<32x128xf32>
    %cst_25 = arith.constant dense<0.000000e+00> : vector<128xf32>
    %71 = vector.multi_reduction <add>, %70, %cst_25 [0] : vector<32x128xf32> to vector<128xf32>
    %72 = vector.shape_cast %71 : vector<128xf32> to vector<1x128xf32>
    %cst_26 = arith.constant 9.99999974E-6 : f32
    %73 = vector.broadcast %cst_26 : f32 to vector<1x128xf32>
    %74 = arith.maximumf %72, %73 : vector<1x128xf32>
    %cst_27 = arith.constant 1.000000e+00 : f32
    %75 = vector.broadcast %cst_27 : f32 to vector<1x128xf32>
    %76 = arith.divf %75, %74 : vector<1x128xf32>
    %77 = vector.shape_cast %52 : vector<32x128xf32> to vector<32x1x128xf32>
    %78 = vector.broadcast %77 : vector<32x1x128xf32> to vector<32x32x128xf32>
    %79 = arith.mulf %69, %78 : vector<32x32x128xf32>
    %cst_28 = arith.constant dense<0.000000e+00> : vector<32x128xf32>
    %80 = vector.multi_reduction <add>, %79, %cst_28 [0] : vector<32x32x128xf32> to vector<32x128xf32>
    %81 = arith.mulf %80, %52 : vector<32x128xf32>
    %cst_29 = arith.constant dense<0.000000e+00> : vector<128xf32>
    %82 = vector.multi_reduction <add>, %81, %cst_29 [0] : vector<32x128xf32> to vector<128xf32>
    %83 = vector.shape_cast %82 : vector<128xf32> to vector<1x128xf32>
    %84 = arith.mulf %83, %76 : vector<1x128xf32>
    %85 = vector.broadcast %76 : vector<1x128xf32> to vector<32x128xf32>
    %86 = arith.mulf %47, %85 : vector<32x128xf32>
    %cst_30 = arith.constant 1.000000e+00 : f32
    %87 = vector.broadcast %cst_30 : f32 to vector<1x128xf32>
    %88 = arith.addf %87, %84 : vector<1x128xf32>
    %89 = vector.broadcast %88 : vector<1x128xf32> to vector<32x128xf32>
    %90 = arith.mulf %47, %89 : vector<32x128xf32>
    %91 = arith.subf %90, %80 : vector<32x128xf32>
    %92 = vector.shape_cast %86 : vector<32x128xf32> to vector<32x1x128xf32>
    %93 = vector.shape_cast %91 : vector<32x128xf32> to vector<1x32x128xf32>
    %94 = vector.broadcast %92 : vector<32x1x128xf32> to vector<32x32x128xf32>
    %95 = vector.broadcast %93 : vector<1x32x128xf32> to vector<32x32x128xf32>
    %96 = arith.mulf %94, %95 : vector<32x32x128xf32>
    %97 = arith.addf %69, %96 : vector<32x32x128xf32>
    %98 = vector.shape_cast %80 : vector<32x128xf32> to vector<32x1x128xf32>
    %99 = vector.shape_cast %86 : vector<32x128xf32> to vector<1x32x128xf32>
    %100 = vector.broadcast %98 : vector<32x1x128xf32> to vector<32x32x128xf32>
    %101 = vector.broadcast %99 : vector<1x32x128xf32> to vector<32x32x128xf32>
    %102 = arith.mulf %100, %101 : vector<32x32x128xf32>
    %103 = arith.subf %97, %102 : vector<32x32x128xf32>
    %cst_31 = arith.constant 5.000000e-01 : f32
    %104 = vector.broadcast %cst_31 : f32 to vector<1x128xf32>
    %105 = arith.cmpf ogt, %8, %104 : vector<1x128xf32>
    %106 = vector.shape_cast %105 : vector<1x128xi1> to vector<1x128xi1>
    %107 = vector.broadcast %106 : vector<1x128xi1> to vector<32x128xi1>
    %108 = arith.select %107, %48, %2 : vector<32x128xi1>, vector<32x128xf32>
    %109 = vector.shape_cast %105 : vector<1x128xi1> to vector<1x128xi1>
    %110 = vector.broadcast %109 : vector<1x128xi1> to vector<32x128xi1>
    %111 = arith.select %110, %51, %7 : vector<32x128xi1>, vector<32x128xf32>
    %112 = arith.mulf %111, %111 : vector<32x128xf32>
    %cst_32 = arith.constant dense<0.000000e+00> : vector<128xf32>
    %113 = vector.multi_reduction <add>, %112, %cst_32 [0] : vector<32x128xf32> to vector<128xf32>
    %114 = vector.shape_cast %113 : vector<128xf32> to vector<1x128xf32>
    %cst_33 = arith.constant 9.99999997E-7 : f32
    %115 = vector.broadcast %cst_33 : f32 to vector<1x128xf32>
    %116 = arith.cmpf ogt, %114, %115 : vector<1x128xf32>
    %117 = arith.andi %105, %116 : vector<1x128xi1>
    %cst_34 = arith.constant 1.000000e+00 : f32
    %cst_35 = arith.constant 0.000000e+00 : f32
    %118 = vector.broadcast %cst_34 : f32 to vector<1x128xf32>
    %119 = vector.broadcast %cst_35 : f32 to vector<1x128xf32>
    %120 = arith.select %117, %118, %119 : vector<1x128xi1>, vector<1x128xf32>
    %c0_36 = arith.constant 0 : index
    %c0_37 = arith.constant 0 : index
    %121 = vector.load %arg4[%c0_36, %c0_37] : memref<32x128xf32, #tpu.memory_space<vmem>>, vector<32x128xf32>
    tpu.vector_store %arg4[%c0_36, %c0_37], %108 {strides = array<i32>} : memref<32x128xf32, #tpu.memory_space<vmem>>, vector<32x128xf32>,
    %c0_38 = arith.constant 0 : index
    %c0_39 = arith.constant 0 : index
    %122 = vector.load %arg6[%c0_38, %c0_39] : memref<32x128xf32, #tpu.memory_space<vmem>>, vector<32x128xf32>
    tpu.vector_store %arg6[%c0_38, %c0_39], %111 {strides = array<i32>} : memref<32x128xf32, #tpu.memory_space<vmem>>, vector<32x128xf32>,
    %c0_40 = arith.constant 0 : index
    %c0_41 = arith.constant 0 : index
    %c0_42 = arith.constant 0 : index
    %123 = vector.load %arg7[%c0_40, %c0_41, %c0_42] : memref<32x32x128xf32, #tpu.memory_space<vmem>>, vector<32x32x128xf32>
    tpu.vector_store %arg7[%c0_40, %c0_41, %c0_42], %103 {strides = array<i32>} : memref<32x32x128xf32, #tpu.memory_space<vmem>>, vector<32x32x128xf32>,
    %c0_43 = arith.constant 0 : index
    %c0_44 = arith.constant 0 : index
    %124 = vector.load %arg8[%c0_43, %c0_44] : memref<1x128xf32, #tpu.memory_space<vmem>>, vector<1x128xf32>
    tpu.vector_store %arg8[%c0_43, %c0_44], %120 {strides = array<i32>} : memref<1x128xf32, #tpu.memory_space<vmem>>, vector<1x128xf32>,
    %c0_45 = arith.constant 0 : index
    %c0_46 = arith.constant 0 : index
    %125 = vector.load %arg5[%c0_45, %c0_46] : memref<1x128xf32, #tpu.memory_space<vmem>>, vector<1x128xf32>
    tpu.vector_store %arg5[%c0_45, %c0_46], %114 {strides = array<i32>} : memref<1x128xf32, #tpu.memory_space<vmem>>, vector<1x128xf32>,
    %c0_i32 = arith.constant 0 : i32
    %c4_i32 = arith.constant 4 : i32
    %126 = arith.addi %c0_i32, %c4_i32 : i32
    %c1_i32 = arith.constant 1 : i32
    scf.for %arg9 = %c0_i32 to %126 step %c1_i32  : i32 {
      %c0_47 = arith.constant 0 : index
      %c0_48 = arith.constant 0 : index
      %127 = vector.load %arg4[%c0_47, %c0_48] : memref<32x128xf32, #tpu.memory_space<vmem>>, vector<32x128xf32>
      %c0_49 = arith.constant 0 : index
      %c0_50 = arith.constant 0 : index
      %128 = vector.load %arg6[%c0_49, %c0_50] : memref<32x128xf32, #tpu.memory_space<vmem>>, vector<32x128xf32>
      %c0_51 = arith.constant 0 : index
      %c0_52 = arith.constant 0 : index
      %c0_53 = arith.constant 0 : index
      %129 = vector.load %arg7[%c0_51, %c0_52, %c0_53] : memref<32x32x128xf32, #tpu.memory_space<vmem>>, vector<32x32x128xf32>
      %c0_54 = arith.constant 0 : index
      %c0_55 = arith.constant 0 : index
      %130 = vector.load %arg8[%c0_54, %c0_55] : memref<1x128xf32, #tpu.memory_space<vmem>>, vector<1x128xf32>
      %131 = vector.shape_cast %128 : vector<32x128xf32> to vector<32x1x128xf32>
      %132 = vector.broadcast %131 : vector<32x1x128xf32> to vector<32x32x128xf32>
      %133 = arith.mulf %129, %132 : vector<32x32x128xf32>
      %cst_56 = arith.constant dense<0.000000e+00> : vector<32x128xf32>
      %134 = vector.multi_reduction <add>, %133, %cst_56 [0] : vector<32x32x128xf32> to vector<32x128xf32>
      %cst_57 = arith.constant -1.000000e+00 : f32
      %135 = vector.broadcast %cst_57 : f32 to vector<32x128xf32>
      %136 = arith.mulf %135, %134 : vector<32x128xf32>
      %137 = math.absf %136 : vector<32x128xf32>
      %cst_58 = arith.constant dense<0xFF800000> : vector<128xf32>
      %138 = vector.multi_reduction <maximumf>, %137, %cst_58 [0] : vector<32x128xf32> to vector<128xf32>
      %139 = vector.shape_cast %138 : vector<128xf32> to vector<1x128xf32>
      %cst_59 = arith.constant 9.99999993E-9 : f32
      %140 = vector.broadcast %cst_59 : f32 to vector<1x128xf32>
      %141 = arith.maximumf %139, %140 : vector<1x128xf32>
      %cst_60 = arith.constant 1.000000e+00 : f32
      %142 = vector.broadcast %cst_60 : f32 to vector<1x128xf32>
      %cst_61 = arith.constant 2.000000e+00 : f32
      %143 = vector.broadcast %cst_61 : f32 to vector<1x128xf32>
      %144 = arith.cmpf ogt, %141, %143 : vector<1x128xf32>
      %cst_62 = arith.constant 2.000000e+00 : f32
      %145 = vector.broadcast %cst_62 : f32 to vector<1x128xf32>
      %146 = arith.divf %145, %141 : vector<1x128xf32>
      %147 = arith.select %144, %146, %142 : vector<1x128xi1>, vector<1x128xf32>
      %cst_63 = arith.constant 9.99999974E-5 : f32
      %148 = vector.broadcast %cst_63 : f32 to vector<1x128xf32>
      %149 = arith.cmpf olt, %141, %148 : vector<1x128xf32>
      %cst_64 = arith.constant 9.99999974E-5 : f32
      %150 = vector.broadcast %cst_64 : f32 to vector<1x128xf32>
      %151 = arith.divf %150, %141 : vector<1x128xf32>
      %152 = arith.select %149, %151, %147 : vector<1x128xi1>, vector<1x128xf32>
      %cst_65 = arith.constant 1.000000e-16 : f32
      %153 = vector.broadcast %cst_65 : f32 to vector<1x128xf32>
      %154 = arith.maximumf %152, %153 : vector<1x128xf32>
      %155 = vector.broadcast %154 : vector<1x128xf32> to vector<32x128xf32>
      %156 = arith.mulf %155, %136 : vector<32x128xf32>
      %157 = vector.shape_cast %156 : vector<32x128xf32> to vector<32x1x128xf32>
      %158 = vector.broadcast %157 : vector<32x1x128xf32> to vector<32x32x128xf32>
      %159 = arith.mulf %0, %158 : vector<32x32x128xf32>
      %cst_66 = arith.constant dense<0.000000e+00> : vector<32x128xf32>
      %160 = vector.multi_reduction <add>, %159, %cst_66 [0] : vector<32x32x128xf32> to vector<32x128xf32>
      %161 = arith.mulf %128, %156 : vector<32x128xf32>
      %cst_67 = arith.constant dense<0.000000e+00> : vector<128xf32>
      %162 = vector.multi_reduction <add>, %161, %cst_67 [0] : vector<32x128xf32> to vector<128xf32>
      %163 = vector.shape_cast %162 : vector<128xf32> to vector<1x128xf32>
      %164 = arith.mulf %156, %160 : vector<32x128xf32>
      %cst_68 = arith.constant dense<0.000000e+00> : vector<128xf32>
      %165 = vector.multi_reduction <add>, %164, %cst_68 [0] : vector<32x128xf32> to vector<128xf32>
      %166 = vector.shape_cast %165 : vector<128xf32> to vector<1x128xf32>
      %cst_69 = arith.constant 0.000000e+00 : f32
      %167 = vector.broadcast %cst_69 : f32 to vector<1x128xf32>
      %168 = arith.subf %167, %163 : vector<1x128xf32>
      %cst_70 = arith.constant 9.99999993E-9 : f32
      %169 = vector.broadcast %cst_70 : f32 to vector<1x128xf32>
      %170 = arith.maximumf %166, %169 : vector<1x128xf32>
      %171 = arith.divf %168, %170 : vector<1x128xf32>
      %172 = vector.broadcast %171 : vector<1x128xf32> to vector<32x128xf32>
      %173 = arith.mulf %172, %156 : vector<32x128xf32>
      %174 = arith.addf %127, %173 : vector<32x128xf32>
      %175 = vector.broadcast %171 : vector<1x128xf32> to vector<32x128xf32>
      %176 = arith.mulf %175, %160 : vector<32x128xf32>
      %177 = arith.addf %128, %176 : vector<32x128xf32>
      %178 = arith.subf %177, %128 : vector<32x128xf32>
      %179 = arith.mulf %173, %178 : vector<32x128xf32>
      %cst_71 = arith.constant dense<0.000000e+00> : vector<128xf32>
      %180 = vector.multi_reduction <add>, %179, %cst_71 [0] : vector<32x128xf32> to vector<128xf32>
      %181 = vector.shape_cast %180 : vector<128xf32> to vector<1x128xf32>
      %cst_72 = arith.constant 9.99999974E-6 : f32
      %182 = vector.broadcast %cst_72 : f32 to vector<1x128xf32>
      %183 = arith.maximumf %181, %182 : vector<1x128xf32>
      %cst_73 = arith.constant 1.000000e+00 : f32
      %184 = vector.broadcast %cst_73 : f32 to vector<1x128xf32>
      %185 = arith.divf %184, %183 : vector<1x128xf32>
      %186 = vector.shape_cast %178 : vector<32x128xf32> to vector<32x1x128xf32>
      %187 = vector.broadcast %186 : vector<32x1x128xf32> to vector<32x32x128xf32>
      %188 = arith.mulf %129, %187 : vector<32x32x128xf32>
      %cst_74 = arith.constant dense<0.000000e+00> : vector<32x128xf32>
      %189 = vector.multi_reduction <add>, %188, %cst_74 [0] : vector<32x32x128xf32> to vector<32x128xf32>
      %190 = arith.mulf %189, %178 : vector<32x128xf32>
      %cst_75 = arith.constant dense<0.000000e+00> : vector<128xf32>
      %191 = vector.multi_reduction <add>, %190, %cst_75 [0] : vector<32x128xf32> to vector<128xf32>
      %192 = vector.shape_cast %191 : vector<128xf32> to vector<1x128xf32>
      %193 = arith.mulf %192, %185 : vector<1x128xf32>
      %194 = vector.broadcast %185 : vector<1x128xf32> to vector<32x128xf32>
      %195 = arith.mulf %173, %194 : vector<32x128xf32>
      %cst_76 = arith.constant 1.000000e+00 : f32
      %196 = vector.broadcast %cst_76 : f32 to vector<1x128xf32>
      %197 = arith.addf %196, %193 : vector<1x128xf32>
      %198 = vector.broadcast %197 : vector<1x128xf32> to vector<32x128xf32>
      %199 = arith.mulf %173, %198 : vector<32x128xf32>
      %200 = arith.subf %199, %189 : vector<32x128xf32>
      %201 = vector.shape_cast %195 : vector<32x128xf32> to vector<32x1x128xf32>
      %202 = vector.shape_cast %200 : vector<32x128xf32> to vector<1x32x128xf32>
      %203 = vector.broadcast %201 : vector<32x1x128xf32> to vector<32x32x128xf32>
      %204 = vector.broadcast %202 : vector<1x32x128xf32> to vector<32x32x128xf32>
      %205 = arith.mulf %203, %204 : vector<32x32x128xf32>
      %206 = arith.addf %129, %205 : vector<32x32x128xf32>
      %207 = vector.shape_cast %189 : vector<32x128xf32> to vector<32x1x128xf32>
      %208 = vector.shape_cast %195 : vector<32x128xf32> to vector<1x32x128xf32>
      %209 = vector.broadcast %207 : vector<32x1x128xf32> to vector<32x32x128xf32>
      %210 = vector.broadcast %208 : vector<1x32x128xf32> to vector<32x32x128xf32>
      %211 = arith.mulf %209, %210 : vector<32x32x128xf32>
      %212 = arith.subf %206, %211 : vector<32x32x128xf32>
      %cst_77 = arith.constant 5.000000e-01 : f32
      %213 = vector.broadcast %cst_77 : f32 to vector<1x128xf32>
      %214 = arith.cmpf ogt, %130, %213 : vector<1x128xf32>
      %215 = vector.shape_cast %214 : vector<1x128xi1> to vector<1x128xi1>
      %216 = vector.broadcast %215 : vector<1x128xi1> to vector<32x128xi1>
      %217 = arith.select %216, %174, %127 : vector<32x128xi1>, vector<32x128xf32>
      %218 = vector.shape_cast %214 : vector<1x128xi1> to vector<1x128xi1>
      %219 = vector.broadcast %218 : vector<1x128xi1> to vector<32x128xi1>
      %220 = arith.select %219, %177, %128 : vector<32x128xi1>, vector<32x128xf32>
      %221 = arith.mulf %220, %220 : vector<32x128xf32>
      %cst_78 = arith.constant dense<0.000000e+00> : vector<128xf32>
      %222 = vector.multi_reduction <add>, %221, %cst_78 [0] : vector<32x128xf32> to vector<128xf32>
      %223 = vector.shape_cast %222 : vector<128xf32> to vector<1x128xf32>
      %cst_79 = arith.constant 9.99999997E-7 : f32
      %224 = vector.broadcast %cst_79 : f32 to vector<1x128xf32>
      %225 = arith.cmpf ogt, %223, %224 : vector<1x128xf32>
      %226 = arith.andi %214, %225 : vector<1x128xi1>
      %cst_80 = arith.constant 1.000000e+00 : f32
      %cst_81 = arith.constant 0.000000e+00 : f32
      %227 = vector.broadcast %cst_80 : f32 to vector<1x128xf32>
      %228 = vector.broadcast %cst_81 : f32 to vector<1x128xf32>
      %229 = arith.select %226, %227, %228 : vector<1x128xi1>, vector<1x128xf32>
      %c0_82 = arith.constant 0 : index
      %c0_83 = arith.constant 0 : index
      %230 = vector.load %arg4[%c0_82, %c0_83] : memref<32x128xf32, #tpu.memory_space<vmem>>, vector<32x128xf32>
      tpu.vector_store %arg4[%c0_82, %c0_83], %217 {strides = array<i32>} : memref<32x128xf32, #tpu.memory_space<vmem>>, vector<32x128xf32>,
      %c0_84 = arith.constant 0 : index
      %c0_85 = arith.constant 0 : index
      %231 = vector.load %arg6[%c0_84, %c0_85] : memref<32x128xf32, #tpu.memory_space<vmem>>, vector<32x128xf32>
      tpu.vector_store %arg6[%c0_84, %c0_85], %220 {strides = array<i32>} : memref<32x128xf32, #tpu.memory_space<vmem>>, vector<32x128xf32>,
      %c0_86 = arith.constant 0 : index
      %c0_87 = arith.constant 0 : index
      %c0_88 = arith.constant 0 : index
      %232 = vector.load %arg7[%c0_86, %c0_87, %c0_88] : memref<32x32x128xf32, #tpu.memory_space<vmem>>, vector<32x32x128xf32>
      tpu.vector_store %arg7[%c0_86, %c0_87, %c0_88], %212 {strides = array<i32>} : memref<32x32x128xf32, #tpu.memory_space<vmem>>, vector<32x32x128xf32>,
      %c0_89 = arith.constant 0 : index
      %c0_90 = arith.constant 0 : index
      %233 = vector.load %arg8[%c0_89, %c0_90] : memref<1x128xf32, #tpu.memory_space<vmem>>, vector<1x128xf32>
      tpu.vector_store %arg8[%c0_89, %c0_90], %229 {strides = array<i32>} : memref<1x128xf32, #tpu.memory_space<vmem>>, vector<1x128xf32>,
      %c0_91 = arith.constant 0 : index
      %c0_92 = arith.constant 0 : index
      %234 = vector.load %arg5[%c0_91, %c0_92] : memref<1x128xf32, #tpu.memory_space<vmem>>, vector<1x128xf32>
      tpu.vector_store %arg5[%c0_91, %c0_92], %223 {strides = array<i32>} : memref<1x128xf32, #tpu.memory_space<vmem>>, vector<1x128xf32>,
    }
    return
  }
  func.func @transform_0(%arg0: i32) -> (i32, i32, i32) {
    %c0_i32 = arith.constant 0 : i32
    %c0_i32_0 = arith.constant 0 : i32
    %c0_i32_1 = arith.constant 0 : i32
    return %c0_i32, %c0_i32_0, %arg0 : i32, i32, i32
  }
  func.func @transform_1(%arg0: i32) -> (i32, i32) {
    %c0_i32 = arith.constant 0 : i32
    %c0_i32_0 = arith.constant 0 : i32
    return %c0_i32, %arg0 : i32, i32
  }
  func.func @transform_2(%arg0: i32) -> (i32, i32) {
    %c0_i32 = arith.constant 0 : i32
    %c0_i32_0 = arith.constant 0 : i32
    return %c0_i32, %arg0 : i32, i32
  }
  func.func @transform_3(%arg0: i32) -> (i32, i32) {
    %c0_i32 = arith.constant 0 : i32
    %c0_i32_0 = arith.constant 0 : i32
    return %c0_i32, %arg0 : i32, i32
  }
  func.func @transform_4(%arg0: i32) -> (i32, i32) {
    %c0_i32 = arith.constant 0 : i32
    %c0_i32_0 = arith.constant 0 : i32
    return %c0_i32, %arg0 : i32, i32
  }
}

</mosaic_0001>

<llo_original>
// kernel: squeeze.1
$region0: #{squeeze.1}
  %s0 = inlined_call_operand.vmem [shape: f32[8], index: 0, kind: input, shape index: {}]
  %s1 = inlined_call_operand.hbm [shape: f32[2,4], index: 1, kind: output, shape index: {}]
  $region1: #{squeeze.1} parent=0
    #allocation0 [shape = 'u8[1024]{0}', space=vmem, size = 0x400, scoped, tag = 'operand span for operand 1']
    #allocation1 [shape = 's32[1]{0}', space=sflag, size = 0x4, scoped, tag = 'scoped memory for squeeze.1']
    #allocation2 [shape = 'u8[4096]{0}', space=vmem, size = 0x1000, scoped, tag = 'scoped mem for output reshape']
    #allocation3 [shape = 'u8[4096]{0}', space=vmem, size = 0x1000, scoped, tag = 'scoped mem for input reshape']
    %2 = vsyncpa [#allocation1], 0
    %s4 = sshllo.u32 0, 1
    %v5 = vld [vmem:[%s0] sm:%s4]
    %6 = vst [vmem:[#allocation3] sm:%s4] %v5
    %v7 = vld [vmem:[#allocation3] sm:$0x1]
    %vm8 = vcmask 31744
    %9 = vst.msk [vmem:[#allocation2] sm:$0x1] %vm8, %v7
    %v10 = vld [vmem:[#allocation3] sm:$0x1]
    %11 = vrot.lane.b32.xlu0 %v10, 124
    %v12 = vpop.permute.xlu0 %11
    %vm13 = vcmask 31744
    %s14 = scalar_lea.vmem [#allocation2], 1
    %15 = vst.msk [vmem:[%s14] sm:$0x1] %vm13, %v12
    %s17 = sshllo.u32 0, 2
    %v19 = vld [vmem:[#allocation2] sm:%s17]
    %s20 = sshllo.u32 0, 2
    %21 = vst [vmem:[#allocation0] sm:%s20] %v19
    %s23 = ssub.s32 32, 32
    %24 = vsyncadd [#allocation1], %s23
    %s26 = sshll.u32 [#allocation0], 4
    %s27 = int_to_ptr.vmem [resolvable:$true] %s26
    %29 = dma.vmem_to_hbm [thread:$0]  %s27, 32, %s1, [#allocation1]
    %30 = dma.done [#allocation1], 32
    %31 = vsyncpa [#allocation1], 1

// kernel: _solve_impl.1
$region0: #{_solve_impl.1}
  #allocation0 [shape = 'u32[]', space=smem, size = 0x4, offset = 0x4, fixed_abs, tag = 'smem constant byte address 0x4 - core index']
  #allocation1 [shape = 'u32[144,128]{1,0:T(1,128)}', space=vmem, size = 0x12000, scoped, tag = 'internal scratch']
  #allocation2 [shape = 'f32[32,128]{1,0:T(8,128)}', space=vmem, size = 0x4000, scoped, tag = 'scratch operand']
  #allocation3 [shape = 'f32[32,32,128]{2,1,0:T(8,128)}', space=vmem, size = 0x80000, scoped, tag = 'scratch operand']
  #allocation4 [shape = 'f32[1,128]{1,0:T(1,128)}', space=vmem, size = 0x200, scoped, tag = 'scratch operand']
  %s0 = inlined_call_operand.vmem [shape: f32[32,32,128], index: 0, kind: input, shape index: {}]
  %s1 = inlined_call_operand.vmem [shape: f32[32,128], index: 1, kind: input, shape index: {}]
  %s2 = inlined_call_operand.vmem [shape: f32[32,128], index: 2, kind: input, shape index: {}]
  %s3 = inlined_call_operand.vmem [shape: f32[32,128], index: 3, kind: output, shape index: {0}]
  %s4 = inlined_call_operand.vmem [shape: f32[1,128], index: 4, kind: output, shape index: {1}]
  %5 = xla_tuple %s3, %s4
  %s6 = sld [smem:[#allocation0]]
  $region37: #{_solve_impl.1} parent=0
    _
  %s8 = ssub.s32 1, %s6
  %s9 = scalar_select 0, %s8, %s6
  // Predicated region
  $region2: #{_solve_impl.1} parent=0 // pred_check
    _
  $region3: #{_solve_impl.1} parent=0 // pred_check_branch
    %11 = sbr.rel (0) target = $region5
  $region4: #{_solve_impl.1} parent=0 // pred_region
    _
  $region5: #{_solve_impl.1} parent=0 // pred_fallthru
    _
  // Predicated region
  $region6: #{_solve_impl.1} parent=0 // pred_check
    _
  $region7: #{_solve_impl.1} parent=0 // pred_check_branch
    %13 = sbr.rel (0) target = $region9
  $region8: #{_solve_impl.1} parent=0 // pred_region
    _
  $region9: #{_solve_impl.1} parent=0 // pred_fallthru
    _
  // Predicated region
  $region10: #{_solve_impl.1} parent=0 // pred_check
    _
  $region11: #{_solve_impl.1} parent=0 // pred_check_branch
    %15 = sbr.rel (0) target = $region13
  $region12: #{_solve_impl.1} parent=0 // pred_region
    _
  $region13: #{_solve_impl.1} parent=0 // pred_fallthru
    _
  %v16 = vld [vmem:[%s0] sm:$0xff]
  %v17 = vld [vmem:[%s0 + $0x8] sm:$0xff]
  %v18 = vld [vmem:[%s0 + $0x10] sm:$0xff]
  %v19 = vld [vmem:[%s0 + $0x18] sm:$0xff]
  %v20 = vld [vmem:[%s0 + $0x20] sm:$0xff]
  %v21 = vld [vmem:[%s0 + $0x28] sm:$0xff]
  %v22 = vld [vmem:[%s0 + $0x30] sm:$0xff]
  %v23 = vld [vmem:[%s0 + $0x38] sm:$0xff]
  %v24 = vld [vmem:[%s0 + $0x40] sm:$0xff]
  %v25 = vld [vmem:[%s0 + $0x48] sm:$0xff]
  %v26 = vld [vmem:[%s0 + $0x50] sm:$0xff]
  %v27 = vld [vmem:[%s0 + $0x58] sm:$0xff]
  %v28 = vld [vmem:[%s0 + $0x60] sm:$0xff]
  %v29 = vld [vmem:[%s0 + $0x68] sm:$0xff]
  %v30 = vld [vmem:[%s0 + $0x70] sm:$0xff]
  %v31 = vld [vmem:[%s0 + $0x78] sm:$0xff]
  %v32 = vld [vmem:[%s0 + $0x80] sm:$0xff]
  %v33 = vld [vmem:[%s0 + $0x88] sm:$0xff]
  %v34 = vld [vmem:[%s0 + $0x90] sm:$0xff]
  %v35 = vld [vmem:[%s0 + $0x98] sm:$0xff]
  %v36 = vld [vmem:[%s0 + $0xa0] sm:$0xff]
  %v37 = vld [vmem:[%s0 + $0xa8] sm:$0xff]
  %v38 = vld [vmem:[%s0 + $0xb0] sm:$0xff]
  %v39 = vld [vmem:[%s0 + $0xb8] sm:$0xff]
  %v40 = vld [vmem:[%s0 + $0xc0] sm:$0xff]
  %v41 = vld [vmem:[%s0 + $0xc8] sm:$0xff]
  %v42 = vld [vmem:[%s0 + $0xd0] sm:$0xff]
  %v43 = vld [vmem:[%s0 + $0xd8] sm:$0xff]
  %v44 = vld [vmem:[%s0 + $0xe0] sm:$0xff]
  %v45 = vld [vmem:[%s0 + $0xe8] sm:$0xff]
  %v46 = vld [vmem:[%s0 + $0xf0] sm:$0xff]
  %v47 = vld [vmem:[%s0 + $0xf8] sm:$0xff]
  %v48 = vld [vmem:[%s0 + $0x100] sm:$0xff]
  %v49 = vld [vmem:[%s0 + $0x108] sm:$0xff]
  %v50 = vld [vmem:[%s0 + $0x110] sm:$0xff]
  %v51 = vld [vmem:[%s0 + $0x118] sm:$0xff]
  %v52 = vld [vmem:[%s0 + $0x120] sm:$0xff]
  %v53 = vld [vmem:[%s0 + $0x128] sm:$0xff]
  %v54 = vld [vmem:[%s0 + $0x130] sm:$0xff]
  %v55 = vld [vmem:[%s0 + $0x138] sm:$0xff]
  %v56 = vld [vmem:[%s0 + $0x140] sm:$0xff]
  %v57 = vld [vmem:[%s0 + $0x148] sm:$0xff]
  %v58 = vld [vmem:[%s0 + $0x150] sm:$0xff]
  %v59 = vld [vmem:[%s0 + $0x158] sm:$0xff]
  %v60 = vld [vmem:[%s0 + $0x160] sm:$0xff]
  %v61 = vld [vmem:[%s0 + $0x168] sm:$0xff]
  %v62 = vld [vmem:[%s0 + $0x170] sm:$0xff]
  %v63 = vld [vmem:[%s0 + $0x178] sm:$0xff]
  %v64 = vld [vmem:[%s0 + $0x180] sm:$0xff]
  %v65 = vld [vmem:[%s0 + $0x188] sm:$0xff]
  %v66 = vld [vmem:[%s0 + $0x190] sm:$0xff]
  %v67 = vld [vmem:[%s0 + $0x198] sm:$0xff]
  %v68 = vld [vmem:[%s0 + $0x1a0] sm:$0xff]
  %v69 = vld [vmem:[%s0 + $0x1a8] sm:$0xff]
  %v70 = vld [vmem:[%s0 + $0x1b0] sm:$0xff]
  %v71 = vld [vmem:[%s0 + $0x1b8] sm:$0xff]
  %v72 = vld [vmem:[%s0 + $0x1c0] sm:$0xff]
  %v73 = vld [vmem:[%s0 + $0x1c8] sm:$0xff]
  %v74 = vld [vmem:[%s0 + $0x1d0] sm:$0xff]
  %v75 = vld [vmem:[%s0 + $0x1d8] sm:$0xff]
  %v76 = vld [vmem:[%s0 + $0x1e0] sm:$0xff]
  %v77 = vld [vmem:[%s0 + $0x1e8] sm:$0xff]
  %v78 = vld [vmem:[%s0 + $0x1f0] sm:$0xff]
  %v79 = vld [vmem:[%s0 + $0x1f8] sm:$0xff]
  %v80 = vld [vmem:[%s0 + $0x200] sm:$0xff]
  %v81 = vld [vmem:[%s0 + $0x208] sm:$0xff]
  %v82 = vld [vmem:[%s0 + $0x210] sm:$0xff]
  %v83 = vld [vmem:[%s0 + $0x218] sm:$0xff]
  %v84 = vld [vmem:[%s0 + $0x220] sm:$0xff]
  %v85 = vld [vmem:[%s0 + $0x228] sm:$0xff]
  %v86 = vld [vmem:[%s0 + $0x230] sm:$0xff]
  %v87 = vld [vmem:[%s0 + $0x238] sm:$0xff]
  %v88 = vld [vmem:[%s0 + $0x240] sm:$0xff]
  %v89 = vld [vmem:[%s0 + $0x248] sm:$0xff]
  %v90 = vld [vmem:[%s0 + $0x250] sm:$0xff]
  %v91 = vld [vmem:[%s0 + $0x258] sm:$0xff]
  %v92 = vld [vmem:[%s0 + $0x260] sm:$0xff]
  %v93 = vld [vmem:[%s0 + $0x268] sm:$0xff]
  %v94 = vld [vmem:[%s0 + $0x270] sm:$0xff]
  %v95 = vld [vmem:[%s0 + $0x278] sm:$0xff]
  %v96 = vld [vmem:[%s0 + $0x280] sm:$0xff]
  %v97 = vld [vmem:[%s0 + $0x288] sm:$0xff]
  %v98 = vld [vmem:[%s0 + $0x290] sm:$0xff]
  %v99 = vld [vmem:[%s0 + $0x298] sm:$0xff]
  %v100 = vld [vmem:[%s0 + $0x2a0] sm:$0xff]
  %v101 = vld [vmem:[%s0 + $0x2a8] sm:$0xff]
  %v102 = vld [vmem:[%s0 + $0x2b0] sm:$0xff]
  %v103 = vld [vmem:[%s0 + $0x2b8] sm:$0xff]
  %v104 = vld [vmem:[%s0 + $0x2c0] sm:$0xff]
  %v105 = vld [vmem:[%s0 + $0x2c8] sm:$0xff]
  %v106 = vld [vmem:[%s0 + $0x2d0] sm:$0xff]
  %v107 = vld [vmem:[%s0 + $0x2d8] sm:$0xff]
  %v108 = vld [vmem:[%s0 + $0x2e0] sm:$0xff]
  %v109 = vld [vmem:[%s0 + $0x2e8] sm:$0xff]
  %v110 = vld [vmem:[%s0 + $0x2f0] sm:$0xff]
  %v111 = vld [vmem:[%s0 + $0x2f8] sm:$0xff]
  %v112 = vld [vmem:[%s0 + $0x300] sm:$0xff]
  %v113 = vld [vmem:[%s0 + $0x308] sm:$0xff]
  %v114 = vld [vmem:[%s0 + $0x310] sm:$0xff]
  %v115 = vld [vmem:[%s0 + $0x318] sm:$0xff]
  %v116 = vld [vmem:[%s0 + $0x320] sm:$0xff]
  %v117 = vld [vmem:[%s0 + $0x328] sm:$0xff]
  %v118 = vld [vmem:[%s0 + $0x330] sm:$0xff]
  %v119 = vld [vmem:[%s0 + $0x338] sm:$0xff]
  %v120 = vld [vmem:[%s0 + $0x340] sm:$0xff]
  %v121 = vld [vmem:[%s0 + $0x348] sm:$0xff]
  %v122 = vld [vmem:[%s0 + $0x350] sm:$0xff]
  %v123 = vld [vmem:[%s0 + $0x358] sm:$0xff]
  %v124 = vld [vmem:[%s0 + $0x360] sm:$0xff]
  %v125 = vld [vmem:[%s0 + $0x368] sm:$0xff]
  %v126 = vld [vmem:[%s0 + $0x370] sm:$0xff]
  %v127 = vld [vmem:[%s0 + $0x378] sm:$0xff]
  %v128 = vld [vmem:[%s0 + $0x380] sm:$0xff]
  %v129 = vld [vmem:[%s0 + $0x388] sm:$0xff]
  %v130 = vld [vmem:[%s0 + $0x390] sm:$0xff]
  %v131 = vld [vmem:[%s0 + $0x398] sm:$0xff]
  %v132 = vld [vmem:[%s0 + $0x3a0] sm:$0xff]
  %v133 = vld [vmem:[%s0 + $0x3a8] sm:$0xff]
  %v134 = vld [vmem:[%s0 + $0x3b0] sm:$0xff]
  %v135 = vld [vmem:[%s0 + $0x3b8] sm:$0xff]
  %v136 = vld [vmem:[%s0 + $0x3c0] sm:$0xff]
  %v137 = vld [vmem:[%s0 + $0x3c8] sm:$0xff]
  %v138 = vld [vmem:[%s0 + $0x3d0] sm:$0xff]
  %v139 = vld [vmem:[%s0 + $0x3d8] sm:$0xff]
  %v140 = vld [vmem:[%s0 + $0x3e0] sm:$0xff]
  %v141 = vld [vmem:[%s0 + $0x3e8] sm:$0xff]
  %v142 = vld [vmem:[%s0 + $0x3f0] sm:$0xff]
  %v143 = vld [vmem:[%s0 + $0x3f8] sm:$0xff]
  %v144 = vld [vmem:[%s1] sm:$0xff]
  %v145 = vld [vmem:[%s1 + $0x8] sm:$0xff]
  %v146 = vld [vmem:[%s1 + $0x10] sm:$0xff]
  %v147 = vld [vmem:[%s1 + $0x18] sm:$0xff]
  %v148 = vld [vmem:[%s2] sm:$0xff]
  %v149 = vld [vmem:[%s2 + $0x8] sm:$0xff]
  %v150 = vld [vmem:[%s2 + $0x10] sm:$0xff]
  %v151 = vld [vmem:[%s2 + $0x18] sm:$0xff]
  %v156 = vcombine.high %v148, %v148
  %v158 = vunpack.c.l.s4 1966171168
  %v159 = vunpack.c.0.s8 %v158
  %v160 = vlaneseq
  %v161 = vshrl.u32 %v160, 7
  %v162 = vsub.s32 %v159, %v161
  %v163 = vrot.slane %v148, %v162
  %v165 = vunpack.c.l.s4 1966171168
  %v166 = vunpack.c.0.s8 %v165
  %v167 = vlaneseq
  %v168 = vshrl.u32 %v167, 7
  %v169 = vsub.s32 %v166, %v168
  %v170 = vrot.slane %v156, %v169
  %v171 = vcombine.high %v163, %v163
  %v172 = vcombine.high %v170, %v170
  %v174 = vunpack.c.l.s4 1966171168
  %v175 = vunpack.c.0.s8 %v174
  %v176 = vlaneseq
  %v177 = vshrl.u32 %v176, 7
  %v178 = vsub.s32 %v175, %v177
  %v179 = vrot.slane %v163, %v178
  %v181 = vunpack.c.l.s4 1966171168
  %v182 = vunpack.c.0.s8 %v181
  %v183 = vlaneseq
  %v184 = vshrl.u32 %v183, 7
  %v185 = vsub.s32 %v182, %v184
  %v186 = vrot.slane %v170, %v185
  %v188 = vunpack.c.l.s4 1966171168
  %v189 = vunpack.c.0.s8 %v188
  %v190 = vlaneseq
  %v191 = vshrl.u32 %v190, 7
  %v192 = vsub.s32 %v189, %v191
  %v193 = vrot.slane %v171, %v192
  %v195 = vunpack.c.l.s4 1966171168
  %v196 = vunpack.c.0.s8 %v195
  %v197 = vlaneseq
  %v198 = vshrl.u32 %v197, 7
  %v199 = vsub.s32 %v196, %v198
  %v200 = vrot.slane %v172, %v199
  %v201 = vcombine.high %v179, %v179
  %v202 = vcombine.high %v186, %v186
  %v203 = vcombine.high %v193, %v193
  %v204 = vcombine.high %v200, %v200
  %v205 = vcombine.high %v149, %v149
  %v207 = vunpack.c.l.s4 1966171168
  %v208 = vunpack.c.0.s8 %v207
  %v209 = vlaneseq
  %v210 = vshrl.u32 %v209, 7
  %v211 = vsub.s32 %v208, %v210
  %v212 = vrot.slane %v149, %v211
  %v214 = vunpack.c.l.s4 1966171168
  %v215 = vunpack.c.0.s8 %v214
  %v216 = vlaneseq
  %v217 = vshrl.u32 %v216, 7
  %v218 = vsub.s32 %v215, %v217
  %v219 = vrot.slane %v205, %v218
  %v220 = vcombine.high %v212, %v212
  %v221 = vcombine.high %v219, %v219
  %v223 = vunpack.c.l.s4 1966171168
  %v224 = vunpack.c.0.s8 %v223
  %v225 = vlaneseq
  %v226 = vshrl.u32 %v225, 7
  %v227 = vsub.s32 %v224, %v226
  %v228 = vrot.slane %v212, %v227
  %v230 = vunpack.c.l.s4 1966171168
  %v231 = vunpack.c.0.s8 %v230
  %v232 = vlaneseq
  %v233 = vshrl.u32 %v232, 7
  %v234 = vsub.s32 %v231, %v233
  %v235 = vrot.slane %v219, %v234
  %v237 = vunpack.c.l.s4 1966171168
  %v238 = vunpack.c.0.s8 %v237
  %v239 = vlaneseq
  %v240 = vshrl.u32 %v239, 7
  %v241 = vsub.s32 %v238, %v240
  %v242 = vrot.slane %v220, %v241
  %v244 = vunpack.c.l.s4 1966171168
  %v245 = vunpack.c.0.s8 %v244
  %v246 = vlaneseq
  %v247 = vshrl.u32 %v246, 7
  %v248 = vsub.s32 %v245, %v247
  %v249 = vrot.slane %v221, %v248
  %v250 = vcombine.high %v228, %v228
  %v251 = vcombine.high %v235, %v235
  %v252 = vcombine.high %v242, %v242
  %v253 = vcombine.high %v249, %v249
  %v254 = vcombine.high %v150, %v150
  %v256 = vunpack.c.l.s4 1966171168
  %v257 = vunpack.c.0.s8 %v256
  %v258 = vlaneseq
  %v259 = vshrl.u32 %v258, 7
  %v260 = vsub.s32 %v257, %v259
  %v261 = vrot.slane %v150, %v260
  %v263 = vunpack.c.l.s4 1966171168
  %v264 = vunpack.c.0.s8 %v263
  %v265 = vlaneseq
  %v266 = vshrl.u32 %v265, 7
  %v267 = vsub.s32 %v264, %v266
  %v268 = vrot.slane %v254, %v267
  %v269 = vcombine.high %v261, %v261
  %v270 = vcombine.high %v268, %v268
  %v272 = vunpack.c.l.s4 1966171168
  %v273 = vunpack.c.0.s8 %v272
  %v274 = vlaneseq
  %v275 = vshrl.u32 %v274, 7
  %v276 = vsub.s32 %v273, %v275
  %v277 = vrot.slane %v261, %v276
  %v279 = vunpack.c.l.s4 1966171168
  %v280 = vunpack.c.0.s8 %v279
  %v281 = vlaneseq
  %v282 = vshrl.u32 %v281, 7
  %v283 = vsub.s32 %v280, %v282
  %v284 = vrot.slane %v268, %v283
  %v286 = vunpack.c.l.s4 1966171168
  %v287 = vunpack.c.0.s8 %v286
  %v288 = vlaneseq
  %v289 = vshrl.u32 %v288, 7
  %v290 = vsub.s32 %v287, %v289
  %v291 = vrot.slane %v269, %v290
  %v293 = vunpack.c.l.s4 1966171168
  %v294 = vunpack.c.0.s8 %v293
  %v295 = vlaneseq
  %v296 = vshrl.u32 %v295, 7
  %v297 = vsub.s32 %v294, %v296
  %v298 = vrot.slane %v270, %v297
  %v299 = vcombine.high %v277, %v277
  %v300 = vcombine.high %v284, %v284
  %v301 = vcombine.high %v291, %v291
  %v302 = vcombine.high %v298, %v298
  %v303 = vcombine.high %v151, %v151
  %v305 = vunpack.c.l.s4 1966171168
  %v306 = vunpack.c.0.s8 %v305
  %v307 = vlaneseq
  %v308 = vshrl.u32 %v307, 7
  %v309 = vsub.s32 %v306, %v308
  %v310 = vrot.slane %v151, %v309
  %v312 = vunpack.c.l.s4 1966171168
  %v313 = vunpack.c.0.s8 %v312
  %v314 = vlaneseq
  %v315 = vshrl.u32 %v314, 7
  %v316 = vsub.s32 %v313, %v315
  %v317 = vrot.slane %v303, %v316
  %v318 = vcombine.high %v310, %v310
  %v319 = vcombine.high %v317, %v317
  %v321 = vunpack.c.l.s4 1966171168
  %v322 = vunpack.c.0.s8 %v321
  %v323 = vlaneseq
  %v324 = vshrl.u32 %v323, 7
  %v325 = vsub.s32 %v322, %v324
  %v326 = vrot.slane %v310, %v325
  %v328 = vunpack.c.l.s4 1966171168
  %v329 = vunpack.c.0.s8 %v328
  %v330 = vlaneseq
  %v331 = vshrl.u32 %v330, 7
  %v332 = vsub.s32 %v329, %v331
  %v333 = vrot.slane %v317, %v332
  %v335 = vunpack.c.l.s4 1966171168
  %v336 = vunpack.c.0.s8 %v335
  %v337 = vlaneseq
  %v338 = vshrl.u32 %v337, 7
  %v339 = vsub.s32 %v336, %v338
  %v340 = vrot.slane %v318, %v339
  %v342 = vunpack.c.l.s4 1966171168
  %v343 = vunpack.c.0.s8 %v342
  %v344 = vlaneseq
  %v345 = vshrl.u32 %v344, 7
  %v346 = vsub.s32 %v343, %v345
  %v347 = vrot.slane %v319, %v346
  %v348 = vcombine.high %v326, %v326
  %v349 = vcombine.high %v333, %v333
  %v350 = vcombine.high %v340, %v340
  %v351 = vcombine.high %v347, %v347
  %v352 = vlaneseq
  %v353 = vshrl.u32 %v352, 7
  %v354 = vsub.s32 0, %v353
  %v355 = vrot.slane %v179, %v354
  %v356 = vlaneseq
  %v357 = vshrl.u32 %v356, 7
  %v358 = vsub.s32 0, %v357
  %v359 = vrot.slane %v193, %v358
  %v360 = vlaneseq
  %v361 = vshrl.u32 %v360, 7
  %v362 = vsub.s32 0, %v361
  %v363 = vrot.slane %v201, %v362
  %v364 = vlaneseq
  %v365 = vshrl.u32 %v364, 7
  %v366 = vsub.s32 0, %v365
  %v367 = vrot.slane %v203, %v366
  %v368 = vlaneseq
  %v369 = vshrl.u32 %v368, 7
  %v370 = vsub.s32 0, %v369
  %v371 = vrot.slane %v186, %v370
  %v372 = vlaneseq
  %v373 = vshrl.u32 %v372, 7
  %v374 = vsub.s32 0, %v373
  %v375 = vrot.slane %v200, %v374
  %v376 = vlaneseq
  %v377 = vshrl.u32 %v376, 7
  %v378 = vsub.s32 0, %v377
  %v379 = vrot.slane %v202, %v378
  %v380 = vlaneseq
  %v381 = vshrl.u32 %v380, 7
  %v382 = vsub.s32 0, %v381
  %v383 = vrot.slane %v204, %v382
  %v384 = vlaneseq
  %v385 = vshrl.u32 %v384, 7
  %v386 = vsub.s32 0, %v385
  %v387 = vrot.slane %v228, %v386
  %v388 = vlaneseq
  %v389 = vshrl.u32 %v388, 7
  %v390 = vsub.s32 0, %v389
  %v391 = vrot.slane %v242, %v390
  %v392 = vlaneseq
  %v393 = vshrl.u32 %v392, 7
  %v394 = vsub.s32 0, %v393
  %v395 = vrot.slane %v250, %v394
  %v396 = vlaneseq
  %v397 = vshrl.u32 %v396, 7
  %v398 = vsub.s32 0, %v397
  %v399 = vrot.slane %v252, %v398
  %v400 = vlaneseq
  %v401 = vshrl.u32 %v400, 7
  %v402 = vsub.s32 0, %v401
  %v403 = vrot.slane %v235, %v402
  %v404 = vlaneseq
  %v405 = vshrl.u32 %v404, 7
  %v406 = vsub.s32 0, %v405
  %v407 = vrot.slane %v249, %v406
  %v408 = vlaneseq
  %v409 = vshrl.u32 %v408, 7
  %v410 = vsub.s32 0, %v409
  %v411 = vrot.slane %v251, %v410
  %v412 = vlaneseq
  %v413 = vshrl.u32 %v412, 7
  %v414 = vsub.s32 0, %v413
  %v415 = vrot.slane %v253, %v414
  %v416 = vlaneseq
  %v417 = vshrl.u32 %v416, 7
  %v418 = vsub.s32 0, %v417
  %v419 = vrot.slane %v277, %v418
  %v420 = vlaneseq
  %v421 = vshrl.u32 %v420, 7
  %v422 = vsub.s32 0, %v421
  %v423 = vrot.slane %v291, %v422
  %v424 = vlaneseq
  %v425 = vshrl.u32 %v424, 7
  %v426 = vsub.s32 0, %v425
  %v427 = vrot.slane %v299, %v426
  %v428 = vlaneseq
  %v429 = vshrl.u32 %v428, 7
  %v430 = vsub.s32 0, %v429
  %v431 = vrot.slane %v301, %v430
  %v432 = vlaneseq
  %v433 = vshrl.u32 %v432, 7
  %v434 = vsub.s32 0, %v433
  %v435 = vrot.slane %v284, %v434
  %v436 = vlaneseq
  %v437 = vshrl.u32 %v436, 7
  %v438 = vsub.s32 0, %v437
  %v439 = vrot.slane %v298, %v438
  %v440 = vlaneseq
  %v441 = vshrl.u32 %v440, 7
  %v442 = vsub.s32 0, %v441
  %v443 = vrot.slane %v300, %v442
  %v444 = vlaneseq
  %v445 = vshrl.u32 %v444, 7
  %v446 = vsub.s32 0, %v445
  %v447 = vrot.slane %v302, %v446
  %v448 = vlaneseq
  %v449 = vshrl.u32 %v448, 7
  %v450 = vsub.s32 0, %v449
  %v451 = vrot.slane %v326, %v450
  %v452 = vlaneseq
  %v453 = vshrl.u32 %v452, 7
  %v454 = vsub.s32 0, %v453
  %v455 = vrot.slane %v340, %v454
  %v456 = vlaneseq
  %v457 = vshrl.u32 %v456, 7
  %v458 = vsub.s32 0, %v457
  %v459 = vrot.slane %v348, %v458
  %v460 = vlaneseq
  %v461 = vshrl.u32 %v460, 7
  %v462 = vsub.s32 0, %v461
  %v463 = vrot.slane %v350, %v462
  %v464 = vlaneseq
  %v465 = vshrl.u32 %v464, 7
  %v466 = vsub.s32 0, %v465
  %v467 = vrot.slane %v333, %v466
  %v468 = vlaneseq
  %v469 = vshrl.u32 %v468, 7
  %v470 = vsub.s32 0, %v469
  %v471 = vrot.slane %v347, %v470
  %v472 = vlaneseq
  %v473 = vshrl.u32 %v472, 7
  %v474 = vsub.s32 0, %v473
  %v475 = vrot.slane %v349, %v474
  %v476 = vlaneseq
  %v477 = vshrl.u32 %v476, 7
  %v478 = vsub.s32 0, %v477
  %v479 = vrot.slane %v351, %v478
  %v512 = vmul.f32 %v16, %v355
  %v513 = vmul.f32 %v17, %v355
  %v514 = vmul.f32 %v18, %v355
  %v515 = vmul.f32 %v19, %v355
  %v516 = vmul.f32 %v20, %v359
  %v517 = vmul.f32 %v21, %v359
  %v518 = vmul.f32 %v22, %v359
  %v519 = vmul.f32 %v23, %v359
  %v520 = vmul.f32 %v24, %v363
  %v521 = vmul.f32 %v25, %v363
  %v522 = vmul.f32 %v26, %v363
  %v523 = vmul.f32 %v27, %v363
  %v524 = vmul.f32 %v28, %v367
  %v525 = vmul.f32 %v29, %v367
  %v526 = vmul.f32 %v30, %v367
  %v527 = vmul.f32 %v31, %v367
  %v528 = vmul.f32 %v32, %v371
  %v529 = vmul.f32 %v33, %v371
  %v530 = vmul.f32 %v34, %v371
  %v531 = vmul.f32 %v35, %v371
  %v532 = vmul.f32 %v36, %v375
  %v533 = vmul.f32 %v37, %v375
  %v534 = vmul.f32 %v38, %v375
  %v535 = vmul.f32 %v39, %v375
  %v536 = vmul.f32 %v40, %v379
  %v537 = vmul.f32 %v41, %v379
  %v538 = vmul.f32 %v42, %v379
  %v539 = vmul.f32 %v43, %v379
  %v540 = vmul.f32 %v44, %v383
  %v541 = vmul.f32 %v45, %v383
  %v542 = vmul.f32 %v46, %v383
  %v543 = vmul.f32 %v47, %v383
  %v544 = vmul.f32 %v48, %v387
  %v545 = vmul.f32 %v49, %v387
  %v546 = vmul.f32 %v50, %v387
  %v547 = vmul.f32 %v51, %v387
  %v548 = vmul.f32 %v52, %v391
  %v549 = vmul.f32 %v53, %v391
  %v550 = vmul.f32 %v54, %v391
  %v551 = vmul.f32 %v55, %v391
  %v552 = vmul.f32 %v56, %v395
  %v553 = vmul.f32 %v57, %v395
  %v554 = vmul.f32 %v58, %v395
  %v555 = vmul.f32 %v59, %v395
  %v556 = vmul.f32 %v60, %v399
  %v557 = vmul.f32 %v61, %v399
  %v558 = vmul.f32 %v62, %v399
  %v559 = vmul.f32 %v63, %v399
  %v560 = vmul.f32 %v64, %v403
  %v561 = vmul.f32 %v65, %v403
  %v562 = vmul.f32 %v66, %v403
  %v563 = vmul.f32 %v67, %v403
  %v564 = vmul.f32 %v68, %v407
  %v565 = vmul.f32 %v69, %v407
  %v566 = vmul.f32 %v70, %v407
  %v567 = vmul.f32 %v71, %v407
  %v568 = vmul.f32 %v72, %v411
  %v569 = vmul.f32 %v73, %v411
  %v570 = vmul.f32 %v74, %v411
  %v571 = vmul.f32 %v75, %v411
  %v572 = vmul.f32 %v76, %v415
  %v573 = vmul.f32 %v77, %v415
  %v574 = vmul.f32 %v78, %v415
  %v575 = vmul.f32 %v79, %v415
  %v576 = vmul.f32 %v80, %v419
  %v577 = vmul.f32 %v81, %v419
  %v578 = vmul.f32 %v82, %v419
  %v579 = vmul.f32 %v83, %v419
  %v580 = vmul.f32 %v84, %v423
  %v581 = vmul.f32 %v85, %v423
  %v582 = vmul.f32 %v86, %v423
  %v583 = vmul.f32 %v87, %v423
  %v584 = vmul.f32 %v88, %v427
  %v585 = vmul.f32 %v89, %v427
  %v586 = vmul.f32 %v90, %v427
  %v587 = vmul.f32 %v91, %v427
  %v588 = vmul.f32 %v92, %v431
  %v589 = vmul.f32 %v93, %v431
  %v590 = vmul.f32 %v94, %v431
  %v591 = vmul.f32 %v95, %v431
  %v592 = vmul.f32 %v96, %v435
  %v593 = vmul.f32 %v97, %v435
  %v594 = vmul.f32 %v98, %v435
  %v595 = vmul.f32 %v99, %v435
  %v596 = vmul.f32 %v100, %v439
  %v597 = vmul.f32 %v101, %v439
  %v598 = vmul.f32 %v102, %v439
  %v599 = vmul.f32 %v103, %v439
  %v600 = vmul.f32 %v104, %v443
  %v601 = vmul.f32 %v105, %v443
  %v602 = vmul.f32 %v106, %v443
  %v603 = vmul.f32 %v107, %v443
  %v604 = vmul.f32 %v108, %v447
  %v605 = vmul.f32 %v109, %v447
  %v606 = vmul.f32 %v110, %v447
  %v607 = vmul.f32 %v111, %v447
  %v608 = vmul.f32 %v112, %v451
  %v609 = vmul.f32 %v113, %v451
  %v610 = vmul.f32 %v114, %v451
  %v611 = vmul.f32 %v115, %v451
  %v612 = vmul.f32 %v116, %v455
  %v613 = vmul.f32 %v117, %v455
  %v614 = vmul.f32 %v118, %v455
  %v615 = vmul.f32 %v119, %v455
  %v616 = vmul.f32 %v120, %v459
  %v617 = vmul.f32 %v121, %v459
  %v618 = vmul.f32 %v122, %v459
  %v619 = vmul.f32 %v123, %v459
  %v620 = vmul.f32 %v124, %v463
  %v621 = vmul.f32 %v125, %v463
  %v622 = vmul.f32 %v126, %v463
  %v623 = vmul.f32 %v127, %v463
  %v624 = vmul.f32 %v128, %v467
  %v625 = vmul.f32 %v129, %v467
  %v626 = vmul.f32 %v130, %v467
  %v627 = vmul.f32 %v131, %v467
  %v628 = vmul.f32 %v132, %v471
  %v629 = vmul.f32 %v133, %v471
  %v630 = vmul.f32 %v134, %v471
  %v631 = vmul.f32 %v135, %v471
  %v632 = vmul.f32 %v136, %v475
  %v633 = vmul.f32 %v137, %v475
  %v634 = vmul.f32 %v138, %v475
  %v635 = vmul.f32 %v139, %v475
  %v636 = vmul.f32 %v140, %v479
  %v637 = vmul.f32 %v141, %v479
  %v638 = vmul.f32 %v142, %v479
  %v639 = vmul.f32 %v143, %v479
  %v640 = vadd.f32 %v512, %v516
  %v641 = vadd.f32 %v640, %v520
  %v642 = vadd.f32 %v641, %v524
  %v643 = vadd.f32 %v642, %v528
  %v644 = vadd.f32 %v643, %v532
  %v645 = vadd.f32 %v644, %v536
  %v646 = vadd.f32 %v645, %v540
  %v647 = vadd.f32 %v646, %v544
  %v648 = vadd.f32 %v647, %v548
  %v649 = vadd.f32 %v648, %v552
  %v650 = vadd.f32 %v649, %v556
  %v651 = vadd.f32 %v650, %v560
  %v652 = vadd.f32 %v651, %v564
  %v653 = vadd.f32 %v652, %v568
  %v654 = vadd.f32 %v653, %v572
  %v655 = vadd.f32 %v654, %v576
  %v656 = vadd.f32 %v655, %v580
  %v657 = vadd.f32 %v656, %v584
  %v658 = vadd.f32 %v657, %v588
  %v659 = vadd.f32 %v658, %v592
  %v660 = vadd.f32 %v659, %v596
  %v661 = vadd.f32 %v660, %v600
  %v662 = vadd.f32 %v661, %v604
  %v663 = vadd.f32 %v662, %v608
  %v664 = vadd.f32 %v663, %v612
  %v665 = vadd.f32 %v664, %v616
  %v666 = vadd.f32 %v665, %v620
  %v667 = vadd.f32 %v666, %v624
  %v668 = vadd.f32 %v667, %v628
  %v669 = vadd.f32 %v668, %v632
  %v670 = vadd.f32 %v669, %v636
  %v671 = vadd.f32 %v513, %v517
  %v672 = vadd.f32 %v671, %v521
  %v673 = vadd.f32 %v672, %v525
  %v674 = vadd.f32 %v673, %v529
  %v675 = vadd.f32 %v674, %v533
  %v676 = vadd.f32 %v675, %v537
  %v677 = vadd.f32 %v676, %v541
  %v678 = vadd.f32 %v677, %v545
  %v679 = vadd.f32 %v678, %v549
  %v680 = vadd.f32 %v679, %v553
  %v681 = vadd.f32 %v680, %v557
  %v682 = vadd.f32 %v681, %v561
  %v683 = vadd.f32 %v682, %v565
  %v684 = vadd.f32 %v683, %v569
  %v685 = vadd.f32 %v684, %v573
  %v686 = vadd.f32 %v685, %v577
  %v687 = vadd.f32 %v686, %v581
  %v688 = vadd.f32 %v687, %v585
  %v689 = vadd.f32 %v688, %v589
  %v690 = vadd.f32 %v689, %v593
  %v691 = vadd.f32 %v690, %v597
  %v692 = vadd.f32 %v691, %v601
  %v693 = vadd.f32 %v692, %v605
  %v694 = vadd.f32 %v693, %v609
  %v695 = vadd.f32 %v694, %v613
  %v696 = vadd.f32 %v695, %v617
  %v697 = vadd.f32 %v696, %v621
  %v698 = vadd.f32 %v697, %v625
  %v699 = vadd.f32 %v698, %v629
  %v700 = vadd.f32 %v699, %v633
  %v701 = vadd.f32 %v700, %v637
  %v702 = vadd.f32 %v514, %v518
  %v703 = vadd.f32 %v702, %v522
  %v704 = vadd.f32 %v703, %v526
  %v705 = vadd.f32 %v704, %v530
  %v706 = vadd.f32 %v705, %v534
  %v707 = vadd.f32 %v706, %v538
  %v708 = vadd.f32 %v707, %v542
  %v709 = vadd.f32 %v708, %v546
  %v710 = vadd.f32 %v709, %v550
  %v711 = vadd.f32 %v710, %v554
  %v712 = vadd.f32 %v711, %v558
  %v713 = vadd.f32 %v712, %v562
  %v714 = vadd.f32 %v713, %v566
  %v715 = vadd.f32 %v714, %v570
  %v716 = vadd.f32 %v715, %v574
  %v717 = vadd.f32 %v716, %v578
  %v718 = vadd.f32 %v717, %v582
  %v719 = vadd.f32 %v718, %v586
  %v720 = vadd.f32 %v719, %v590
  %v721 = vadd.f32 %v720, %v594
  %v722 = vadd.f32 %v721, %v598
  %v723 = vadd.f32 %v722, %v602
  %v724 = vadd.f32 %v723, %v606
  %v725 = vadd.f32 %v724, %v610
  %v726 = vadd.f32 %v725, %v614
  %v727 = vadd.f32 %v726, %v618
  %v728 = vadd.f32 %v727, %v622
  %v729 = vadd.f32 %v728, %v626
  %v730 = vadd.f32 %v729, %v630
  %v731 = vadd.f32 %v730, %v634
  %v732 = vadd.f32 %v731, %v638
  %v733 = vadd.f32 %v515, %v519
  %v734 = vadd.f32 %v733, %v523
  %v735 = vadd.f32 %v734, %v527
  %v736 = vadd.f32 %v735, %v531
  %v737 = vadd.f32 %v736, %v535
  %v738 = vadd.f32 %v737, %v539
  %v739 = vadd.f32 %v738, %v543
  %v740 = vadd.f32 %v739, %v547
  %v741 = vadd.f32 %v740, %v551
  %v742 = vadd.f32 %v741, %v555
  %v743 = vadd.f32 %v742, %v559
  %v744 = vadd.f32 %v743, %v563
  %v745 = vadd.f32 %v744, %v567
  %v746 = vadd.f32 %v745, %v571
  %v747 = vadd.f32 %v746, %v575
  %v748 = vadd.f32 %v747, %v579
  %v749 = vadd.f32 %v748, %v583
  %v750 = vadd.f32 %v749, %v587
  %v751 = vadd.f32 %v750, %v591
  %v752 = vadd.f32 %v751, %v595
  %v753 = vadd.f32 %v752, %v599
  %v754 = vadd.f32 %v753, %v603
  %v755 = vadd.f32 %v754, %v607
  %v756 = vadd.f32 %v755, %v611
  %v757 = vadd.f32 %v756, %v615
  %v758 = vadd.f32 %v757, %v619
  %v759 = vadd.f32 %v758, %v623
  %v760 = vadd.f32 %v759, %v627
  %v761 = vadd.f32 %v760, %v631
  %v762 = vadd.f32 %v761, %v635
  %v763 = vadd.f32 %v762, %v639
  %v764 = vsub.f32 %v670, %v144
  %v765 = vsub.f32 %v701, %v145
  %v766 = vsub.f32 %v732, %v146
  %v767 = vsub.f32 %v763, %v147
  %v768 = vmul.f32 %v764, -1.0
  %v769 = vmul.f32 %v765, -1.0
  %v770 = vmul.f32 %v766, -1.0
  %v771 = vmul.f32 %v767, -1.0
  %v772 = vand.u32 2147483647, %v768
  %v773 = vand.u32 2147483647, %v769
  %v774 = vand.u32 2147483647, %v770
  %v775 = vand.u32 2147483647, %v771
  %v776 = vmax.f32 %v772, %v773
  %v777 = vmax.f32 %v774, %v775
  %v778 = vmax.f32 %v776, %v777
  %v779 = vrot.slane %v778, 4
  %v780 = vmax.f32 %v778, %v779
  %v781 = vrot.slane %v780, 2
  %v782 = vmax.f32 %v780, %v781
  %v783 = vrot.slane %v782, 1
  %v784 = vmax.f32 %v782, %v783
  %v785 = vmax.f32 %v784, 1e-08
  %vm786 = vcmp.gt.f32.partialorder %v785, 2.0
  %v787 = vrcp.pop %v785
  %v788 = vmul.f32 2.0, %v787
  %v789 = vsel %vm786, %v788, 1.0
  %vm790 = vcmp.lt.f32.partialorder %v785, 0.0001
  %v791 = vmul.f32 0.0001, %v787
  %v792 = vsel %vm790, %v791, %v789
  %v793 = vmax.f32 %v792, 1e-16
  %v794 = vmul.f32 %v793, %v768
  %v795 = vmul.f32 %v793, %v769
  %v796 = vmul.f32 %v793, %v770
  %v797 = vmul.f32 %v793, %v771
  %v802 = vcombine.high %v794, %v794
  %v804 = vunpack.c.l.s4 1966171168
  %v805 = vunpack.c.0.s8 %v804
  %v806 = vlaneseq
  %v807 = vshrl.u32 %v806, 7
  %v808 = vsub.s32 %v805, %v807
  %v809 = vrot.slane %v794, %v808
  %v811 = vunpack.c.l.s4 1966171168
  %v812 = vunpack.c.0.s8 %v811
  %v813 = vlaneseq
  %v814 = vshrl.u32 %v813, 7
  %v815 = vsub.s32 %v812, %v814
  %v816 = vrot.slane %v802, %v815
  %v817 = vcombine.high %v809, %v809
  %v818 = vcombine.high %v816, %v816
  %v820 = vunpack.c.l.s4 1966171168
  %v821 = vunpack.c.0.s8 %v820
  %v822 = vlaneseq
  %v823 = vshrl.u32 %v822, 7
  %v824 = vsub.s32 %v821, %v823
  %v825 = vrot.slane %v809, %v824
  %v827 = vunpack.c.l.s4 1966171168
  %v828 = vunpack.c.0.s8 %v827
  %v829 = vlaneseq
  %v830 = vshrl.u32 %v829, 7
  %v831 = vsub.s32 %v828, %v830
  %v832 = vrot.slane %v816, %v831
  %v834 = vunpack.c.l.s4 1966171168
  %v835 = vunpack.c.0.s8 %v834
  %v836 = vlaneseq
  %v837 = vshrl.u32 %v836, 7
  %v838 = vsub.s32 %v835, %v837
  %v839 = vrot.slane %v817, %v838
  %v841 = vunpack.c.l.s4 1966171168
  %v842 = vunpack.c.0.s8 %v841
  %v843 = vlaneseq
  %v844 = vshrl.u32 %v843, 7
  %v845 = vsub.s32 %v842, %v844
  %v846 = vrot.slane %v818, %v845
  %v847 = vcombine.high %v825, %v825
  %v848 = vcombine.high %v832, %v832
  %v849 = vcombine.high %v839, %v839
  %v850 = vcombine.high %v846, %v846
  %v851 = vcombine.high %v795, %v795
  %v853 = vunpack.c.l.s4 1966171168
  %v854 = vunpack.c.0.s8 %v853
  %v855 = vlaneseq
  %v856 = vshrl.u32 %v855, 7
  %v857 = vsub.s32 %v854, %v856
  %v858 = vrot.slane %v795, %v857
  %v860 = vunpack.c.l.s4 1966171168
  %v861 = vunpack.c.0.s8 %v860
  %v862 = vlaneseq
  %v863 = vshrl.u32 %v862, 7
  %v864 = vsub.s32 %v861, %v863
  %v865 = vrot.slane %v851, %v864
  %v866 = vcombine.high %v858, %v858
  %v867 = vcombine.high %v865, %v865
  %v869 = vunpack.c.l.s4 1966171168
  %v870 = vunpack.c.0.s8 %v869
  %v871 = vlaneseq
  %v872 = vshrl.u32 %v871, 7
  %v873 = vsub.s32 %v870, %v872
  %v874 = vrot.slane %v858, %v873
  %v876 = vunpack.c.l.s4 1966171168
  %v877 = vunpack.c.0.s8 %v876
  %v878 = vlaneseq
  %v879 = vshrl.u32 %v878, 7
  %v880 = vsub.s32 %v877, %v879
  %v881 = vrot.slane %v865, %v880
  %v883 = vunpack.c.l.s4 1966171168
  %v884 = vunpack.c.0.s8 %v883
  %v885 = vlaneseq
  %v886 = vshrl.u32 %v885, 7
  %v887 = vsub.s32 %v884, %v886
  %v888 = vrot.slane %v866, %v887
  %v890 = vunpack.c.l.s4 1966171168
  %v891 = vunpack.c.0.s8 %v890
  %v892 = vlaneseq
  %v893 = vshrl.u32 %v892, 7
  %v894 = vsub.s32 %v891, %v893
  %v895 = vrot.slane %v867, %v894
  %v896 = vcombine.high %v874, %v874
  %v897 = vcombine.high %v881, %v881
  %v898 = vcombine.high %v888, %v888
  %v899 = vcombine.high %v895, %v895
  %v900 = vcombine.high %v796, %v796
  %v902 = vunpack.c.l.s4 1966171168
  %v903 = vunpack.c.0.s8 %v902
  %v904 = vlaneseq
  %v905 = vshrl.u32 %v904, 7
  %v906 = vsub.s32 %v903, %v905
  %v907 = vrot.slane %v796, %v906
  %v909 = vunpack.c.l.s4 1966171168
  %v910 = vunpack.c.0.s8 %v909
  %v911 = vlaneseq
  %v912 = vshrl.u32 %v911, 7
  %v913 = vsub.s32 %v910, %v912
  %v914 = vrot.slane %v900, %v913
  %v915 = vcombine.high %v907, %v907
  %v916 = vcombine.high %v914, %v914
  %v918 = vunpack.c.l.s4 1966171168
  %v919 = vunpack.c.0.s8 %v918
  %v920 = vlaneseq
  %v921 = vshrl.u32 %v920, 7
  %v922 = vsub.s32 %v919, %v921
  %v923 = vrot.slane %v907, %v922
  %v925 = vunpack.c.l.s4 1966171168
  %v926 = vunpack.c.0.s8 %v925
  %v927 = vlaneseq
  %v928 = vshrl.u32 %v927, 7
  %v929 = vsub.s32 %v926, %v928
  %v930 = vrot.slane %v914, %v929
  %v932 = vunpack.c.l.s4 1966171168
  %v933 = vunpack.c.0.s8 %v932
  %v934 = vlaneseq
  %v935 = vshrl.u32 %v934, 7
  %v936 = vsub.s32 %v933, %v935
  %v937 = vrot.slane %v915, %v936
  %v939 = vunpack.c.l.s4 1966171168
  %v940 = vunpack.c.0.s8 %v939
  %v941 = vlaneseq
  %v942 = vshrl.u32 %v941, 7
  %v943 = vsub.s32 %v940, %v942
  %v944 = vrot.slane %v916, %v943
  %v945 = vcombine.high %v923, %v923
  %v946 = vcombine.high %v930, %v930
  %v947 = vcombine.high %v937, %v937
  %v948 = vcombine.high %v944, %v944
  %v949 = vcombine.high %v797, %v797
  %v951 = vunpack.c.l.s4 1966171168
  %v952 = vunpack.c.0.s8 %v951
  %v953 = vlaneseq
  %v954 = vshrl.u32 %v953, 7
  %v955 = vsub.s32 %v952, %v954
  %v956 = vrot.slane %v797, %v955
  %v958 = vunpack.c.l.s4 1966171168
  %v959 = vunpack.c.0.s8 %v958
  %v960 = vlaneseq
  %v961 = vshrl.u32 %v960, 7
  %v962 = vsub.s32 %v959, %v961
  %v963 = vrot.slane %v949, %v962
  %v964 = vcombine.high %v956, %v956
  %v965 = vcombine.high %v963, %v963
  %v967 = vunpack.c.l.s4 1966171168
  %v968 = vunpack.c.0.s8 %v967
  %v969 = vlaneseq
  %v970 = vshrl.u32 %v969, 7
  %v971 = vsub.s32 %v968, %v970
  %v972 = vrot.slane %v956, %v971
  %v974 = vunpack.c.l.s4 1966171168
  %v975 = vunpack.c.0.s8 %v974
  %v976 = vlaneseq
  %v977 = vshrl.u32 %v976, 7
  %v978 = vsub.s32 %v975, %v977
  %v979 = vrot.slane %v963, %v978
  %v981 = vunpack.c.l.s4 1966171168
  %v982 = vunpack.c.0.s8 %v981
  %v983 = vlaneseq
  %v984 = vshrl.u32 %v983, 7
  %v985 = vsub.s32 %v982, %v984
  %v986 = vrot.slane %v964, %v985
  %v988 = vunpack.c.l.s4 1966171168
  %v989 = vunpack.c.0.s8 %v988
  %v990 = vlaneseq
  %v991 = vshrl.u32 %v990, 7
  %v992 = vsub.s32 %v989, %v991
  %v993 = vrot.slane %v965, %v992
  %v994 = vcombine.high %v972, %v972
  %v995 = vcombine.high %v979, %v979
  %v996 = vcombine.high %v986, %v986
  %v997 = vcombine.high %v993, %v993
  %v998 = vlaneseq
  %v999 = vshrl.u32 %v998, 7
  %v1000 = vsub.s32 0, %v999
  %v1001 = vrot.slane %v825, %v1000
  %v1002 = vlaneseq
  %v1003 = vshrl.u32 %v1002, 7
  %v1004 = vsub.s32 0, %v1003
  %v1005 = vrot.slane %v839, %v1004
  %v1006 = vlaneseq
  %v1007 = vshrl.u32 %v1006, 7
  %v1008 = vsub.s32 0, %v1007
  %v1009 = vrot.slane %v847, %v1008
  %v1010 = vlaneseq
  %v1011 = vshrl.u32 %v1010, 7
  %v1012 = vsub.s32 0, %v1011
  %v1013 = vrot.slane %v849, %v1012
  %v1014 = vlaneseq
  %v1015 = vshrl.u32 %v1014, 7
  %v1016 = vsub.s32 0, %v1015
  %v1017 = vrot.slane %v832, %v1016
  %v1018 = vlaneseq
  %v1019 = vshrl.u32 %v1018, 7
  %v1020 = vsub.s32 0, %v1019
  %v1021 = vrot.slane %v846, %v1020
  %v1022 = vlaneseq
  %v1023 = vshrl.u32 %v1022, 7
  %v1024 = vsub.s32 0, %v1023
  %v1025 = vrot.slane %v848, %v1024
  %v1026 = vlaneseq
  %v1027 = vshrl.u32 %v1026, 7
  %v1028 = vsub.s32 0, %v1027
  %v1029 = vrot.slane %v850, %v1028
  %v1030 = vlaneseq
  %v1031 = vshrl.u32 %v1030, 7
  %v1032 = vsub.s32 0, %v1031
  %v1033 = vrot.slane %v874, %v1032
  %v1034 = vlaneseq
  %v1035 = vshrl.u32 %v1034, 7
  %v1036 = vsub.s32 0, %v1035
  %v1037 = vrot.slane %v888, %v1036
  %v1038 = vlaneseq
  %v1039 = vshrl.u32 %v1038, 7
  %v1040 = vsub.s32 0, %v1039
  %v1041 = vrot.slane %v896, %v1040
  %v1042 = vlaneseq
  %v1043 = vshrl.u32 %v1042, 7
  %v1044 = vsub.s32 0, %v1043
  %v1045 = vrot.slane %v898, %v1044
  %v1046 = vlaneseq
  %v1047 = vshrl.u32 %v1046, 7
  %v1048 = vsub.s32 0, %v1047
  %v1049 = vrot.slane %v881, %v1048
  %v1050 = vlaneseq
  %v1051 = vshrl.u32 %v1050, 7
  %v1052 = vsub.s32 0, %v1051
  %v1053 = vrot.slane %v895, %v1052
  %v1054 = vlaneseq
  %v1055 = vshrl.u32 %v1054, 7
  %v1056 = vsub.s32 0, %v1055
  %v1057 = vrot.slane %v897, %v1056
  %v1058 = vlaneseq
  %v1059 = vshrl.u32 %v1058, 7
  %v1060 = vsub.s32 0, %v1059
  %v1061 = vrot.slane %v899, %v1060
  %v1062 = vlaneseq
  %v1063 = vshrl.u32 %v1062, 7
  %v1064 = vsub.s32 0, %v1063
  %v1065 = vrot.slane %v923, %v1064
  %v1066 = vlaneseq
  %v1067 = vshrl.u32 %v1066, 7
  %v1068 = vsub.s32 0, %v1067
  %v1069 = vrot.slane %v937, %v1068
  %v1070 = vlaneseq
  %v1071 = vshrl.u32 %v1070, 7
  %v1072 = vsub.s32 0, %v1071
  %v1073 = vrot.slane %v945, %v1072
  %v1074 = vlaneseq
  %v1075 = vshrl.u32 %v1074, 7
  %v1076 = vsub.s32 0, %v1075
  %v1077 = vrot.slane %v947, %v1076
  %v1078 = vlaneseq
  %v1079 = vshrl.u32 %v1078, 7
  %v1080 = vsub.s32 0, %v1079
  %v1081 = vrot.slane %v930, %v1080
  %v1082 = vlaneseq
  %v1083 = vshrl.u32 %v1082, 7
  %v1084 = vsub.s32 0, %v1083
  %v1085 = vrot.slane %v944, %v1084
  %v1086 = vlaneseq
  %v1087 = vshrl.u32 %v1086, 7
  %v1088 = vsub.s32 0, %v1087
  %v1089 = vrot.slane %v946, %v1088
  %v1090 = vlaneseq
  %v1091 = vshrl.u32 %v1090, 7
  %v1092 = vsub.s32 0, %v1091
  %v1093 = vrot.slane %v948, %v1092
  %v1094 = vlaneseq
  %v1095 = vshrl.u32 %v1094, 7
  %v1096 = vsub.s32 0, %v1095
  %v1097 = vrot.slane %v972, %v1096
  %v1098 = vlaneseq
  %v1099 = vshrl.u32 %v1098, 7
  %v1100 = vsub.s32 0, %v1099
  %v1101 = vrot.slane %v986, %v1100
  %v1102 = vlaneseq
  %v1103 = vshrl.u32 %v1102, 7
  %v1104 = vsub.s32 0, %v1103
  %v1105 = vrot.slane %v994, %v1104
  %v1106 = vlaneseq
  %v1107 = vshrl.u32 %v1106, 7
  %v1108 = vsub.s32 0, %v1107
  %v1109 = vrot.slane %v996, %v1108
  %v1110 = vlaneseq
  %v1111 = vshrl.u32 %v1110, 7
  %v1112 = vsub.s32 0, %v1111
  %v1113 = vrot.slane %v979, %v1112
  %v1114 = vlaneseq
  %v1115 = vshrl.u32 %v1114, 7
  %v1116 = vsub.s32 0, %v1115
  %v1117 = vrot.slane %v993, %v1116
  %v1118 = vlaneseq
  %v1119 = vshrl.u32 %v1118, 7
  %v1120 = vsub.s32 0, %v1119
  %v1121 = vrot.slane %v995, %v1120
  %v1122 = vlaneseq
  %v1123 = vshrl.u32 %v1122, 7
  %v1124 = vsub.s32 0, %v1123
  %v1125 = vrot.slane %v997, %v1124
  %v1158 = vmul.f32 %v16, %v1001
  %v1159 = vmul.f32 %v17, %v1001
  %v1160 = vmul.f32 %v18, %v1001
  %v1161 = vmul.f32 %v19, %v1001
  %v1162 = vmul.f32 %v20, %v1005
  %v1163 = vmul.f32 %v21, %v1005
  %v1164 = vmul.f32 %v22, %v1005
  %v1165 = vmul.f32 %v23, %v1005
  %v1166 = vmul.f32 %v24, %v1009
  %v1167 = vmul.f32 %v25, %v1009
  %v1168 = vmul.f32 %v26, %v1009
  %v1169 = vmul.f32 %v27, %v1009
  %v1170 = vmul.f32 %v28, %v1013
  %v1171 = vmul.f32 %v29, %v1013
  %v1172 = vmul.f32 %v30, %v1013
  %v1173 = vmul.f32 %v31, %v1013
  %v1174 = vmul.f32 %v32, %v1017
  %v1175 = vmul.f32 %v33, %v1017
  %v1176 = vmul.f32 %v34, %v1017
  %v1177 = vmul.f32 %v35, %v1017
  %v1178 = vmul.f32 %v36, %v1021
  %v1179 = vmul.f32 %v37, %v1021
  %v1180 = vmul.f32 %v38, %v1021
  %v1181 = vmul.f32 %v39, %v1021
  %v1182 = vmul.f32 %v40, %v1025
  %v1183 = vmul.f32 %v41, %v1025
  %v1184 = vmul.f32 %v42, %v1025
  %v1185 = vmul.f32 %v43, %v1025
  %v1186 = vmul.f32 %v44, %v1029
  %v1187 = vmul.f32 %v45, %v1029
  %v1188 = vmul.f32 %v46, %v1029
  %v1189 = vmul.f32 %v47, %v1029
  %v1190 = vmul.f32 %v48, %v1033
  %v1191 = vmul.f32 %v49, %v1033
  %v1192 = vmul.f32 %v50, %v1033
  %v1193 = vmul.f32 %v51, %v1033
  %v1194 = vmul.f32 %v52, %v1037
  %v1195 = vmul.f32 %v53, %v1037
  %v1196 = vmul.f32 %v54, %v1037
  %v1197 = vmul.f32 %v55, %v1037
  %v1198 = vmul.f32 %v56, %v1041
  %v1199 = vmul.f32 %v57, %v1041
  %v1200 = vmul.f32 %v58, %v1041
  %v1201 = vmul.f32 %v59, %v1041
  %v1202 = vmul.f32 %v60, %v1045
  %v1203 = vmul.f32 %v61, %v1045
  %v1204 = vmul.f32 %v62, %v1045
  %v1205 = vmul.f32 %v63, %v1045
  %v1206 = vmul.f32 %v64, %v1049
  %v1207 = vmul.f32 %v65, %v1049
  %v1208 = vmul.f32 %v66, %v1049
  %v1209 = vmul.f32 %v67, %v1049
  %v1210 = vmul.f32 %v68, %v1053
  %v1211 = vmul.f32 %v69, %v1053
  %v1212 = vmul.f32 %v70, %v1053
  %v1213 = vmul.f32 %v71, %v1053
  %v1214 = vmul.f32 %v72, %v1057
  %v1215 = vmul.f32 %v73, %v1057
  %v1216 = vmul.f32 %v74, %v1057
  %v1217 = vmul.f32 %v75, %v1057
  %v1218 = vmul.f32 %v76, %v1061
  %v1219 = vmul.f32 %v77, %v1061
  %v1220 = vmul.f32 %v78, %v1061
  %v1221 = vmul.f32 %v79, %v1061
  %v1222 = vmul.f32 %v80, %v1065
  %v1223 = vmul.f32 %v81, %v1065
  %v1224 = vmul.f32 %v82, %v1065
  %v1225 = vmul.f32 %v83, %v1065
  %v1226 = vmul.f32 %v84, %v1069
  %v1227 = vmul.f32 %v85, %v1069
  %v1228 = vmul.f32 %v86, %v1069
  %v1229 = vmul.f32 %v87, %v1069
  %v1230 = vmul.f32 %v88, %v1073
  %v1231 = vmul.f32 %v89, %v1073
  %v1232 = vmul.f32 %v90, %v1073
  %v1233 = vmul.f32 %v91, %v1073
  %v1234 = vmul.f32 %v92, %v1077
  %v1235 = vmul.f32 %v93, %v1077
  %v1236 = vmul.f32 %v94, %v1077
  %v1237 = vmul.f32 %v95, %v1077
  %v1238 = vmul.f32 %v96, %v1081
  %v1239 = vmul.f32 %v97, %v1081
  %v1240 = vmul.f32 %v98, %v1081
  %v1241 = vmul.f32 %v99, %v1081
  %v1242 = vmul.f32 %v100, %v1085
  %v1243 = vmul.f32 %v101, %v1085
  %v1244 = vmul.f32 %v102, %v1085
  %v1245 = vmul.f32 %v103, %v1085
  %v1246 = vmul.f32 %v104, %v1089
  %v1247 = vmul.f32 %v105, %v1089
  %v1248 = vmul.f32 %v106, %v1089
  %v1249 = vmul.f32 %v107, %v1089
  %v1250 = vmul.f32 %v108, %v1093
  %v1251 = vmul.f32 %v109, %v1093
  %v1252 = vmul.f32 %v110, %v1093
  %v1253 = vmul.f32 %v111, %v1093
  %v1254 = vmul.f32 %v112, %v1097
  %v1255 = vmul.f32 %v113, %v1097
  %v1256 = vmul.f32 %v114, %v1097
  %v1257 = vmul.f32 %v115, %v1097
  %v1258 = vmul.f32 %v116, %v1101
  %v1259 = vmul.f32 %v117, %v1101
  %v1260 = vmul.f32 %v118, %v1101
  %v1261 = vmul.f32 %v119, %v1101
  %v1262 = vmul.f32 %v120, %v1105
  %v1263 = vmul.f32 %v121, %v1105
  %v1264 = vmul.f32 %v122, %v1105
  %v1265 = vmul.f32 %v123, %v1105
  %v1266 = vmul.f32 %v124, %v1109
  %v1267 = vmul.f32 %v125, %v1109
  %v1268 = vmul.f32 %v126, %v1109
  %v1269 = vmul.f32 %v127, %v1109
  %v1270 = vmul.f32 %v128, %v1113
  %v1271 = vmul.f32 %v129, %v1113
  %v1272 = vmul.f32 %v130, %v1113
  %v1273 = vmul.f32 %v131, %v1113
  %v1274 = vmul.f32 %v132, %v1117
  %v1275 = vmul.f32 %v133, %v1117
  %v1276 = vmul.f32 %v134, %v1117
  %v1277 = vmul.f32 %v135, %v1117
  %v1278 = vmul.f32 %v136, %v1121
  %v1279 = vmul.f32 %v137, %v1121
  %v1280 = vmul.f32 %v138, %v1121
  %v1281 = vmul.f32 %v139, %v1121
  %v1282 = vmul.f32 %v140, %v1125
  %v1283 = vmul.f32 %v141, %v1125
  %v1284 = vmul.f32 %v142, %v1125
  %v1285 = vmul.f32 %v143, %v1125
  %v1286 = vadd.f32 %v1158, %v1162
  %v1287 = vadd.f32 %v1286, %v1166
  %v1288 = vadd.f32 %v1287, %v1170
  %v1289 = vadd.f32 %v1288, %v1174
  %v1290 = vadd.f32 %v1289, %v1178
  %v1291 = vadd.f32 %v1290, %v1182
  %v1292 = vadd.f32 %v1291, %v1186
  %v1293 = vadd.f32 %v1292, %v1190
  %v1294 = vadd.f32 %v1293, %v1194
  %v1295 = vadd.f32 %v1294, %v1198
  %v1296 = vadd.f32 %v1295, %v1202
  %v1297 = vadd.f32 %v1296, %v1206
  %v1298 = vadd.f32 %v1297, %v1210
  %v1299 = vadd.f32 %v1298, %v1214
  %v1300 = vadd.f32 %v1299, %v1218
  %v1301 = vadd.f32 %v1300, %v1222
  %v1302 = vadd.f32 %v1301, %v1226
  %v1303 = vadd.f32 %v1302, %v1230
  %v1304 = vadd.f32 %v1303, %v1234
  %v1305 = vadd.f32 %v1304, %v1238
  %v1306 = vadd.f32 %v1305, %v1242
  %v1307 = vadd.f32 %v1306, %v1246
  %v1308 = vadd.f32 %v1307, %v1250
  %v1309 = vadd.f32 %v1308, %v1254
  %v1310 = vadd.f32 %v1309, %v1258
  %v1311 = vadd.f32 %v1310, %v1262
  %v1312 = vadd.f32 %v1311, %v1266
  %v1313 = vadd.f32 %v1312, %v1270
  %v1314 = vadd.f32 %v1313, %v1274
  %v1315 = vadd.f32 %v1314, %v1278
  %v1316 = vadd.f32 %v1315, %v1282
  %v1317 = vadd.f32 %v1159, %v1163
  %v1318 = vadd.f32 %v1317, %v1167
  %v1319 = vadd.f32 %v1318, %v1171
  %v1320 = vadd.f32 %v1319, %v1175
  %v1321 = vadd.f32 %v1320, %v1179
  %v1322 = vadd.f32 %v1321, %v1183
  %v1323 = vadd.f32 %v1322, %v1187
  %v1324 = vadd.f32 %v1323, %v1191
  %v1325 = vadd.f32 %v1324, %v1195
  %v1326 = vadd.f32 %v1325, %v1199
  %v1327 = vadd.f32 %v1326, %v1203
  %v1328 = vadd.f32 %v1327, %v1207
  %v1329 = vadd.f32 %v1328, %v1211
  %v1330 = vadd.f32 %v1329, %v1215
  %v1331 = vadd.f32 %v1330, %v1219
  %v1332 = vadd.f32 %v1331, %v1223
  %v1333 = vadd.f32 %v1332, %v1227
  %v1334 = vadd.f32 %v1333, %v1231
  %v1335 = vadd.f32 %v1334, %v1235
  %v1336 = vadd.f32 %v1335, %v1239
  %v1337 = vadd.f32 %v1336, %v1243
  %v1338 = vadd.f32 %v1337, %v1247
  %v1339 = vadd.f32 %v1338, %v1251
  %v1340 = vadd.f32 %v1339, %v1255
  %v1341 = vadd.f32 %v1340, %v1259
  %v1342 = vadd.f32 %v1341, %v1263
  %v1343 = vadd.f32 %v1342, %v1267
  %v1344 = vadd.f32 %v1343, %v1271
  %v1345 = vadd.f32 %v1344, %v1275
  %v1346 = vadd.f32 %v1345, %v1279
  %v1347 = vadd.f32 %v1346, %v1283
  %v1348 = vadd.f32 %v1160, %v1164
  %v1349 = vadd.f32 %v1348, %v1168
  %v1350 = vadd.f32 %v1349, %v1172
  %v1351 = vadd.f32 %v1350, %v1176
  %v1352 = vadd.f32 %v1351, %v1180
  %v1353 = vadd.f32 %v1352, %v1184
  %v1354 = vadd.f32 %v1353, %v1188
  %v1355 = vadd.f32 %v1354, %v1192
  %v1356 = vadd.f32 %v1355, %v1196
  %v1357 = vadd.f32 %v1356, %v1200
  %v1358 = vadd.f32 %v1357, %v1204
  %v1359 = vadd.f32 %v1358, %v1208
  %v1360 = vadd.f32 %v1359, %v1212
  %v1361 = vadd.f32 %v1360, %v1216
  %v1362 = vadd.f32 %v1361, %v1220
  %v1363 = vadd.f32 %v1362, %v1224
  %v1364 = vadd.f32 %v1363, %v1228
  %v1365 = vadd.f32 %v1364, %v1232
  %v1366 = vadd.f32 %v1365, %v1236
  %v1367 = vadd.f32 %v1366, %v1240
  %v1368 = vadd.f32 %v1367, %v1244
  %v1369 = vadd.f32 %v1368, %v1248
  %v1370 = vadd.f32 %v1369, %v1252
  %v1371 = vadd.f32 %v1370, %v1256
  %v1372 = vadd.f32 %v1371, %v1260
  %v1373 = vadd.f32 %v1372, %v1264
  %v1374 = vadd.f32 %v1373, %v1268
  %v1375 = vadd.f32 %v1374, %v1272
  %v1376 = vadd.f32 %v1375, %v1276
  %v1377 = vadd.f32 %v1376, %v1280
  %v1378 = vadd.f32 %v1377, %v1284
  %v1379 = vadd.f32 %v1161, %v1165
  %v1380 = vadd.f32 %v1379, %v1169
  %v1381 = vadd.f32 %v1380, %v1173
  %v1382 = vadd.f32 %v1381, %v1177
  %v1383 = vadd.f32 %v1382, %v1181
  %v1384 = vadd.f32 %v1383, %v1185
  %v1385 = vadd.f32 %v1384, %v1189
  %v1386 = vadd.f32 %v1385, %v1193
  %v1387 = vadd.f32 %v1386, %v1197
  %v1388 = vadd.f32 %v1387, %v1201
  %v1389 = vadd.f32 %v1388, %v1205
  %v1390 = vadd.f32 %v1389, %v1209
  %v1391 = vadd.f32 %v1390, %v1213
  %v1392 = vadd.f32 %v1391, %v1217
  %v1393 = vadd.f32 %v1392, %v1221
  %v1394 = vadd.f32 %v1393, %v1225
  %v1395 = vadd.f32 %v1394, %v1229
  %v1396 = vadd.f32 %v1395, %v1233
  %v1397 = vadd.f32 %v1396, %v1237
  %v1398 = vadd.f32 %v1397, %v1241
  %v1399 = vadd.f32 %v1398, %v1245
  %v1400 = vadd.f32 %v1399, %v1249
  %v1401 = vadd.f32 %v1400, %v1253
  %v1402 = vadd.f32 %v1401, %v1257
  %v1403 = vadd.f32 %v1402, %v1261
  %v1404 = vadd.f32 %v1403, %v1265
  %v1405 = vadd.f32 %v1404, %v1269
  %v1406 = vadd.f32 %v1405, %v1273
  %v1407 = vadd.f32 %v1406, %v1277
  %v1408 = vadd.f32 %v1407, %v1281
  %v1409 = vadd.f32 %v1408, %v1285
  %v1410 = vmul.f32 %v764, %v794
  %v1411 = vmul.f32 %v765, %v795
  %v1412 = vmul.f32 %v766, %v796
  %v1413 = vmul.f32 %v767, %v797
  %v1414 = vadd.f32 %v1410, %v1411
  %v1415 = vadd.f32 %v1414, %v1412
  %v1416 = vadd.f32 %v1415, %v1413
  %v1417 = vrot.slane %v1416, 4
  %v1418 = vadd.f32 %v1416, %v1417
  %v1419 = vrot.slane %v1418, 2
  %v1420 = vadd.f32 %v1418, %v1419
  %v1421 = vrot.slane %v1420, 1
  %v1422 = vadd.f32 %v1420, %v1421
  %v1423 = vmul.f32 %v794, %v1316
  %v1424 = vmul.f32 %v795, %v1347
  %v1425 = vmul.f32 %v796, %v1378
  %v1426 = vmul.f32 %v797, %v1409
  %v1427 = vadd.f32 %v1423, %v1424
  %v1428 = vadd.f32 %v1427, %v1425
  %v1429 = vadd.f32 %v1428, %v1426
  %v1430 = vrot.slane %v1429, 4
  %v1431 = vadd.f32 %v1429, %v1430
  %v1432 = vrot.slane %v1431, 2
  %v1433 = vadd.f32 %v1431, %v1432
  %v1434 = vrot.slane %v1433, 1
  %v1435 = vadd.f32 %v1433, %v1434
  %v1436 = vsub.f32 0.0, %v1422
  %v1437 = vmax.f32 %v1435, 1e-08
  %v1438 = vrcp.pop %v1437
  %v1439 = vmul.f32 %v1436, %v1438
  %v1440 = vmul.f32 %v1439, %v794
  %v1441 = vmul.f32 %v1439, %v795
  %v1442 = vmul.f32 %v1439, %v796
  %v1443 = vmul.f32 %v1439, %v797
  %v1444 = vadd.f32 %v148, %v1440
  %v1445 = vadd.f32 %v149, %v1441
  %v1446 = vadd.f32 %v150, %v1442
  %v1447 = vadd.f32 %v151, %v1443
  %v1448 = vmul.f32 %v1439, %v1316
  %v1449 = vmul.f32 %v1439, %v1347
  %v1450 = vmul.f32 %v1439, %v1378
  %v1451 = vmul.f32 %v1439, %v1409
  %v1452 = vadd.f32 %v764, %v1448
  %v1453 = vadd.f32 %v765, %v1449
  %v1454 = vadd.f32 %v766, %v1450
  %v1455 = vadd.f32 %v767, %v1451
  %v1456 = vsub.f32 %v1452, %v764
  %v1457 = vsub.f32 %v1453, %v765
  %v1458 = vsub.f32 %v1454, %v766
  %v1459 = vsub.f32 %v1455, %v767
  %v1460 = vmul.f32 %v1456, %v1456
  %v1461 = vmul.f32 %v1457, %v1457
  %v1462 = vmul.f32 %v1458, %v1458
  %v1463 = vmul.f32 %v1459, %v1459
  %v1464 = vadd.f32 %v1460, %v1461
  %v1465 = vadd.f32 %v1464, %v1462
  %v1466 = vadd.f32 %v1465, %v1463
  %v1467 = vrot.slane %v1466, 4
  %v1468 = vadd.f32 %v1466, %v1467
  %v1469 = vrot.slane %v1468, 2
  %v1470 = vadd.f32 %v1468, %v1469
  %v1471 = vrot.slane %v1470, 1
  %v1472 = vadd.f32 %v1470, %v1471
  %v1473 = vmax.f32 %v1472, 1e-05
  %v1474 = vmul.f32 %v1440, %v1456
  %v1475 = vmul.f32 %v1441, %v1457
  %v1476 = vmul.f32 %v1442, %v1458
  %v1477 = vmul.f32 %v1443, %v1459
  %v1478 = vadd.f32 %v1474, %v1475
  %v1479 = vadd.f32 %v1478, %v1476
  %v1480 = vadd.f32 %v1479, %v1477
  %v1481 = vrot.slane %v1480, 4
  %v1482 = vadd.f32 %v1480, %v1481
  %v1483 = vrot.slane %v1482, 2
  %v1484 = vadd.f32 %v1482, %v1483
  %v1485 = vrot.slane %v1484, 1
  %v1486 = vadd.f32 %v1484, %v1485
  %v1487 = vrcp.pop %v1473
  %v1488 = vmul.f32 %v1486, %v1487
  %v1489 = vlaneseq
  %v1490 = vshrl.u32 %v1489, 7
  %v1491 = vadd.s32 %v1490, 8
  %v1492 = vadd.s32 %v1490, 16
  %v1493 = vadd.s32 %v1490, 24
  %vm1494 = vcmp.eq.s32.totalorder %v1490, 0
  %vm1495 = vcmp.eq.s32.totalorder %v1491, 0
  %vm1496 = vcmp.eq.s32.totalorder %v1492, 0
  %vm1497 = vcmp.eq.s32.totalorder %v1493, 0
  %vm1498 = vcmp.eq.s32.totalorder %v1490, 1
  %vm1499 = vcmp.eq.s32.totalorder %v1491, 1
  %vm1500 = vcmp.eq.s32.totalorder %v1492, 1
  %vm1501 = vcmp.eq.s32.totalorder %v1493, 1
  %vm1502 = vcmp.eq.s32.totalorder %v1490, 2
  %vm1503 = vcmp.eq.s32.totalorder %v1491, 2
  %vm1504 = vcmp.eq.s32.totalorder %v1492, 2
  %vm1505 = vcmp.eq.s32.totalorder %v1493, 2
  %vm1506 = vcmp.eq.s32.totalorder %v1490, 3
  %vm1507 = vcmp.eq.s32.totalorder %v1491, 3
  %vm1508 = vcmp.eq.s32.totalorder %v1492, 3
  %vm1509 = vcmp.eq.s32.totalorder %v1493, 3
  %vm1510 = vcmp.eq.s32.totalorder %v1490, 4
  %vm1511 = vcmp.eq.s32.totalorder %v1491, 4
  %vm1512 = vcmp.eq.s32.totalorder %v1492, 4
  %vm1513 = vcmp.eq.s32.totalorder %v1493, 4
  %vm1514 = vcmp.eq.s32.totalorder %v1490, 5
  %vm1515 = vcmp.eq.s32.totalorder %v1491, 5
  %vm1516 = vcmp.eq.s32.totalorder %v1492, 5
  %vm1517 = vcmp.eq.s32.totalorder %v1493, 5
  %vm1518 = vcmp.eq.s32.totalorder %v1490, 6
  %vm1519 = vcmp.eq.s32.totalorder %v1491, 6
  %vm1520 = vcmp.eq.s32.totalorder %v1492, 6
  %vm1521 = vcmp.eq.s32.totalorder %v1493, 6
  %vm1522 = vcmp.eq.s32.totalorder %v1490, 7
  %vm1523 = vcmp.eq.s32.totalorder %v1491, 7
  %vm1524 = vcmp.eq.s32.totalorder %v1492, 7
  %vm1525 = vcmp.eq.s32.totalorder %v1493, 7
  %vm1526 = vcmp.eq.s32.totalorder %v1490, 8
  %vm1527 = vcmp.eq.s32.totalorder %v1491, 8
  %vm1528 = vcmp.eq.s32.totalorder %v1492, 8
  %vm1529 = vcmp.eq.s32.totalorder %v1493, 8
  %vm1530 = vcmp.eq.s32.totalorder %v1490, 9
  %vm1531 = vcmp.eq.s32.totalorder %v1491, 9
  %vm1532 = vcmp.eq.s32.totalorder %v1492, 9
  %vm1533 = vcmp.eq.s32.totalorder %v1493, 9
  %vm1534 = vcmp.eq.s32.totalorder %v1490, 10
  %vm1535 = vcmp.eq.s32.totalorder %v1491, 10
  %vm1536 = vcmp.eq.s32.totalorder %v1492, 10
  %vm1537 = vcmp.eq.s32.totalorder %v1493, 10
  %vm1538 = vcmp.eq.s32.totalorder %v1490, 11
  %vm1539 = vcmp.eq.s32.totalorder %v1491, 11
  %vm1540 = vcmp.eq.s32.totalorder %v1492, 11
  %vm1541 = vcmp.eq.s32.totalorder %v1493, 11
  %vm1542 = vcmp.eq.s32.totalorder %v1490, 12
  %vm1543 = vcmp.eq.s32.totalorder %v1491, 12
  %vm1544 = vcmp.eq.s32.totalorder %v1492, 12
  %vm1545 = vcmp.eq.s32.totalorder %v1493, 12
  %vm1546 = vcmp.eq.s32.totalorder %v1490, 13
  %vm1547 = vcmp.eq.s32.totalorder %v1491, 13
  %vm1548 = vcmp.eq.s32.totalorder %v1492, 13
  %vm1549 = vcmp.eq.s32.totalorder %v1493, 13
  %vm1550 = vcmp.eq.s32.totalorder %v1490, 14
  %vm1551 = vcmp.eq.s32.totalorder %v1491, 14
  %vm1552 = vcmp.eq.s32.totalorder %v1492, 14
  %vm1553 = vcmp.eq.s32.totalorder %v1493, 14
  %vm1554 = vcmp.eq.s32.totalorder %v1490, 15
  %vm1555 = vcmp.eq.s32.totalorder %v1491, 15
  %vm1556 = vcmp.eq.s32.totalorder %v1492, 15
  %vm1557 = vcmp.eq.s32.totalorder %v1493, 15
  %vm1558 = vcmp.eq.s32.totalorder %v1490, 16
  %vm1559 = vcmp.eq.s32.totalorder %v1491, 16
  %vm1560 = vcmp.eq.s32.totalorder %v1492, 16
  %vm1561 = vcmp.eq.s32.totalorder %v1493, 16
  %vm1562 = vcmp.eq.s32.totalorder %v1490, 17
  %vm1563 = vcmp.eq.s32.totalorder %v1491, 17
  %vm1564 = vcmp.eq.s32.totalorder %v1492, 17
  %vm1565 = vcmp.eq.s32.totalorder %v1493, 17
  %vm1566 = vcmp.eq.s32.totalorder %v1490, 18
  %vm1567 = vcmp.eq.s32.totalorder %v1491, 18
  %vm1568 = vcmp.eq.s32.totalorder %v1492, 18
  %vm1569 = vcmp.eq.s32.totalorder %v1493, 18
  %vm1570 = vcmp.eq.s32.totalorder %v1490, 19
  %vm1571 = vcmp.eq.s32.totalorder %v1491, 19
  %vm1572 = vcmp.eq.s32.totalorder %v1492, 19
  %vm1573 = vcmp.eq.s32.totalorder %v1493, 19
  %vm1574 = vcmp.eq.s32.totalorder %v1490, 20
  %vm1575 = vcmp.eq.s32.totalorder %v1491, 20
  %vm1576 = vcmp.eq.s32.totalorder %v1492, 20
  %vm1577 = vcmp.eq.s32.totalorder %v1493, 20
  %vm1578 = vcmp.eq.s32.totalorder %v1490, 21
  %vm1579 = vcmp.eq.s32.totalorder %v1491, 21
  %vm1580 = vcmp.eq.s32.totalorder %v1492, 21
  %vm1581 = vcmp.eq.s32.totalorder %v1493, 21
  %vm1582 = vcmp.eq.s32.totalorder %v1490, 22
  %vm1583 = vcmp.eq.s32.totalorder %v1491, 22
  %vm1584 = vcmp.eq.s32.totalorder %v1492, 22
  %vm1585 = vcmp.eq.s32.totalorder %v1493, 22
  %vm1586 = vcmp.eq.s32.totalorder %v1490, 23
  %vm1587 = vcmp.eq.s32.totalorder %v1491, 23
  %vm1588 = vcmp.eq.s32.totalorder %v1492, 23
  %vm1589 = vcmp.eq.s32.totalorder %v1493, 23
  %vm1590 = vcmp.eq.s32.totalorder %v1490, 24
  %vm1591 = vcmp.eq.s32.totalorder %v1491, 24
  %vm1592 = vcmp.eq.s32.totalorder %v1492, 24
  %vm1593 = vcmp.eq.s32.totalorder %v1493, 24
  %vm1594 = vcmp.eq.s32.totalorder %v1490, 25
  %vm1595 = vcmp.eq.s32.totalorder %v1491, 25
  %vm1596 = vcmp.eq.s32.totalorder %v1492, 25
  %vm1597 = vcmp.eq.s32.totalorder %v1493, 25
  %vm1598 = vcmp.eq.s32.totalorder %v1490, 26
  %vm1599 = vcmp.eq.s32.totalorder %v1491, 26
  %vm1600 = vcmp.eq.s32.totalorder %v1492, 26
  %vm1601 = vcmp.eq.s32.totalorder %v1493, 26
  %vm1602 = vcmp.eq.s32.totalorder %v1490, 27
  %vm1603 = vcmp.eq.s32.totalorder %v1491, 27
  %vm1604 = vcmp.eq.s32.totalorder %v1492, 27
  %vm1605 = vcmp.eq.s32.totalorder %v1493, 27
  %vm1606 = vcmp.eq.s32.totalorder %v1490, 28
  %vm1607 = vcmp.eq.s32.totalorder %v1491, 28
  %vm1608 = vcmp.eq.s32.totalorder %v1492, 28
  %vm1609 = vcmp.eq.s32.totalorder %v1493, 28
  %vm1610 = vcmp.eq.s32.totalorder %v1490, 29
  %vm1611 = vcmp.eq.s32.totalorder %v1491, 29
  %vm1612 = vcmp.eq.s32.totalorder %v1492, 29
  %vm1613 = vcmp.eq.s32.totalorder %v1493, 29
  %vm1614 = vcmp.eq.s32.totalorder %v1490, 30
  %vm1615 = vcmp.eq.s32.totalorder %v1491, 30
  %vm1616 = vcmp.eq.s32.totalorder %v1492, 30
  %vm1617 = vcmp.eq.s32.totalorder %v1493, 30
  %vm1618 = vcmp.eq.s32.totalorder %v1490, 31
  %vm1619 = vcmp.eq.s32.totalorder %v1491, 31
  %vm1620 = vcmp.eq.s32.totalorder %v1492, 31
  %vm1621 = vcmp.eq.s32.totalorder %v1493, 31
  %v1622 = vsel %vm1494, %v1488, 0.0
  %v1623 = vsel %vm1495, %v1488, 0.0
  %v1624 = vsel %vm1496, %v1488, 0.0
  %v1625 = vsel %vm1497, %v1488, 0.0
  %v1626 = vsel %vm1498, %v1488, 0.0
  %v1627 = vsel %vm1499, %v1488, 0.0
  %v1628 = vsel %vm1500, %v1488, 0.0
  %v1629 = vsel %vm1501, %v1488, 0.0
  %v1630 = vsel %vm1502, %v1488, 0.0
  %v1631 = vsel %vm1503, %v1488, 0.0
  %v1632 = vsel %vm1504, %v1488, 0.0
  %v1633 = vsel %vm1505, %v1488, 0.0
  %v1634 = vsel %vm1506, %v1488, 0.0
  %v1635 = vsel %vm1507, %v1488, 0.0
  %v1636 = vsel %vm1508, %v1488, 0.0
  %v1637 = vsel %vm1509, %v1488, 0.0
  %v1638 = vsel %vm1510, %v1488, 0.0
  %v1639 = vsel %vm1511, %v1488, 0.0
  %v1640 = vsel %vm1512, %v1488, 0.0
  %v1641 = vsel %vm1513, %v1488, 0.0
  %v1642 = vsel %vm1514, %v1488, 0.0
  %v1643 = vsel %vm1515, %v1488, 0.0
  %v1644 = vsel %vm1516, %v1488, 0.0
  %v1645 = vsel %vm1517, %v1488, 0.0
  %v1646 = vsel %vm1518, %v1488, 0.0
  %v1647 = vsel %vm1519, %v1488, 0.0
  %v1648 = vsel %vm1520, %v1488, 0.0
  %v1649 = vsel %vm1521, %v1488, 0.0
  %v1650 = vsel %vm1522, %v1488, 0.0
  %v1651 = vsel %vm1523, %v1488, 0.0
  %v1652 = vsel %vm1524, %v1488, 0.0
  %v1653 = vsel %vm1525, %v1488, 0.0
  %v1654 = vsel %vm1526, %v1488, 0.0
  %v1655 = vsel %vm1527, %v1488, 0.0
  %v1656 = vsel %vm1528, %v1488, 0.0
  %v1657 = vsel %vm1529, %v1488, 0.0
  %v1658 = vsel %vm1530, %v1488, 0.0
  %v1659 = vsel %vm1531, %v1488, 0.0
  %v1660 = vsel %vm1532, %v1488, 0.0
  %v1661 = vsel %vm1533, %v1488, 0.0
  %v1662 = vsel %vm1534, %v1488, 0.0
  %v1663 = vsel %vm1535, %v1488, 0.0
  %v1664 = vsel %vm1536, %v1488, 0.0
  %v1665 = vsel %vm1537, %v1488, 0.0
  %v1666 = vsel %vm1538, %v1488, 0.0
  %v1667 = vsel %vm1539, %v1488, 0.0
  %v1668 = vsel %vm1540, %v1488, 0.0
  %v1669 = vsel %vm1541, %v1488, 0.0
  %v1670 = vsel %vm1542, %v1488, 0.0
  %v1671 = vsel %vm1543, %v1488, 0.0
  %v1672 = vsel %vm1544, %v1488, 0.0
  %v1673 = vsel %vm1545, %v1488, 0.0
  %v1674 = vsel %vm1546, %v1488, 0.0
  %v1675 = vsel %vm1547, %v1488, 0.0
  %v1676 = vsel %vm1548, %v1488, 0.0
  %v1677 = vsel %vm1549, %v1488, 0.0
  %v1678 = vsel %vm1550, %v1488, 0.0
  %v1679 = vsel %vm1551, %v1488, 0.0
  %v1680 = vsel %vm1552, %v1488, 0.0
  %v1681 = vsel %vm1553, %v1488, 0.0
  %v1682 = vsel %vm1554, %v1488, 0.0
  %v1683 = vsel %vm1555, %v1488, 0.0
  %v1684 = vsel %vm1556, %v1488, 0.0
  %v1685 = vsel %vm1557, %v1488, 0.0
  %v1686 = vsel %vm1558, %v1488, 0.0
  %v1687 = vsel %vm1559, %v1488, 0.0
  %v1688 = vsel %vm1560, %v1488, 0.0
  %v1689 = vsel %vm1561, %v1488, 0.0
  %v1690 = vsel %vm1562, %v1488, 0.0
  %v1691 = vsel %vm1563, %v1488, 0.0
  %v1692 = vsel %vm1564, %v1488, 0.0
  %v1693 = vsel %vm1565, %v1488, 0.0
  %v1694 = vsel %vm1566, %v1488, 0.0
  %v1695 = vsel %vm1567, %v1488, 0.0
  %v1696 = vsel %vm1568, %v1488, 0.0
  %v1697 = vsel %vm1569, %v1488, 0.0
  %v1698 = vsel %vm1570, %v1488, 0.0
  %v1699 = vsel %vm1571, %v1488, 0.0
  %v1700 = vsel %vm1572, %v1488, 0.0
  %v1701 = vsel %vm1573, %v1488, 0.0
  %v1702 = vsel %vm1574, %v1488, 0.0
  %v1703 = vsel %vm1575, %v1488, 0.0
  %v1704 = vsel %vm1576, %v1488, 0.0
  %v1705 = vsel %vm1577, %v1488, 0.0
  %v1706 = vsel %vm1578, %v1488, 0.0
  %v1707 = vsel %vm1579, %v1488, 0.0
  %v1708 = vsel %vm1580, %v1488, 0.0
  %v1709 = vsel %vm1581, %v1488, 0.0
  %v1710 = vsel %vm1582, %v1488, 0.0
  %v1711 = vsel %vm1583, %v1488, 0.0
  %v1712 = vsel %vm1584, %v1488, 0.0
  %v1713 = vsel %vm1585, %v1488, 0.0
  %v1714 = vsel %vm1586, %v1488, 0.0
  %v1715 = vsel %vm1587, %v1488, 0.0
  %v1716 = vsel %vm1588, %v1488, 0.0
  %v1717 = vsel %vm1589, %v1488, 0.0
  %v1718 = vsel %vm1590, %v1488, 0.0
  %v1719 = vsel %vm1591, %v1488, 0.0
  %v1720 = vsel %vm1592, %v1488, 0.0
  %v1721 = vsel %vm1593, %v1488, 0.0
  %v1722 = vsel %vm1594, %v1488, 0.0
  %v1723 = vsel %vm1595, %v1488, 0.0
  %v1724 = vsel %vm1596, %v1488, 0.0
  %v1725 = vsel %vm1597, %v1488, 0.0
  %v1726 = vsel %vm1598, %v1488, 0.0
  %v1727 = vsel %vm1599, %v1488, 0.0
  %v1728 = vsel %vm1600, %v1488, 0.0
  %v1729 = vsel %vm1601, %v1488, 0.0
  %v1730 = vsel %vm1602, %v1488, 0.0
  %v1731 = vsel %vm1603, %v1488, 0.0
  %v1732 = vsel %vm1604, %v1488, 0.0
  %v1733 = vsel %vm1605, %v1488, 0.0
  %v1734 = vsel %vm1606, %v1488, 0.0
  %v1735 = vsel %vm1607, %v1488, 0.0
  %v1736 = vsel %vm1608, %v1488, 0.0
  %v1737 = vsel %vm1609, %v1488, 0.0
  %v1738 = vsel %vm1610, %v1488, 0.0
  %v1739 = vsel %vm1611, %v1488, 0.0
  %v1740 = vsel %vm1612, %v1488, 0.0
  %v1741 = vsel %vm1613, %v1488, 0.0
  %v1742 = vsel %vm1614, %v1488, 0.0
  %v1743 = vsel %vm1615, %v1488, 0.0
  %v1744 = vsel %vm1616, %v1488, 0.0
  %v1745 = vsel %vm1617, %v1488, 0.0
  %v1746 = vsel %vm1618, %v1488, 0.0
  %v1747 = vsel %vm1619, %v1488, 0.0
  %v1748 = vsel %vm1620, %v1488, 0.0
  %v1749 = vsel %vm1621, %v1488, 0.0
  %v1750 = vmax.f32 %v1486, 1e-05
  %v1751 = vrcp.pop %v1750
  %v1752 = vmul.f32 1.0, %v1751
  %v1757 = vcombine.high %v1456, %v1456
  %v1759 = vunpack.c.l.s4 1966171168
  %v1760 = vunpack.c.0.s8 %v1759
  %v1761 = vlaneseq
  %v1762 = vshrl.u32 %v1761, 7
  %v1763 = vsub.s32 %v1760, %v1762
  %v1764 = vrot.slane %v1456, %v1763
  %v1766 = vunpack.c.l.s4 1966171168
  %v1767 = vunpack.c.0.s8 %v1766
  %v1768 = vlaneseq
  %v1769 = vshrl.u32 %v1768, 7
  %v1770 = vsub.s32 %v1767, %v1769
  %v1771 = vrot.slane %v1757, %v1770
  %v1772 = vcombine.high %v1764, %v1764
  %v1773 = vcombine.high %v1771, %v1771
  %v1775 = vunpack.c.l.s4 1966171168
  %v1776 = vunpack.c.0.s8 %v1775
  %v1777 = vlaneseq
  %v1778 = vshrl.u32 %v1777, 7
  %v1779 = vsub.s32 %v1776, %v1778
  %v1780 = vrot.slane %v1764, %v1779
  %v1782 = vunpack.c.l.s4 1966171168
  %v1783 = vunpack.c.0.s8 %v1782
  %v1784 = vlaneseq
  %v1785 = vshrl.u32 %v1784, 7
  %v1786 = vsub.s32 %v1783, %v1785
  %v1787 = vrot.slane %v1771, %v1786
  %v1789 = vunpack.c.l.s4 1966171168
  %v1790 = vunpack.c.0.s8 %v1789
  %v1791 = vlaneseq
  %v1792 = vshrl.u32 %v1791, 7
  %v1793 = vsub.s32 %v1790, %v1792
  %v1794 = vrot.slane %v1772, %v1793
  %v1796 = vunpack.c.l.s4 1966171168
  %v1797 = vunpack.c.0.s8 %v1796
  %v1798 = vlaneseq
  %v1799 = vshrl.u32 %v1798, 7
  %v1800 = vsub.s32 %v1797, %v1799
  %v1801 = vrot.slane %v1773, %v1800
  %v1802 = vcombine.high %v1780, %v1780
  %v1803 = vcombine.high %v1787, %v1787
  %v1804 = vcombine.high %v1794, %v1794
  %v1805 = vcombine.high %v1801, %v1801
  %v1806 = vcombine.high %v1457, %v1457
  %v1808 = vunpack.c.l.s4 1966171168
  %v1809 = vunpack.c.0.s8 %v1808
  %v1810 = vlaneseq
  %v1811 = vshrl.u32 %v1810, 7
  %v1812 = vsub.s32 %v1809, %v1811
  %v1813 = vrot.slane %v1457, %v1812
  %v1815 = vunpack.c.l.s4 1966171168
  %v1816 = vunpack.c.0.s8 %v1815
  %v1817 = vlaneseq
  %v1818 = vshrl.u32 %v1817, 7
  %v1819 = vsub.s32 %v1816, %v1818
  %v1820 = vrot.slane %v1806, %v1819
  %v1821 = vcombine.high %v1813, %v1813
  %v1822 = vcombine.high %v1820, %v1820
  %v1824 = vunpack.c.l.s4 1966171168
  %v1825 = vunpack.c.0.s8 %v1824
  %v1826 = vlaneseq
  %v1827 = vshrl.u32 %v1826, 7
  %v1828 = vsub.s32 %v1825, %v1827
  %v1829 = vrot.slane %v1813, %v1828
  %v1831 = vunpack.c.l.s4 1966171168
  %v1832 = vunpack.c.0.s8 %v1831
  %v1833 = vlaneseq
  %v1834 = vshrl.u32 %v1833, 7
  %v1835 = vsub.s32 %v1832, %v1834
  %v1836 = vrot.slane %v1820, %v1835
  %v1838 = vunpack.c.l.s4 1966171168
  %v1839 = vunpack.c.0.s8 %v1838
  %v1840 = vlaneseq
  %v1841 = vshrl.u32 %v1840, 7
  %v1842 = vsub.s32 %v1839, %v1841
  %v1843 = vrot.slane %v1821, %v1842
  %v1845 = vunpack.c.l.s4 1966171168
  %v1846 = vunpack.c.0.s8 %v1845
  %v1847 = vlaneseq
  %v1848 = vshrl.u32 %v1847, 7
  %v1849 = vsub.s32 %v1846, %v1848
  %v1850 = vrot.slane %v1822, %v1849
  %v1851 = vcombine.high %v1829, %v1829
  %v1852 = vcombine.high %v1836, %v1836
  %v1853 = vcombine.high %v1843, %v1843
  %v1854 = vcombine.high %v1850, %v1850
  %v1855 = vcombine.high %v1458, %v1458
  %v1857 = vunpack.c.l.s4 1966171168
  %v1858 = vunpack.c.0.s8 %v1857
  %v1859 = vlaneseq
  %v1860 = vshrl.u32 %v1859, 7
  %v1861 = vsub.s32 %v1858, %v1860
  %v1862 = vrot.slane %v1458, %v1861
  %v1864 = vunpack.c.l.s4 1966171168
  %v1865 = vunpack.c.0.s8 %v1864
  %v1866 = vlaneseq
  %v1867 = vshrl.u32 %v1866, 7
  %v1868 = vsub.s32 %v1865, %v1867
  %v1869 = vrot.slane %v1855, %v1868
  %v1870 = vcombine.high %v1862, %v1862
  %v1871 = vcombine.high %v1869, %v1869
  %v1873 = vunpack.c.l.s4 1966171168
  %v1874 = vunpack.c.0.s8 %v1873
  %v1875 = vlaneseq
  %v1876 = vshrl.u32 %v1875, 7
  %v1877 = vsub.s32 %v1874, %v1876
  %v1878 = vrot.slane %v1862, %v1877
  %v1880 = vunpack.c.l.s4 1966171168
  %v1881 = vunpack.c.0.s8 %v1880
  %v1882 = vlaneseq
  %v1883 = vshrl.u32 %v1882, 7
  %v1884 = vsub.s32 %v1881, %v1883
  %v1885 = vrot.slane %v1869, %v1884
  %v1887 = vunpack.c.l.s4 1966171168
  %v1888 = vunpack.c.0.s8 %v1887
  %v1889 = vlaneseq
  %v1890 = vshrl.u32 %v1889, 7
  %v1891 = vsub.s32 %v1888, %v1890
  %v1892 = vrot.slane %v1870, %v1891
  %v1894 = vunpack.c.l.s4 1966171168
  %v1895 = vunpack.c.0.s8 %v1894
  %v1896 = vlaneseq
  %v1897 = vshrl.u32 %v1896, 7
  %v1898 = vsub.s32 %v1895, %v1897
  %v1899 = vrot.slane %v1871, %v1898
  %v1900 = vcombine.high %v1878, %v1878
  %v1901 = vcombine.high %v1885, %v1885
  %v1902 = vcombine.high %v1892, %v1892
  %v1903 = vcombine.high %v1899, %v1899
  %v1904 = vcombine.high %v1459, %v1459
  %v1906 = vunpack.c.l.s4 1966171168
  %v1907 = vunpack.c.0.s8 %v1906
  %v1908 = vlaneseq
  %v1909 = vshrl.u32 %v1908, 7
  %v1910 = vsub.s32 %v1907, %v1909
  %v1911 = vrot.slane %v1459, %v1910
  %v1913 = vunpack.c.l.s4 1966171168
  %v1914 = vunpack.c.0.s8 %v1913
  %v1915 = vlaneseq
  %v1916 = vshrl.u32 %v1915, 7
  %v1917 = vsub.s32 %v1914, %v1916
  %v1918 = vrot.slane %v1904, %v1917
  %v1919 = vcombine.high %v1911, %v1911
  %v1920 = vcombine.high %v1918, %v1918
  %v1922 = vunpack.c.l.s4 1966171168
  %v1923 = vunpack.c.0.s8 %v1922
  %v1924 = vlaneseq
  %v1925 = vshrl.u32 %v1924, 7
  %v1926 = vsub.s32 %v1923, %v1925
  %v1927 = vrot.slane %v1911, %v1926
  %v1929 = vunpack.c.l.s4 1966171168
  %v1930 = vunpack.c.0.s8 %v1929
  %v1931 = vlaneseq
  %v1932 = vshrl.u32 %v1931, 7
  %v1933 = vsub.s32 %v1930, %v1932
  %v1934 = vrot.slane %v1918, %v1933
  %v1936 = vunpack.c.l.s4 1966171168
  %v1937 = vunpack.c.0.s8 %v1936
  %v1938 = vlaneseq
  %v1939 = vshrl.u32 %v1938, 7
  %v1940 = vsub.s32 %v1937, %v1939
  %v1941 = vrot.slane %v1919, %v1940
  %v1943 = vunpack.c.l.s4 1966171168
  %v1944 = vunpack.c.0.s8 %v1943
  %v1945 = vlaneseq
  %v1946 = vshrl.u32 %v1945, 7
  %v1947 = vsub.s32 %v1944, %v1946
  %v1948 = vrot.slane %v1920, %v1947
  %v1949 = vcombine.high %v1927, %v1927
  %v1950 = vcombine.high %v1934, %v1934
  %v1951 = vcombine.high %v1941, %v1941
  %v1952 = vcombine.high %v1948, %v1948
  %v1953 = vlaneseq
  %v1954 = vshrl.u32 %v1953, 7
  %v1955 = vsub.s32 0, %v1954
  %v1956 = vrot.slane %v1780, %v1955
  %v1957 = vlaneseq
  %v1958 = vshrl.u32 %v1957, 7
  %v1959 = vsub.s32 0, %v1958
  %v1960 = vrot.slane %v1794, %v1959
  %v1961 = vlaneseq
  %v1962 = vshrl.u32 %v1961, 7
  %v1963 = vsub.s32 0, %v1962
  %v1964 = vrot.slane %v1802, %v1963
  %v1965 = vlaneseq
  %v1966 = vshrl.u32 %v1965, 7
  %v1967 = vsub.s32 0, %v1966
  %v1968 = vrot.slane %v1804, %v1967
  %v1969 = vlaneseq
  %v1970 = vshrl.u32 %v1969, 7
  %v1971 = vsub.s32 0, %v1970
  %v1972 = vrot.slane %v1787, %v1971
  %v1973 = vlaneseq
  %v1974 = vshrl.u32 %v1973, 7
  %v1975 = vsub.s32 0, %v1974
  %v1976 = vrot.slane %v1801, %v1975
  %v1977 = vlaneseq
  %v1978 = vshrl.u32 %v1977, 7
  %v1979 = vsub.s32 0, %v1978
  %v1980 = vrot.slane %v1803, %v1979
  %v1981 = vlaneseq
  %v1982 = vshrl.u32 %v1981, 7
  %v1983 = vsub.s32 0, %v1982
  %v1984 = vrot.slane %v1805, %v1983
  %v1985 = vlaneseq
  %v1986 = vshrl.u32 %v1985, 7
  %v1987 = vsub.s32 0, %v1986
  %v1988 = vrot.slane %v1829, %v1987
  %v1989 = vlaneseq
  %v1990 = vshrl.u32 %v1989, 7
  %v1991 = vsub.s32 0, %v1990
  %v1992 = vrot.slane %v1843, %v1991
  %v1993 = vlaneseq
  %v1994 = vshrl.u32 %v1993, 7
  %v1995 = vsub.s32 0, %v1994
  %v1996 = vrot.slane %v1851, %v1995
  %v1997 = vlaneseq
  %v1998 = vshrl.u32 %v1997, 7
  %v1999 = vsub.s32 0, %v1998
  %v2000 = vrot.slane %v1853, %v1999
  %v2001 = vlaneseq
  %v2002 = vshrl.u32 %v2001, 7
  %v2003 = vsub.s32 0, %v2002
  %v2004 = vrot.slane %v1836, %v2003
  %v2005 = vlaneseq
  %v2006 = vshrl.u32 %v2005, 7
  %v2007 = vsub.s32 0, %v2006
  %v2008 = vrot.slane %v1850, %v2007
  %v2009 = vlaneseq
  %v2010 = vshrl.u32 %v2009, 7
  %v2011 = vsub.s32 0, %v2010
  %v2012 = vrot.slane %v1852, %v2011
  %v2013 = vlaneseq
  %v2014 = vshrl.u32 %v2013, 7
  %v2015 = vsub.s32 0, %v2014
  %v2016 = vrot.slane %v1854, %v2015
  %v2017 = vlaneseq
  %v2018 = vshrl.u32 %v2017, 7
  %v2019 = vsub.s32 0, %v2018
  %v2020 = vrot.slane %v1878, %v2019
  %v2021 = vlaneseq
  %v2022 = vshrl.u32 %v2021, 7
  %v2023 = vsub.s32 0, %v2022
  %v2024 = vrot.slane %v1892, %v2023
  %v2025 = vlaneseq
  %v2026 = vshrl.u32 %v2025, 7
  %v2027 = vsub.s32 0, %v2026
  %v2028 = vrot.slane %v1900, %v2027
  %v2029 = vlaneseq
  %v2030 = vshrl.u32 %v2029, 7
  %v2031 = vsub.s32 0, %v2030
  %v2032 = vrot.slane %v1902, %v2031
  %v2033 = vlaneseq
  %v2034 = vshrl.u32 %v2033, 7
  %v2035 = vsub.s32 0, %v2034
  %v2036 = vrot.slane %v1885, %v2035
  %v2037 = vlaneseq
  %v2038 = vshrl.u32 %v2037, 7
  %v2039 = vsub.s32 0, %v2038
  %v2040 = vrot.slane %v1899, %v2039
  %v2041 = vlaneseq
  %v2042 = vshrl.u32 %v2041, 7
  %v2043 = vsub.s32 0, %v2042
  %v2044 = vrot.slane %v1901, %v2043
  %v2045 = vlaneseq
  %v2046 = vshrl.u32 %v2045, 7
  %v2047 = vsub.s32 0, %v2046
  %v2048 = vrot.slane %v1903, %v2047
  %v2049 = vlaneseq
  %v2050 = vshrl.u32 %v2049, 7
  %v2051 = vsub.s32 0, %v2050
  %v2052 = vrot.slane %v1927, %v2051
  %v2053 = vlaneseq
  %v2054 = vshrl.u32 %v2053, 7
  %v2055 = vsub.s32 0, %v2054
  %v2056 = vrot.slane %v1941, %v2055
  %v2057 = vlaneseq
  %v2058 = vshrl.u32 %v2057, 7
  %v2059 = vsub.s32 0, %v2058
  %v2060 = vrot.slane %v1949, %v2059
  %v2061 = vlaneseq
  %v2062 = vshrl.u32 %v2061, 7
  %v2063 = vsub.s32 0, %v2062
  %v2064 = vrot.slane %v1951, %v2063
  %v2065 = vlaneseq
  %v2066 = vshrl.u32 %v2065, 7
  %v2067 = vsub.s32 0, %v2066
  %v2068 = vrot.slane %v1934, %v2067
  %v2069 = vlaneseq
  %v2070 = vshrl.u32 %v2069, 7
  %v2071 = vsub.s32 0, %v2070
  %v2072 = vrot.slane %v1948, %v2071
  %v2073 = vlaneseq
  %v2074 = vshrl.u32 %v2073, 7
  %v2075 = vsub.s32 0, %v2074
  %v2076 = vrot.slane %v1950, %v2075
  %v2077 = vlaneseq
  %v2078 = vshrl.u32 %v2077, 7
  %v2079 = vsub.s32 0, %v2078
  %v2080 = vrot.slane %v1952, %v2079
  %v2113 = vmul.f32 %v1622, %v1956
  %v2114 = vmul.f32 %v1623, %v1956
  %v2115 = vmul.f32 %v1624, %v1956
  %v2116 = vmul.f32 %v1625, %v1956
  %v2117 = vmul.f32 %v1626, %v1960
  %v2118 = vmul.f32 %v1627, %v1960
  %v2119 = vmul.f32 %v1628, %v1960
  %v2120 = vmul.f32 %v1629, %v1960
  %v2121 = vmul.f32 %v1630, %v1964
  %v2122 = vmul.f32 %v1631, %v1964
  %v2123 = vmul.f32 %v1632, %v1964
  %v2124 = vmul.f32 %v1633, %v1964
  %v2125 = vmul.f32 %v1634, %v1968
  %v2126 = vmul.f32 %v1635, %v1968
  %v2127 = vmul.f32 %v1636, %v1968
  %v2128 = vmul.f32 %v1637, %v1968
  %v2129 = vmul.f32 %v1638, %v1972
  %v2130 = vmul.f32 %v1639, %v1972
  %v2131 = vmul.f32 %v1640, %v1972
  %v2132 = vmul.f32 %v1641, %v1972
  %v2133 = vmul.f32 %v1642, %v1976
  %v2134 = vmul.f32 %v1643, %v1976
  %v2135 = vmul.f32 %v1644, %v1976
  %v2136 = vmul.f32 %v1645, %v1976
  %v2137 = vmul.f32 %v1646, %v1980
  %v2138 = vmul.f32 %v1647, %v1980
  %v2139 = vmul.f32 %v1648, %v1980
  %v2140 = vmul.f32 %v1649, %v1980
  %v2141 = vmul.f32 %v1650, %v1984
  %v2142 = vmul.f32 %v1651, %v1984
  %v2143 = vmul.f32 %v1652, %v1984
  %v2144 = vmul.f32 %v1653, %v1984
  %v2145 = vmul.f32 %v1654, %v1988
  %v2146 = vmul.f32 %v1655, %v1988
  %v2147 = vmul.f32 %v1656, %v1988
  %v2148 = vmul.f32 %v1657, %v1988
  %v2149 = vmul.f32 %v1658, %v1992
  %v2150 = vmul.f32 %v1659, %v1992
  %v2151 = vmul.f32 %v1660, %v1992
  %v2152 = vmul.f32 %v1661, %v1992
  %v2153 = vmul.f32 %v1662, %v1996
  %v2154 = vmul.f32 %v1663, %v1996
  %v2155 = vmul.f32 %v1664, %v1996
  %v2156 = vmul.f32 %v1665, %v1996
  %v2157 = vmul.f32 %v1666, %v2000
  %v2158 = vmul.f32 %v1667, %v2000
  %v2159 = vmul.f32 %v1668, %v2000
  %v2160 = vmul.f32 %v1669, %v2000
  %v2161 = vmul.f32 %v1670, %v2004
  %v2162 = vmul.f32 %v1671, %v2004
  %v2163 = vmul.f32 %v1672, %v2004
  %v2164 = vmul.f32 %v1673, %v2004
  %v2165 = vmul.f32 %v1674, %v2008
  %v2166 = vmul.f32 %v1675, %v2008
  %v2167 = vmul.f32 %v1676, %v2008
  %v2168 = vmul.f32 %v1677, %v2008
  %v2169 = vmul.f32 %v1678, %v2012
  %v2170 = vmul.f32 %v1679, %v2012
  %v2171 = vmul.f32 %v1680, %v2012
  %v2172 = vmul.f32 %v1681, %v2012
  %v2173 = vmul.f32 %v1682, %v2016
  %v2174 = vmul.f32 %v1683, %v2016
  %v2175 = vmul.f32 %v1684, %v2016
  %v2176 = vmul.f32 %v1685, %v2016
  %v2177 = vmul.f32 %v1686, %v2020
  %v2178 = vmul.f32 %v1687, %v2020
  %v2179 = vmul.f32 %v1688, %v2020
  %v2180 = vmul.f32 %v1689, %v2020
  %v2181 = vmul.f32 %v1690, %v2024
  %v2182 = vmul.f32 %v1691, %v2024
  %v2183 = vmul.f32 %v1692, %v2024
  %v2184 = vmul.f32 %v1693, %v2024
  %v2185 = vmul.f32 %v1694, %v2028
  %v2186 = vmul.f32 %v1695, %v2028
  %v2187 = vmul.f32 %v1696, %v2028
  %v2188 = vmul.f32 %v1697, %v2028
  %v2189 = vmul.f32 %v1698, %v2032
  %v2190 = vmul.f32 %v1699, %v2032
  %v2191 = vmul.f32 %v1700, %v2032
  %v2192 = vmul.f32 %v1701, %v2032
  %v2193 = vmul.f32 %v1702, %v2036
  %v2194 = vmul.f32 %v1703, %v2036
  %v2195 = vmul.f32 %v1704, %v2036
  %v2196 = vmul.f32 %v1705, %v2036
  %v2197 = vmul.f32 %v1706, %v2040
  %v2198 = vmul.f32 %v1707, %v2040
  %v2199 = vmul.f32 %v1708, %v2040
  %v2200 = vmul.f32 %v1709, %v2040
  %v2201 = vmul.f32 %v1710, %v2044
  %v2202 = vmul.f32 %v1711, %v2044
  %v2203 = vmul.f32 %v1712, %v2044
  %v2204 = vmul.f32 %v1713, %v2044
  %v2205 = vmul.f32 %v1714, %v2048
  %v2206 = vmul.f32 %v1715, %v2048
  %v2207 = vmul.f32 %v1716, %v2048
  %v2208 = vmul.f32 %v1717, %v2048
  %v2209 = vmul.f32 %v1718, %v2052
  %v2210 = vmul.f32 %v1719, %v2052
  %v2211 = vmul.f32 %v1720, %v2052
  %v2212 = vmul.f32 %v1721, %v2052
  %v2213 = vmul.f32 %v1722, %v2056
  %v2214 = vmul.f32 %v1723, %v2056
  %v2215 = vmul.f32 %v1724, %v2056
  %v2216 = vmul.f32 %v1725, %v2056
  %v2217 = vmul.f32 %v1726, %v2060
  %v2218 = vmul.f32 %v1727, %v2060
  %v2219 = vmul.f32 %v1728, %v2060
  %v2220 = vmul.f32 %v1729, %v2060
  %v2221 = vmul.f32 %v1730, %v2064
  %v2222 = vmul.f32 %v1731, %v2064
  %v2223 = vmul.f32 %v1732, %v2064
  %v2224 = vmul.f32 %v1733, %v2064
  %v2225 = vmul.f32 %v1734, %v2068
  %v2226 = vmul.f32 %v1735, %v2068
  %v2227 = vmul.f32 %v1736, %v2068
  %v2228 = vmul.f32 %v1737, %v2068
  %v2229 = vmul.f32 %v1738, %v2072
  %v2230 = vmul.f32 %v1739, %v2072
  %v2231 = vmul.f32 %v1740, %v2072
  %v2232 = vmul.f32 %v1741, %v2072
  %v2233 = vmul.f32 %v1742, %v2076
  %v2234 = vmul.f32 %v1743, %v2076
  %v2235 = vmul.f32 %v1744, %v2076
  %v2236 = vmul.f32 %v1745, %v2076
  %v2237 = vmul.f32 %v1746, %v2080
  %v2238 = vmul.f32 %v1747, %v2080
  %v2239 = vmul.f32 %v1748, %v2080
  %v2240 = vmul.f32 %v1749, %v2080
  %v2241 = vadd.f32 %v2113, %v2117
  %v2242 = vadd.f32 %v2241, %v2121
  %v2243 = vadd.f32 %v2242, %v2125
  %v2244 = vadd.f32 %v2243, %v2129
  %v2245 = vadd.f32 %v2244, %v2133
  %v2246 = vadd.f32 %v2245, %v2137
  %v2247 = vadd.f32 %v2246, %v2141
  %v2248 = vadd.f32 %v2247, %v2145
  %v2249 = vadd.f32 %v2248, %v2149
  %v2250 = vadd.f32 %v2249, %v2153
  %v2251 = vadd.f32 %v2250, %v2157
  %v2252 = vadd.f32 %v2251, %v2161
  %v2253 = vadd.f32 %v2252, %v2165
  %v2254 = vadd.f32 %v2253, %v2169
  %v2255 = vadd.f32 %v2254, %v2173
  %v2256 = vadd.f32 %v2255, %v2177
  %v2257 = vadd.f32 %v2256, %v2181
  %v2258 = vadd.f32 %v2257, %v2185
  %v2259 = vadd.f32 %v2258, %v2189
  %v2260 = vadd.f32 %v2259, %v2193
  %v2261 = vadd.f32 %v2260, %v2197
  %v2262 = vadd.f32 %v2261, %v2201
  %v2263 = vadd.f32 %v2262, %v2205
  %v2264 = vadd.f32 %v2263, %v2209
  %v2265 = vadd.f32 %v2264, %v2213
  %v2266 = vadd.f32 %v2265, %v2217
  %v2267 = vadd.f32 %v2266, %v2221
  %v2268 = vadd.f32 %v2267, %v2225
  %v2269 = vadd.f32 %v2268, %v2229
  %v2270 = vadd.f32 %v2269, %v2233
  %v2271 = vadd.f32 %v2270, %v2237
  %v2272 = vadd.f32 %v2114, %v2118
  %v2273 = vadd.f32 %v2272, %v2122
  %v2274 = vadd.f32 %v2273, %v2126
  %v2275 = vadd.f32 %v2274, %v2130
  %v2276 = vadd.f32 %v2275, %v2134
  %v2277 = vadd.f32 %v2276, %v2138
  %v2278 = vadd.f32 %v2277, %v2142
  %v2279 = vadd.f32 %v2278, %v2146
  %v2280 = vadd.f32 %v2279, %v2150
  %v2281 = vadd.f32 %v2280, %v2154
  %v2282 = vadd.f32 %v2281, %v2158
  %v2283 = vadd.f32 %v2282, %v2162
  %v2284 = vadd.f32 %v2283, %v2166
  %v2285 = vadd.f32 %v2284, %v2170
  %v2286 = vadd.f32 %v2285, %v2174
  %v2287 = vadd.f32 %v2286, %v2178
  %v2288 = vadd.f32 %v2287, %v2182
  %v2289 = vadd.f32 %v2288, %v2186
  %v2290 = vadd.f32 %v2289, %v2190
  %v2291 = vadd.f32 %v2290, %v2194
  %v2292 = vadd.f32 %v2291, %v2198
  %v2293 = vadd.f32 %v2292, %v2202
  %v2294 = vadd.f32 %v2293, %v2206
  %v2295 = vadd.f32 %v2294, %v2210
  %v2296 = vadd.f32 %v2295, %v2214
  %v2297 = vadd.f32 %v2296, %v2218
  %v2298 = vadd.f32 %v2297, %v2222
  %v2299 = vadd.f32 %v2298, %v2226
  %v2300 = vadd.f32 %v2299, %v2230
  %v2301 = vadd.f32 %v2300, %v2234
  %v2302 = vadd.f32 %v2301, %v2238
  %v2303 = vadd.f32 %v2115, %v2119
  %v2304 = vadd.f32 %v2303, %v2123
  %v2305 = vadd.f32 %v2304, %v2127
  %v2306 = vadd.f32 %v2305, %v2131
  %v2307 = vadd.f32 %v2306, %v2135
  %v2308 = vadd.f32 %v2307, %v2139
  %v2309 = vadd.f32 %v2308, %v2143
  %v2310 = vadd.f32 %v2309, %v2147
  %v2311 = vadd.f32 %v2310, %v2151
  %v2312 = vadd.f32 %v2311, %v2155
  %v2313 = vadd.f32 %v2312, %v2159
  %v2314 = vadd.f32 %v2313, %v2163
  %v2315 = vadd.f32 %v2314, %v2167
  %v2316 = vadd.f32 %v2315, %v2171
  %v2317 = vadd.f32 %v2316, %v2175
  %v2318 = vadd.f32 %v2317, %v2179
  %v2319 = vadd.f32 %v2318, %v2183
  %v2320 = vadd.f32 %v2319, %v2187
  %v2321 = vadd.f32 %v2320, %v2191
  %v2322 = vadd.f32 %v2321, %v2195
  %v2323 = vadd.f32 %v2322, %v2199
  %v2324 = vadd.f32 %v2323, %v2203
  %v2325 = vadd.f32 %v2324, %v2207
  %v2326 = vadd.f32 %v2325, %v2211
  %v2327 = vadd.f32 %v2326, %v2215
  %v2328 = vadd.f32 %v2327, %v2219
  %v2329 = vadd.f32 %v2328, %v2223
  %v2330 = vadd.f32 %v2329, %v2227
  %v2331 = vadd.f32 %v2330, %v2231
  %v2332 = vadd.f32 %v2331, %v2235
  %v2333 = vadd.f32 %v2332, %v2239
  %v2334 = vadd.f32 %v2116, %v2120
  %v2335 = vadd.f32 %v2334, %v2124
  %v2336 = vadd.f32 %v2335, %v2128
  %v2337 = vadd.f32 %v2336, %v2132
  %v2338 = vadd.f32 %v2337, %v2136
  %v2339 = vadd.f32 %v2338, %v2140
  %v2340 = vadd.f32 %v2339, %v2144
  %v2341 = vadd.f32 %v2340, %v2148
  %v2342 = vadd.f32 %v2341, %v2152
  %v2343 = vadd.f32 %v2342, %v2156
  %v2344 = vadd.f32 %v2343, %v2160
  %v2345 = vadd.f32 %v2344, %v2164
  %v2346 = vadd.f32 %v2345, %v2168
  %v2347 = vadd.f32 %v2346, %v2172
  %v2348 = vadd.f32 %v2347, %v2176
  %v2349 = vadd.f32 %v2348, %v2180
  %v2350 = vadd.f32 %v2349, %v2184
  %v2351 = vadd.f32 %v2350, %v2188
  %v2352 = vadd.f32 %v2351, %v2192
  %v2353 = vadd.f32 %v2352, %v2196
  %v2354 = vadd.f32 %v2353, %v2200
  %v2355 = vadd.f32 %v2354, %v2204
  %v2356 = vadd.f32 %v2355, %v2208
  %v2357 = vadd.f32 %v2356, %v2212
  %v2358 = vadd.f32 %v2357, %v2216
  %v2359 = vadd.f32 %v2358, %v2220
  %v2360 = vadd.f32 %v2359, %v2224
  %v2361 = vadd.f32 %v2360, %v2228
  %v2362 = vadd.f32 %v2361, %v2232
  %v2363 = vadd.f32 %v2362, %v2236
  %v2364 = vadd.f32 %v2363, %v2240
  %v2365 = vmul.f32 %v2271, %v1456
  %v2366 = vmul.f32 %v2302, %v1457
  %v2367 = vmul.f32 %v2333, %v1458
  %v2368 = vmul.f32 %v2364, %v1459
  %v2369 = vadd.f32 %v2365, %v2366
  %v2370 = vadd.f32 %v2369, %v2367
  %v2371 = vadd.f32 %v2370, %v2368
  %v2372 = vrot.slane %v2371, 4
  %v2373 = vadd.f32 %v2371, %v2372
  %v2374 = vrot.slane %v2373, 2
  %v2375 = vadd.f32 %v2373, %v2374
  %v2376 = vrot.slane %v2375, 1
  %v2377 = vadd.f32 %v2375, %v2376
  %v2378 = vmul.f32 %v2377, %v1752
  %v2379 = vmul.f32 %v1440, %v1752
  %v2380 = vmul.f32 %v1441, %v1752
  %v2381 = vmul.f32 %v1442, %v1752
  %v2382 = vmul.f32 %v1443, %v1752
  %v2383 = vadd.f32 %v2378, 1.0
  %v2384 = vmul.f32 %v1440, %v2383
  %v2385 = vmul.f32 %v1441, %v2383
  %v2386 = vmul.f32 %v1442, %v2383
  %v2387 = vmul.f32 %v1443, %v2383
  %v2388 = vsub.f32 %v2384, %v2271
  %v2389 = vsub.f32 %v2385, %v2302
  %v2390 = vsub.f32 %v2386, %v2333
  %v2391 = vsub.f32 %v2387, %v2364
  %v2396 = vcombine.high %v2379, %v2379
  %v2398 = vunpack.c.l.s4 1966171168
  %v2399 = vunpack.c.0.s8 %v2398
  %v2400 = vlaneseq
  %v2401 = vshrl.u32 %v2400, 7
  %v2402 = vsub.s32 %v2399, %v2401
  %v2403 = vrot.slane %v2379, %v2402
  %v2405 = vunpack.c.l.s4 1966171168
  %v2406 = vunpack.c.0.s8 %v2405
  %v2407 = vlaneseq
  %v2408 = vshrl.u32 %v2407, 7
  %v2409 = vsub.s32 %v2406, %v2408
  %v2410 = vrot.slane %v2396, %v2409
  %v2411 = vcombine.high %v2403, %v2403
  %v2412 = vcombine.high %v2410, %v2410
  %v2414 = vunpack.c.l.s4 1966171168
  %v2415 = vunpack.c.0.s8 %v2414
  %v2416 = vlaneseq
  %v2417 = vshrl.u32 %v2416, 7
  %v2418 = vsub.s32 %v2415, %v2417
  %v2419 = vrot.slane %v2403, %v2418
  %v2421 = vunpack.c.l.s4 1966171168
  %v2422 = vunpack.c.0.s8 %v2421
  %v2423 = vlaneseq
  %v2424 = vshrl.u32 %v2423, 7
  %v2425 = vsub.s32 %v2422, %v2424
  %v2426 = vrot.slane %v2410, %v2425
  %v2428 = vunpack.c.l.s4 1966171168
  %v2429 = vunpack.c.0.s8 %v2428
  %v2430 = vlaneseq
  %v2431 = vshrl.u32 %v2430, 7
  %v2432 = vsub.s32 %v2429, %v2431
  %v2433 = vrot.slane %v2411, %v2432
  %v2435 = vunpack.c.l.s4 1966171168
  %v2436 = vunpack.c.0.s8 %v2435
  %v2437 = vlaneseq
  %v2438 = vshrl.u32 %v2437, 7
  %v2439 = vsub.s32 %v2436, %v2438
  %v2440 = vrot.slane %v2412, %v2439
  %v2441 = vcombine.high %v2419, %v2419
  %v2442 = vcombine.high %v2426, %v2426
  %v2443 = vcombine.high %v2433, %v2433
  %v2444 = vcombine.high %v2440, %v2440
  %v2445 = vcombine.high %v2380, %v2380
  %v2447 = vunpack.c.l.s4 1966171168
  %v2448 = vunpack.c.0.s8 %v2447
  %v2449 = vlaneseq
  %v2450 = vshrl.u32 %v2449, 7
  %v2451 = vsub.s32 %v2448, %v2450
  %v2452 = vrot.slane %v2380, %v2451
  %v2454 = vunpack.c.l.s4 1966171168
  %v2455 = vunpack.c.0.s8 %v2454
  %v2456 = vlaneseq
  %v2457 = vshrl.u32 %v2456, 7
  %v2458 = vsub.s32 %v2455, %v2457
  %v2459 = vrot.slane %v2445, %v2458
  %v2460 = vcombine.high %v2452, %v2452
  %v2461 = vcombine.high %v2459, %v2459
  %v2463 = vunpack.c.l.s4 1966171168
  %v2464 = vunpack.c.0.s8 %v2463
  %v2465 = vlaneseq
  %v2466 = vshrl.u32 %v2465, 7
  %v2467 = vsub.s32 %v2464, %v2466
  %v2468 = vrot.slane %v2452, %v2467
  %v2470 = vunpack.c.l.s4 1966171168
  %v2471 = vunpack.c.0.s8 %v2470
  %v2472 = vlaneseq
  %v2473 = vshrl.u32 %v2472, 7
  %v2474 = vsub.s32 %v2471, %v2473
  %v2475 = vrot.slane %v2459, %v2474
  %v2477 = vunpack.c.l.s4 1966171168
  %v2478 = vunpack.c.0.s8 %v2477
  %v2479 = vlaneseq
  %v2480 = vshrl.u32 %v2479, 7
  %v2481 = vsub.s32 %v2478, %v2480
  %v2482 = vrot.slane %v2460, %v2481
  %v2484 = vunpack.c.l.s4 1966171168
  %v2485 = vunpack.c.0.s8 %v2484
  %v2486 = vlaneseq
  %v2487 = vshrl.u32 %v2486, 7
  %v2488 = vsub.s32 %v2485, %v2487
  %v2489 = vrot.slane %v2461, %v2488
  %v2490 = vcombine.high %v2468, %v2468
  %v2491 = vcombine.high %v2475, %v2475
  %v2492 = vcombine.high %v2482, %v2482
  %v2493 = vcombine.high %v2489, %v2489
  %v2494 = vcombine.high %v2381, %v2381
  %v2496 = vunpack.c.l.s4 1966171168
  %v2497 = vunpack.c.0.s8 %v2496
  %v2498 = vlaneseq
  %v2499 = vshrl.u32 %v2498, 7
  %v2500 = vsub.s32 %v2497, %v2499
  %v2501 = vrot.slane %v2381, %v2500
  %v2503 = vunpack.c.l.s4 1966171168
  %v2504 = vunpack.c.0.s8 %v2503
  %v2505 = vlaneseq
  %v2506 = vshrl.u32 %v2505, 7
  %v2507 = vsub.s32 %v2504, %v2506
  %v2508 = vrot.slane %v2494, %v2507
  %v2509 = vcombine.high %v2501, %v2501
  %v2510 = vcombine.high %v2508, %v2508
  %v2512 = vunpack.c.l.s4 1966171168
  %v2513 = vunpack.c.0.s8 %v2512
  %v2514 = vlaneseq
  %v2515 = vshrl.u32 %v2514, 7
  %v2516 = vsub.s32 %v2513, %v2515
  %v2517 = vrot.slane %v2501, %v2516
  %v2519 = vunpack.c.l.s4 1966171168
  %v2520 = vunpack.c.0.s8 %v2519
  %v2521 = vlaneseq
  %v2522 = vshrl.u32 %v2521, 7
  %v2523 = vsub.s32 %v2520, %v2522
  %v2524 = vrot.slane %v2508, %v2523
  %v2526 = vunpack.c.l.s4 1966171168
  %v2527 = vunpack.c.0.s8 %v2526
  %v2528 = vlaneseq
  %v2529 = vshrl.u32 %v2528, 7
  %v2530 = vsub.s32 %v2527, %v2529
  %v2531 = vrot.slane %v2509, %v2530
  %v2533 = vunpack.c.l.s4 1966171168
  %v2534 = vunpack.c.0.s8 %v2533
  %v2535 = vlaneseq
  %v2536 = vshrl.u32 %v2535, 7
  %v2537 = vsub.s32 %v2534, %v2536
  %v2538 = vrot.slane %v2510, %v2537
  %v2539 = vcombine.high %v2517, %v2517
  %v2540 = vcombine.high %v2524, %v2524
  %v2541 = vcombine.high %v2531, %v2531
  %v2542 = vcombine.high %v2538, %v2538
  %v2543 = vcombine.high %v2382, %v2382
  %v2545 = vunpack.c.l.s4 1966171168
  %v2546 = vunpack.c.0.s8 %v2545
  %v2547 = vlaneseq
  %v2548 = vshrl.u32 %v2547, 7
  %v2549 = vsub.s32 %v2546, %v2548
  %v2550 = vrot.slane %v2382, %v2549
  %v2552 = vunpack.c.l.s4 1966171168
  %v2553 = vunpack.c.0.s8 %v2552
  %v2554 = vlaneseq
  %v2555 = vshrl.u32 %v2554, 7
  %v2556 = vsub.s32 %v2553, %v2555
  %v2557 = vrot.slane %v2543, %v2556
  %v2558 = vcombine.high %v2550, %v2550
  %v2559 = vcombine.high %v2557, %v2557
  %v2561 = vunpack.c.l.s4 1966171168
  %v2562 = vunpack.c.0.s8 %v2561
  %v2563 = vlaneseq
  %v2564 = vshrl.u32 %v2563, 7
  %v2565 = vsub.s32 %v2562, %v2564
  %v2566 = vrot.slane %v2550, %v2565
  %v2568 = vunpack.c.l.s4 1966171168
  %v2569 = vunpack.c.0.s8 %v2568
  %v2570 = vlaneseq
  %v2571 = vshrl.u32 %v2570, 7
  %v2572 = vsub.s32 %v2569, %v2571
  %v2573 = vrot.slane %v2557, %v2572
  %v2575 = vunpack.c.l.s4 1966171168
  %v2576 = vunpack.c.0.s8 %v2575
  %v2577 = vlaneseq
  %v2578 = vshrl.u32 %v2577, 7
  %v2579 = vsub.s32 %v2576, %v2578
  %v2580 = vrot.slane %v2558, %v2579
  %v2582 = vunpack.c.l.s4 1966171168
  %v2583 = vunpack.c.0.s8 %v2582
  %v2584 = vlaneseq
  %v2585 = vshrl.u32 %v2584, 7
  %v2586 = vsub.s32 %v2583, %v2585
  %v2587 = vrot.slane %v2559, %v2586
  %v2588 = vcombine.high %v2566, %v2566
  %v2589 = vcombine.high %v2573, %v2573
  %v2590 = vcombine.high %v2580, %v2580
  %v2591 = vcombine.high %v2587, %v2587
  %v2592 = vlaneseq
  %v2593 = vshrl.u32 %v2592, 7
  %v2594 = vsub.s32 0, %v2593
  %v2595 = vrot.slane %v2419, %v2594
  %v2596 = vlaneseq
  %v2597 = vshrl.u32 %v2596, 7
  %v2598 = vsub.s32 0, %v2597
  %v2599 = vrot.slane %v2433, %v2598
  %v2600 = vlaneseq
  %v2601 = vshrl.u32 %v2600, 7
  %v2602 = vsub.s32 0, %v2601
  %v2603 = vrot.slane %v2441, %v2602
  %v2604 = vlaneseq
  %v2605 = vshrl.u32 %v2604, 7
  %v2606 = vsub.s32 0, %v2605
  %v2607 = vrot.slane %v2443, %v2606
  %v2608 = vlaneseq
  %v2609 = vshrl.u32 %v2608, 7
  %v2610 = vsub.s32 0, %v2609
  %v2611 = vrot.slane %v2426, %v2610
  %v2612 = vlaneseq
  %v2613 = vshrl.u32 %v2612, 7
  %v2614 = vsub.s32 0, %v2613
  %v2615 = vrot.slane %v2440, %v2614
  %v2616 = vlaneseq
  %v2617 = vshrl.u32 %v2616, 7
  %v2618 = vsub.s32 0, %v2617
  %v2619 = vrot.slane %v2442, %v2618
  %v2620 = vlaneseq
  %v2621 = vshrl.u32 %v2620, 7
  %v2622 = vsub.s32 0, %v2621
  %v2623 = vrot.slane %v2444, %v2622
  %v2624 = vlaneseq
  %v2625 = vshrl.u32 %v2624, 7
  %v2626 = vsub.s32 0, %v2625
  %v2627 = vrot.slane %v2468, %v2626
  %v2628 = vlaneseq
  %v2629 = vshrl.u32 %v2628, 7
  %v2630 = vsub.s32 0, %v2629
  %v2631 = vrot.slane %v2482, %v2630
  %v2632 = vlaneseq
  %v2633 = vshrl.u32 %v2632, 7
  %v2634 = vsub.s32 0, %v2633
  %v2635 = vrot.slane %v2490, %v2634
  %v2636 = vlaneseq
  %v2637 = vshrl.u32 %v2636, 7
  %v2638 = vsub.s32 0, %v2637
  %v2639 = vrot.slane %v2492, %v2638
  %v2640 = vlaneseq
  %v2641 = vshrl.u32 %v2640, 7
  %v2642 = vsub.s32 0, %v2641
  %v2643 = vrot.slane %v2475, %v2642
  %v2644 = vlaneseq
  %v2645 = vshrl.u32 %v2644, 7
  %v2646 = vsub.s32 0, %v2645
  %v2647 = vrot.slane %v2489, %v2646
  %v2648 = vlaneseq
  %v2649 = vshrl.u32 %v2648, 7
  %v2650 = vsub.s32 0, %v2649
  %v2651 = vrot.slane %v2491, %v2650
  %v2652 = vlaneseq
  %v2653 = vshrl.u32 %v2652, 7
  %v2654 = vsub.s32 0, %v2653
  %v2655 = vrot.slane %v2493, %v2654
  %v2656 = vlaneseq
  %v2657 = vshrl.u32 %v2656, 7
  %v2658 = vsub.s32 0, %v2657
  %v2659 = vrot.slane %v2517, %v2658
  %v2660 = vlaneseq
  %v2661 = vshrl.u32 %v2660, 7
  %v2662 = vsub.s32 0, %v2661
  %v2663 = vrot.slane %v2531, %v2662
  %v2664 = vlaneseq
  %v2665 = vshrl.u32 %v2664, 7
  %v2666 = vsub.s32 0, %v2665
  %v2667 = vrot.slane %v2539, %v2666
  %v2668 = vlaneseq
  %v2669 = vshrl.u32 %v2668, 7
  %v2670 = vsub.s32 0, %v2669
  %v2671 = vrot.slane %v2541, %v2670
  %v2672 = vlaneseq
  %v2673 = vshrl.u32 %v2672, 7
  %v2674 = vsub.s32 0, %v2673
  %v2675 = vrot.slane %v2524, %v2674
  %v2676 = vlaneseq
  %v2677 = vshrl.u32 %v2676, 7
  %v2678 = vsub.s32 0, %v2677
  %v2679 = vrot.slane %v2538, %v2678
  %v2680 = vlaneseq
  %v2681 = vshrl.u32 %v2680, 7
  %v2682 = vsub.s32 0, %v2681
  %v2683 = vrot.slane %v2540, %v2682
  %v2684 = vlaneseq
  %v2685 = vshrl.u32 %v2684, 7
  %v2686 = vsub.s32 0, %v2685
  %v2687 = vrot.slane %v2542, %v2686
  %v2688 = vlaneseq
  %v2689 = vshrl.u32 %v2688, 7
  %v2690 = vsub.s32 0, %v2689
  %v2691 = vrot.slane %v2566, %v2690
  %v2692 = vlaneseq
  %v2693 = vshrl.u32 %v2692, 7
  %v2694 = vsub.s32 0, %v2693
  %v2695 = vrot.slane %v2580, %v2694
  %v2696 = vlaneseq
  %v2697 = vshrl.u32 %v2696, 7
  %v2698 = vsub.s32 0, %v2697
  %v2699 = vrot.slane %v2588, %v2698
  %v2700 = vlaneseq
  %v2701 = vshrl.u32 %v2700, 7
  %v2702 = vsub.s32 0, %v2701
  %v2703 = vrot.slane %v2590, %v2702
  %v2704 = vlaneseq
  %v2705 = vshrl.u32 %v2704, 7
  %v2706 = vsub.s32 0, %v2705
  %v2707 = vrot.slane %v2573, %v2706
  %v2708 = vlaneseq
  %v2709 = vshrl.u32 %v2708, 7
  %v2710 = vsub.s32 0, %v2709
  %v2711 = vrot.slane %v2587, %v2710
  %v2712 = vlaneseq
  %v2713 = vshrl.u32 %v2712, 7
  %v2714 = vsub.s32 0, %v2713
  %v2715 = vrot.slane %v2589, %v2714
  %v2716 = vlaneseq
  %v2717 = vshrl.u32 %v2716, 7
  %v2718 = vsub.s32 0, %v2717
  %v2719 = vrot.slane %v2591, %v2718
  %v2752 = vmul.f32 %v2595, %v2388
  %v2753 = vmul.f32 %v2595, %v2389
  %v2754 = vmul.f32 %v2595, %v2390
  %v2755 = vmul.f32 %v2595, %v2391
  %v2756 = vmul.f32 %v2599, %v2388
  %v2757 = vmul.f32 %v2599, %v2389
  %v2758 = vmul.f32 %v2599, %v2390
  %v2759 = vmul.f32 %v2599, %v2391
  %v2760 = vmul.f32 %v2603, %v2388
  %v2761 = vmul.f32 %v2603, %v2389
  %v2762 = vmul.f32 %v2603, %v2390
  %v2763 = vmul.f32 %v2603, %v2391
  %v2764 = vmul.f32 %v2607, %v2388
  %v2765 = vmul.f32 %v2607, %v2389
  %v2766 = vmul.f32 %v2607, %v2390
  %v2767 = vmul.f32 %v2607, %v2391
  %v2768 = vmul.f32 %v2611, %v2388
  %v2769 = vmul.f32 %v2611, %v2389
  %v2770 = vmul.f32 %v2611, %v2390
  %v2771 = vmul.f32 %v2611, %v2391
  %v2772 = vmul.f32 %v2615, %v2388
  %v2773 = vmul.f32 %v2615, %v2389
  %v2774 = vmul.f32 %v2615, %v2390
  %v2775 = vmul.f32 %v2615, %v2391
  %v2776 = vmul.f32 %v2619, %v2388
  %v2777 = vmul.f32 %v2619, %v2389
  %v2778 = vmul.f32 %v2619, %v2390
  %v2779 = vmul.f32 %v2619, %v2391
  %v2780 = vmul.f32 %v2623, %v2388
  %v2781 = vmul.f32 %v2623, %v2389
  %v2782 = vmul.f32 %v2623, %v2390
  %v2783 = vmul.f32 %v2623, %v2391
  %v2784 = vmul.f32 %v2627, %v2388
  %v2785 = vmul.f32 %v2627, %v2389
  %v2786 = vmul.f32 %v2627, %v2390
  %v2787 = vmul.f32 %v2627, %v2391
  %v2788 = vmul.f32 %v2631, %v2388
  %v2789 = vmul.f32 %v2631, %v2389
  %v2790 = vmul.f32 %v2631, %v2390
  %v2791 = vmul.f32 %v2631, %v2391
  %v2792 = vmul.f32 %v2635, %v2388
  %v2793 = vmul.f32 %v2635, %v2389
  %v2794 = vmul.f32 %v2635, %v2390
  %v2795 = vmul.f32 %v2635, %v2391
  %v2796 = vmul.f32 %v2639, %v2388
  %v2797 = vmul.f32 %v2639, %v2389
  %v2798 = vmul.f32 %v2639, %v2390
  %v2799 = vmul.f32 %v2639, %v2391
  %v2800 = vmul.f32 %v2643, %v2388
  %v2801 = vmul.f32 %v2643, %v2389
  %v2802 = vmul.f32 %v2643, %v2390
  %v2803 = vmul.f32 %v2643, %v2391
  %v2804 = vmul.f32 %v2647, %v2388
  %v2805 = vmul.f32 %v2647, %v2389
  %v2806 = vmul.f32 %v2647, %v2390
  %v2807 = vmul.f32 %v2647, %v2391
  %v2808 = vmul.f32 %v2651, %v2388
  %v2809 = vmul.f32 %v2651, %v2389
  %v2810 = vmul.f32 %v2651, %v2390
  %v2811 = vmul.f32 %v2651, %v2391
  %v2812 = vmul.f32 %v2655, %v2388
  %v2813 = vmul.f32 %v2655, %v2389
  %v2814 = vmul.f32 %v2655, %v2390
  %v2815 = vmul.f32 %v2655, %v2391
  %v2816 = vmul.f32 %v2659, %v2388
  %v2817 = vmul.f32 %v2659, %v2389
  %v2818 = vmul.f32 %v2659, %v2390
  %v2819 = vmul.f32 %v2659, %v2391
  %v2820 = vmul.f32 %v2663, %v2388
  %v2821 = vmul.f32 %v2663, %v2389
  %v2822 = vmul.f32 %v2663, %v2390
  %v2823 = vmul.f32 %v2663, %v2391
  %v2824 = vmul.f32 %v2667, %v2388
  %v2825 = vmul.f32 %v2667, %v2389
  %v2826 = vmul.f32 %v2667, %v2390
  %v2827 = vmul.f32 %v2667, %v2391
  %v2828 = vmul.f32 %v2671, %v2388
  %v2829 = vmul.f32 %v2671, %v2389
  %v2830 = vmul.f32 %v2671, %v2390
  %v2831 = vmul.f32 %v2671, %v2391
  %v2832 = vmul.f32 %v2675, %v2388
  %v2833 = vmul.f32 %v2675, %v2389
  %v2834 = vmul.f32 %v2675, %v2390
  %v2835 = vmul.f32 %v2675, %v2391
  %v2836 = vmul.f32 %v2679, %v2388
  %v2837 = vmul.f32 %v2679, %v2389
  %v2838 = vmul.f32 %v2679, %v2390
  %v2839 = vmul.f32 %v2679, %v2391
  %v2840 = vmul.f32 %v2683, %v2388
  %v2841 = vmul.f32 %v2683, %v2389
  %v2842 = vmul.f32 %v2683, %v2390
  %v2843 = vmul.f32 %v2683, %v2391
  %v2844 = vmul.f32 %v2687, %v2388
  %v2845 = vmul.f32 %v2687, %v2389
  %v2846 = vmul.f32 %v2687, %v2390
  %v2847 = vmul.f32 %v2687, %v2391
  %v2848 = vmul.f32 %v2691, %v2388
  %v2849 = vmul.f32 %v2691, %v2389
  %v2850 = vmul.f32 %v2691, %v2390
  %v2851 = vmul.f32 %v2691, %v2391
  %v2852 = vmul.f32 %v2695, %v2388
  %v2853 = vmul.f32 %v2695, %v2389
  %v2854 = vmul.f32 %v2695, %v2390
  %v2855 = vmul.f32 %v2695, %v2391
  %v2856 = vmul.f32 %v2699, %v2388
  %v2857 = vmul.f32 %v2699, %v2389
  %v2858 = vmul.f32 %v2699, %v2390
  %v2859 = vmul.f32 %v2699, %v2391
  %v2860 = vmul.f32 %v2703, %v2388
  %v2861 = vmul.f32 %v2703, %v2389
  %v2862 = vmul.f32 %v2703, %v2390
  %v2863 = vmul.f32 %v2703, %v2391
  %v2864 = vmul.f32 %v2707, %v2388
  %v2865 = vmul.f32 %v2707, %v2389
  %v2866 = vmul.f32 %v2707, %v2390
  %v2867 = vmul.f32 %v2707, %v2391
  %v2868 = vmul.f32 %v2711, %v2388
  %v2869 = vmul.f32 %v2711, %v2389
  %v2870 = vmul.f32 %v2711, %v2390
  %v2871 = vmul.f32 %v2711, %v2391
  %v2872 = vmul.f32 %v2715, %v2388
  %v2873 = vmul.f32 %v2715, %v2389
  %v2874 = vmul.f32 %v2715, %v2390
  %v2875 = vmul.f32 %v2715, %v2391
  %v2876 = vmul.f32 %v2719, %v2388
  %v2877 = vmul.f32 %v2719, %v2389
  %v2878 = vmul.f32 %v2719, %v2390
  %v2879 = vmul.f32 %v2719, %v2391
  %v2880 = vadd.f32 %v1622, %v2752
  %v2881 = vadd.f32 %v1623, %v2753
  %v2882 = vadd.f32 %v1624, %v2754
  %v2883 = vadd.f32 %v1625, %v2755
  %v2884 = vadd.f32 %v1626, %v2756
  %v2885 = vadd.f32 %v1627, %v2757
  %v2886 = vadd.f32 %v1628, %v2758
  %v2887 = vadd.f32 %v1629, %v2759
  %v2888 = vadd.f32 %v1630, %v2760
  %v2889 = vadd.f32 %v1631, %v2761
  %v2890 = vadd.f32 %v1632, %v2762
  %v2891 = vadd.f32 %v1633, %v2763
  %v2892 = vadd.f32 %v1634, %v2764
  %v2893 = vadd.f32 %v1635, %v2765
  %v2894 = vadd.f32 %v1636, %v2766
  %v2895 = vadd.f32 %v1637, %v2767
  %v2896 = vadd.f32 %v1638, %v2768
  %v2897 = vadd.f32 %v1639, %v2769
  %v2898 = vadd.f32 %v1640, %v2770
  %v2899 = vadd.f32 %v1641, %v2771
  %v2900 = vadd.f32 %v1642, %v2772
  %v2901 = vadd.f32 %v1643, %v2773
  %v2902 = vadd.f32 %v1644, %v2774
  %v2903 = vadd.f32 %v1645, %v2775
  %v2904 = vadd.f32 %v1646, %v2776
  %v2905 = vadd.f32 %v1647, %v2777
  %v2906 = vadd.f32 %v1648, %v2778
  %v2907 = vadd.f32 %v1649, %v2779
  %v2908 = vadd.f32 %v1650, %v2780
  %v2909 = vadd.f32 %v1651, %v2781
  %v2910 = vadd.f32 %v1652, %v2782
  %v2911 = vadd.f32 %v1653, %v2783
  %v2912 = vadd.f32 %v1654, %v2784
  %v2913 = vadd.f32 %v1655, %v2785
  %v2914 = vadd.f32 %v1656, %v2786
  %v2915 = vadd.f32 %v1657, %v2787
  %v2916 = vadd.f32 %v1658, %v2788
  %v2917 = vadd.f32 %v1659, %v2789
  %v2918 = vadd.f32 %v1660, %v2790
  %v2919 = vadd.f32 %v1661, %v2791
  %v2920 = vadd.f32 %v1662, %v2792
  %v2921 = vadd.f32 %v1663, %v2793
  %v2922 = vadd.f32 %v1664, %v2794
  %v2923 = vadd.f32 %v1665, %v2795
  %v2924 = vadd.f32 %v1666, %v2796
  %v2925 = vadd.f32 %v1667, %v2797
  %v2926 = vadd.f32 %v1668, %v2798
  %v2927 = vadd.f32 %v1669, %v2799
  %v2928 = vadd.f32 %v1670, %v2800
  %v2929 = vadd.f32 %v1671, %v2801
  %v2930 = vadd.f32 %v1672, %v2802
  %v2931 = vadd.f32 %v1673, %v2803
  %v2932 = vadd.f32 %v1674, %v2804
  %v2933 = vadd.f32 %v1675, %v2805
  %v2934 = vadd.f32 %v1676, %v2806
  %v2935 = vadd.f32 %v1677, %v2807
  %v2936 = vadd.f32 %v1678, %v2808
  %v2937 = vadd.f32 %v1679, %v2809
  %v2938 = vadd.f32 %v1680, %v2810
  %v2939 = vadd.f32 %v1681, %v2811
  %v2940 = vadd.f32 %v1682, %v2812
  %v2941 = vadd.f32 %v1683, %v2813
  %v2942 = vadd.f32 %v1684, %v2814
  %v2943 = vadd.f32 %v1685, %v2815
  %v2944 = vadd.f32 %v1686, %v2816
  %v2945 = vadd.f32 %v1687, %v2817
  %v2946 = vadd.f32 %v1688, %v2818
  %v2947 = vadd.f32 %v1689, %v2819
  %v2948 = vadd.f32 %v1690, %v2820
  %v2949 = vadd.f32 %v1691, %v2821
  %v2950 = vadd.f32 %v1692, %v2822
  %v2951 = vadd.f32 %v1693, %v2823
  %v2952 = vadd.f32 %v1694, %v2824
  %v2953 = vadd.f32 %v1695, %v2825
  %v2954 = vadd.f32 %v1696, %v2826
  %v2955 = vadd.f32 %v1697, %v2827
  %v2956 = vadd.f32 %v1698, %v2828
  %v2957 = vadd.f32 %v1699, %v2829
  %v2958 = vadd.f32 %v1700, %v2830
  %v2959 = vadd.f32 %v1701, %v2831
  %v2960 = vadd.f32 %v1702, %v2832
  %v2961 = vadd.f32 %v1703, %v2833
  %v2962 = vadd.f32 %v1704, %v2834
  %v2963 = vadd.f32 %v1705, %v2835
  %v2964 = vadd.f32 %v1706, %v2836
  %v2965 = vadd.f32 %v1707, %v2837
  %v2966 = vadd.f32 %v1708, %v2838
  %v2967 = vadd.f32 %v1709, %v2839
  %v2968 = vadd.f32 %v1710, %v2840
  %v2969 = vadd.f32 %v1711, %v2841
  %v2970 = vadd.f32 %v1712, %v2842
  %v2971 = vadd.f32 %v1713, %v2843
  %v2972 = vadd.f32 %v1714, %v2844
  %v2973 = vadd.f32 %v1715, %v2845
  %v2974 = vadd.f32 %v1716, %v2846
  %v2975 = vadd.f32 %v1717, %v2847
  %v2976 = vadd.f32 %v1718, %v2848
  %v2977 = vadd.f32 %v1719, %v2849
  %v2978 = vadd.f32 %v1720, %v2850
  %v2979 = vadd.f32 %v1721, %v2851
  %v2980 = vadd.f32 %v1722, %v2852
  %v2981 = vadd.f32 %v1723, %v2853
  %v2982 = vadd.f32 %v1724, %v2854
  %v2983 = vadd.f32 %v1725, %v2855
  %v2984 = vadd.f32 %v1726, %v2856
  %v2985 = vadd.f32 %v1727, %v2857
  %v2986 = vadd.f32 %v1728, %v2858
  %v2987 = vadd.f32 %v1729, %v2859
  %v2988 = vadd.f32 %v1730, %v2860
  %v2989 = vadd.f32 %v1731, %v2861
  %v2990 = vadd.f32 %v1732, %v2862
  %v2991 = vadd.f32 %v1733, %v2863
  %v2992 = vadd.f32 %v1734, %v2864
  %v2993 = vadd.f32 %v1735, %v2865
  %v2994 = vadd.f32 %v1736, %v2866
  %v2995 = vadd.f32 %v1737, %v2867
  %v2996 = vadd.f32 %v1738, %v2868
  %v2997 = vadd.f32 %v1739, %v2869
  %v2998 = vadd.f32 %v1740, %v2870
  %v2999 = vadd.f32 %v1741, %v2871
  %v3000 = vadd.f32 %v1742, %v2872
  %v3001 = vadd.f32 %v1743, %v2873
  %v3002 = vadd.f32 %v1744, %v2874
  %v3003 = vadd.f32 %v1745, %v2875
  %v3004 = vadd.f32 %v1746, %v2876
  %v3005 = vadd.f32 %v1747, %v2877
  %v3006 = vadd.f32 %v1748, %v2878
  %v3007 = vadd.f32 %v1749, %v2879
  %v3012 = vcombine.high %v2271, %v2271
  %v3014 = vunpack.c.l.s4 1966171168
  %v3015 = vunpack.c.0.s8 %v3014
  %v3016 = vlaneseq
  %v3017 = vshrl.u32 %v3016, 7
  %v3018 = vsub.s32 %v3015, %v3017
  %v3019 = vrot.slane %v2271, %v3018
  %v3021 = vunpack.c.l.s4 1966171168
  %v3022 = vunpack.c.0.s8 %v3021
  %v3023 = vlaneseq
  %v3024 = vshrl.u32 %v3023, 7
  %v3025 = vsub.s32 %v3022, %v3024
  %v3026 = vrot.slane %v3012, %v3025
  %v3027 = vcombine.high %v3019, %v3019
  %v3028 = vcombine.high %v3026, %v3026
  %v3030 = vunpack.c.l.s4 1966171168
  %v3031 = vunpack.c.0.s8 %v3030
  %v3032 = vlaneseq
  %v3033 = vshrl.u32 %v3032, 7
  %v3034 = vsub.s32 %v3031, %v3033
  %v3035 = vrot.slane %v3019, %v3034
  %v3037 = vunpack.c.l.s4 1966171168
  %v3038 = vunpack.c.0.s8 %v3037
  %v3039 = vlaneseq
  %v3040 = vshrl.u32 %v3039, 7
  %v3041 = vsub.s32 %v3038, %v3040
  %v3042 = vrot.slane %v3026, %v3041
  %v3044 = vunpack.c.l.s4 1966171168
  %v3045 = vunpack.c.0.s8 %v3044
  %v3046 = vlaneseq
  %v3047 = vshrl.u32 %v3046, 7
  %v3048 = vsub.s32 %v3045, %v3047
  %v3049 = vrot.slane %v3027, %v3048
  %v3051 = vunpack.c.l.s4 1966171168
  %v3052 = vunpack.c.0.s8 %v3051
  %v3053 = vlaneseq
  %v3054 = vshrl.u32 %v3053, 7
  %v3055 = vsub.s32 %v3052, %v3054
  %v3056 = vrot.slane %v3028, %v3055
  %v3057 = vcombine.high %v3035, %v3035
  %v3058 = vcombine.high %v3042, %v3042
  %v3059 = vcombine.high %v3049, %v3049
  %v3060 = vcombine.high %v3056, %v3056
  %v3061 = vcombine.high %v2302, %v2302
  %v3063 = vunpack.c.l.s4 1966171168
  %v3064 = vunpack.c.0.s8 %v3063
  %v3065 = vlaneseq
  %v3066 = vshrl.u32 %v3065, 7
  %v3067 = vsub.s32 %v3064, %v3066
  %v3068 = vrot.slane %v2302, %v3067
  %v3070 = vunpack.c.l.s4 1966171168
  %v3071 = vunpack.c.0.s8 %v3070
  %v3072 = vlaneseq
  %v3073 = vshrl.u32 %v3072, 7
  %v3074 = vsub.s32 %v3071, %v3073
  %v3075 = vrot.slane %v3061, %v3074
  %v3076 = vcombine.high %v3068, %v3068
  %v3077 = vcombine.high %v3075, %v3075
  %v3079 = vunpack.c.l.s4 1966171168
  %v3080 = vunpack.c.0.s8 %v3079
  %v3081 = vlaneseq
  %v3082 = vshrl.u32 %v3081, 7
  %v3083 = vsub.s32 %v3080, %v3082
  %v3084 = vrot.slane %v3068, %v3083
  %v3086 = vunpack.c.l.s4 1966171168
  %v3087 = vunpack.c.0.s8 %v3086
  %v3088 = vlaneseq
  %v3089 = vshrl.u32 %v3088, 7
  %v3090 = vsub.s32 %v3087, %v3089
  %v3091 = vrot.slane %v3075, %v3090
  %v3093 = vunpack.c.l.s4 1966171168
  %v3094 = vunpack.c.0.s8 %v3093
  %v3095 = vlaneseq
  %v3096 = vshrl.u32 %v3095, 7
  %v3097 = vsub.s32 %v3094, %v3096
  %v3098 = vrot.slane %v3076, %v3097
  %v3100 = vunpack.c.l.s4 1966171168
  %v3101 = vunpack.c.0.s8 %v3100
  %v3102 = vlaneseq
  %v3103 = vshrl.u32 %v3102, 7
  %v3104 = vsub.s32 %v3101, %v3103
  %v3105 = vrot.slane %v3077, %v3104
  %v3106 = vcombine.high %v3084, %v3084
  %v3107 = vcombine.high %v3091, %v3091
  %v3108 = vcombine.high %v3098, %v3098
  %v3109 = vcombine.high %v3105, %v3105
  %v3110 = vcombine.high %v2333, %v2333
  %v3112 = vunpack.c.l.s4 1966171168
  %v3113 = vunpack.c.0.s8 %v3112
  %v3114 = vlaneseq
  %v3115 = vshrl.u32 %v3114, 7
  %v3116 = vsub.s32 %v3113, %v3115
  %v3117 = vrot.slane %v2333, %v3116
  %v3119 = vunpack.c.l.s4 1966171168
  %v3120 = vunpack.c.0.s8 %v3119
  %v3121 = vlaneseq
  %v3122 = vshrl.u32 %v3121, 7
  %v3123 = vsub.s32 %v3120, %v3122
  %v3124 = vrot.slane %v3110, %v3123
  %v3125 = vcombine.high %v3117, %v3117
  %v3126 = vcombine.high %v3124, %v3124
  %v3128 = vunpack.c.l.s4 1966171168
  %v3129 = vunpack.c.0.s8 %v3128
  %v3130 = vlaneseq
  %v3131 = vshrl.u32 %v3130, 7
  %v3132 = vsub.s32 %v3129, %v3131
  %v3133 = vrot.slane %v3117, %v3132
  %v3135 = vunpack.c.l.s4 1966171168
  %v3136 = vunpack.c.0.s8 %v3135
  %v3137 = vlaneseq
  %v3138 = vshrl.u32 %v3137, 7
  %v3139 = vsub.s32 %v3136, %v3138
  %v3140 = vrot.slane %v3124, %v3139
  %v3142 = vunpack.c.l.s4 1966171168
  %v3143 = vunpack.c.0.s8 %v3142
  %v3144 = vlaneseq
  %v3145 = vshrl.u32 %v3144, 7
  %v3146 = vsub.s32 %v3143, %v3145
  %v3147 = vrot.slane %v3125, %v3146
  %v3149 = vunpack.c.l.s4 1966171168
  %v3150 = vunpack.c.0.s8 %v3149
  %v3151 = vlaneseq
  %v3152 = vshrl.u32 %v3151, 7
  %v3153 = vsub.s32 %v3150, %v3152
  %v3154 = vrot.slane %v3126, %v3153
  %v3155 = vcombine.high %v3133, %v3133
  %v3156 = vcombine.high %v3140, %v3140
  %v3157 = vcombine.high %v3147, %v3147
  %v3158 = vcombine.high %v3154, %v3154
  %v3159 = vcombine.high %v2364, %v2364
  %v3161 = vunpack.c.l.s4 1966171168
  %v3162 = vunpack.c.0.s8 %v3161
  %v3163 = vlaneseq
  %v3164 = vshrl.u32 %v3163, 7
  %v3165 = vsub.s32 %v3162, %v3164
  %v3166 = vrot.slane %v2364, %v3165
  %v3168 = vunpack.c.l.s4 1966171168
  %v3169 = vunpack.c.0.s8 %v3168
  %v3170 = vlaneseq
  %v3171 = vshrl.u32 %v3170, 7
  %v3172 = vsub.s32 %v3169, %v3171
  %v3173 = vrot.slane %v3159, %v3172
  %v3174 = vcombine.high %v3166, %v3166
  %v3175 = vcombine.high %v3173, %v3173
  %v3177 = vunpack.c.l.s4 1966171168
  %v3178 = vunpack.c.0.s8 %v3177
  %v3179 = vlaneseq
  %v3180 = vshrl.u32 %v3179, 7
  %v3181 = vsub.s32 %v3178, %v3180
  %v3182 = vrot.slane %v3166, %v3181
  %v3184 = vunpack.c.l.s4 1966171168
  %v3185 = vunpack.c.0.s8 %v3184
  %v3186 = vlaneseq
  %v3187 = vshrl.u32 %v3186, 7
  %v3188 = vsub.s32 %v3185, %v3187
  %v3189 = vrot.slane %v3173, %v3188
  %v3191 = vunpack.c.l.s4 1966171168
  %v3192 = vunpack.c.0.s8 %v3191
  %v3193 = vlaneseq
  %v3194 = vshrl.u32 %v3193, 7
  %v3195 = vsub.s32 %v3192, %v3194
  %v3196 = vrot.slane %v3174, %v3195
  %v3198 = vunpack.c.l.s4 1966171168
  %v3199 = vunpack.c.0.s8 %v3198
  %v3200 = vlaneseq
  %v3201 = vshrl.u32 %v3200, 7
  %v3202 = vsub.s32 %v3199, %v3201
  %v3203 = vrot.slane %v3175, %v3202
  %v3204 = vcombine.high %v3182, %v3182
  %v3205 = vcombine.high %v3189, %v3189
  %v3206 = vcombine.high %v3196, %v3196
  %v3207 = vcombine.high %v3203, %v3203
  %v3208 = vlaneseq
  %v3209 = vshrl.u32 %v3208, 7
  %v3210 = vsub.s32 0, %v3209
  %v3211 = vrot.slane %v3035, %v3210
  %v3212 = vlaneseq
  %v3213 = vshrl.u32 %v3212, 7
  %v3214 = vsub.s32 0, %v3213
  %v3215 = vrot.slane %v3049, %v3214
  %v3216 = vlaneseq
  %v3217 = vshrl.u32 %v3216, 7
  %v3218 = vsub.s32 0, %v3217
  %v3219 = vrot.slane %v3057, %v3218
  %v3220 = vlaneseq
  %v3221 = vshrl.u32 %v3220, 7
  %v3222 = vsub.s32 0, %v3221
  %v3223 = vrot.slane %v3059, %v3222
  %v3224 = vlaneseq
  %v3225 = vshrl.u32 %v3224, 7
  %v3226 = vsub.s32 0, %v3225
  %v3227 = vrot.slane %v3042, %v3226
  %v3228 = vlaneseq
  %v3229 = vshrl.u32 %v3228, 7
  %v3230 = vsub.s32 0, %v3229
  %v3231 = vrot.slane %v3056, %v3230
  %v3232 = vlaneseq
  %v3233 = vshrl.u32 %v3232, 7
  %v3234 = vsub.s32 0, %v3233
  %v3235 = vrot.slane %v3058, %v3234
  %v3236 = vlaneseq
  %v3237 = vshrl.u32 %v3236, 7
  %v3238 = vsub.s32 0, %v3237
  %v3239 = vrot.slane %v3060, %v3238
  %v3240 = vlaneseq
  %v3241 = vshrl.u32 %v3240, 7
  %v3242 = vsub.s32 0, %v3241
  %v3243 = vrot.slane %v3084, %v3242
  %v3244 = vlaneseq
  %v3245 = vshrl.u32 %v3244, 7
  %v3246 = vsub.s32 0, %v3245
  %v3247 = vrot.slane %v3098, %v3246
  %v3248 = vlaneseq
  %v3249 = vshrl.u32 %v3248, 7
  %v3250 = vsub.s32 0, %v3249
  %v3251 = vrot.slane %v3106, %v3250
  %v3252 = vlaneseq
  %v3253 = vshrl.u32 %v3252, 7
  %v3254 = vsub.s32 0, %v3253
  %v3255 = vrot.slane %v3108, %v3254
  %v3256 = vlaneseq
  %v3257 = vshrl.u32 %v3256, 7
  %v3258 = vsub.s32 0, %v3257
  %v3259 = vrot.slane %v3091, %v3258
  %v3260 = vlaneseq
  %v3261 = vshrl.u32 %v3260, 7
  %v3262 = vsub.s32 0, %v3261
  %v3263 = vrot.slane %v3105, %v3262
  %v3264 = vlaneseq
  %v3265 = vshrl.u32 %v3264, 7
  %v3266 = vsub.s32 0, %v3265
  %v3267 = vrot.slane %v3107, %v3266
  %v3268 = vlaneseq
  %v3269 = vshrl.u32 %v3268, 7
  %v3270 = vsub.s32 0, %v3269
  %v3271 = vrot.slane %v3109, %v3270
  %v3272 = vlaneseq
  %v3273 = vshrl.u32 %v3272, 7
  %v3274 = vsub.s32 0, %v3273
  %v3275 = vrot.slane %v3133, %v3274
  %v3276 = vlaneseq
  %v3277 = vshrl.u32 %v3276, 7
  %v3278 = vsub.s32 0, %v3277
  %v3279 = vrot.slane %v3147, %v3278
  %v3280 = vlaneseq
  %v3281 = vshrl.u32 %v3280, 7
  %v3282 = vsub.s32 0, %v3281
  %v3283 = vrot.slane %v3155, %v3282
  %v3284 = vlaneseq
  %v3285 = vshrl.u32 %v3284, 7
  %v3286 = vsub.s32 0, %v3285
  %v3287 = vrot.slane %v3157, %v3286
  %v3288 = vlaneseq
  %v3289 = vshrl.u32 %v3288, 7
  %v3290 = vsub.s32 0, %v3289
  %v3291 = vrot.slane %v3140, %v3290
  %v3292 = vlaneseq
  %v3293 = vshrl.u32 %v3292, 7
  %v3294 = vsub.s32 0, %v3293
  %v3295 = vrot.slane %v3154, %v3294
  %v3296 = vlaneseq
  %v3297 = vshrl.u32 %v3296, 7
  %v3298 = vsub.s32 0, %v3297
  %v3299 = vrot.slane %v3156, %v3298
  %v3300 = vlaneseq
  %v3301 = vshrl.u32 %v3300, 7
  %v3302 = vsub.s32 0, %v3301
  %v3303 = vrot.slane %v3158, %v3302
  %v3304 = vlaneseq
  %v3305 = vshrl.u32 %v3304, 7
  %v3306 = vsub.s32 0, %v3305
  %v3307 = vrot.slane %v3182, %v3306
  %v3308 = vlaneseq
  %v3309 = vshrl.u32 %v3308, 7
  %v3310 = vsub.s32 0, %v3309
  %v3311 = vrot.slane %v3196, %v3310
  %v3312 = vlaneseq
  %v3313 = vshrl.u32 %v3312, 7
  %v3314 = vsub.s32 0, %v3313
  %v3315 = vrot.slane %v3204, %v3314
  %v3316 = vlaneseq
  %v3317 = vshrl.u32 %v3316, 7
  %v3318 = vsub.s32 0, %v3317
  %v3319 = vrot.slane %v3206, %v3318
  %v3320 = vlaneseq
  %v3321 = vshrl.u32 %v3320, 7
  %v3322 = vsub.s32 0, %v3321
  %v3323 = vrot.slane %v3189, %v3322
  %v3324 = vlaneseq
  %v3325 = vshrl.u32 %v3324, 7
  %v3326 = vsub.s32 0, %v3325
  %v3327 = vrot.slane %v3203, %v3326
  %v3328 = vlaneseq
  %v3329 = vshrl.u32 %v3328, 7
  %v3330 = vsub.s32 0, %v3329
  %v3331 = vrot.slane %v3205, %v3330
  %v3332 = vlaneseq
  %v3333 = vshrl.u32 %v3332, 7
  %v3334 = vsub.s32 0, %v3333
  %v3335 = vrot.slane %v3207, %v3334
  %v3368 = vmul.f32 %v3211, %v2379
  %v3369 = vmul.f32 %v3211, %v2380
  %v3370 = vmul.f32 %v3211, %v2381
  %v3371 = vmul.f32 %v3211, %v2382
  %v3372 = vmul.f32 %v3215, %v2379
  %v3373 = vmul.f32 %v3215, %v2380
  %v3374 = vmul.f32 %v3215, %v2381
  %v3375 = vmul.f32 %v3215, %v2382
  %v3376 = vmul.f32 %v3219, %v2379
  %v3377 = vmul.f32 %v3219, %v2380
  %v3378 = vmul.f32 %v3219, %v2381
  %v3379 = vmul.f32 %v3219, %v2382
  %v3380 = vmul.f32 %v3223, %v2379
  %v3381 = vmul.f32 %v3223, %v2380
  %v3382 = vmul.f32 %v3223, %v2381
  %v3383 = vmul.f32 %v3223, %v2382
  %v3384 = vmul.f32 %v3227, %v2379
  %v3385 = vmul.f32 %v3227, %v2380
  %v3386 = vmul.f32 %v3227, %v2381
  %v3387 = vmul.f32 %v3227, %v2382
  %v3388 = vmul.f32 %v3231, %v2379
  %v3389 = vmul.f32 %v3231, %v2380
  %v3390 = vmul.f32 %v3231, %v2381
  %v3391 = vmul.f32 %v3231, %v2382
  %v3392 = vmul.f32 %v3235, %v2379
  %v3393 = vmul.f32 %v3235, %v2380
  %v3394 = vmul.f32 %v3235, %v2381
  %v3395 = vmul.f32 %v3235, %v2382
  %v3396 = vmul.f32 %v3239, %v2379
  %v3397 = vmul.f32 %v3239, %v2380
  %v3398 = vmul.f32 %v3239, %v2381
  %v3399 = vmul.f32 %v3239, %v2382
  %v3400 = vmul.f32 %v3243, %v2379
  %v3401 = vmul.f32 %v3243, %v2380
  %v3402 = vmul.f32 %v3243, %v2381
  %v3403 = vmul.f32 %v3243, %v2382
  %v3404 = vmul.f32 %v3247, %v2379
  %v3405 = vmul.f32 %v3247, %v2380
  %v3406 = vmul.f32 %v3247, %v2381
  %v3407 = vmul.f32 %v3247, %v2382
  %v3408 = vmul.f32 %v3251, %v2379
  %v3409 = vmul.f32 %v3251, %v2380
  %v3410 = vmul.f32 %v3251, %v2381
  %v3411 = vmul.f32 %v3251, %v2382
  %v3412 = vmul.f32 %v3255, %v2379
  %v3413 = vmul.f32 %v3255, %v2380
  %v3414 = vmul.f32 %v3255, %v2381
  %v3415 = vmul.f32 %v3255, %v2382
  %v3416 = vmul.f32 %v3259, %v2379
  %v3417 = vmul.f32 %v3259, %v2380
  %v3418 = vmul.f32 %v3259, %v2381
  %v3419 = vmul.f32 %v3259, %v2382
  %v3420 = vmul.f32 %v3263, %v2379
  %v3421 = vmul.f32 %v3263, %v2380
  %v3422 = vmul.f32 %v3263, %v2381
  %v3423 = vmul.f32 %v3263, %v2382
  %v3424 = vmul.f32 %v3267, %v2379
  %v3425 = vmul.f32 %v3267, %v2380
  %v3426 = vmul.f32 %v3267, %v2381
  %v3427 = vmul.f32 %v3267, %v2382
  %v3428 = vmul.f32 %v3271, %v2379
  %v3429 = vmul.f32 %v3271, %v2380
  %v3430 = vmul.f32 %v3271, %v2381
  %v3431 = vmul.f32 %v3271, %v2382
  %v3432 = vmul.f32 %v3275, %v2379
  %v3433 = vmul.f32 %v3275, %v2380
  %v3434 = vmul.f32 %v3275, %v2381
  %v3435 = vmul.f32 %v3275, %v2382
  %v3436 = vmul.f32 %v3279, %v2379
  %v3437 = vmul.f32 %v3279, %v2380
  %v3438 = vmul.f32 %v3279, %v2381
  %v3439 = vmul.f32 %v3279, %v2382
  %v3440 = vmul.f32 %v3283, %v2379
  %v3441 = vmul.f32 %v3283, %v2380
  %v3442 = vmul.f32 %v3283, %v2381
  %v3443 = vmul.f32 %v3283, %v2382
  %v3444 = vmul.f32 %v3287, %v2379
  %v3445 = vmul.f32 %v3287, %v2380
  %v3446 = vmul.f32 %v3287, %v2381
  %v3447 = vmul.f32 %v3287, %v2382
  %v3448 = vmul.f32 %v3291, %v2379
  %v3449 = vmul.f32 %v3291, %v2380
  %v3450 = vmul.f32 %v3291, %v2381
  %v3451 = vmul.f32 %v3291, %v2382
  %v3452 = vmul.f32 %v3295, %v2379
  %v3453 = vmul.f32 %v3295, %v2380
  %v3454 = vmul.f32 %v3295, %v2381
  %v3455 = vmul.f32 %v3295, %v2382
  %v3456 = vmul.f32 %v3299, %v2379
  %v3457 = vmul.f32 %v3299, %v2380
  %v3458 = vmul.f32 %v3299, %v2381
  %v3459 = vmul.f32 %v3299, %v2382
  %v3460 = vmul.f32 %v3303, %v2379
  %v3461 = vmul.f32 %v3303, %v2380
  %v3462 = vmul.f32 %v3303, %v2381
  %v3463 = vmul.f32 %v3303, %v2382
  %v3464 = vmul.f32 %v3307, %v2379
  %v3465 = vmul.f32 %v3307, %v2380
  %v3466 = vmul.f32 %v3307, %v2381
  %v3467 = vmul.f32 %v3307, %v2382
  %v3468 = vmul.f32 %v3311, %v2379
  %v3469 = vmul.f32 %v3311, %v2380
  %v3470 = vmul.f32 %v3311, %v2381
  %v3471 = vmul.f32 %v3311, %v2382
  %v3472 = vmul.f32 %v3315, %v2379
  %v3473 = vmul.f32 %v3315, %v2380
  %v3474 = vmul.f32 %v3315, %v2381
  %v3475 = vmul.f32 %v3315, %v2382
  %v3476 = vmul.f32 %v3319, %v2379
  %v3477 = vmul.f32 %v3319, %v2380
  %v3478 = vmul.f32 %v3319, %v2381
  %v3479 = vmul.f32 %v3319, %v2382
  %v3480 = vmul.f32 %v3323, %v2379
  %v3481 = vmul.f32 %v3323, %v2380
  %v3482 = vmul.f32 %v3323, %v2381
  %v3483 = vmul.f32 %v3323, %v2382
  %v3484 = vmul.f32 %v3327, %v2379
  %v3485 = vmul.f32 %v3327, %v2380
  %v3486 = vmul.f32 %v3327, %v2381
  %v3487 = vmul.f32 %v3327, %v2382
  %v3488 = vmul.f32 %v3331, %v2379
  %v3489 = vmul.f32 %v3331, %v2380
  %v3490 = vmul.f32 %v3331, %v2381
  %v3491 = vmul.f32 %v3331, %v2382
  %v3492 = vmul.f32 %v3335, %v2379
  %v3493 = vmul.f32 %v3335, %v2380
  %v3494 = vmul.f32 %v3335, %v2381
  %v3495 = vmul.f32 %v3335, %v2382
  %v3496 = vsub.f32 %v2880, %v3368
  %v3497 = vsub.f32 %v2881, %v3369
  %v3498 = vsub.f32 %v2882, %v3370
  %v3499 = vsub.f32 %v2883, %v3371
  %v3500 = vsub.f32 %v2884, %v3372
  %v3501 = vsub.f32 %v2885, %v3373
  %v3502 = vsub.f32 %v2886, %v3374
  %v3503 = vsub.f32 %v2887, %v3375
  %v3504 = vsub.f32 %v2888, %v3376
  %v3505 = vsub.f32 %v2889, %v3377
  %v3506 = vsub.f32 %v2890, %v3378
  %v3507 = vsub.f32 %v2891, %v3379
  %v3508 = vsub.f32 %v2892, %v3380
  %v3509 = vsub.f32 %v2893, %v3381
  %v3510 = vsub.f32 %v2894, %v3382
  %v3511 = vsub.f32 %v2895, %v3383
  %v3512 = vsub.f32 %v2896, %v3384
  %v3513 = vsub.f32 %v2897, %v3385
  %v3514 = vsub.f32 %v2898, %v3386
  %v3515 = vsub.f32 %v2899, %v3387
  %v3516 = vsub.f32 %v2900, %v3388
  %v3517 = vsub.f32 %v2901, %v3389
  %v3518 = vsub.f32 %v2902, %v3390
  %v3519 = vsub.f32 %v2903, %v3391
  %v3520 = vsub.f32 %v2904, %v3392
  %v3521 = vsub.f32 %v2905, %v3393
  %v3522 = vsub.f32 %v2906, %v3394
  %v3523 = vsub.f32 %v2907, %v3395
  %v3524 = vsub.f32 %v2908, %v3396
  %v3525 = vsub.f32 %v2909, %v3397
  %v3526 = vsub.f32 %v2910, %v3398
  %v3527 = vsub.f32 %v2911, %v3399
  %v3528 = vsub.f32 %v2912, %v3400
  %v3529 = vsub.f32 %v2913, %v3401
  %v3530 = vsub.f32 %v2914, %v3402
  %v3531 = vsub.f32 %v2915, %v3403
  %v3532 = vsub.f32 %v2916, %v3404
  %v3533 = vsub.f32 %v2917, %v3405
  %v3534 = vsub.f32 %v2918, %v3406
  %v3535 = vsub.f32 %v2919, %v3407
  %v3536 = vsub.f32 %v2920, %v3408
  %v3537 = vsub.f32 %v2921, %v3409
  %v3538 = vsub.f32 %v2922, %v3410
  %v3539 = vsub.f32 %v2923, %v3411
  %v3540 = vsub.f32 %v2924, %v3412
  %v3541 = vsub.f32 %v2925, %v3413
  %v3542 = vsub.f32 %v2926, %v3414
  %v3543 = vsub.f32 %v2927, %v3415
  %v3544 = vsub.f32 %v2928, %v3416
  %v3545 = vsub.f32 %v2929, %v3417
  %v3546 = vsub.f32 %v2930, %v3418
  %v3547 = vsub.f32 %v2931, %v3419
  %v3548 = vsub.f32 %v2932, %v3420
  %v3549 = vsub.f32 %v2933, %v3421
  %v3550 = vsub.f32 %v2934, %v3422
  %v3551 = vsub.f32 %v2935, %v3423
  %v3552 = vsub.f32 %v2936, %v3424
  %v3553 = vsub.f32 %v2937, %v3425
  %v3554 = vsub.f32 %v2938, %v3426
  %v3555 = vsub.f32 %v2939, %v3427
  %v3556 = vsub.f32 %v2940, %v3428
  %v3557 = vsub.f32 %v2941, %v3429
  %v3558 = vsub.f32 %v2942, %v3430
  %v3559 = vsub.f32 %v2943, %v3431
  %v3560 = vsub.f32 %v2944, %v3432
  %v3561 = vsub.f32 %v2945, %v3433
  %v3562 = vsub.f32 %v2946, %v3434
  %v3563 = vsub.f32 %v2947, %v3435
  %v3564 = vsub.f32 %v2948, %v3436
  %v3565 = vsub.f32 %v2949, %v3437
  %v3566 = vsub.f32 %v2950, %v3438
  %v3567 = vsub.f32 %v2951, %v3439
  %v3568 = vsub.f32 %v2952, %v3440
  %v3569 = vsub.f32 %v2953, %v3441
  %v3570 = vsub.f32 %v2954, %v3442
  %v3571 = vsub.f32 %v2955, %v3443
  %v3572 = vsub.f32 %v2956, %v3444
  %v3573 = vsub.f32 %v2957, %v3445
  %v3574 = vsub.f32 %v2958, %v3446
  %v3575 = vsub.f32 %v2959, %v3447
  %v3576 = vsub.f32 %v2960, %v3448
  %v3577 = vsub.f32 %v2961, %v3449
  %v3578 = vsub.f32 %v2962, %v3450
  %v3579 = vsub.f32 %v2963, %v3451
  %v3580 = vsub.f32 %v2964, %v3452
  %v3581 = vsub.f32 %v2965, %v3453
  %v3582 = vsub.f32 %v2966, %v3454
  %v3583 = vsub.f32 %v2967, %v3455
  %v3584 = vsub.f32 %v2968, %v3456
  %v3585 = vsub.f32 %v2969, %v3457
  %v3586 = vsub.f32 %v2970, %v3458
  %v3587 = vsub.f32 %v2971, %v3459
  %v3588 = vsub.f32 %v2972, %v3460
  %v3589 = vsub.f32 %v2973, %v3461
  %v3590 = vsub.f32 %v2974, %v3462
  %v3591 = vsub.f32 %v2975, %v3463
  %v3592 = vsub.f32 %v2976, %v3464
  %v3593 = vsub.f32 %v2977, %v3465
  %v3594 = vsub.f32 %v2978, %v3466
  %v3595 = vsub.f32 %v2979, %v3467
  %v3596 = vsub.f32 %v2980, %v3468
  %v3597 = vsub.f32 %v2981, %v3469
  %v3598 = vsub.f32 %v2982, %v3470
  %v3599 = vsub.f32 %v2983, %v3471
  %v3600 = vsub.f32 %v2984, %v3472
  %v3601 = vsub.f32 %v2985, %v3473
  %v3602 = vsub.f32 %v2986, %v3474
  %v3603 = vsub.f32 %v2987, %v3475
  %v3604 = vsub.f32 %v2988, %v3476
  %v3605 = vsub.f32 %v2989, %v3477
  %v3606 = vsub.f32 %v2990, %v3478
  %v3607 = vsub.f32 %v2991, %v3479
  %v3608 = vsub.f32 %v2992, %v3480
  %v3609 = vsub.f32 %v2993, %v3481
  %v3610 = vsub.f32 %v2994, %v3482
  %v3611 = vsub.f32 %v2995, %v3483
  %v3612 = vsub.f32 %v2996, %v3484
  %v3613 = vsub.f32 %v2997, %v3485
  %v3614 = vsub.f32 %v2998, %v3486
  %v3615 = vsub.f32 %v2999, %v3487
  %v3616 = vsub.f32 %v3000, %v3488
  %v3617 = vsub.f32 %v3001, %v3489
  %v3618 = vsub.f32 %v3002, %v3490
  %v3619 = vsub.f32 %v3003, %v3491
  %v3620 = vsub.f32 %v3004, %v3492
  %v3621 = vsub.f32 %v3005, %v3493
  %v3622 = vsub.f32 %v3006, %v3494
  %v3623 = vsub.f32 %v3007, %v3495
  %vm3624 = vcmp.gt.f32.partialorder 1.0, 0.5
  %v3625 = vsel %vm3624, 1, 0
  %vm3626 = vcmp.eq.s32.totalorder %v3625, 1
  %v3627 = vsel %vm3626, %v1444, %v148
  %v3628 = vsel %vm3626, %v1445, %v149
  %v3629 = vsel %vm3626, %v1446, %v150
  %v3630 = vsel %vm3626, %v1447, %v151
  %v3631 = vsel %vm3626, %v1452, %v764
  %v3632 = vsel %vm3626, %v1453, %v765
  %v3633 = vsel %vm3626, %v1454, %v766
  %v3634 = vsel %vm3626, %v1455, %v767
  %v3635 = vmul.f32 %v3631, %v3631
  %v3636 = vmul.f32 %v3632, %v3632
  %v3637 = vmul.f32 %v3633, %v3633
  %v3638 = vmul.f32 %v3634, %v3634
  %v3639 = vadd.f32 %v3635, %v3636
  %v3640 = vadd.f32 %v3639, %v3637
  %v3641 = vadd.f32 %v3640, %v3638
  %v3642 = vrot.slane %v3641, 4
  %v3643 = vadd.f32 %v3641, %v3642
  %v3644 = vrot.slane %v3643, 2
  %v3645 = vadd.f32 %v3643, %v3644
  %v3646 = vrot.slane %v3645, 1
  %v3647 = vadd.f32 %v3645, %v3646
  %vm3648 = vcmp.gt.f32.partialorder %v3647, 1e-06
  %vm3649 = vmand %vm3624, %vm3648
  %v3650 = vsel %vm3649, 1.0, 0.0
  %3651 = vst [vmem:[%s3] sm:$0xff] %v3627
  %3652 = vst [vmem:[%s3 + $0x8] sm:$0xff] %v3628
  %3653 = vst [vmem:[%s3 + $0x10] sm:$0xff] %v3629
  %3654 = vst [vmem:[%s3 + $0x18] sm:$0xff] %v3630
  %3655 = vst [vmem:[#allocation2] sm:$0xff] %v3631
  %3656 = vst [vmem:[#allocation2 + $0x8] sm:$0xff] %v3632
  %3657 = vst [vmem:[#allocation2 + $0x10] sm:$0xff] %v3633
  %3658 = vst [vmem:[#allocation2 + $0x18] sm:$0xff] %v3634
  %3659 = vst [vmem:[#allocation3] sm:$0xff] %v3496
  %3660 = vst [vmem:[#allocation3 + $0x8] sm:$0xff] %v3497
  %3661 = vst [vmem:[#allocation3 + $0x10] sm:$0xff] %v3498
  %3662 = vst [vmem:[#allocation3 + $0x18] sm:$0xff] %v3499
  %3663 = vst [vmem:[#allocation3 + $0x20] sm:$0xff] %v3500
  %3664 = vst [vmem:[#allocation3 + $0x28] sm:$0xff] %v3501
  %3665 = vst [vmem:[#allocation3 + $0x30] sm:$0xff] %v3502
  %3666 = vst [vmem:[#allocation3 + $0x38] sm:$0xff] %v3503
  %3667 = vst [vmem:[#allocation3 + $0x40] sm:$0xff] %v3504
  %3668 = vst [vmem:[#allocation3 + $0x48] sm:$0xff] %v3505
  %3669 = vst [vmem:[#allocation3 + $0x50] sm:$0xff] %v3506
  %3670 = vst [vmem:[#allocation3 + $0x58] sm:$0xff] %v3507
  %3671 = vst [vmem:[#allocation3 + $0x60] sm:$0xff] %v3508
  %3672 = vst [vmem:[#allocation3 + $0x68] sm:$0xff] %v3509
  %3673 = vst [vmem:[#allocation3 + $0x70] sm:$0xff] %v3510
  %3674 = vst [vmem:[#allocation3 + $0x78] sm:$0xff] %v3511
  %3675 = vst [vmem:[#allocation3 + $0x80] sm:$0xff] %v3512
  %3676 = vst [vmem:[#allocation3 + $0x88] sm:$0xff] %v3513
  %3677 = vst [vmem:[#allocation3 + $0x90] sm:$0xff] %v3514
  %3678 = vst [vmem:[#allocation3 + $0x98] sm:$0xff] %v3515
  %3679 = vst [vmem:[#allocation3 + $0xa0] sm:$0xff] %v3516
  %3680 = vst [vmem:[#allocation3 + $0xa8] sm:$0xff] %v3517
  %3681 = vst [vmem:[#allocation3 + $0xb0] sm:$0xff] %v3518
  %3682 = vst [vmem:[#allocation3 + $0xb8] sm:$0xff] %v3519
  %3683 = vst [vmem:[#allocation3 + $0xc0] sm:$0xff] %v3520
  %3684 = vst [vmem:[#allocation3 + $0xc8] sm:$0xff] %v3521
  %3685 = vst [vmem:[#allocation3 + $0xd0] sm:$0xff] %v3522
  %3686 = vst [vmem:[#allocation3 + $0xd8] sm:$0xff] %v3523
  %3687 = vst [vmem:[#allocation3 + $0xe0] sm:$0xff] %v3524
  %3688 = vst [vmem:[#allocation3 + $0xe8] sm:$0xff] %v3525
  %3689 = vst [vmem:[#allocation3 + $0xf0] sm:$0xff] %v3526
  %3690 = vst [vmem:[#allocation3 + $0xf8] sm:$0xff] %v3527
  %3691 = vst [vmem:[#allocation3 + $0x100] sm:$0xff] %v3528
  %3692 = vst [vmem:[#allocation3 + $0x108] sm:$0xff] %v3529
  %3693 = vst [vmem:[#allocation3 + $0x110] sm:$0xff] %v3530
  %3694 = vst [vmem:[#allocation3 + $0x118] sm:$0xff] %v3531
  %3695 = vst [vmem:[#allocation3 + $0x120] sm:$0xff] %v3532
  %3696 = vst [vmem:[#allocation3 + $0x128] sm:$0xff] %v3533
  %3697 = vst [vmem:[#allocation3 + $0x130] sm:$0xff] %v3534
  %3698 = vst [vmem:[#allocation3 + $0x138] sm:$0xff] %v3535
  %3699 = vst [vmem:[#allocation3 + $0x140] sm:$0xff] %v3536
  %3700 = vst [vmem:[#allocation3 + $0x148] sm:$0xff] %v3537
  %3701 = vst [vmem:[#allocation3 + $0x150] sm:$0xff] %v3538
  %3702 = vst [vmem:[#allocation3 + $0x158] sm:$0xff] %v3539
  %3703 = vst [vmem:[#allocation3 + $0x160] sm:$0xff] %v3540
  %3704 = vst [vmem:[#allocation3 + $0x168] sm:$0xff] %v3541
  %3705 = vst [vmem:[#allocation3 + $0x170] sm:$0xff] %v3542
  %3706 = vst [vmem:[#allocation3 + $0x178] sm:$0xff] %v3543
  %3707 = vst [vmem:[#allocation3 + $0x180] sm:$0xff] %v3544
  %3708 = vst [vmem:[#allocation3 + $0x188] sm:$0xff] %v3545
  %3709 = vst [vmem:[#allocation3 + $0x190] sm:$0xff] %v3546
  %3710 = vst [vmem:[#allocation3 + $0x198] sm:$0xff] %v3547
  %3711 = vst [vmem:[#allocation3 + $0x1a0] sm:$0xff] %v3548
  %3712 = vst [vmem:[#allocation3 + $0x1a8] sm:$0xff] %v3549
  %3713 = vst [vmem:[#allocation3 + $0x1b0] sm:$0xff] %v3550
  %3714 = vst [vmem:[#allocation3 + $0x1b8] sm:$0xff] %v3551
  %3715 = vst [vmem:[#allocation3 + $0x1c0] sm:$0xff] %v3552
  %3716 = vst [vmem:[#allocation3 + $0x1c8] sm:$0xff] %v3553
  %3717 = vst [vmem:[#allocation3 + $0x1d0] sm:$0xff] %v3554
  %3718 = vst [vmem:[#allocation3 + $0x1d8] sm:$0xff] %v3555
  %3719 = vst [vmem:[#allocation3 + $0x1e0] sm:$0xff] %v3556
  %3720 = vst [vmem:[#allocation3 + $0x1e8] sm:$0xff] %v3557
  %3721 = vst [vmem:[#allocation3 + $0x1f0] sm:$0xff] %v3558
  %3722 = vst [vmem:[#allocation3 + $0x1f8] sm:$0xff] %v3559
  %3723 = vst [vmem:[#allocation3 + $0x200] sm:$0xff] %v3560
  %3724 = vst [vmem:[#allocation3 + $0x208] sm:$0xff] %v3561
  %3725 = vst [vmem:[#allocation3 + $0x210] sm:$0xff] %v3562
  %3726 = vst [vmem:[#allocation3 + $0x218] sm:$0xff] %v3563
  %3727 = vst [vmem:[#allocation3 + $0x220] sm:$0xff] %v3564
  %3728 = vst [vmem:[#allocation3 + $0x228] sm:$0xff] %v3565
  %3729 = vst [vmem:[#allocation3 + $0x230] sm:$0xff] %v3566
  %3730 = vst [vmem:[#allocation3 + $0x238] sm:$0xff] %v3567
  %3731 = vst [vmem:[#allocation3 + $0x240] sm:$0xff] %v3568
  %3732 = vst [vmem:[#allocation3 + $0x248] sm:$0xff] %v3569
  %3733 = vst [vmem:[#allocation3 + $0x250] sm:$0xff] %v3570
  %3734 = vst [vmem:[#allocation3 + $0x258] sm:$0xff] %v3571
  %3735 = vst [vmem:[#allocation3 + $0x260] sm:$0xff] %v3572
  %3736 = vst [vmem:[#allocation3 + $0x268] sm:$0xff] %v3573
  %3737 = vst [vmem:[#allocation3 + $0x270] sm:$0xff] %v3574
  %3738 = vst [vmem:[#allocation3 + $0x278] sm:$0xff] %v3575
  %3739 = vst [vmem:[#allocation3 + $0x280] sm:$0xff] %v3576
  %3740 = vst [vmem:[#allocation3 + $0x288] sm:$0xff] %v3577
  %3741 = vst [vmem:[#allocation3 + $0x290] sm:$0xff] %v3578
  %3742 = vst [vmem:[#allocation3 + $0x298] sm:$0xff] %v3579
  %3743 = vst [vmem:[#allocation3 + $0x2a0] sm:$0xff] %v3580
  %3744 = vst [vmem:[#allocation3 + $0x2a8] sm:$0xff] %v3581
  %3745 = vst [vmem:[#allocation3 + $0x2b0] sm:$0xff] %v3582
  %3746 = vst [vmem:[#allocation3 + $0x2b8] sm:$0xff] %v3583
  %3747 = vst [vmem:[#allocation3 + $0x2c0] sm:$0xff] %v3584
  %3748 = vst [vmem:[#allocation3 + $0x2c8] sm:$0xff] %v3585
  %3749 = vst [vmem:[#allocation3 + $0x2d0] sm:$0xff] %v3586
  %3750 = vst [vmem:[#allocation3 + $0x2d8] sm:$0xff] %v3587
  %3751 = vst [vmem:[#allocation3 + $0x2e0] sm:$0xff] %v3588
  %3752 = vst [vmem:[#allocation3 + $0x2e8] sm:$0xff] %v3589
  %3753 = vst [vmem:[#allocation3 + $0x2f0] sm:$0xff] %v3590
  %3754 = vst [vmem:[#allocation3 + $0x2f8] sm:$0xff] %v3591
  %3755 = vst [vmem:[#allocation3 + $0x300] sm:$0xff] %v3592
  %3756 = vst [vmem:[#allocation3 + $0x308] sm:$0xff] %v3593
  %3757 = vst [vmem:[#allocation3 + $0x310] sm:$0xff] %v3594
  %3758 = vst [vmem:[#allocation3 + $0x318] sm:$0xff] %v3595
  %3759 = vst [vmem:[#allocation3 + $0x320] sm:$0xff] %v3596
  %3760 = vst [vmem:[#allocation3 + $0x328] sm:$0xff] %v3597
  %3761 = vst [vmem:[#allocation3 + $0x330] sm:$0xff] %v3598
  %3762 = vst [vmem:[#allocation3 + $0x338] sm:$0xff] %v3599
  %3763 = vst [vmem:[#allocation3 + $0x340] sm:$0xff] %v3600
  %3764 = vst [vmem:[#allocation3 + $0x348] sm:$0xff] %v3601
  %3765 = vst [vmem:[#allocation3 + $0x350] sm:$0xff] %v3602
  %3766 = vst [vmem:[#allocation3 + $0x358] sm:$0xff] %v3603
  %3767 = vst [vmem:[#allocation3 + $0x360] sm:$0xff] %v3604
  %3768 = vst [vmem:[#allocation3 + $0x368] sm:$0xff] %v3605
  %3769 = vst [vmem:[#allocation3 + $0x370] sm:$0xff] %v3606
  %3770 = vst [vmem:[#allocation3 + $0x378] sm:$0xff] %v3607
  %3771 = vst [vmem:[#allocation3 + $0x380] sm:$0xff] %v3608
  %3772 = vst [vmem:[#allocation3 + $0x388] sm:$0xff] %v3609
  %3773 = vst [vmem:[#allocation3 + $0x390] sm:$0xff] %v3610
  %3774 = vst [vmem:[#allocation3 + $0x398] sm:$0xff] %v3611
  %3775 = vst [vmem:[#allocation3 + $0x3a0] sm:$0xff] %v3612
  %3776 = vst [vmem:[#allocation3 + $0x3a8] sm:$0xff] %v3613
  %3777 = vst [vmem:[#allocation3 + $0x3b0] sm:$0xff] %v3614
  %3778 = vst [vmem:[#allocation3 + $0x3b8] sm:$0xff] %v3615
  %3779 = vst [vmem:[#allocation3 + $0x3c0] sm:$0xff] %v3616
  %3780 = vst [vmem:[#allocation3 + $0x3c8] sm:$0xff] %v3617
  %3781 = vst [vmem:[#allocation3 + $0x3d0] sm:$0xff] %v3618
  %3782 = vst [vmem:[#allocation3 + $0x3d8] sm:$0xff] %v3619
  %3783 = vst [vmem:[#allocation3 + $0x3e0] sm:$0xff] %v3620
  %3784 = vst [vmem:[#allocation3 + $0x3e8] sm:$0xff] %v3621
  %3785 = vst [vmem:[#allocation3 + $0x3f0] sm:$0xff] %v3622
  %3786 = vst [vmem:[#allocation3 + $0x3f8] sm:$0xff] %v3623
  %3787 = vst [vmem:[#allocation4] sm:$0x1] %v3650
  %3788 = vst [vmem:[%s4] sm:$0x1] %v3647
  loop: start=0, step=1, limit=4
  $region14: #{_solve_impl.1} parent=0 // loop_pre_header
    _
  $region15: #{_solve_impl.1} parent=0 // loop_header
    %s3790 = sphi 0, %s3794
    %p3791 = scmp.ge.s32.totalorder %s3790, 4
  $region16: #{_solve_impl.1} parent=0 // loop_header_branch
    %3793 = sbr.rel (%p3791) target = $region20
  $region17: #{_solve_impl.1} parent=0 // loop_body
    %v3795 = vld [vmem:[%s3] sm:$0xff]
    %v3796 = vld [vmem:[%s3 + $0x8] sm:$0xff]
    %v3797 = vld [vmem:[%s3 + $0x10] sm:$0xff]
    %v3798 = vld [vmem:[%s3 + $0x18] sm:$0xff]
    %v3799 = vld [vmem:[#allocation2] sm:$0xff]
    %v3800 = vld [vmem:[#allocation2 + $0x8] sm:$0xff]
    %v3801 = vld [vmem:[#allocation2 + $0x10] sm:$0xff]
    %v3802 = vld [vmem:[#allocation2 + $0x18] sm:$0xff]
    %v3803 = vld [vmem:[#allocation3] sm:$0xff]
    %v3804 = vld [vmem:[#allocation3 + $0x8] sm:$0xff]
    %v3805 = vld [vmem:[#allocation3 + $0x10] sm:$0xff]
    %v3806 = vld [vmem:[#allocation3 + $0x18] sm:$0xff]
    %v3807 = vld [vmem:[#allocation3 + $0x20] sm:$0xff]
    %v3808 = vld [vmem:[#allocation3 + $0x28] sm:$0xff]
    %v3809 = vld [vmem:[#allocation3 + $0x30] sm:$0xff]
    %v3810 = vld [vmem:[#allocation3 + $0x38] sm:$0xff]
    %v3811 = vld [vmem:[#allocation3 + $0x40] sm:$0xff]
    %v3812 = vld [vmem:[#allocation3 + $0x48] sm:$0xff]
    %v3813 = vld [vmem:[#allocation3 + $0x50] sm:$0xff]
    %v3814 = vld [vmem:[#allocation3 + $0x58] sm:$0xff]
    %v3815 = vld [vmem:[#allocation3 + $0x60] sm:$0xff]
    %v3816 = vld [vmem:[#allocation3 + $0x68] sm:$0xff]
    %v3817 = vld [vmem:[#allocation3 + $0x70] sm:$0xff]
    %v3818 = vld [vmem:[#allocation3 + $0x78] sm:$0xff]
    %v3819 = vld [vmem:[#allocation3 + $0x80] sm:$0xff]
    %v3820 = vld [vmem:[#allocation3 + $0x88] sm:$0xff]
    %v3821 = vld [vmem:[#allocation3 + $0x90] sm:$0xff]
    %v3822 = vld [vmem:[#allocation3 + $0x98] sm:$0xff]
    %v3823 = vld [vmem:[#allocation3 + $0xa0] sm:$0xff]
    %v3824 = vld [vmem:[#allocation3 + $0xa8] sm:$0xff]
    %v3825 = vld [vmem:[#allocation3 + $0xb0] sm:$0xff]
    %v3826 = vld [vmem:[#allocation3 + $0xb8] sm:$0xff]
    %v3827 = vld [vmem:[#allocation3 + $0xc0] sm:$0xff]
    %v3828 = vld [vmem:[#allocation3 + $0xc8] sm:$0xff]
    %v3829 = vld [vmem:[#allocation3 + $0xd0] sm:$0xff]
    %v3830 = vld [vmem:[#allocation3 + $0xd8] sm:$0xff]
    %v3831 = vld [vmem:[#allocation3 + $0xe0] sm:$0xff]
    %v3832 = vld [vmem:[#allocation3 + $0xe8] sm:$0xff]
    %v3833 = vld [vmem:[#allocation3 + $0xf0] sm:$0xff]
    %v3834 = vld [vmem:[#allocation3 + $0xf8] sm:$0xff]
    %v3835 = vld [vmem:[#allocation3 + $0x100] sm:$0xff]
    %v3836 = vld [vmem:[#allocation3 + $0x108] sm:$0xff]
    %v3837 = vld [vmem:[#allocation3 + $0x110] sm:$0xff]
    %v3838 = vld [vmem:[#allocation3 + $0x118] sm:$0xff]
    %v3839 = vld [vmem:[#allocation3 + $0x120] sm:$0xff]
    %v3840 = vld [vmem:[#allocation3 + $0x128] sm:$0xff]
    %v3841 = vld [vmem:[#allocation3 + $0x130] sm:$0xff]
    %v3842 = vld [vmem:[#allocation3 + $0x138] sm:$0xff]
    %v3843 = vld [vmem:[#allocation3 + $0x140] sm:$0xff]
    %v3844 = vld [vmem:[#allocation3 + $0x148] sm:$0xff]
    %v3845 = vld [vmem:[#allocation3 + $0x150] sm:$0xff]
    %v3846 = vld [vmem:[#allocation3 + $0x158] sm:$0xff]
    %v3847 = vld [vmem:[#allocation3 + $0x160] sm:$0xff]
    %v3848 = vld [vmem:[#allocation3 + $0x168] sm:$0xff]
    %v3849 = vld [vmem:[#allocation3 + $0x170] sm:$0xff]
    %v3850 = vld [vmem:[#allocation3 + $0x178] sm:$0xff]
    %v3851 = vld [vmem:[#allocation3 + $0x180] sm:$0xff]
    %v3852 = vld [vmem:[#allocation3 + $0x188] sm:$0xff]
    %v3853 = vld [vmem:[#allocation3 + $0x190] sm:$0xff]
    %v3854 = vld [vmem:[#allocation3 + $0x198] sm:$0xff]
    %v3855 = vld [vmem:[#allocation3 + $0x1a0] sm:$0xff]
    %v3856 = vld [vmem:[#allocation3 + $0x1a8] sm:$0xff]
    %v3857 = vld [vmem:[#allocation3 + $0x1b0] sm:$0xff]
    %v3858 = vld [vmem:[#allocation3 + $0x1b8] sm:$0xff]
    %v3859 = vld [vmem:[#allocation3 + $0x1c0] sm:$0xff]
    %v3860 = vld [vmem:[#allocation3 + $0x1c8] sm:$0xff]
    %v3861 = vld [vmem:[#allocation3 + $0x1d0] sm:$0xff]
    %v3862 = vld [vmem:[#allocation3 + $0x1d8] sm:$0xff]
    %v3863 = vld [vmem:[#allocation3 + $0x1e0] sm:$0xff]
    %v3864 = vld [vmem:[#allocation3 + $0x1e8] sm:$0xff]
    %v3865 = vld [vmem:[#allocation3 + $0x1f0] sm:$0xff]
    %v3866 = vld [vmem:[#allocation3 + $0x1f8] sm:$0xff]
    %v3867 = vld [vmem:[#allocation3 + $0x200] sm:$0xff]
    %v3868 = vld [vmem:[#allocation3 + $0x208] sm:$0xff]
    %v3869 = vld [vmem:[#allocation3 + $0x210] sm:$0xff]
    %v3870 = vld [vmem:[#allocation3 + $0x218] sm:$0xff]
    %v3871 = vld [vmem:[#allocation3 + $0x220] sm:$0xff]
    %v3872 = vld [vmem:[#allocation3 + $0x228] sm:$0xff]
    %v3873 = vld [vmem:[#allocation3 + $0x230] sm:$0xff]
    %v3874 = vld [vmem:[#allocation3 + $0x238] sm:$0xff]
    %v3875 = vld [vmem:[#allocation3 + $0x240] sm:$0xff]
    %v3876 = vld [vmem:[#allocation3 + $0x248] sm:$0xff]
    %v3877 = vld [vmem:[#allocation3 + $0x250] sm:$0xff]
    %v3878 = vld [vmem:[#allocation3 + $0x258] sm:$0xff]
    %v3879 = vld [vmem:[#allocation3 + $0x260] sm:$0xff]
    %v3880 = vld [vmem:[#allocation3 + $0x268] sm:$0xff]
    %v3881 = vld [vmem:[#allocation3 + $0x270] sm:$0xff]
    %v3882 = vld [vmem:[#allocation3 + $0x278] sm:$0xff]
    %v3883 = vld [vmem:[#allocation3 + $0x280] sm:$0xff]
    %v3884 = vld [vmem:[#allocation3 + $0x288] sm:$0xff]
    %v3885 = vld [vmem:[#allocation3 + $0x290] sm:$0xff]
    %v3886 = vld [vmem:[#allocation3 + $0x298] sm:$0xff]
    %v3887 = vld [vmem:[#allocation3 + $0x2a0] sm:$0xff]
    %v3888 = vld [vmem:[#allocation3 + $0x2a8] sm:$0xff]
    %v3889 = vld [vmem:[#allocation3 + $0x2b0] sm:$0xff]
    %v3890 = vld [vmem:[#allocation3 + $0x2b8] sm:$0xff]
    %v3891 = vld [vmem:[#allocation3 + $0x2c0] sm:$0xff]
    %v3892 = vld [vmem:[#allocation3 + $0x2c8] sm:$0xff]
    %v3893 = vld [vmem:[#allocation3 + $0x2d0] sm:$0xff]
    %v3894 = vld [vmem:[#allocation3 + $0x2d8] sm:$0xff]
    %v3895 = vld [vmem:[#allocation3 + $0x2e0] sm:$0xff]
    %v3896 = vld [vmem:[#allocation3 + $0x2e8] sm:$0xff]
    %v3897 = vld [vmem:[#allocation3 + $0x2f0] sm:$0xff]
    %v3898 = vld [vmem:[#allocation3 + $0x2f8] sm:$0xff]
    %v3899 = vld [vmem:[#allocation3 + $0x300] sm:$0xff]
    %v3900 = vld [vmem:[#allocation3 + $0x308] sm:$0xff]
    %v3901 = vld [vmem:[#allocation3 + $0x310] sm:$0xff]
    %v3902 = vld [vmem:[#allocation3 + $0x318] sm:$0xff]
    %v3903 = vld [vmem:[#allocation3 + $0x320] sm:$0xff]
    %v3904 = vld [vmem:[#allocation3 + $0x328] sm:$0xff]
    %v3905 = vld [vmem:[#allocation3 + $0x330] sm:$0xff]
    %v3906 = vld [vmem:[#allocation3 + $0x338] sm:$0xff]
    %v3907 = vld [vmem:[#allocation3 + $0x340] sm:$0xff]
    %v3908 = vld [vmem:[#allocation3 + $0x348] sm:$0xff]
    %v3909 = vld [vmem:[#allocation3 + $0x350] sm:$0xff]
    %v3910 = vld [vmem:[#allocation3 + $0x358] sm:$0xff]
    %v3911 = vld [vmem:[#allocation3 + $0x360] sm:$0xff]
    %v3912 = vld [vmem:[#allocation3 + $0x368] sm:$0xff]
    %v3913 = vld [vmem:[#allocation3 + $0x370] sm:$0xff]
    %v3914 = vld [vmem:[#allocation3 + $0x378] sm:$0xff]
    %v3915 = vld [vmem:[#allocation3 + $0x380] sm:$0xff]
    %v3916 = vld [vmem:[#allocation3 + $0x388] sm:$0xff]
    %v3917 = vld [vmem:[#allocation3 + $0x390] sm:$0xff]
    %v3918 = vld [vmem:[#allocation3 + $0x398] sm:$0xff]
    %v3919 = vld [vmem:[#allocation3 + $0x3a0] sm:$0xff]
    %v3920 = vld [vmem:[#allocation3 + $0x3a8] sm:$0xff]
    %v3921 = vld [vmem:[#allocation3 + $0x3b0] sm:$0xff]
    %v3922 = vld [vmem:[#allocation3 + $0x3b8] sm:$0xff]
    %v3923 = vld [vmem:[#allocation3 + $0x3c0] sm:$0xff]
    %v3924 = vld [vmem:[#allocation3 + $0x3c8] sm:$0xff]
    %v3925 = vld [vmem:[#allocation3 + $0x3d0] sm:$0xff]
    %v3926 = vld [vmem:[#allocation3 + $0x3d8] sm:$0xff]
    %v3927 = vld [vmem:[#allocation3 + $0x3e0] sm:$0xff]
    %v3928 = vld [vmem:[#allocation3 + $0x3e8] sm:$0xff]
    %v3929 = vld [vmem:[#allocation3 + $0x3f0] sm:$0xff]
    %v3930 = vld [vmem:[#allocation3 + $0x3f8] sm:$0xff]
    %v3931 = vld [vmem:[#allocation4] sm:$0x1]
    %v3936 = vcombine.high %v3799, %v3799
    %v3938 = vunpack.c.l.s4 1966171168
    %v3939 = vunpack.c.0.s8 %v3938
    %v3940 = vlaneseq
    %v3941 = vshrl.u32 %v3940, 7
    %v3942 = vsub.s32 %v3939, %v3941
    %v3943 = vrot.slane %v3799, %v3942
    %v3945 = vunpack.c.l.s4 1966171168
    %v3946 = vunpack.c.0.s8 %v3945
    %v3947 = vlaneseq
    %v3948 = vshrl.u32 %v3947, 7
    %v3949 = vsub.s32 %v3946, %v3948
    %v3950 = vrot.slane %v3936, %v3949
    %v3951 = vcombine.high %v3943, %v3943
    %v3952 = vcombine.high %v3950, %v3950
    %v3954 = vunpack.c.l.s4 1966171168
    %v3955 = vunpack.c.0.s8 %v3954
    %v3956 = vlaneseq
    %v3957 = vshrl.u32 %v3956, 7
    %v3958 = vsub.s32 %v3955, %v3957
    %v3959 = vrot.slane %v3943, %v3958
    %v3961 = vunpack.c.l.s4 1966171168
    %v3962 = vunpack.c.0.s8 %v3961
    %v3963 = vlaneseq
    %v3964 = vshrl.u32 %v3963, 7
    %v3965 = vsub.s32 %v3962, %v3964
    %v3966 = vrot.slane %v3950, %v3965
    %v3968 = vunpack.c.l.s4 1966171168
    %v3969 = vunpack.c.0.s8 %v3968
    %v3970 = vlaneseq
    %v3971 = vshrl.u32 %v3970, 7
    %v3972 = vsub.s32 %v3969, %v3971
    %v3973 = vrot.slane %v3951, %v3972
    %v3975 = vunpack.c.l.s4 1966171168
    %v3976 = vunpack.c.0.s8 %v3975
    %v3977 = vlaneseq
    %v3978 = vshrl.u32 %v3977, 7
    %v3979 = vsub.s32 %v3976, %v3978
    %v3980 = vrot.slane %v3952, %v3979
    %v3981 = vcombine.high %v3959, %v3959
    %v3982 = vcombine.high %v3966, %v3966
    %v3983 = vcombine.high %v3973, %v3973
    %v3984 = vcombine.high %v3980, %v3980
    %v3985 = vcombine.high %v3800, %v3800
    %v3987 = vunpack.c.l.s4 1966171168
    %v3988 = vunpack.c.0.s8 %v3987
    %v3989 = vlaneseq
    %v3990 = vshrl.u32 %v3989, 7
    %v3991 = vsub.s32 %v3988, %v3990
    %v3992 = vrot.slane %v3800, %v3991
    %v3994 = vunpack.c.l.s4 1966171168
    %v3995 = vunpack.c.0.s8 %v3994
    %v3996 = vlaneseq
    %v3997 = vshrl.u32 %v3996, 7
    %v3998 = vsub.s32 %v3995, %v3997
    %v3999 = vrot.slane %v3985, %v3998
    %v4000 = vcombine.high %v3992, %v3992
    %v4001 = vcombine.high %v3999, %v3999
    %v4003 = vunpack.c.l.s4 1966171168
    %v4004 = vunpack.c.0.s8 %v4003
    %v4005 = vlaneseq
    %v4006 = vshrl.u32 %v4005, 7
    %v4007 = vsub.s32 %v4004, %v4006
    %v4008 = vrot.slane %v3992, %v4007
    %v4010 = vunpack.c.l.s4 1966171168
    %v4011 = vunpack.c.0.s8 %v4010
    %v4012 = vlaneseq
    %v4013 = vshrl.u32 %v4012, 7
    %v4014 = vsub.s32 %v4011, %v4013
    %v4015 = vrot.slane %v3999, %v4014
    %v4017 = vunpack.c.l.s4 1966171168
    %v4018 = vunpack.c.0.s8 %v4017
    %v4019 = vlaneseq
    %v4020 = vshrl.u32 %v4019, 7
    %v4021 = vsub.s32 %v4018, %v4020
    %v4022 = vrot.slane %v4000, %v4021
    %v4024 = vunpack.c.l.s4 1966171168
    %v4025 = vunpack.c.0.s8 %v4024
    %v4026 = vlaneseq
    %v4027 = vshrl.u32 %v4026, 7
    %v4028 = vsub.s32 %v4025, %v4027
    %v4029 = vrot.slane %v4001, %v4028
    %v4030 = vcombine.high %v4008, %v4008
    %v4031 = vcombine.high %v4015, %v4015
    %v4032 = vcombine.high %v4022, %v4022
    %v4033 = vcombine.high %v4029, %v4029
    %v4034 = vcombine.high %v3801, %v3801
    %v4036 = vunpack.c.l.s4 1966171168
    %v4037 = vunpack.c.0.s8 %v4036
    %v4038 = vlaneseq
    %v4039 = vshrl.u32 %v4038, 7
    %v4040 = vsub.s32 %v4037, %v4039
    %v4041 = vrot.slane %v3801, %v4040
    %v4043 = vunpack.c.l.s4 1966171168
    %v4044 = vunpack.c.0.s8 %v4043
    %v4045 = vlaneseq
    %v4046 = vshrl.u32 %v4045, 7
    %v4047 = vsub.s32 %v4044, %v4046
    %v4048 = vrot.slane %v4034, %v4047
    %v4049 = vcombine.high %v4041, %v4041
    %v4050 = vcombine.high %v4048, %v4048
    %v4052 = vunpack.c.l.s4 1966171168
    %v4053 = vunpack.c.0.s8 %v4052
    %v4054 = vlaneseq
    %v4055 = vshrl.u32 %v4054, 7
    %v4056 = vsub.s32 %v4053, %v4055
    %v4057 = vrot.slane %v4041, %v4056
    %v4059 = vunpack.c.l.s4 1966171168
    %v4060 = vunpack.c.0.s8 %v4059
    %v4061 = vlaneseq
    %v4062 = vshrl.u32 %v4061, 7
    %v4063 = vsub.s32 %v4060, %v4062
    %v4064 = vrot.slane %v4048, %v4063
    %v4066 = vunpack.c.l.s4 1966171168
    %v4067 = vunpack.c.0.s8 %v4066
    %v4068 = vlaneseq
    %v4069 = vshrl.u32 %v4068, 7
    %v4070 = vsub.s32 %v4067, %v4069
    %v4071 = vrot.slane %v4049, %v4070
    %v4073 = vunpack.c.l.s4 1966171168
    %v4074 = vunpack.c.0.s8 %v4073
    %v4075 = vlaneseq
    %v4076 = vshrl.u32 %v4075, 7
    %v4077 = vsub.s32 %v4074, %v4076
    %v4078 = vrot.slane %v4050, %v4077
    %v4079 = vcombine.high %v4057, %v4057
    %v4080 = vcombine.high %v4064, %v4064
    %v4081 = vcombine.high %v4071, %v4071
    %v4082 = vcombine.high %v4078, %v4078
    %v4083 = vcombine.high %v3802, %v3802
    %v4085 = vunpack.c.l.s4 1966171168
    %v4086 = vunpack.c.0.s8 %v4085
    %v4087 = vlaneseq
    %v4088 = vshrl.u32 %v4087, 7
    %v4089 = vsub.s32 %v4086, %v4088
    %v4090 = vrot.slane %v3802, %v4089
    %v4092 = vunpack.c.l.s4 1966171168
    %v4093 = vunpack.c.0.s8 %v4092
    %v4094 = vlaneseq
    %v4095 = vshrl.u32 %v4094, 7
    %v4096 = vsub.s32 %v4093, %v4095
    %v4097 = vrot.slane %v4083, %v4096
    %v4098 = vcombine.high %v4090, %v4090
    %v4099 = vcombine.high %v4097, %v4097
    %v4101 = vunpack.c.l.s4 1966171168
    %v4102 = vunpack.c.0.s8 %v4101
    %v4103 = vlaneseq
    %v4104 = vshrl.u32 %v4103, 7
    %v4105 = vsub.s32 %v4102, %v4104
    %v4106 = vrot.slane %v4090, %v4105
    %v4108 = vunpack.c.l.s4 1966171168
    %v4109 = vunpack.c.0.s8 %v4108
    %v4110 = vlaneseq
    %v4111 = vshrl.u32 %v4110, 7
    %v4112 = vsub.s32 %v4109, %v4111
    %v4113 = vrot.slane %v4097, %v4112
    %v4115 = vunpack.c.l.s4 1966171168
    %v4116 = vunpack.c.0.s8 %v4115
    %v4117 = vlaneseq
    %v4118 = vshrl.u32 %v4117, 7
    %v4119 = vsub.s32 %v4116, %v4118
    %v4120 = vrot.slane %v4098, %v4119
    %v4122 = vunpack.c.l.s4 1966171168
    %v4123 = vunpack.c.0.s8 %v4122
    %v4124 = vlaneseq
    %v4125 = vshrl.u32 %v4124, 7
    %v4126 = vsub.s32 %v4123, %v4125
    %v4127 = vrot.slane %v4099, %v4126
    %v4128 = vcombine.high %v4106, %v4106
    %v4129 = vcombine.high %v4113, %v4113
    %v4130 = vcombine.high %v4120, %v4120
    %v4131 = vcombine.high %v4127, %v4127
    %v4132 = vlaneseq
    %v4133 = vshrl.u32 %v4132, 7
    %v4134 = vsub.s32 0, %v4133
    %v4135 = vrot.slane %v3959, %v4134
    %v4136 = vlaneseq
    %v4137 = vshrl.u32 %v4136, 7
    %v4138 = vsub.s32 0, %v4137
    %v4139 = vrot.slane %v3973, %v4138
    %v4140 = vlaneseq
    %v4141 = vshrl.u32 %v4140, 7
    %v4142 = vsub.s32 0, %v4141
    %v4143 = vrot.slane %v3981, %v4142
    %v4144 = vlaneseq
    %v4145 = vshrl.u32 %v4144, 7
    %v4146 = vsub.s32 0, %v4145
    %v4147 = vrot.slane %v3983, %v4146
    %v4148 = vlaneseq
    %v4149 = vshrl.u32 %v4148, 7
    %v4150 = vsub.s32 0, %v4149
    %v4151 = vrot.slane %v3966, %v4150
    %v4152 = vlaneseq
    %v4153 = vshrl.u32 %v4152, 7
    %v4154 = vsub.s32 0, %v4153
    %v4155 = vrot.slane %v3980, %v4154
    %v4156 = vlaneseq
    %v4157 = vshrl.u32 %v4156, 7
    %v4158 = vsub.s32 0, %v4157
    %v4159 = vrot.slane %v3982, %v4158
    %v4160 = vlaneseq
    %v4161 = vshrl.u32 %v4160, 7
    %v4162 = vsub.s32 0, %v4161
    %v4163 = vrot.slane %v3984, %v4162
    %v4164 = vlaneseq
    %v4165 = vshrl.u32 %v4164, 7
    %v4166 = vsub.s32 0, %v4165
    %v4167 = vrot.slane %v4008, %v4166
    %v4168 = vlaneseq
    %v4169 = vshrl.u32 %v4168, 7
    %v4170 = vsub.s32 0, %v4169
    %v4171 = vrot.slane %v4022, %v4170
    %v4172 = vlaneseq
    %v4173 = vshrl.u32 %v4172, 7
    %v4174 = vsub.s32 0, %v4173
    %v4175 = vrot.slane %v4030, %v4174
    %v4176 = vlaneseq
    %v4177 = vshrl.u32 %v4176, 7
    %v4178 = vsub.s32 0, %v4177
    %v4179 = vrot.slane %v4032, %v4178
    %v4180 = vlaneseq
    %v4181 = vshrl.u32 %v4180, 7
    %v4182 = vsub.s32 0, %v4181
    %v4183 = vrot.slane %v4015, %v4182
    %v4184 = vlaneseq
    %v4185 = vshrl.u32 %v4184, 7
    %v4186 = vsub.s32 0, %v4185
    %v4187 = vrot.slane %v4029, %v4186
    %v4188 = vlaneseq
    %v4189 = vshrl.u32 %v4188, 7
    %v4190 = vsub.s32 0, %v4189
    %v4191 = vrot.slane %v4031, %v4190
    %v4192 = vlaneseq
    %v4193 = vshrl.u32 %v4192, 7
    %v4194 = vsub.s32 0, %v4193
    %v4195 = vrot.slane %v4033, %v4194
    %v4196 = vlaneseq
    %v4197 = vshrl.u32 %v4196, 7
    %v4198 = vsub.s32 0, %v4197
    %v4199 = vrot.slane %v4057, %v4198
    %v4200 = vlaneseq
    %v4201 = vshrl.u32 %v4200, 7
    %v4202 = vsub.s32 0, %v4201
    %v4203 = vrot.slane %v4071, %v4202
    %v4204 = vlaneseq
    %v4205 = vshrl.u32 %v4204, 7
    %v4206 = vsub.s32 0, %v4205
    %v4207 = vrot.slane %v4079, %v4206
    %v4208 = vlaneseq
    %v4209 = vshrl.u32 %v4208, 7
    %v4210 = vsub.s32 0, %v4209
    %v4211 = vrot.slane %v4081, %v4210
    %v4212 = vlaneseq
    %v4213 = vshrl.u32 %v4212, 7
    %v4214 = vsub.s32 0, %v4213
    %v4215 = vrot.slane %v4064, %v4214
    %v4216 = vlaneseq
    %v4217 = vshrl.u32 %v4216, 7
    %v4218 = vsub.s32 0, %v4217
    %v4219 = vrot.slane %v4078, %v4218
    %v4220 = vlaneseq
    %v4221 = vshrl.u32 %v4220, 7
    %v4222 = vsub.s32 0, %v4221
    %v4223 = vrot.slane %v4080, %v4222
    %v4224 = vlaneseq
    %v4225 = vshrl.u32 %v4224, 7
    %v4226 = vsub.s32 0, %v4225
    %v4227 = vrot.slane %v4082, %v4226
    %v4228 = vlaneseq
    %v4229 = vshrl.u32 %v4228, 7
    %v4230 = vsub.s32 0, %v4229
    %v4231 = vrot.slane %v4106, %v4230
    %v4232 = vlaneseq
    %v4233 = vshrl.u32 %v4232, 7
    %v4234 = vsub.s32 0, %v4233
    %v4235 = vrot.slane %v4120, %v4234
    %v4236 = vlaneseq
    %v4237 = vshrl.u32 %v4236, 7
    %v4238 = vsub.s32 0, %v4237
    %v4239 = vrot.slane %v4128, %v4238
    %v4240 = vlaneseq
    %v4241 = vshrl.u32 %v4240, 7
    %v4242 = vsub.s32 0, %v4241
    %v4243 = vrot.slane %v4130, %v4242
    %v4244 = vlaneseq
    %v4245 = vshrl.u32 %v4244, 7
    %v4246 = vsub.s32 0, %v4245
    %v4247 = vrot.slane %v4113, %v4246
    %v4248 = vlaneseq
    %v4249 = vshrl.u32 %v4248, 7
    %v4250 = vsub.s32 0, %v4249
    %v4251 = vrot.slane %v4127, %v4250
    %v4252 = vlaneseq
    %v4253 = vshrl.u32 %v4252, 7
    %v4254 = vsub.s32 0, %v4253
    %v4255 = vrot.slane %v4129, %v4254
    %v4256 = vlaneseq
    %v4257 = vshrl.u32 %v4256, 7
    %v4258 = vsub.s32 0, %v4257
    %v4259 = vrot.slane %v4131, %v4258
    %v4292 = vmul.f32 %v3803, %v4135
    %v4293 = vmul.f32 %v3804, %v4135
    %v4294 = vmul.f32 %v3805, %v4135
    %v4295 = vmul.f32 %v3806, %v4135
    %v4296 = vmul.f32 %v3807, %v4139
    %v4297 = vmul.f32 %v3808, %v4139
    %v4298 = vmul.f32 %v3809, %v4139
    %v4299 = vmul.f32 %v3810, %v4139
    %v4300 = vmul.f32 %v3811, %v4143
    %v4301 = vmul.f32 %v3812, %v4143
    %v4302 = vmul.f32 %v3813, %v4143
    %v4303 = vmul.f32 %v3814, %v4143
    %v4304 = vmul.f32 %v3815, %v4147
    %v4305 = vmul.f32 %v3816, %v4147
    %v4306 = vmul.f32 %v3817, %v4147
    %v4307 = vmul.f32 %v3818, %v4147
    %v4308 = vmul.f32 %v3819, %v4151
    %v4309 = vmul.f32 %v3820, %v4151
    %v4310 = vmul.f32 %v3821, %v4151
    %v4311 = vmul.f32 %v3822, %v4151
    %v4312 = vmul.f32 %v3823, %v4155
    %v4313 = vmul.f32 %v3824, %v4155
    %v4314 = vmul.f32 %v3825, %v4155
    %v4315 = vmul.f32 %v3826, %v4155
    %v4316 = vmul.f32 %v3827, %v4159
    %v4317 = vmul.f32 %v3828, %v4159
    %v4318 = vmul.f32 %v3829, %v4159
    %v4319 = vmul.f32 %v3830, %v4159
    %v4320 = vmul.f32 %v3831, %v4163
    %v4321 = vmul.f32 %v3832, %v4163
    %v4322 = vmul.f32 %v3833, %v4163
    %v4323 = vmul.f32 %v3834, %v4163
    %v4324 = vmul.f32 %v3835, %v4167
    %v4325 = vmul.f32 %v3836, %v4167
    %v4326 = vmul.f32 %v3837, %v4167
    %v4327 = vmul.f32 %v3838, %v4167
    %v4328 = vmul.f32 %v3839, %v4171
    %v4329 = vmul.f32 %v3840, %v4171
    %v4330 = vmul.f32 %v3841, %v4171
    %v4331 = vmul.f32 %v3842, %v4171
    %v4332 = vmul.f32 %v3843, %v4175
    %v4333 = vmul.f32 %v3844, %v4175
    %v4334 = vmul.f32 %v3845, %v4175
    %v4335 = vmul.f32 %v3846, %v4175
    %v4336 = vmul.f32 %v3847, %v4179
    %v4337 = vmul.f32 %v3848, %v4179
    %v4338 = vmul.f32 %v3849, %v4179
    %v4339 = vmul.f32 %v3850, %v4179
    %v4340 = vmul.f32 %v3851, %v4183
    %v4341 = vmul.f32 %v3852, %v4183
    %v4342 = vmul.f32 %v3853, %v4183
    %v4343 = vmul.f32 %v3854, %v4183
    %v4344 = vmul.f32 %v3855, %v4187
    %v4345 = vmul.f32 %v3856, %v4187
    %v4346 = vmul.f32 %v3857, %v4187
    %v4347 = vmul.f32 %v3858, %v4187
    %v4348 = vmul.f32 %v3859, %v4191
    %v4349 = vmul.f32 %v3860, %v4191
    %v4350 = vmul.f32 %v3861, %v4191
    %v4351 = vmul.f32 %v3862, %v4191
    %v4352 = vmul.f32 %v3863, %v4195
    %v4353 = vmul.f32 %v3864, %v4195
    %v4354 = vmul.f32 %v3865, %v4195
    %v4355 = vmul.f32 %v3866, %v4195
    %v4356 = vmul.f32 %v3867, %v4199
    %v4357 = vmul.f32 %v3868, %v4199
    %v4358 = vmul.f32 %v3869, %v4199
    %v4359 = vmul.f32 %v3870, %v4199
    %v4360 = vmul.f32 %v3871, %v4203
    %v4361 = vmul.f32 %v3872, %v4203
    %v4362 = vmul.f32 %v3873, %v4203
    %v4363 = vmul.f32 %v3874, %v4203
    %v4364 = vmul.f32 %v3875, %v4207
    %v4365 = vmul.f32 %v3876, %v4207
    %v4366 = vmul.f32 %v3877, %v4207
    %v4367 = vmul.f32 %v3878, %v4207
    %v4368 = vmul.f32 %v3879, %v4211
    %v4369 = vmul.f32 %v3880, %v4211
    %v4370 = vmul.f32 %v3881, %v4211
    %v4371 = vmul.f32 %v3882, %v4211
    %v4372 = vmul.f32 %v3883, %v4215
    %v4373 = vmul.f32 %v3884, %v4215
    %v4374 = vmul.f32 %v3885, %v4215
    %v4375 = vmul.f32 %v3886, %v4215
    %v4376 = vmul.f32 %v3887, %v4219
    %v4377 = vmul.f32 %v3888, %v4219
    %v4378 = vmul.f32 %v3889, %v4219
    %v4379 = vmul.f32 %v3890, %v4219
    %v4380 = vmul.f32 %v3891, %v4223
    %v4381 = vmul.f32 %v3892, %v4223
    %v4382 = vmul.f32 %v3893, %v4223
    %v4383 = vmul.f32 %v3894, %v4223
    %v4384 = vmul.f32 %v3895, %v4227
    %v4385 = vmul.f32 %v3896, %v4227
    %v4386 = vmul.f32 %v3897, %v4227
    %v4387 = vmul.f32 %v3898, %v4227
    %v4388 = vmul.f32 %v3899, %v4231
    %v4389 = vmul.f32 %v3900, %v4231
    %v4390 = vmul.f32 %v3901, %v4231
    %v4391 = vmul.f32 %v3902, %v4231
    %v4392 = vmul.f32 %v3903, %v4235
    %v4393 = vmul.f32 %v3904, %v4235
    %v4394 = vmul.f32 %v3905, %v4235
    %v4395 = vmul.f32 %v3906, %v4235
    %v4396 = vmul.f32 %v3907, %v4239
    %v4397 = vmul.f32 %v3908, %v4239
    %v4398 = vmul.f32 %v3909, %v4239
    %v4399 = vmul.f32 %v3910, %v4239
    %v4400 = vmul.f32 %v3911, %v4243
    %v4401 = vmul.f32 %v3912, %v4243
    %v4402 = vmul.f32 %v3913, %v4243
    %v4403 = vmul.f32 %v3914, %v4243
    %v4404 = vmul.f32 %v3915, %v4247
    %v4405 = vmul.f32 %v3916, %v4247
    %v4406 = vmul.f32 %v3917, %v4247
    %v4407 = vmul.f32 %v3918, %v4247
    %v4408 = vmul.f32 %v3919, %v4251
    %v4409 = vmul.f32 %v3920, %v4251
    %v4410 = vmul.f32 %v3921, %v4251
    %v4411 = vmul.f32 %v3922, %v4251
    %v4412 = vmul.f32 %v3923, %v4255
    %v4413 = vmul.f32 %v3924, %v4255
    %v4414 = vmul.f32 %v3925, %v4255
    %v4415 = vmul.f32 %v3926, %v4255
    %v4416 = vmul.f32 %v3927, %v4259
    %v4417 = vmul.f32 %v3928, %v4259
    %v4418 = vmul.f32 %v3929, %v4259
    %v4419 = vmul.f32 %v3930, %v4259
    %v4420 = vadd.f32 %v4292, %v4296
    %v4421 = vadd.f32 %v4420, %v4300
    %v4422 = vadd.f32 %v4421, %v4304
    %v4423 = vadd.f32 %v4422, %v4308
    %v4424 = vadd.f32 %v4423, %v4312
    %v4425 = vadd.f32 %v4424, %v4316
    %v4426 = vadd.f32 %v4425, %v4320
    %v4427 = vadd.f32 %v4426, %v4324
    %v4428 = vadd.f32 %v4427, %v4328
    %v4429 = vadd.f32 %v4428, %v4332
    %v4430 = vadd.f32 %v4429, %v4336
    %v4431 = vadd.f32 %v4430, %v4340
    %v4432 = vadd.f32 %v4431, %v4344
    %v4433 = vadd.f32 %v4432, %v4348
    %v4434 = vadd.f32 %v4433, %v4352
    %v4435 = vadd.f32 %v4434, %v4356
    %v4436 = vadd.f32 %v4435, %v4360
    %v4437 = vadd.f32 %v4436, %v4364
    %v4438 = vadd.f32 %v4437, %v4368
    %v4439 = vadd.f32 %v4438, %v4372
    %v4440 = vadd.f32 %v4439, %v4376
    %v4441 = vadd.f32 %v4440, %v4380
    %v4442 = vadd.f32 %v4441, %v4384
    %v4443 = vadd.f32 %v4442, %v4388
    %v4444 = vadd.f32 %v4443, %v4392
    %v4445 = vadd.f32 %v4444, %v4396
    %v4446 = vadd.f32 %v4445, %v4400
    %v4447 = vadd.f32 %v4446, %v4404
    %v4448 = vadd.f32 %v4447, %v4408
    %v4449 = vadd.f32 %v4448, %v4412
    %v4450 = vadd.f32 %v4449, %v4416
    %v4451 = vadd.f32 %v4293, %v4297
    %v4452 = vadd.f32 %v4451, %v4301
    %v4453 = vadd.f32 %v4452, %v4305
    %v4454 = vadd.f32 %v4453, %v4309
    %v4455 = vadd.f32 %v4454, %v4313
    %v4456 = vadd.f32 %v4455, %v4317
    %v4457 = vadd.f32 %v4456, %v4321
    %v4458 = vadd.f32 %v4457, %v4325
    %v4459 = vadd.f32 %v4458, %v4329
    %v4460 = vadd.f32 %v4459, %v4333
    %v4461 = vadd.f32 %v4460, %v4337
    %v4462 = vadd.f32 %v4461, %v4341
    %v4463 = vadd.f32 %v4462, %v4345
    %v4464 = vadd.f32 %v4463, %v4349
    %v4465 = vadd.f32 %v4464, %v4353
    %v4466 = vadd.f32 %v4465, %v4357
    %v4467 = vadd.f32 %v4466, %v4361
    %v4468 = vadd.f32 %v4467, %v4365
    %v4469 = vadd.f32 %v4468, %v4369
    %v4470 = vadd.f32 %v4469, %v4373
    %v4471 = vadd.f32 %v4470, %v4377
    %v4472 = vadd.f32 %v4471, %v4381
    %v4473 = vadd.f32 %v4472, %v4385
    %v4474 = vadd.f32 %v4473, %v4389
    %v4475 = vadd.f32 %v4474, %v4393
    %v4476 = vadd.f32 %v4475, %v4397
    %v4477 = vadd.f32 %v4476, %v4401
    %v4478 = vadd.f32 %v4477, %v4405
    %v4479 = vadd.f32 %v4478, %v4409
    %v4480 = vadd.f32 %v4479, %v4413
    %v4481 = vadd.f32 %v4480, %v4417
    %v4482 = vadd.f32 %v4294, %v4298
    %v4483 = vadd.f32 %v4482, %v4302
    %v4484 = vadd.f32 %v4483, %v4306
    %v4485 = vadd.f32 %v4484, %v4310
    %v4486 = vadd.f32 %v4485, %v4314
    %v4487 = vadd.f32 %v4486, %v4318
    %v4488 = vadd.f32 %v4487, %v4322
    %v4489 = vadd.f32 %v4488, %v4326
    %v4490 = vadd.f32 %v4489, %v4330
    %v4491 = vadd.f32 %v4490, %v4334
    %v4492 = vadd.f32 %v4491, %v4338
    %v4493 = vadd.f32 %v4492, %v4342
    %v4494 = vadd.f32 %v4493, %v4346
    %v4495 = vadd.f32 %v4494, %v4350
    %v4496 = vadd.f32 %v4495, %v4354
    %v4497 = vadd.f32 %v4496, %v4358
    %v4498 = vadd.f32 %v4497, %v4362
    %v4499 = vadd.f32 %v4498, %v4366
    %v4500 = vadd.f32 %v4499, %v4370
    %v4501 = vadd.f32 %v4500, %v4374
    %v4502 = vadd.f32 %v4501, %v4378
    %v4503 = vadd.f32 %v4502, %v4382
    %v4504 = vadd.f32 %v4503, %v4386
    %v4505 = vadd.f32 %v4504, %v4390
    %v4506 = vadd.f32 %v4505, %v4394
    %v4507 = vadd.f32 %v4506, %v4398
    %v4508 = vadd.f32 %v4507, %v4402
    %v4509 = vadd.f32 %v4508, %v4406
    %v4510 = vadd.f32 %v4509, %v4410
    %v4511 = vadd.f32 %v4510, %v4414
    %v4512 = vadd.f32 %v4511, %v4418
    %v4513 = vadd.f32 %v4295, %v4299
    %v4514 = vadd.f32 %v4513, %v4303
    %v4515 = vadd.f32 %v4514, %v4307
    %v4516 = vadd.f32 %v4515, %v4311
    %v4517 = vadd.f32 %v4516, %v4315
    %v4518 = vadd.f32 %v4517, %v4319
    %v4519 = vadd.f32 %v4518, %v4323
    %v4520 = vadd.f32 %v4519, %v4327
    %v4521 = vadd.f32 %v4520, %v4331
    %v4522 = vadd.f32 %v4521, %v4335
    %v4523 = vadd.f32 %v4522, %v4339
    %v4524 = vadd.f32 %v4523, %v4343
    %v4525 = vadd.f32 %v4524, %v4347
    %v4526 = vadd.f32 %v4525, %v4351
    %v4527 = vadd.f32 %v4526, %v4355
    %v4528 = vadd.f32 %v4527, %v4359
    %v4529 = vadd.f32 %v4528, %v4363
    %v4530 = vadd.f32 %v4529, %v4367
    %v4531 = vadd.f32 %v4530, %v4371
    %v4532 = vadd.f32 %v4531, %v4375
    %v4533 = vadd.f32 %v4532, %v4379
    %v4534 = vadd.f32 %v4533, %v4383
    %v4535 = vadd.f32 %v4534, %v4387
    %v4536 = vadd.f32 %v4535, %v4391
    %v4537 = vadd.f32 %v4536, %v4395
    %v4538 = vadd.f32 %v4537, %v4399
    %v4539 = vadd.f32 %v4538, %v4403
    %v4540 = vadd.f32 %v4539, %v4407
    %v4541 = vadd.f32 %v4540, %v4411
    %v4542 = vadd.f32 %v4541, %v4415
    %v4543 = vadd.f32 %v4542, %v4419
    %v4544 = vmul.f32 %v4450, -1.0
    %v4545 = vmul.f32 %v4481, -1.0
    %v4546 = vmul.f32 %v4512, -1.0
    %v4547 = vmul.f32 %v4543, -1.0
    %v4548 = vand.u32 2147483647, %v4544
    %v4549 = vand.u32 2147483647, %v4545
    %v4550 = vand.u32 2147483647, %v4546
    %v4551 = vand.u32 2147483647, %v4547
    %v4552 = vmax.f32 %v4548, %v4549
    %v4553 = vmax.f32 %v4550, %v4551
    %v4554 = vmax.f32 %v4552, %v4553
    %v4555 = vrot.slane %v4554, 4
    %v4556 = vmax.f32 %v4554, %v4555
    %v4557 = vrot.slane %v4556, 2
    %v4558 = vmax.f32 %v4556, %v4557
    %v4559 = vrot.slane %v4558, 1
    %v4560 = vmax.f32 %v4558, %v4559
    %v4561 = vmax.f32 %v4560, 1e-08
    %vm4562 = vcmp.gt.f32.partialorder %v4561, 2.0
    %v4563 = vrcp.pop %v4561
    %v4564 = vmul.f32 2.0, %v4563
    %v4565 = vsel %vm4562, %v4564, 1.0
    %vm4566 = vcmp.lt.f32.partialorder %v4561, 0.0001
    %v4567 = vmul.f32 0.0001, %v4563
    %v4568 = vsel %vm4566, %v4567, %v4565
    %v4569 = vmax.f32 %v4568, 1e-16
    %v4570 = vmul.f32 %v4569, %v4544
    %v4571 = vmul.f32 %v4569, %v4545
    %v4572 = vmul.f32 %v4569, %v4546
    %v4573 = vmul.f32 %v4569, %v4547
    %v4578 = vcombine.high %v4570, %v4570
    %v4580 = vunpack.c.l.s4 1966171168
    %v4581 = vunpack.c.0.s8 %v4580
    %v4582 = vlaneseq
    %v4583 = vshrl.u32 %v4582, 7
    %v4584 = vsub.s32 %v4581, %v4583
    %v4585 = vrot.slane %v4570, %v4584
    %v4587 = vunpack.c.l.s4 1966171168
    %v4588 = vunpack.c.0.s8 %v4587
    %v4589 = vlaneseq
    %v4590 = vshrl.u32 %v4589, 7
    %v4591 = vsub.s32 %v4588, %v4590
    %v4592 = vrot.slane %v4578, %v4591
    %v4593 = vcombine.high %v4585, %v4585
    %v4594 = vcombine.high %v4592, %v4592
    %v4596 = vunpack.c.l.s4 1966171168
    %v4597 = vunpack.c.0.s8 %v4596
    %v4598 = vlaneseq
    %v4599 = vshrl.u32 %v4598, 7
    %v4600 = vsub.s32 %v4597, %v4599
    %v4601 = vrot.slane %v4585, %v4600
    %v4603 = vunpack.c.l.s4 1966171168
    %v4604 = vunpack.c.0.s8 %v4603
    %v4605 = vlaneseq
    %v4606 = vshrl.u32 %v4605, 7
    %v4607 = vsub.s32 %v4604, %v4606
    %v4608 = vrot.slane %v4592, %v4607
    %v4610 = vunpack.c.l.s4 1966171168
    %v4611 = vunpack.c.0.s8 %v4610
    %v4612 = vlaneseq
    %v4613 = vshrl.u32 %v4612, 7
    %v4614 = vsub.s32 %v4611, %v4613
    %v4615 = vrot.slane %v4593, %v4614
    %v4617 = vunpack.c.l.s4 1966171168
    %v4618 = vunpack.c.0.s8 %v4617
    %v4619 = vlaneseq
    %v4620 = vshrl.u32 %v4619, 7
    %v4621 = vsub.s32 %v4618, %v4620
    %v4622 = vrot.slane %v4594, %v4621
    %v4623 = vcombine.high %v4601, %v4601
    %v4624 = vcombine.high %v4608, %v4608
    %v4625 = vcombine.high %v4615, %v4615
    %v4626 = vcombine.high %v4622, %v4622
    %v4627 = vcombine.high %v4571, %v4571
    %v4629 = vunpack.c.l.s4 1966171168
    %v4630 = vunpack.c.0.s8 %v4629
    %v4631 = vlaneseq
    %v4632 = vshrl.u32 %v4631, 7
    %v4633 = vsub.s32 %v4630, %v4632
    %v4634 = vrot.slane %v4571, %v4633
    %v4636 = vunpack.c.l.s4 1966171168
    %v4637 = vunpack.c.0.s8 %v4636
    %v4638 = vlaneseq
    %v4639 = vshrl.u32 %v4638, 7
    %v4640 = vsub.s32 %v4637, %v4639
    %v4641 = vrot.slane %v4627, %v4640
    %v4642 = vcombine.high %v4634, %v4634
    %v4643 = vcombine.high %v4641, %v4641
    %v4645 = vunpack.c.l.s4 1966171168
    %v4646 = vunpack.c.0.s8 %v4645
    %v4647 = vlaneseq
    %v4648 = vshrl.u32 %v4647, 7
    %v4649 = vsub.s32 %v4646, %v4648
    %v4650 = vrot.slane %v4634, %v4649
    %v4652 = vunpack.c.l.s4 1966171168
    %v4653 = vunpack.c.0.s8 %v4652
    %v4654 = vlaneseq
    %v4655 = vshrl.u32 %v4654, 7
    %v4656 = vsub.s32 %v4653, %v4655
    %v4657 = vrot.slane %v4641, %v4656
    %v4659 = vunpack.c.l.s4 1966171168
    %v4660 = vunpack.c.0.s8 %v4659
    %v4661 = vlaneseq
    %v4662 = vshrl.u32 %v4661, 7
    %v4663 = vsub.s32 %v4660, %v4662
    %v4664 = vrot.slane %v4642, %v4663
    %v4666 = vunpack.c.l.s4 1966171168
    %v4667 = vunpack.c.0.s8 %v4666
    %v4668 = vlaneseq
    %v4669 = vshrl.u32 %v4668, 7
    %v4670 = vsub.s32 %v4667, %v4669
    %v4671 = vrot.slane %v4643, %v4670
    %v4672 = vcombine.high %v4650, %v4650
    %v4673 = vcombine.high %v4657, %v4657
    %v4674 = vcombine.high %v4664, %v4664
    %v4675 = vcombine.high %v4671, %v4671
    %v4676 = vcombine.high %v4572, %v4572
    %v4678 = vunpack.c.l.s4 1966171168
    %v4679 = vunpack.c.0.s8 %v4678
    %v4680 = vlaneseq
    %v4681 = vshrl.u32 %v4680, 7
    %v4682 = vsub.s32 %v4679, %v4681
    %v4683 = vrot.slane %v4572, %v4682
    %v4685 = vunpack.c.l.s4 1966171168
    %v4686 = vunpack.c.0.s8 %v4685
    %v4687 = vlaneseq
    %v4688 = vshrl.u32 %v4687, 7
    %v4689 = vsub.s32 %v4686, %v4688
    %v4690 = vrot.slane %v4676, %v4689
    %v4691 = vcombine.high %v4683, %v4683
    %v4692 = vcombine.high %v4690, %v4690
    %v4694 = vunpack.c.l.s4 1966171168
    %v4695 = vunpack.c.0.s8 %v4694
    %v4696 = vlaneseq
    %v4697 = vshrl.u32 %v4696, 7
    %v4698 = vsub.s32 %v4695, %v4697
    %v4699 = vrot.slane %v4683, %v4698
    %v4701 = vunpack.c.l.s4 1966171168
    %v4702 = vunpack.c.0.s8 %v4701
    %v4703 = vlaneseq
    %v4704 = vshrl.u32 %v4703, 7
    %v4705 = vsub.s32 %v4702, %v4704
    %v4706 = vrot.slane %v4690, %v4705
    %v4708 = vunpack.c.l.s4 1966171168
    %v4709 = vunpack.c.0.s8 %v4708
    %v4710 = vlaneseq
    %v4711 = vshrl.u32 %v4710, 7
    %v4712 = vsub.s32 %v4709, %v4711
    %v4713 = vrot.slane %v4691, %v4712
    %v4715 = vunpack.c.l.s4 1966171168
    %v4716 = vunpack.c.0.s8 %v4715
    %v4717 = vlaneseq
    %v4718 = vshrl.u32 %v4717, 7
    %v4719 = vsub.s32 %v4716, %v4718
    %v4720 = vrot.slane %v4692, %v4719
    %v4721 = vcombine.high %v4699, %v4699
    %v4722 = vcombine.high %v4706, %v4706
    %v4723 = vcombine.high %v4713, %v4713
    %v4724 = vcombine.high %v4720, %v4720
    %v4725 = vcombine.high %v4573, %v4573
    %v4727 = vunpack.c.l.s4 1966171168
    %v4728 = vunpack.c.0.s8 %v4727
    %v4729 = vlaneseq
    %v4730 = vshrl.u32 %v4729, 7
    %v4731 = vsub.s32 %v4728, %v4730
    %v4732 = vrot.slane %v4573, %v4731
    %v4734 = vunpack.c.l.s4 1966171168
    %v4735 = vunpack.c.0.s8 %v4734
    %v4736 = vlaneseq
    %v4737 = vshrl.u32 %v4736, 7
    %v4738 = vsub.s32 %v4735, %v4737
    %v4739 = vrot.slane %v4725, %v4738
    %v4740 = vcombine.high %v4732, %v4732
    %v4741 = vcombine.high %v4739, %v4739
    %v4743 = vunpack.c.l.s4 1966171168
    %v4744 = vunpack.c.0.s8 %v4743
    %v4745 = vlaneseq
    %v4746 = vshrl.u32 %v4745, 7
    %v4747 = vsub.s32 %v4744, %v4746
    %v4748 = vrot.slane %v4732, %v4747
    %v4750 = vunpack.c.l.s4 1966171168
    %v4751 = vunpack.c.0.s8 %v4750
    %v4752 = vlaneseq
    %v4753 = vshrl.u32 %v4752, 7
    %v4754 = vsub.s32 %v4751, %v4753
    %v4755 = vrot.slane %v4739, %v4754
    %v4757 = vunpack.c.l.s4 1966171168
    %v4758 = vunpack.c.0.s8 %v4757
    %v4759 = vlaneseq
    %v4760 = vshrl.u32 %v4759, 7
    %v4761 = vsub.s32 %v4758, %v4760
    %v4762 = vrot.slane %v4740, %v4761
    %v4764 = vunpack.c.l.s4 1966171168
    %v4765 = vunpack.c.0.s8 %v4764
    %v4766 = vlaneseq
    %v4767 = vshrl.u32 %v4766, 7
    %v4768 = vsub.s32 %v4765, %v4767
    %v4769 = vrot.slane %v4741, %v4768
    %v4770 = vcombine.high %v4748, %v4748
    %v4771 = vcombine.high %v4755, %v4755
    %v4772 = vcombine.high %v4762, %v4762
    %v4773 = vcombine.high %v4769, %v4769
    %v4774 = vlaneseq
    %v4775 = vshrl.u32 %v4774, 7
    %v4776 = vsub.s32 0, %v4775
    %v4777 = vrot.slane %v4601, %v4776
    %v4778 = vlaneseq
    %v4779 = vshrl.u32 %v4778, 7
    %v4780 = vsub.s32 0, %v4779
    %v4781 = vrot.slane %v4615, %v4780
    %v4782 = vlaneseq
    %v4783 = vshrl.u32 %v4782, 7
    %v4784 = vsub.s32 0, %v4783
    %v4785 = vrot.slane %v4623, %v4784
    %v4786 = vlaneseq
    %v4787 = vshrl.u32 %v4786, 7
    %v4788 = vsub.s32 0, %v4787
    %v4789 = vrot.slane %v4625, %v4788
    %v4790 = vlaneseq
    %v4791 = vshrl.u32 %v4790, 7
    %v4792 = vsub.s32 0, %v4791
    %v4793 = vrot.slane %v4608, %v4792
    %v4794 = vlaneseq
    %v4795 = vshrl.u32 %v4794, 7
    %v4796 = vsub.s32 0, %v4795
    %v4797 = vrot.slane %v4622, %v4796
    %v4798 = vlaneseq
    %v4799 = vshrl.u32 %v4798, 7
    %v4800 = vsub.s32 0, %v4799
    %v4801 = vrot.slane %v4624, %v4800
    %v4802 = vlaneseq
    %v4803 = vshrl.u32 %v4802, 7
    %v4804 = vsub.s32 0, %v4803
    %v4805 = vrot.slane %v4626, %v4804
    %v4806 = vlaneseq
    %v4807 = vshrl.u32 %v4806, 7
    %v4808 = vsub.s32 0, %v4807
    %v4809 = vrot.slane %v4650, %v4808
    %v4810 = vlaneseq
    %v4811 = vshrl.u32 %v4810, 7
    %v4812 = vsub.s32 0, %v4811
    %v4813 = vrot.slane %v4664, %v4812
    %v4814 = vlaneseq
    %v4815 = vshrl.u32 %v4814, 7
    %v4816 = vsub.s32 0, %v4815
    %v4817 = vrot.slane %v4672, %v4816
    %v4818 = vlaneseq
    %v4819 = vshrl.u32 %v4818, 7
    %v4820 = vsub.s32 0, %v4819
    %v4821 = vrot.slane %v4674, %v4820
    %v4822 = vlaneseq
    %v4823 = vshrl.u32 %v4822, 7
    %v4824 = vsub.s32 0, %v4823
    %v4825 = vrot.slane %v4657, %v4824
    %v4826 = vlaneseq
    %v4827 = vshrl.u32 %v4826, 7
    %v4828 = vsub.s32 0, %v4827
    %v4829 = vrot.slane %v4671, %v4828
    %v4830 = vlaneseq
    %v4831 = vshrl.u32 %v4830, 7
    %v4832 = vsub.s32 0, %v4831
    %v4833 = vrot.slane %v4673, %v4832
    %v4834 = vlaneseq
    %v4835 = vshrl.u32 %v4834, 7
    %v4836 = vsub.s32 0, %v4835
    %v4837 = vrot.slane %v4675, %v4836
    %v4838 = vlaneseq
    %v4839 = vshrl.u32 %v4838, 7
    %v4840 = vsub.s32 0, %v4839
    %v4841 = vrot.slane %v4699, %v4840
    %v4842 = vlaneseq
    %v4843 = vshrl.u32 %v4842, 7
    %v4844 = vsub.s32 0, %v4843
    %v4845 = vrot.slane %v4713, %v4844
    %v4846 = vlaneseq
    %v4847 = vshrl.u32 %v4846, 7
    %v4848 = vsub.s32 0, %v4847
    %v4849 = vrot.slane %v4721, %v4848
    %v4850 = vlaneseq
    %v4851 = vshrl.u32 %v4850, 7
    %v4852 = vsub.s32 0, %v4851
    %v4853 = vrot.slane %v4723, %v4852
    %v4854 = vlaneseq
    %v4855 = vshrl.u32 %v4854, 7
    %v4856 = vsub.s32 0, %v4855
    %v4857 = vrot.slane %v4706, %v4856
    %v4858 = vlaneseq
    %v4859 = vshrl.u32 %v4858, 7
    %v4860 = vsub.s32 0, %v4859
    %v4861 = vrot.slane %v4720, %v4860
    %v4862 = vlaneseq
    %v4863 = vshrl.u32 %v4862, 7
    %v4864 = vsub.s32 0, %v4863
    %v4865 = vrot.slane %v4722, %v4864
    %v4866 = vlaneseq
    %v4867 = vshrl.u32 %v4866, 7
    %v4868 = vsub.s32 0, %v4867
    %v4869 = vrot.slane %v4724, %v4868
    %v4870 = vlaneseq
    %v4871 = vshrl.u32 %v4870, 7
    %v4872 = vsub.s32 0, %v4871
    %v4873 = vrot.slane %v4748, %v4872
    %v4874 = vlaneseq
    %v4875 = vshrl.u32 %v4874, 7
    %v4876 = vsub.s32 0, %v4875
    %v4877 = vrot.slane %v4762, %v4876
    %v4878 = vlaneseq
    %v4879 = vshrl.u32 %v4878, 7
    %v4880 = vsub.s32 0, %v4879
    %v4881 = vrot.slane %v4770, %v4880
    %v4882 = vlaneseq
    %v4883 = vshrl.u32 %v4882, 7
    %v4884 = vsub.s32 0, %v4883
    %v4885 = vrot.slane %v4772, %v4884
    %v4886 = vlaneseq
    %v4887 = vshrl.u32 %v4886, 7
    %v4888 = vsub.s32 0, %v4887
    %v4889 = vrot.slane %v4755, %v4888
    %v4890 = vlaneseq
    %v4891 = vshrl.u32 %v4890, 7
    %v4892 = vsub.s32 0, %v4891
    %v4893 = vrot.slane %v4769, %v4892
    %v4894 = vlaneseq
    %v4895 = vshrl.u32 %v4894, 7
    %v4896 = vsub.s32 0, %v4895
    %v4897 = vrot.slane %v4771, %v4896
    %v4898 = vlaneseq
    %v4899 = vshrl.u32 %v4898, 7
    %v4900 = vsub.s32 0, %v4899
    %v4901 = vrot.slane %v4773, %v4900
    %v4934 = vmul.f32 %v16, %v4777
    %v4935 = vmul.f32 %v17, %v4777
    %v4936 = vmul.f32 %v18, %v4777
    %v4937 = vmul.f32 %v19, %v4777
    %v4938 = vmul.f32 %v20, %v4781
    %v4939 = vmul.f32 %v21, %v4781
    %v4940 = vmul.f32 %v22, %v4781
    %v4941 = vmul.f32 %v23, %v4781
    %v4942 = vmul.f32 %v24, %v4785
    %v4943 = vmul.f32 %v25, %v4785
    %v4944 = vmul.f32 %v26, %v4785
    %v4945 = vmul.f32 %v27, %v4785
    %v4946 = vmul.f32 %v28, %v4789
    %v4947 = vmul.f32 %v29, %v4789
    %v4948 = vmul.f32 %v30, %v4789
    %v4949 = vmul.f32 %v31, %v4789
    %v4950 = vmul.f32 %v32, %v4793
    %v4951 = vmul.f32 %v33, %v4793
    %v4952 = vmul.f32 %v34, %v4793
    %v4953 = vmul.f32 %v35, %v4793
    %v4954 = vmul.f32 %v36, %v4797
    %v4955 = vmul.f32 %v37, %v4797
    %v4956 = vmul.f32 %v38, %v4797
    %v4957 = vmul.f32 %v39, %v4797
    %v4958 = vmul.f32 %v40, %v4801
    %v4959 = vmul.f32 %v41, %v4801
    %v4960 = vmul.f32 %v42, %v4801
    %v4961 = vmul.f32 %v43, %v4801
    %v4962 = vmul.f32 %v44, %v4805
    %v4963 = vmul.f32 %v45, %v4805
    %v4964 = vmul.f32 %v46, %v4805
    %v4965 = vmul.f32 %v47, %v4805
    %v4966 = vmul.f32 %v48, %v4809
    %v4967 = vmul.f32 %v49, %v4809
    %v4968 = vmul.f32 %v50, %v4809
    %v4969 = vmul.f32 %v51, %v4809
    %v4970 = vmul.f32 %v52, %v4813
    %v4971 = vmul.f32 %v53, %v4813
    %v4972 = vmul.f32 %v54, %v4813
    %v4973 = vmul.f32 %v55, %v4813
    %v4974 = vmul.f32 %v56, %v4817
    %v4975 = vmul.f32 %v57, %v4817
    %v4976 = vmul.f32 %v58, %v4817
    %v4977 = vmul.f32 %v59, %v4817
    %v4978 = vmul.f32 %v60, %v4821
    %v4979 = vmul.f32 %v61, %v4821
    %v4980 = vmul.f32 %v62, %v4821
    %v4981 = vmul.f32 %v63, %v4821
    %v4982 = vmul.f32 %v64, %v4825
    %v4983 = vmul.f32 %v65, %v4825
    %v4984 = vmul.f32 %v66, %v4825
    %v4985 = vmul.f32 %v67, %v4825
    %v4986 = vmul.f32 %v68, %v4829
    %v4987 = vmul.f32 %v69, %v4829
    %v4988 = vmul.f32 %v70, %v4829
    %v4989 = vmul.f32 %v71, %v4829
    %v4990 = vmul.f32 %v72, %v4833
    %v4991 = vmul.f32 %v73, %v4833
    %v4992 = vmul.f32 %v74, %v4833
    %v4993 = vmul.f32 %v75, %v4833
    %v4994 = vmul.f32 %v76, %v4837
    %v4995 = vmul.f32 %v77, %v4837
    %v4996 = vmul.f32 %v78, %v4837
    %v4997 = vmul.f32 %v79, %v4837
    %v4998 = vmul.f32 %v80, %v4841
    %v4999 = vmul.f32 %v81, %v4841
    %v5000 = vmul.f32 %v82, %v4841
    %v5001 = vmul.f32 %v83, %v4841
    %v5002 = vmul.f32 %v84, %v4845
    %v5003 = vmul.f32 %v85, %v4845
    %v5004 = vmul.f32 %v86, %v4845
    %v5005 = vmul.f32 %v87, %v4845
    %v5006 = vmul.f32 %v88, %v4849
    %v5007 = vmul.f32 %v89, %v4849
    %v5008 = vmul.f32 %v90, %v4849
    %v5009 = vmul.f32 %v91, %v4849
    %v5010 = vmul.f32 %v92, %v4853
    %v5011 = vmul.f32 %v93, %v4853
    %v5012 = vmul.f32 %v94, %v4853
    %v5013 = vmul.f32 %v95, %v4853
    %v5014 = vmul.f32 %v96, %v4857
    %v5015 = vmul.f32 %v97, %v4857
    %v5016 = vmul.f32 %v98, %v4857
    %v5017 = vmul.f32 %v99, %v4857
    %v5018 = vmul.f32 %v100, %v4861
    %v5019 = vmul.f32 %v101, %v4861
    %v5020 = vmul.f32 %v102, %v4861
    %v5021 = vmul.f32 %v103, %v4861
    %v5022 = vmul.f32 %v104, %v4865
    %v5023 = vmul.f32 %v105, %v4865
    %v5024 = vmul.f32 %v106, %v4865
    %v5025 = vmul.f32 %v107, %v4865
    %v5026 = vmul.f32 %v108, %v4869
    %v5027 = vmul.f32 %v109, %v4869
    %v5028 = vmul.f32 %v110, %v4869
    %v5029 = vmul.f32 %v111, %v4869
    %v5030 = vmul.f32 %v112, %v4873
    %v5031 = vmul.f32 %v113, %v4873
    %v5032 = vmul.f32 %v114, %v4873
    %v5033 = vmul.f32 %v115, %v4873
    %v5034 = vmul.f32 %v116, %v4877
    %v5035 = vmul.f32 %v117, %v4877
    %v5036 = vmul.f32 %v118, %v4877
    %v5037 = vmul.f32 %v119, %v4877
    %v5038 = vmul.f32 %v120, %v4881
    %v5039 = vmul.f32 %v121, %v4881
    %v5040 = vmul.f32 %v122, %v4881
    %v5041 = vmul.f32 %v123, %v4881
    %v5042 = vmul.f32 %v124, %v4885
    %v5043 = vmul.f32 %v125, %v4885
    %v5044 = vmul.f32 %v126, %v4885
    %v5045 = vmul.f32 %v127, %v4885
    %v5046 = vmul.f32 %v128, %v4889
    %v5047 = vmul.f32 %v129, %v4889
    %v5048 = vmul.f32 %v130, %v4889
    %v5049 = vmul.f32 %v131, %v4889
    %v5050 = vmul.f32 %v132, %v4893
    %v5051 = vmul.f32 %v133, %v4893
    %v5052 = vmul.f32 %v134, %v4893
    %v5053 = vmul.f32 %v135, %v4893
    %v5054 = vmul.f32 %v136, %v4897
    %v5055 = vmul.f32 %v137, %v4897
    %v5056 = vmul.f32 %v138, %v4897
    %v5057 = vmul.f32 %v139, %v4897
    %v5058 = vmul.f32 %v140, %v4901
    %v5059 = vmul.f32 %v141, %v4901
    %v5060 = vmul.f32 %v142, %v4901
    %v5061 = vmul.f32 %v143, %v4901
    %v5062 = vadd.f32 %v4934, %v4938
    %v5063 = vadd.f32 %v5062, %v4942
    %v5064 = vadd.f32 %v5063, %v4946
    %v5065 = vadd.f32 %v5064, %v4950
    %v5066 = vadd.f32 %v5065, %v4954
    %v5067 = vadd.f32 %v5066, %v4958
    %v5068 = vadd.f32 %v5067, %v4962
    %v5069 = vadd.f32 %v5068, %v4966
    %v5070 = vadd.f32 %v5069, %v4970
    %v5071 = vadd.f32 %v5070, %v4974
    %v5072 = vadd.f32 %v5071, %v4978
    %v5073 = vadd.f32 %v5072, %v4982
    %v5074 = vadd.f32 %v5073, %v4986
    %v5075 = vadd.f32 %v5074, %v4990
    %v5076 = vadd.f32 %v5075, %v4994
    %v5077 = vadd.f32 %v5076, %v4998
    %v5078 = vadd.f32 %v5077, %v5002
    %v5079 = vadd.f32 %v5078, %v5006
    %v5080 = vadd.f32 %v5079, %v5010
    %v5081 = vadd.f32 %v5080, %v5014
    %v5082 = vadd.f32 %v5081, %v5018
    %v5083 = vadd.f32 %v5082, %v5022
    %v5084 = vadd.f32 %v5083, %v5026
    %v5085 = vadd.f32 %v5084, %v5030
    %v5086 = vadd.f32 %v5085, %v5034
    %v5087 = vadd.f32 %v5086, %v5038
    %v5088 = vadd.f32 %v5087, %v5042
    %v5089 = vadd.f32 %v5088, %v5046
    %v5090 = vadd.f32 %v5089, %v5050
    %v5091 = vadd.f32 %v5090, %v5054
    %v5092 = vadd.f32 %v5091, %v5058
    %v5093 = vadd.f32 %v4935, %v4939
    %v5094 = vadd.f32 %v5093, %v4943
    %v5095 = vadd.f32 %v5094, %v4947
    %v5096 = vadd.f32 %v5095, %v4951
    %v5097 = vadd.f32 %v5096, %v4955
    %v5098 = vadd.f32 %v5097, %v4959
    %v5099 = vadd.f32 %v5098, %v4963
    %v5100 = vadd.f32 %v5099, %v4967
    %v5101 = vadd.f32 %v5100, %v4971
    %v5102 = vadd.f32 %v5101, %v4975
    %v5103 = vadd.f32 %v5102, %v4979
    %v5104 = vadd.f32 %v5103, %v4983
    %v5105 = vadd.f32 %v5104, %v4987
    %v5106 = vadd.f32 %v5105, %v4991
    %v5107 = vadd.f32 %v5106, %v4995
    %v5108 = vadd.f32 %v5107, %v4999
    %v5109 = vadd.f32 %v5108, %v5003
    %v5110 = vadd.f32 %v5109, %v5007
    %v5111 = vadd.f32 %v5110, %v5011
    %v5112 = vadd.f32 %v5111, %v5015
    %v5113 = vadd.f32 %v5112, %v5019
    %v5114 = vadd.f32 %v5113, %v5023
    %v5115 = vadd.f32 %v5114, %v5027
    %v5116 = vadd.f32 %v5115, %v5031
    %v5117 = vadd.f32 %v5116, %v5035
    %v5118 = vadd.f32 %v5117, %v5039
    %v5119 = vadd.f32 %v5118, %v5043
    %v5120 = vadd.f32 %v5119, %v5047
    %v5121 = vadd.f32 %v5120, %v5051
    %v5122 = vadd.f32 %v5121, %v5055
    %v5123 = vadd.f32 %v5122, %v5059
    %v5124 = vadd.f32 %v4936, %v4940
    %v5125 = vadd.f32 %v5124, %v4944
    %v5126 = vadd.f32 %v5125, %v4948
    %v5127 = vadd.f32 %v5126, %v4952
    %v5128 = vadd.f32 %v5127, %v4956
    %v5129 = vadd.f32 %v5128, %v4960
    %v5130 = vadd.f32 %v5129, %v4964
    %v5131 = vadd.f32 %v5130, %v4968
    %v5132 = vadd.f32 %v5131, %v4972
    %v5133 = vadd.f32 %v5132, %v4976
    %v5134 = vadd.f32 %v5133, %v4980
    %v5135 = vadd.f32 %v5134, %v4984
    %v5136 = vadd.f32 %v5135, %v4988
    %v5137 = vadd.f32 %v5136, %v4992
    %v5138 = vadd.f32 %v5137, %v4996
    %v5139 = vadd.f32 %v5138, %v5000
    %v5140 = vadd.f32 %v5139, %v5004
    %v5141 = vadd.f32 %v5140, %v5008
    %v5142 = vadd.f32 %v5141, %v5012
    %v5143 = vadd.f32 %v5142, %v5016
    %v5144 = vadd.f32 %v5143, %v5020
    %v5145 = vadd.f32 %v5144, %v5024
    %v5146 = vadd.f32 %v5145, %v5028
    %v5147 = vadd.f32 %v5146, %v5032
    %v5148 = vadd.f32 %v5147, %v5036
    %v5149 = vadd.f32 %v5148, %v5040
    %v5150 = vadd.f32 %v5149, %v5044
    %v5151 = vadd.f32 %v5150, %v5048
    %v5152 = vadd.f32 %v5151, %v5052
    %v5153 = vadd.f32 %v5152, %v5056
    %v5154 = vadd.f32 %v5153, %v5060
    %v5155 = vadd.f32 %v4937, %v4941
    %v5156 = vadd.f32 %v5155, %v4945
    %v5157 = vadd.f32 %v5156, %v4949
    %v5158 = vadd.f32 %v5157, %v4953
    %v5159 = vadd.f32 %v5158, %v4957
    %v5160 = vadd.f32 %v5159, %v4961
    %v5161 = vadd.f32 %v5160, %v4965
    %v5162 = vadd.f32 %v5161, %v4969
    %v5163 = vadd.f32 %v5162, %v4973
    %v5164 = vadd.f32 %v5163, %v4977
    %v5165 = vadd.f32 %v5164, %v4981
    %v5166 = vadd.f32 %v5165, %v4985
    %v5167 = vadd.f32 %v5166, %v4989
    %v5168 = vadd.f32 %v5167, %v4993
    %v5169 = vadd.f32 %v5168, %v4997
    %v5170 = vadd.f32 %v5169, %v5001
    %v5171 = vadd.f32 %v5170, %v5005
    %v5172 = vadd.f32 %v5171, %v5009
    %v5173 = vadd.f32 %v5172, %v5013
    %v5174 = vadd.f32 %v5173, %v5017
    %v5175 = vadd.f32 %v5174, %v5021
    %v5176 = vadd.f32 %v5175, %v5025
    %v5177 = vadd.f32 %v5176, %v5029
    %v5178 = vadd.f32 %v5177, %v5033
    %v5179 = vadd.f32 %v5178, %v5037
    %v5180 = vadd.f32 %v5179, %v5041
    %v5181 = vadd.f32 %v5180, %v5045
    %v5182 = vadd.f32 %v5181, %v5049
    %v5183 = vadd.f32 %v5182, %v5053
    %v5184 = vadd.f32 %v5183, %v5057
    %v5185 = vadd.f32 %v5184, %v5061
    %v5186 = vmul.f32 %v3799, %v4570
    %v5187 = vmul.f32 %v3800, %v4571
    %v5188 = vmul.f32 %v3801, %v4572
    %v5189 = vmul.f32 %v3802, %v4573
    %v5190 = vadd.f32 %v5186, %v5187
    %v5191 = vadd.f32 %v5190, %v5188
    %v5192 = vadd.f32 %v5191, %v5189
    %v5193 = vrot.slane %v5192, 4
    %v5194 = vadd.f32 %v5192, %v5193
    %v5195 = vrot.slane %v5194, 2
    %v5196 = vadd.f32 %v5194, %v5195
    %v5197 = vrot.slane %v5196, 1
    %v5198 = vadd.f32 %v5196, %v5197
    %v5199 = vmul.f32 %v4570, %v5092
    %v5200 = vmul.f32 %v4571, %v5123
    %v5201 = vmul.f32 %v4572, %v5154
    %v5202 = vmul.f32 %v4573, %v5185
    %v5203 = vadd.f32 %v5199, %v5200
    %v5204 = vadd.f32 %v5203, %v5201
    %v5205 = vadd.f32 %v5204, %v5202
    %v5206 = vrot.slane %v5205, 4
    %v5207 = vadd.f32 %v5205, %v5206
    %v5208 = vrot.slane %v5207, 2
    %v5209 = vadd.f32 %v5207, %v5208
    %v5210 = vrot.slane %v5209, 1
    %v5211 = vadd.f32 %v5209, %v5210
    %v5212 = vsub.f32 0.0, %v5198
    %v5213 = vmax.f32 %v5211, 1e-08
    %v5214 = vrcp.pop %v5213
    %v5215 = vmul.f32 %v5212, %v5214
    %v5216 = vmul.f32 %v5215, %v4570
    %v5217 = vmul.f32 %v5215, %v4571
    %v5218 = vmul.f32 %v5215, %v4572
    %v5219 = vmul.f32 %v5215, %v4573
    %v5220 = vadd.f32 %v3795, %v5216
    %v5221 = vadd.f32 %v3796, %v5217
    %v5222 = vadd.f32 %v3797, %v5218
    %v5223 = vadd.f32 %v3798, %v5219
    %v5224 = vmul.f32 %v5215, %v5092
    %v5225 = vmul.f32 %v5215, %v5123
    %v5226 = vmul.f32 %v5215, %v5154
    %v5227 = vmul.f32 %v5215, %v5185
    %v5228 = vadd.f32 %v3799, %v5224
    %v5229 = vadd.f32 %v3800, %v5225
    %v5230 = vadd.f32 %v3801, %v5226
    %v5231 = vadd.f32 %v3802, %v5227
    %v5232 = vsub.f32 %v5228, %v3799
    %v5233 = vsub.f32 %v5229, %v3800
    %v5234 = vsub.f32 %v5230, %v3801
    %v5235 = vsub.f32 %v5231, %v3802
    %v5236 = vmul.f32 %v5216, %v5232
    %v5237 = vmul.f32 %v5217, %v5233
    %v5238 = vmul.f32 %v5218, %v5234
    %v5239 = vmul.f32 %v5219, %v5235
    %v5240 = vadd.f32 %v5236, %v5237
    %v5241 = vadd.f32 %v5240, %v5238
    %v5242 = vadd.f32 %v5241, %v5239
    %v5243 = vrot.slane %v5242, 4
    %v5244 = vadd.f32 %v5242, %v5243
    %v5245 = vrot.slane %v5244, 2
    %v5246 = vadd.f32 %v5244, %v5245
    %v5247 = vrot.slane %v5246, 1
    %v5248 = vadd.f32 %v5246, %v5247
    %v5249 = vmax.f32 %v5248, 1e-05
    %v5250 = vrcp.pop %v5249
    %v5251 = vmul.f32 1.0, %v5250
    %v5256 = vcombine.high %v5232, %v5232
    %v5258 = vunpack.c.l.s4 1966171168
    %v5259 = vunpack.c.0.s8 %v5258
    %v5260 = vlaneseq
    %v5261 = vshrl.u32 %v5260, 7
    %v5262 = vsub.s32 %v5259, %v5261
    %v5263 = vrot.slane %v5232, %v5262
    %v5265 = vunpack.c.l.s4 1966171168
    %v5266 = vunpack.c.0.s8 %v5265
    %v5267 = vlaneseq
    %v5268 = vshrl.u32 %v5267, 7
    %v5269 = vsub.s32 %v5266, %v5268
    %v5270 = vrot.slane %v5256, %v5269
    %v5271 = vcombine.high %v5263, %v5263
    %v5272 = vcombine.high %v5270, %v5270
    %v5274 = vunpack.c.l.s4 1966171168
    %v5275 = vunpack.c.0.s8 %v5274
    %v5276 = vlaneseq
    %v5277 = vshrl.u32 %v5276, 7
    %v5278 = vsub.s32 %v5275, %v5277
    %v5279 = vrot.slane %v5263, %v5278
    %v5281 = vunpack.c.l.s4 1966171168
    %v5282 = vunpack.c.0.s8 %v5281
    %v5283 = vlaneseq
    %v5284 = vshrl.u32 %v5283, 7
    %v5285 = vsub.s32 %v5282, %v5284
    %v5286 = vrot.slane %v5270, %v5285
    %v5288 = vunpack.c.l.s4 1966171168
    %v5289 = vunpack.c.0.s8 %v5288
    %v5290 = vlaneseq
    %v5291 = vshrl.u32 %v5290, 7
    %v5292 = vsub.s32 %v5289, %v5291
    %v5293 = vrot.slane %v5271, %v5292
    %v5295 = vunpack.c.l.s4 1966171168
    %v5296 = vunpack.c.0.s8 %v5295
    %v5297 = vlaneseq
    %v5298 = vshrl.u32 %v5297, 7
    %v5299 = vsub.s32 %v5296, %v5298
    %v5300 = vrot.slane %v5272, %v5299
    %v5301 = vcombine.high %v5279, %v5279
    %v5302 = vcombine.high %v5286, %v5286
    %v5303 = vcombine.high %v5293, %v5293
    %v5304 = vcombine.high %v5300, %v5300
    %v5305 = vcombine.high %v5233, %v5233
    %v5307 = vunpack.c.l.s4 1966171168
    %v5308 = vunpack.c.0.s8 %v5307
    %v5309 = vlaneseq
    %v5310 = vshrl.u32 %v5309, 7
    %v5311 = vsub.s32 %v5308, %v5310
    %v5312 = vrot.slane %v5233, %v5311
    %v5314 = vunpack.c.l.s4 1966171168
    %v5315 = vunpack.c.0.s8 %v5314
    %v5316 = vlaneseq
    %v5317 = vshrl.u32 %v5316, 7
    %v5318 = vsub.s32 %v5315, %v5317
    %v5319 = vrot.slane %v5305, %v5318
    %v5320 = vcombine.high %v5312, %v5312
    %v5321 = vcombine.high %v5319, %v5319
    %v5323 = vunpack.c.l.s4 1966171168
    %v5324 = vunpack.c.0.s8 %v5323
    %v5325 = vlaneseq
    %v5326 = vshrl.u32 %v5325, 7
    %v5327 = vsub.s32 %v5324, %v5326
    %v5328 = vrot.slane %v5312, %v5327
    %v5330 = vunpack.c.l.s4 1966171168
    %v5331 = vunpack.c.0.s8 %v5330
    %v5332 = vlaneseq
    %v5333 = vshrl.u32 %v5332, 7
    %v5334 = vsub.s32 %v5331, %v5333
    %v5335 = vrot.slane %v5319, %v5334
    %v5337 = vunpack.c.l.s4 1966171168
    %v5338 = vunpack.c.0.s8 %v5337
    %v5339 = vlaneseq
    %v5340 = vshrl.u32 %v5339, 7
    %v5341 = vsub.s32 %v5338, %v5340
    %v5342 = vrot.slane %v5320, %v5341
    %v5344 = vunpack.c.l.s4 1966171168
    %v5345 = vunpack.c.0.s8 %v5344
    %v5346 = vlaneseq
    %v5347 = vshrl.u32 %v5346, 7
    %v5348 = vsub.s32 %v5345, %v5347
    %v5349 = vrot.slane %v5321, %v5348
    %v5350 = vcombine.high %v5328, %v5328
    %v5351 = vcombine.high %v5335, %v5335
    %v5352 = vcombine.high %v5342, %v5342
    %v5353 = vcombine.high %v5349, %v5349
    %v5354 = vcombine.high %v5234, %v5234
    %v5356 = vunpack.c.l.s4 1966171168
    %v5357 = vunpack.c.0.s8 %v5356
    %v5358 = vlaneseq
    %v5359 = vshrl.u32 %v5358, 7
    %v5360 = vsub.s32 %v5357, %v5359
    %v5361 = vrot.slane %v5234, %v5360
    %v5363 = vunpack.c.l.s4 1966171168
    %v5364 = vunpack.c.0.s8 %v5363
    %v5365 = vlaneseq
    %v5366 = vshrl.u32 %v5365, 7
    %v5367 = vsub.s32 %v5364, %v5366
    %v5368 = vrot.slane %v5354, %v5367
    %v5369 = vcombine.high %v5361, %v5361
    %v5370 = vcombine.high %v5368, %v5368
    %v5372 = vunpack.c.l.s4 1966171168
    %v5373 = vunpack.c.0.s8 %v5372
    %v5374 = vlaneseq
    %v5375 = vshrl.u32 %v5374, 7
    %v5376 = vsub.s32 %v5373, %v5375
    %v5377 = vrot.slane %v5361, %v5376
    %v5379 = vunpack.c.l.s4 1966171168
    %v5380 = vunpack.c.0.s8 %v5379
    %v5381 = vlaneseq
    %v5382 = vshrl.u32 %v5381, 7
    %v5383 = vsub.s32 %v5380, %v5382
    %v5384 = vrot.slane %v5368, %v5383
    %v5386 = vunpack.c.l.s4 1966171168
    %v5387 = vunpack.c.0.s8 %v5386
    %v5388 = vlaneseq
    %v5389 = vshrl.u32 %v5388, 7
    %v5390 = vsub.s32 %v5387, %v5389
    %v5391 = vrot.slane %v5369, %v5390
    %v5393 = vunpack.c.l.s4 1966171168
    %v5394 = vunpack.c.0.s8 %v5393
    %v5395 = vlaneseq
    %v5396 = vshrl.u32 %v5395, 7
    %v5397 = vsub.s32 %v5394, %v5396
    %v5398 = vrot.slane %v5370, %v5397
    %v5399 = vcombine.high %v5377, %v5377
    %v5400 = vcombine.high %v5384, %v5384
    %v5401 = vcombine.high %v5391, %v5391
    %v5402 = vcombine.high %v5398, %v5398
    %v5403 = vcombine.high %v5235, %v5235
    %v5405 = vunpack.c.l.s4 1966171168
    %v5406 = vunpack.c.0.s8 %v5405
    %v5407 = vlaneseq
    %v5408 = vshrl.u32 %v5407, 7
    %v5409 = vsub.s32 %v5406, %v5408
    %v5410 = vrot.slane %v5235, %v5409
    %v5412 = vunpack.c.l.s4 1966171168
    %v5413 = vunpack.c.0.s8 %v5412
    %v5414 = vlaneseq
    %v5415 = vshrl.u32 %v5414, 7
    %v5416 = vsub.s32 %v5413, %v5415
    %v5417 = vrot.slane %v5403, %v5416
    %v5418 = vcombine.high %v5410, %v5410
    %v5419 = vcombine.high %v5417, %v5417
    %v5421 = vunpack.c.l.s4 1966171168
    %v5422 = vunpack.c.0.s8 %v5421
    %v5423 = vlaneseq
    %v5424 = vshrl.u32 %v5423, 7
    %v5425 = vsub.s32 %v5422, %v5424
    %v5426 = vrot.slane %v5410, %v5425
    %v5428 = vunpack.c.l.s4 1966171168
    %v5429 = vunpack.c.0.s8 %v5428
    %v5430 = vlaneseq
    %v5431 = vshrl.u32 %v5430, 7
    %v5432 = vsub.s32 %v5429, %v5431
    %v5433 = vrot.slane %v5417, %v5432
    %v5435 = vunpack.c.l.s4 1966171168
    %v5436 = vunpack.c.0.s8 %v5435
    %v5437 = vlaneseq
    %v5438 = vshrl.u32 %v5437, 7
    %v5439 = vsub.s32 %v5436, %v5438
    %v5440 = vrot.slane %v5418, %v5439
    %v5442 = vunpack.c.l.s4 1966171168
    %v5443 = vunpack.c.0.s8 %v5442
    %v5444 = vlaneseq
    %v5445 = vshrl.u32 %v5444, 7
    %v5446 = vsub.s32 %v5443, %v5445
    %v5447 = vrot.slane %v5419, %v5446
    %v5448 = vcombine.high %v5426, %v5426
    %v5449 = vcombine.high %v5433, %v5433
    %v5450 = vcombine.high %v5440, %v5440
    %v5451 = vcombine.high %v5447, %v5447
    %v5452 = vlaneseq
    %v5453 = vshrl.u32 %v5452, 7
    %v5454 = vsub.s32 0, %v5453
    %v5455 = vrot.slane %v5279, %v5454
    %v5456 = vlaneseq
    %v5457 = vshrl.u32 %v5456, 7
    %v5458 = vsub.s32 0, %v5457
    %v5459 = vrot.slane %v5293, %v5458
    %v5460 = vlaneseq
    %v5461 = vshrl.u32 %v5460, 7
    %v5462 = vsub.s32 0, %v5461
    %v5463 = vrot.slane %v5301, %v5462
    %v5464 = vlaneseq
    %v5465 = vshrl.u32 %v5464, 7
    %v5466 = vsub.s32 0, %v5465
    %v5467 = vrot.slane %v5303, %v5466
    %v5468 = vlaneseq
    %v5469 = vshrl.u32 %v5468, 7
    %v5470 = vsub.s32 0, %v5469
    %v5471 = vrot.slane %v5286, %v5470
    %v5472 = vlaneseq
    %v5473 = vshrl.u32 %v5472, 7
    %v5474 = vsub.s32 0, %v5473
    %v5475 = vrot.slane %v5300, %v5474
    %v5476 = vlaneseq
    %v5477 = vshrl.u32 %v5476, 7
    %v5478 = vsub.s32 0, %v5477
    %v5479 = vrot.slane %v5302, %v5478
    %v5480 = vlaneseq
    %v5481 = vshrl.u32 %v5480, 7
    %v5482 = vsub.s32 0, %v5481
    %v5483 = vrot.slane %v5304, %v5482
    %v5484 = vlaneseq
    %v5485 = vshrl.u32 %v5484, 7
    %v5486 = vsub.s32 0, %v5485
    %v5487 = vrot.slane %v5328, %v5486
    %v5488 = vlaneseq
    %v5489 = vshrl.u32 %v5488, 7
    %v5490 = vsub.s32 0, %v5489
    %v5491 = vrot.slane %v5342, %v5490
    %v5492 = vlaneseq
    %v5493 = vshrl.u32 %v5492, 7
    %v5494 = vsub.s32 0, %v5493
    %v5495 = vrot.slane %v5350, %v5494
    %v5496 = vlaneseq
    %v5497 = vshrl.u32 %v5496, 7
    %v5498 = vsub.s32 0, %v5497
    %v5499 = vrot.slane %v5352, %v5498
    %v5500 = vlaneseq
    %v5501 = vshrl.u32 %v5500, 7
    %v5502 = vsub.s32 0, %v5501
    %v5503 = vrot.slane %v5335, %v5502
    %v5504 = vlaneseq
    %v5505 = vshrl.u32 %v5504, 7
    %v5506 = vsub.s32 0, %v5505
    %v5507 = vrot.slane %v5349, %v5506
    %v5508 = vlaneseq
    %v5509 = vshrl.u32 %v5508, 7
    %v5510 = vsub.s32 0, %v5509
    %v5511 = vrot.slane %v5351, %v5510
    %v5512 = vlaneseq
    %v5513 = vshrl.u32 %v5512, 7
    %v5514 = vsub.s32 0, %v5513
    %v5515 = vrot.slane %v5353, %v5514
    %v5516 = vlaneseq
    %v5517 = vshrl.u32 %v5516, 7
    %v5518 = vsub.s32 0, %v5517
    %v5519 = vrot.slane %v5377, %v5518
    %v5520 = vlaneseq
    %v5521 = vshrl.u32 %v5520, 7
    %v5522 = vsub.s32 0, %v5521
    %v5523 = vrot.slane %v5391, %v5522
    %v5524 = vlaneseq
    %v5525 = vshrl.u32 %v5524, 7
    %v5526 = vsub.s32 0, %v5525
    %v5527 = vrot.slane %v5399, %v5526
    %v5528 = vlaneseq
    %v5529 = vshrl.u32 %v5528, 7
    %v5530 = vsub.s32 0, %v5529
    %v5531 = vrot.slane %v5401, %v5530
    %v5532 = vlaneseq
    %v5533 = vshrl.u32 %v5532, 7
    %v5534 = vsub.s32 0, %v5533
    %v5535 = vrot.slane %v5384, %v5534
    %v5536 = vlaneseq
    %v5537 = vshrl.u32 %v5536, 7
    %v5538 = vsub.s32 0, %v5537
    %v5539 = vrot.slane %v5398, %v5538
    %v5540 = vlaneseq
    %v5541 = vshrl.u32 %v5540, 7
    %v5542 = vsub.s32 0, %v5541
    %v5543 = vrot.slane %v5400, %v5542
    %v5544 = vlaneseq
    %v5545 = vshrl.u32 %v5544, 7
    %v5546 = vsub.s32 0, %v5545
    %v5547 = vrot.slane %v5402, %v5546
    %v5548 = vlaneseq
    %v5549 = vshrl.u32 %v5548, 7
    %v5550 = vsub.s32 0, %v5549
    %v5551 = vrot.slane %v5426, %v5550
    %v5552 = vlaneseq
    %v5553 = vshrl.u32 %v5552, 7
    %v5554 = vsub.s32 0, %v5553
    %v5555 = vrot.slane %v5440, %v5554
    %v5556 = vlaneseq
    %v5557 = vshrl.u32 %v5556, 7
    %v5558 = vsub.s32 0, %v5557
    %v5559 = vrot.slane %v5448, %v5558
    %v5560 = vlaneseq
    %v5561 = vshrl.u32 %v5560, 7
    %v5562 = vsub.s32 0, %v5561
    %v5563 = vrot.slane %v5450, %v5562
    %v5564 = vlaneseq
    %v5565 = vshrl.u32 %v5564, 7
    %v5566 = vsub.s32 0, %v5565
    %v5567 = vrot.slane %v5433, %v5566
    %v5568 = vlaneseq
    %v5569 = vshrl.u32 %v5568, 7
    %v5570 = vsub.s32 0, %v5569
    %v5571 = vrot.slane %v5447, %v5570
    %v5572 = vlaneseq
    %v5573 = vshrl.u32 %v5572, 7
    %v5574 = vsub.s32 0, %v5573
    %v5575 = vrot.slane %v5449, %v5574
    %v5576 = vlaneseq
    %v5577 = vshrl.u32 %v5576, 7
    %v5578 = vsub.s32 0, %v5577
    %v5579 = vrot.slane %v5451, %v5578
    %v5612 = vmul.f32 %v3803, %v5455
    %v5613 = vmul.f32 %v3804, %v5455
    %v5614 = vmul.f32 %v3805, %v5455
    %v5615 = vmul.f32 %v3806, %v5455
    %v5616 = vmul.f32 %v3807, %v5459
    %v5617 = vmul.f32 %v3808, %v5459
    %v5618 = vmul.f32 %v3809, %v5459
    %v5619 = vmul.f32 %v3810, %v5459
    %v5620 = vmul.f32 %v3811, %v5463
    %v5621 = vmul.f32 %v3812, %v5463
    %v5622 = vmul.f32 %v3813, %v5463
    %v5623 = vmul.f32 %v3814, %v5463
    %v5624 = vmul.f32 %v3815, %v5467
    %v5625 = vmul.f32 %v3816, %v5467
    %v5626 = vmul.f32 %v3817, %v5467
    %v5627 = vmul.f32 %v3818, %v5467
    %v5628 = vmul.f32 %v3819, %v5471
    %v5629 = vmul.f32 %v3820, %v5471
    %v5630 = vmul.f32 %v3821, %v5471
    %v5631 = vmul.f32 %v3822, %v5471
    %v5632 = vmul.f32 %v3823, %v5475
    %v5633 = vmul.f32 %v3824, %v5475
    %v5634 = vmul.f32 %v3825, %v5475
    %v5635 = vmul.f32 %v3826, %v5475
    %v5636 = vmul.f32 %v3827, %v5479
    %v5637 = vmul.f32 %v3828, %v5479
    %v5638 = vmul.f32 %v3829, %v5479
    %v5639 = vmul.f32 %v3830, %v5479
    %v5640 = vmul.f32 %v3831, %v5483
    %v5641 = vmul.f32 %v3832, %v5483
    %v5642 = vmul.f32 %v3833, %v5483
    %v5643 = vmul.f32 %v3834, %v5483
    %v5644 = vmul.f32 %v3835, %v5487
    %v5645 = vmul.f32 %v3836, %v5487
    %v5646 = vmul.f32 %v3837, %v5487
    %v5647 = vmul.f32 %v3838, %v5487
    %v5648 = vmul.f32 %v3839, %v5491
    %v5649 = vmul.f32 %v3840, %v5491
    %v5650 = vmul.f32 %v3841, %v5491
    %v5651 = vmul.f32 %v3842, %v5491
    %v5652 = vmul.f32 %v3843, %v5495
    %v5653 = vmul.f32 %v3844, %v5495
    %v5654 = vmul.f32 %v3845, %v5495
    %v5655 = vmul.f32 %v3846, %v5495
    %v5656 = vmul.f32 %v3847, %v5499
    %v5657 = vmul.f32 %v3848, %v5499
    %v5658 = vmul.f32 %v3849, %v5499
    %v5659 = vmul.f32 %v3850, %v5499
    %v5660 = vmul.f32 %v3851, %v5503
    %v5661 = vmul.f32 %v3852, %v5503
    %v5662 = vmul.f32 %v3853, %v5503
    %v5663 = vmul.f32 %v3854, %v5503
    %v5664 = vmul.f32 %v3855, %v5507
    %v5665 = vmul.f32 %v3856, %v5507
    %v5666 = vmul.f32 %v3857, %v5507
    %v5667 = vmul.f32 %v3858, %v5507
    %v5668 = vmul.f32 %v3859, %v5511
    %v5669 = vmul.f32 %v3860, %v5511
    %v5670 = vmul.f32 %v3861, %v5511
    %v5671 = vmul.f32 %v3862, %v5511
    %v5672 = vmul.f32 %v3863, %v5515
    %v5673 = vmul.f32 %v3864, %v5515
    %v5674 = vmul.f32 %v3865, %v5515
    %v5675 = vmul.f32 %v3866, %v5515
    %v5676 = vmul.f32 %v3867, %v5519
    %v5677 = vmul.f32 %v3868, %v5519
    %v5678 = vmul.f32 %v3869, %v5519
    %v5679 = vmul.f32 %v3870, %v5519
    %v5680 = vmul.f32 %v3871, %v5523
    %v5681 = vmul.f32 %v3872, %v5523
    %v5682 = vmul.f32 %v3873, %v5523
    %v5683 = vmul.f32 %v3874, %v5523
    %v5684 = vmul.f32 %v3875, %v5527
    %v5685 = vmul.f32 %v3876, %v5527
    %v5686 = vmul.f32 %v3877, %v5527
    %v5687 = vmul.f32 %v3878, %v5527
    %v5688 = vmul.f32 %v3879, %v5531
    %v5689 = vmul.f32 %v3880, %v5531
    %v5690 = vmul.f32 %v3881, %v5531
    %v5691 = vmul.f32 %v3882, %v5531
    %v5692 = vmul.f32 %v3883, %v5535
    %v5693 = vmul.f32 %v3884, %v5535
    %v5694 = vmul.f32 %v3885, %v5535
    %v5695 = vmul.f32 %v3886, %v5535
    %v5696 = vmul.f32 %v3887, %v5539
    %v5697 = vmul.f32 %v3888, %v5539
    %v5698 = vmul.f32 %v3889, %v5539
    %v5699 = vmul.f32 %v3890, %v5539
    %v5700 = vmul.f32 %v3891, %v5543
    %v5701 = vmul.f32 %v3892, %v5543
    %v5702 = vmul.f32 %v3893, %v5543
    %v5703 = vmul.f32 %v3894, %v5543
    %v5704 = vmul.f32 %v3895, %v5547
    %v5705 = vmul.f32 %v3896, %v5547
    %v5706 = vmul.f32 %v3897, %v5547
    %v5707 = vmul.f32 %v3898, %v5547
    %v5708 = vmul.f32 %v3899, %v5551
    %v5709 = vmul.f32 %v3900, %v5551
    %v5710 = vmul.f32 %v3901, %v5551
    %v5711 = vmul.f32 %v3902, %v5551
    %v5712 = vmul.f32 %v3903, %v5555
    %v5713 = vmul.f32 %v3904, %v5555
    %v5714 = vmul.f32 %v3905, %v5555
    %v5715 = vmul.f32 %v3906, %v5555
    %v5716 = vmul.f32 %v3907, %v5559
    %v5717 = vmul.f32 %v3908, %v5559
    %v5718 = vmul.f32 %v3909, %v5559
    %v5719 = vmul.f32 %v3910, %v5559
    %v5720 = vmul.f32 %v3911, %v5563
    %v5721 = vmul.f32 %v3912, %v5563
    %v5722 = vmul.f32 %v3913, %v5563
    %v5723 = vmul.f32 %v3914, %v5563
    %v5724 = vmul.f32 %v3915, %v5567
    %v5725 = vmul.f32 %v3916, %v5567
    %v5726 = vmul.f32 %v3917, %v5567
    %v5727 = vmul.f32 %v3918, %v5567
    %v5728 = vmul.f32 %v3919, %v5571
    %v5729 = vmul.f32 %v3920, %v5571
    %v5730 = vmul.f32 %v3921, %v5571
    %v5731 = vmul.f32 %v3922, %v5571
    %v5732 = vmul.f32 %v3923, %v5575
    %v5733 = vmul.f32 %v3924, %v5575
    %v5734 = vmul.f32 %v3925, %v5575
    %v5735 = vmul.f32 %v3926, %v5575
    %v5736 = vmul.f32 %v3927, %v5579
    %v5737 = vmul.f32 %v3928, %v5579
    %v5738 = vmul.f32 %v3929, %v5579
    %v5739 = vmul.f32 %v3930, %v5579
    %v5740 = vadd.f32 %v5612, %v5616
    %v5741 = vadd.f32 %v5740, %v5620
    %v5742 = vadd.f32 %v5741, %v5624
    %v5743 = vadd.f32 %v5742, %v5628
    %v5744 = vadd.f32 %v5743, %v5632
    %v5745 = vadd.f32 %v5744, %v5636
    %v5746 = vadd.f32 %v5745, %v5640
    %v5747 = vadd.f32 %v5746, %v5644
    %v5748 = vadd.f32 %v5747, %v5648
    %v5749 = vadd.f32 %v5748, %v5652
    %v5750 = vadd.f32 %v5749, %v5656
    %v5751 = vadd.f32 %v5750, %v5660
    %v5752 = vadd.f32 %v5751, %v5664
    %v5753 = vadd.f32 %v5752, %v5668
    %v5754 = vadd.f32 %v5753, %v5672
    %v5755 = vadd.f32 %v5754, %v5676
    %v5756 = vadd.f32 %v5755, %v5680
    %v5757 = vadd.f32 %v5756, %v5684
    %v5758 = vadd.f32 %v5757, %v5688
    %v5759 = vadd.f32 %v5758, %v5692
    %v5760 = vadd.f32 %v5759, %v5696
    %v5761 = vadd.f32 %v5760, %v5700
    %v5762 = vadd.f32 %v5761, %v5704
    %v5763 = vadd.f32 %v5762, %v5708
    %v5764 = vadd.f32 %v5763, %v5712
    %v5765 = vadd.f32 %v5764, %v5716
    %v5766 = vadd.f32 %v5765, %v5720
    %v5767 = vadd.f32 %v5766, %v5724
    %v5768 = vadd.f32 %v5767, %v5728
    %v5769 = vadd.f32 %v5768, %v5732
    %v5770 = vadd.f32 %v5769, %v5736
    %v5771 = vadd.f32 %v5613, %v5617
    %v5772 = vadd.f32 %v5771, %v5621
    %v5773 = vadd.f32 %v5772, %v5625
    %v5774 = vadd.f32 %v5773, %v5629
    %v5775 = vadd.f32 %v5774, %v5633
    %v5776 = vadd.f32 %v5775, %v5637
    %v5777 = vadd.f32 %v5776, %v5641
    %v5778 = vadd.f32 %v5777, %v5645
    %v5779 = vadd.f32 %v5778, %v5649
    %v5780 = vadd.f32 %v5779, %v5653
    %v5781 = vadd.f32 %v5780, %v5657
    %v5782 = vadd.f32 %v5781, %v5661
    %v5783 = vadd.f32 %v5782, %v5665
    %v5784 = vadd.f32 %v5783, %v5669
    %v5785 = vadd.f32 %v5784, %v5673
    %v5786 = vadd.f32 %v5785, %v5677
    %v5787 = vadd.f32 %v5786, %v5681
    %v5788 = vadd.f32 %v5787, %v5685
    %v5789 = vadd.f32 %v5788, %v5689
    %v5790 = vadd.f32 %v5789, %v5693
    %v5791 = vadd.f32 %v5790, %v5697
    %v5792 = vadd.f32 %v5791, %v5701
    %v5793 = vadd.f32 %v5792, %v5705
    %v5794 = vadd.f32 %v5793, %v5709
    %v5795 = vadd.f32 %v5794, %v5713
    %v5796 = vadd.f32 %v5795, %v5717
    %v5797 = vadd.f32 %v5796, %v5721
    %v5798 = vadd.f32 %v5797, %v5725
    %v5799 = vadd.f32 %v5798, %v5729
    %v5800 = vadd.f32 %v5799, %v5733
    %v5801 = vadd.f32 %v5800, %v5737
    %v5802 = vadd.f32 %v5614, %v5618
    %v5803 = vadd.f32 %v5802, %v5622
    %v5804 = vadd.f32 %v5803, %v5626
    %v5805 = vadd.f32 %v5804, %v5630
    %v5806 = vadd.f32 %v5805, %v5634
    %v5807 = vadd.f32 %v5806, %v5638
    %v5808 = vadd.f32 %v5807, %v5642
    %v5809 = vadd.f32 %v5808, %v5646
    %v5810 = vadd.f32 %v5809, %v5650
    %v5811 = vadd.f32 %v5810, %v5654
    %v5812 = vadd.f32 %v5811, %v5658
    %v5813 = vadd.f32 %v5812, %v5662
    %v5814 = vadd.f32 %v5813, %v5666
    %v5815 = vadd.f32 %v5814, %v5670
    %v5816 = vadd.f32 %v5815, %v5674
    %v5817 = vadd.f32 %v5816, %v5678
    %v5818 = vadd.f32 %v5817, %v5682
    %v5819 = vadd.f32 %v5818, %v5686
    %v5820 = vadd.f32 %v5819, %v5690
    %v5821 = vadd.f32 %v5820, %v5694
    %v5822 = vadd.f32 %v5821, %v5698
    %v5823 = vadd.f32 %v5822, %v5702
    %v5824 = vadd.f32 %v5823, %v5706
    %v5825 = vadd.f32 %v5824, %v5710
    %v5826 = vadd.f32 %v5825, %v5714
    %v5827 = vadd.f32 %v5826, %v5718
    %v5828 = vadd.f32 %v5827, %v5722
    %v5829 = vadd.f32 %v5828, %v5726
    %v5830 = vadd.f32 %v5829, %v5730
    %v5831 = vadd.f32 %v5830, %v5734
    %v5832 = vadd.f32 %v5831, %v5738
    %v5833 = vadd.f32 %v5615, %v5619
    %v5834 = vadd.f32 %v5833, %v5623
    %v5835 = vadd.f32 %v5834, %v5627
    %v5836 = vadd.f32 %v5835, %v5631
    %v5837 = vadd.f32 %v5836, %v5635
    %v5838 = vadd.f32 %v5837, %v5639
    %v5839 = vadd.f32 %v5838, %v5643
    %v5840 = vadd.f32 %v5839, %v5647
    %v5841 = vadd.f32 %v5840, %v5651
    %v5842 = vadd.f32 %v5841, %v5655
    %v5843 = vadd.f32 %v5842, %v5659
    %v5844 = vadd.f32 %v5843, %v5663
    %v5845 = vadd.f32 %v5844, %v5667
    %v5846 = vadd.f32 %v5845, %v5671
    %v5847 = vadd.f32 %v5846, %v5675
    %v5848 = vadd.f32 %v5847, %v5679
    %v5849 = vadd.f32 %v5848, %v5683
    %v5850 = vadd.f32 %v5849, %v5687
    %v5851 = vadd.f32 %v5850, %v5691
    %v5852 = vadd.f32 %v5851, %v5695
    %v5853 = vadd.f32 %v5852, %v5699
    %v5854 = vadd.f32 %v5853, %v5703
    %v5855 = vadd.f32 %v5854, %v5707
    %v5856 = vadd.f32 %v5855, %v5711
    %v5857 = vadd.f32 %v5856, %v5715
    %v5858 = vadd.f32 %v5857, %v5719
    %v5859 = vadd.f32 %v5858, %v5723
    %v5860 = vadd.f32 %v5859, %v5727
    %v5861 = vadd.f32 %v5860, %v5731
    %v5862 = vadd.f32 %v5861, %v5735
    %v5863 = vadd.f32 %v5862, %v5739
    %v5864 = vmul.f32 %v5770, %v5232
    %v5865 = vmul.f32 %v5801, %v5233
    %v5866 = vmul.f32 %v5832, %v5234
    %v5867 = vmul.f32 %v5863, %v5235
    %v5868 = vadd.f32 %v5864, %v5865
    %v5869 = vadd.f32 %v5868, %v5866
    %v5870 = vadd.f32 %v5869, %v5867
    %v5871 = vrot.slane %v5870, 4
    %v5872 = vadd.f32 %v5870, %v5871
    %v5873 = vrot.slane %v5872, 2
    %v5874 = vadd.f32 %v5872, %v5873
    %v5875 = vrot.slane %v5874, 1
    %v5876 = vadd.f32 %v5874, %v5875
    %v5877 = vmul.f32 %v5876, %v5251
    %v5878 = vmul.f32 %v5216, %v5251
    %v5879 = vmul.f32 %v5217, %v5251
    %v5880 = vmul.f32 %v5218, %v5251
    %v5881 = vmul.f32 %v5219, %v5251
    %v5882 = vadd.f32 %v5877, 1.0
    %v5883 = vmul.f32 %v5216, %v5882
    %v5884 = vmul.f32 %v5217, %v5882
    %v5885 = vmul.f32 %v5218, %v5882
    %v5886 = vmul.f32 %v5219, %v5882
    %v5887 = vsub.f32 %v5883, %v5770
    %v5888 = vsub.f32 %v5884, %v5801
    %v5889 = vsub.f32 %v5885, %v5832
    %v5890 = vsub.f32 %v5886, %v5863
    %v5895 = vcombine.high %v5878, %v5878
    %v5897 = vunpack.c.l.s4 1966171168
    %v5898 = vunpack.c.0.s8 %v5897
    %v5899 = vlaneseq
    %v5900 = vshrl.u32 %v5899, 7
    %v5901 = vsub.s32 %v5898, %v5900
    %v5902 = vrot.slane %v5878, %v5901
    %v5904 = vunpack.c.l.s4 1966171168
    %v5905 = vunpack.c.0.s8 %v5904
    %v5906 = vlaneseq
    %v5907 = vshrl.u32 %v5906, 7
    %v5908 = vsub.s32 %v5905, %v5907
    %v5909 = vrot.slane %v5895, %v5908
    %v5910 = vcombine.high %v5902, %v5902
    %v5911 = vcombine.high %v5909, %v5909
    %v5913 = vunpack.c.l.s4 1966171168
    %v5914 = vunpack.c.0.s8 %v5913
    %v5915 = vlaneseq
    %v5916 = vshrl.u32 %v5915, 7
    %v5917 = vsub.s32 %v5914, %v5916
    %v5918 = vrot.slane %v5902, %v5917
    %v5920 = vunpack.c.l.s4 1966171168
    %v5921 = vunpack.c.0.s8 %v5920
    %v5922 = vlaneseq
    %v5923 = vshrl.u32 %v5922, 7
    %v5924 = vsub.s32 %v5921, %v5923
    %v5925 = vrot.slane %v5909, %v5924
    %v5927 = vunpack.c.l.s4 1966171168
    %v5928 = vunpack.c.0.s8 %v5927
    %v5929 = vlaneseq
    %v5930 = vshrl.u32 %v5929, 7
    %v5931 = vsub.s32 %v5928, %v5930
    %v5932 = vrot.slane %v5910, %v5931
    %v5934 = vunpack.c.l.s4 1966171168
    %v5935 = vunpack.c.0.s8 %v5934
    %v5936 = vlaneseq
    %v5937 = vshrl.u32 %v5936, 7
    %v5938 = vsub.s32 %v5935, %v5937
    %v5939 = vrot.slane %v5911, %v5938
    %v5940 = vcombine.high %v5918, %v5918
    %v5941 = vcombine.high %v5925, %v5925
    %v5942 = vcombine.high %v5932, %v5932
    %v5943 = vcombine.high %v5939, %v5939
    %v5944 = vcombine.high %v5879, %v5879
    %v5946 = vunpack.c.l.s4 1966171168
    %v5947 = vunpack.c.0.s8 %v5946
    %v5948 = vlaneseq
    %v5949 = vshrl.u32 %v5948, 7
    %v5950 = vsub.s32 %v5947, %v5949
    %v5951 = vrot.slane %v5879, %v5950
    %v5953 = vunpack.c.l.s4 1966171168
    %v5954 = vunpack.c.0.s8 %v5953
    %v5955 = vlaneseq
    %v5956 = vshrl.u32 %v5955, 7
    %v5957 = vsub.s32 %v5954, %v5956
    %v5958 = vrot.slane %v5944, %v5957
    %v5959 = vcombine.high %v5951, %v5951
    %v5960 = vcombine.high %v5958, %v5958
    %v5962 = vunpack.c.l.s4 1966171168
    %v5963 = vunpack.c.0.s8 %v5962
    %v5964 = vlaneseq
    %v5965 = vshrl.u32 %v5964, 7
    %v5966 = vsub.s32 %v5963, %v5965
    %v5967 = vrot.slane %v5951, %v5966
    %v5969 = vunpack.c.l.s4 1966171168
    %v5970 = vunpack.c.0.s8 %v5969
    %v5971 = vlaneseq
    %v5972 = vshrl.u32 %v5971, 7
    %v5973 = vsub.s32 %v5970, %v5972
    %v5974 = vrot.slane %v5958, %v5973
    %v5976 = vunpack.c.l.s4 1966171168
    %v5977 = vunpack.c.0.s8 %v5976
    %v5978 = vlaneseq
    %v5979 = vshrl.u32 %v5978, 7
    %v5980 = vsub.s32 %v5977, %v5979
    %v5981 = vrot.slane %v5959, %v5980
    %v5983 = vunpack.c.l.s4 1966171168
    %v5984 = vunpack.c.0.s8 %v5983
    %v5985 = vlaneseq
    %v5986 = vshrl.u32 %v5985, 7
    %v5987 = vsub.s32 %v5984, %v5986
    %v5988 = vrot.slane %v5960, %v5987
    %v5989 = vcombine.high %v5967, %v5967
    %v5990 = vcombine.high %v5974, %v5974
    %v5991 = vcombine.high %v5981, %v5981
    %v5992 = vcombine.high %v5988, %v5988
    %v5993 = vcombine.high %v5880, %v5880
    %v5995 = vunpack.c.l.s4 1966171168
    %v5996 = vunpack.c.0.s8 %v5995
    %v5997 = vlaneseq
    %v5998 = vshrl.u32 %v5997, 7
    %v5999 = vsub.s32 %v5996, %v5998
    %v6000 = vrot.slane %v5880, %v5999
    %v6002 = vunpack.c.l.s4 1966171168
    %v6003 = vunpack.c.0.s8 %v6002
    %v6004 = vlaneseq
    %v6005 = vshrl.u32 %v6004, 7
    %v6006 = vsub.s32 %v6003, %v6005
    %v6007 = vrot.slane %v5993, %v6006
    %v6008 = vcombine.high %v6000, %v6000
    %v6009 = vcombine.high %v6007, %v6007
    %v6011 = vunpack.c.l.s4 1966171168
    %v6012 = vunpack.c.0.s8 %v6011
    %v6013 = vlaneseq
    %v6014 = vshrl.u32 %v6013, 7
    %v6015 = vsub.s32 %v6012, %v6014
    %v6016 = vrot.slane %v6000, %v6015
    %v6018 = vunpack.c.l.s4 1966171168
    %v6019 = vunpack.c.0.s8 %v6018
    %v6020 = vlaneseq
    %v6021 = vshrl.u32 %v6020, 7
    %v6022 = vsub.s32 %v6019, %v6021
    %v6023 = vrot.slane %v6007, %v6022
    %v6025 = vunpack.c.l.s4 1966171168
    %v6026 = vunpack.c.0.s8 %v6025
    %v6027 = vlaneseq
    %v6028 = vshrl.u32 %v6027, 7
    %v6029 = vsub.s32 %v6026, %v6028
    %v6030 = vrot.slane %v6008, %v6029
    %v6032 = vunpack.c.l.s4 1966171168
    %v6033 = vunpack.c.0.s8 %v6032
    %v6034 = vlaneseq
    %v6035 = vshrl.u32 %v6034, 7
    %v6036 = vsub.s32 %v6033, %v6035
    %v6037 = vrot.slane %v6009, %v6036
    %v6038 = vcombine.high %v6016, %v6016
    %v6039 = vcombine.high %v6023, %v6023
    %v6040 = vcombine.high %v6030, %v6030
    %v6041 = vcombine.high %v6037, %v6037
    %v6042 = vcombine.high %v5881, %v5881
    %v6044 = vunpack.c.l.s4 1966171168
    %v6045 = vunpack.c.0.s8 %v6044
    %v6046 = vlaneseq
    %v6047 = vshrl.u32 %v6046, 7
    %v6048 = vsub.s32 %v6045, %v6047
    %v6049 = vrot.slane %v5881, %v6048
    %v6051 = vunpack.c.l.s4 1966171168
    %v6052 = vunpack.c.0.s8 %v6051
    %v6053 = vlaneseq
    %v6054 = vshrl.u32 %v6053, 7
    %v6055 = vsub.s32 %v6052, %v6054
    %v6056 = vrot.slane %v6042, %v6055
    %v6057 = vcombine.high %v6049, %v6049
    %v6058 = vcombine.high %v6056, %v6056
    %v6060 = vunpack.c.l.s4 1966171168
    %v6061 = vunpack.c.0.s8 %v6060
    %v6062 = vlaneseq
    %v6063 = vshrl.u32 %v6062, 7
    %v6064 = vsub.s32 %v6061, %v6063
    %v6065 = vrot.slane %v6049, %v6064
    %v6067 = vunpack.c.l.s4 1966171168
    %v6068 = vunpack.c.0.s8 %v6067
    %v6069 = vlaneseq
    %v6070 = vshrl.u32 %v6069, 7
    %v6071 = vsub.s32 %v6068, %v6070
    %v6072 = vrot.slane %v6056, %v6071
    %v6074 = vunpack.c.l.s4 1966171168
    %v6075 = vunpack.c.0.s8 %v6074
    %v6076 = vlaneseq
    %v6077 = vshrl.u32 %v6076, 7
    %v6078 = vsub.s32 %v6075, %v6077
    %v6079 = vrot.slane %v6057, %v6078
    %v6081 = vunpack.c.l.s4 1966171168
    %v6082 = vunpack.c.0.s8 %v6081
    %v6083 = vlaneseq
    %v6084 = vshrl.u32 %v6083, 7
    %v6085 = vsub.s32 %v6082, %v6084
    %v6086 = vrot.slane %v6058, %v6085
    %v6087 = vcombine.high %v6065, %v6065
    %v6088 = vcombine.high %v6072, %v6072
    %v6089 = vcombine.high %v6079, %v6079
    %v6090 = vcombine.high %v6086, %v6086
    %v6091 = vlaneseq
    %v6092 = vshrl.u32 %v6091, 7
    %v6093 = vsub.s32 0, %v6092
    %v6094 = vrot.slane %v5918, %v6093
    %v6095 = vlaneseq
    %v6096 = vshrl.u32 %v6095, 7
    %v6097 = vsub.s32 0, %v6096
    %v6098 = vrot.slane %v5932, %v6097
    %v6099 = vlaneseq
    %v6100 = vshrl.u32 %v6099, 7
    %v6101 = vsub.s32 0, %v6100
    %v6102 = vrot.slane %v5940, %v6101
    %v6103 = vlaneseq
    %v6104 = vshrl.u32 %v6103, 7
    %v6105 = vsub.s32 0, %v6104
    %v6106 = vrot.slane %v5942, %v6105
    %v6107 = vlaneseq
    %v6108 = vshrl.u32 %v6107, 7
    %v6109 = vsub.s32 0, %v6108
    %v6110 = vrot.slane %v5925, %v6109
    %v6111 = vlaneseq
    %v6112 = vshrl.u32 %v6111, 7
    %v6113 = vsub.s32 0, %v6112
    %v6114 = vrot.slane %v5939, %v6113
    %v6115 = vlaneseq
    %v6116 = vshrl.u32 %v6115, 7
    %v6117 = vsub.s32 0, %v6116
    %v6118 = vrot.slane %v5941, %v6117
    %v6119 = vlaneseq
    %v6120 = vshrl.u32 %v6119, 7
    %v6121 = vsub.s32 0, %v6120
    %v6122 = vrot.slane %v5943, %v6121
    %v6123 = vlaneseq
    %v6124 = vshrl.u32 %v6123, 7
    %v6125 = vsub.s32 0, %v6124
    %v6126 = vrot.slane %v5967, %v6125
    %v6127 = vlaneseq
    %v6128 = vshrl.u32 %v6127, 7
    %v6129 = vsub.s32 0, %v6128
    %v6130 = vrot.slane %v5981, %v6129
    %v6131 = vlaneseq
    %v6132 = vshrl.u32 %v6131, 7
    %v6133 = vsub.s32 0, %v6132
    %v6134 = vrot.slane %v5989, %v6133
    %v6135 = vlaneseq
    %v6136 = vshrl.u32 %v6135, 7
    %v6137 = vsub.s32 0, %v6136
    %v6138 = vrot.slane %v5991, %v6137
    %v6139 = vlaneseq
    %v6140 = vshrl.u32 %v6139, 7
    %v6141 = vsub.s32 0, %v6140
    %v6142 = vrot.slane %v5974, %v6141
    %v6143 = vlaneseq
    %v6144 = vshrl.u32 %v6143, 7
    %v6145 = vsub.s32 0, %v6144
    %v6146 = vrot.slane %v5988, %v6145
    %v6147 = vlaneseq
    %v6148 = vshrl.u32 %v6147, 7
    %v6149 = vsub.s32 0, %v6148
    %v6150 = vrot.slane %v5990, %v6149
    %v6151 = vlaneseq
    %v6152 = vshrl.u32 %v6151, 7
    %v6153 = vsub.s32 0, %v6152
    %v6154 = vrot.slane %v5992, %v6153
    %v6155 = vlaneseq
    %v6156 = vshrl.u32 %v6155, 7
    %v6157 = vsub.s32 0, %v6156
    %v6158 = vrot.slane %v6016, %v6157
    %v6159 = vlaneseq
    %v6160 = vshrl.u32 %v6159, 7
    %v6161 = vsub.s32 0, %v6160
    %v6162 = vrot.slane %v6030, %v6161
    %v6163 = vlaneseq
    %v6164 = vshrl.u32 %v6163, 7
    %v6165 = vsub.s32 0, %v6164
    %v6166 = vrot.slane %v6038, %v6165
    %v6167 = vlaneseq
    %v6168 = vshrl.u32 %v6167, 7
    %v6169 = vsub.s32 0, %v6168
    %v6170 = vrot.slane %v6040, %v6169
    %v6171 = vlaneseq
    %v6172 = vshrl.u32 %v6171, 7
    %v6173 = vsub.s32 0, %v6172
    %v6174 = vrot.slane %v6023, %v6173
    %v6175 = vlaneseq
    %v6176 = vshrl.u32 %v6175, 7
    %v6177 = vsub.s32 0, %v6176
    %v6178 = vrot.slane %v6037, %v6177
    %v6179 = vlaneseq
    %v6180 = vshrl.u32 %v6179, 7
    %v6181 = vsub.s32 0, %v6180
    %v6182 = vrot.slane %v6039, %v6181
    %v6183 = vlaneseq
    %v6184 = vshrl.u32 %v6183, 7
    %v6185 = vsub.s32 0, %v6184
    %v6186 = vrot.slane %v6041, %v6185
    %v6187 = vlaneseq
    %v6188 = vshrl.u32 %v6187, 7
    %v6189 = vsub.s32 0, %v6188
    %v6190 = vrot.slane %v6065, %v6189
    %v6191 = vlaneseq
    %v6192 = vshrl.u32 %v6191, 7
    %v6193 = vsub.s32 0, %v6192
    %v6194 = vrot.slane %v6079, %v6193
    %v6195 = vlaneseq
    %v6196 = vshrl.u32 %v6195, 7
    %v6197 = vsub.s32 0, %v6196
    %v6198 = vrot.slane %v6087, %v6197
    %v6199 = vlaneseq
    %v6200 = vshrl.u32 %v6199, 7
    %v6201 = vsub.s32 0, %v6200
    %v6202 = vrot.slane %v6089, %v6201
    %v6203 = vlaneseq
    %v6204 = vshrl.u32 %v6203, 7
    %v6205 = vsub.s32 0, %v6204
    %v6206 = vrot.slane %v6072, %v6205
    %v6207 = vlaneseq
    %v6208 = vshrl.u32 %v6207, 7
    %v6209 = vsub.s32 0, %v6208
    %v6210 = vrot.slane %v6086, %v6209
    %v6211 = vlaneseq
    %v6212 = vshrl.u32 %v6211, 7
    %v6213 = vsub.s32 0, %v6212
    %v6214 = vrot.slane %v6088, %v6213
    %v6215 = vlaneseq
    %v6216 = vshrl.u32 %v6215, 7
    %v6217 = vsub.s32 0, %v6216
    %v6218 = vrot.slane %v6090, %v6217
    %v6251 = vmul.f32 %v6094, %v5887
    %v6252 = vmul.f32 %v6094, %v5888
    %v6253 = vmul.f32 %v6094, %v5889
    %v6254 = vmul.f32 %v6094, %v5890
    %v6255 = vmul.f32 %v6098, %v5887
    %v6256 = vmul.f32 %v6098, %v5888
    %v6257 = vmul.f32 %v6098, %v5889
    %v6258 = vmul.f32 %v6098, %v5890
    %v6259 = vmul.f32 %v6102, %v5887
    %v6260 = vmul.f32 %v6102, %v5888
    %v6261 = vmul.f32 %v6102, %v5889
    %v6262 = vmul.f32 %v6102, %v5890
    %v6263 = vmul.f32 %v6106, %v5887
    %v6264 = vmul.f32 %v6106, %v5888
    %v6265 = vmul.f32 %v6106, %v5889
    %v6266 = vmul.f32 %v6106, %v5890
    %v6267 = vmul.f32 %v6110, %v5887
    %v6268 = vmul.f32 %v6110, %v5888
    %v6269 = vmul.f32 %v6110, %v5889
    %v6270 = vmul.f32 %v6110, %v5890
    %v6271 = vmul.f32 %v6114, %v5887
    %v6272 = vmul.f32 %v6114, %v5888
    %v6273 = vmul.f32 %v6114, %v5889
    %v6274 = vmul.f32 %v6114, %v5890
    %v6275 = vmul.f32 %v6118, %v5887
    %v6276 = vmul.f32 %v6118, %v5888
    %v6277 = vmul.f32 %v6118, %v5889
    %v6278 = vmul.f32 %v6118, %v5890
    %v6279 = vmul.f32 %v6122, %v5887
    %v6280 = vmul.f32 %v6122, %v5888
    %v6281 = vmul.f32 %v6122, %v5889
    %v6282 = vmul.f32 %v6122, %v5890
    %v6283 = vmul.f32 %v6126, %v5887
    %v6284 = vmul.f32 %v6126, %v5888
    %v6285 = vmul.f32 %v6126, %v5889
    %v6286 = vmul.f32 %v6126, %v5890
    %v6287 = vmul.f32 %v6130, %v5887
    %v6288 = vmul.f32 %v6130, %v5888
    %v6289 = vmul.f32 %v6130, %v5889
    %v6290 = vmul.f32 %v6130, %v5890
    %v6291 = vmul.f32 %v6134, %v5887
    %v6292 = vmul.f32 %v6134, %v5888
    %v6293 = vmul.f32 %v6134, %v5889
    %v6294 = vmul.f32 %v6134, %v5890
    %v6295 = vmul.f32 %v6138, %v5887
    %v6296 = vmul.f32 %v6138, %v5888
    %v6297 = vmul.f32 %v6138, %v5889
    %v6298 = vmul.f32 %v6138, %v5890
    %v6299 = vmul.f32 %v6142, %v5887
    %v6300 = vmul.f32 %v6142, %v5888
    %v6301 = vmul.f32 %v6142, %v5889
    %v6302 = vmul.f32 %v6142, %v5890
    %v6303 = vmul.f32 %v6146, %v5887
    %v6304 = vmul.f32 %v6146, %v5888
    %v6305 = vmul.f32 %v6146, %v5889
    %v6306 = vmul.f32 %v6146, %v5890
    %v6307 = vmul.f32 %v6150, %v5887
    %v6308 = vmul.f32 %v6150, %v5888
    %v6309 = vmul.f32 %v6150, %v5889
    %v6310 = vmul.f32 %v6150, %v5890
    %v6311 = vmul.f32 %v6154, %v5887
    %v6312 = vmul.f32 %v6154, %v5888
    %v6313 = vmul.f32 %v6154, %v5889
    %v6314 = vmul.f32 %v6154, %v5890
    %v6315 = vmul.f32 %v6158, %v5887
    %v6316 = vmul.f32 %v6158, %v5888
    %v6317 = vmul.f32 %v6158, %v5889
    %v6318 = vmul.f32 %v6158, %v5890
    %v6319 = vmul.f32 %v6162, %v5887
    %v6320 = vmul.f32 %v6162, %v5888
    %v6321 = vmul.f32 %v6162, %v5889
    %v6322 = vmul.f32 %v6162, %v5890
    %v6323 = vmul.f32 %v6166, %v5887
    %v6324 = vmul.f32 %v6166, %v5888
    %v6325 = vmul.f32 %v6166, %v5889
    %v6326 = vmul.f32 %v6166, %v5890
    %v6327 = vmul.f32 %v6170, %v5887
    %v6328 = vmul.f32 %v6170, %v5888
    %v6329 = vmul.f32 %v6170, %v5889
    %v6330 = vmul.f32 %v6170, %v5890
    %v6331 = vmul.f32 %v6174, %v5887
    %v6332 = vmul.f32 %v6174, %v5888
    %v6333 = vmul.f32 %v6174, %v5889
    %v6334 = vmul.f32 %v6174, %v5890
    %v6335 = vmul.f32 %v6178, %v5887
    %v6336 = vmul.f32 %v6178, %v5888
    %v6337 = vmul.f32 %v6178, %v5889
    %v6338 = vmul.f32 %v6178, %v5890
    %v6339 = vmul.f32 %v6182, %v5887
    %v6340 = vmul.f32 %v6182, %v5888
    %v6341 = vmul.f32 %v6182, %v5889
    %v6342 = vmul.f32 %v6182, %v5890
    %v6343 = vmul.f32 %v6186, %v5887
    %v6344 = vmul.f32 %v6186, %v5888
    %v6345 = vmul.f32 %v6186, %v5889
    %v6346 = vmul.f32 %v6186, %v5890
    %v6347 = vmul.f32 %v6190, %v5887
    %v6348 = vmul.f32 %v6190, %v5888
    %v6349 = vmul.f32 %v6190, %v5889
    %v6350 = vmul.f32 %v6190, %v5890
    %v6351 = vmul.f32 %v6194, %v5887
    %v6352 = vmul.f32 %v6194, %v5888
    %v6353 = vmul.f32 %v6194, %v5889
    %v6354 = vmul.f32 %v6194, %v5890
    %v6355 = vmul.f32 %v6198, %v5887
    %v6356 = vmul.f32 %v6198, %v5888
    %v6357 = vmul.f32 %v6198, %v5889
    %v6358 = vmul.f32 %v6198, %v5890
    %v6359 = vmul.f32 %v6202, %v5887
    %v6360 = vmul.f32 %v6202, %v5888
    %v6361 = vmul.f32 %v6202, %v5889
    %v6362 = vmul.f32 %v6202, %v5890
    %v6363 = vmul.f32 %v6206, %v5887
    %v6364 = vmul.f32 %v6206, %v5888
    %v6365 = vmul.f32 %v6206, %v5889
    %v6366 = vmul.f32 %v6206, %v5890
    %v6367 = vmul.f32 %v6210, %v5887
    %v6368 = vmul.f32 %v6210, %v5888
    %v6369 = vmul.f32 %v6210, %v5889
    %v6370 = vmul.f32 %v6210, %v5890
    %v6371 = vmul.f32 %v6214, %v5887
    %v6372 = vmul.f32 %v6214, %v5888
    %v6373 = vmul.f32 %v6214, %v5889
    %v6374 = vmul.f32 %v6214, %v5890
    %v6375 = vmul.f32 %v6218, %v5887
    %v6376 = vmul.f32 %v6218, %v5888
    %v6377 = vmul.f32 %v6218, %v5889
    %v6378 = vmul.f32 %v6218, %v5890
    %v6379 = vadd.f32 %v3803, %v6251
    %v6380 = vadd.f32 %v3804, %v6252
    %v6381 = vadd.f32 %v3805, %v6253
    %v6382 = vadd.f32 %v3806, %v6254
    %v6383 = vadd.f32 %v3807, %v6255
    %v6384 = vadd.f32 %v3808, %v6256
    %v6385 = vadd.f32 %v3809, %v6257
    %v6386 = vadd.f32 %v3810, %v6258
    %v6387 = vadd.f32 %v3811, %v6259
    %v6388 = vadd.f32 %v3812, %v6260
    %v6389 = vadd.f32 %v3813, %v6261
    %v6390 = vadd.f32 %v3814, %v6262
    %v6391 = vadd.f32 %v3815, %v6263
    %v6392 = vadd.f32 %v3816, %v6264
    %v6393 = vadd.f32 %v3817, %v6265
    %v6394 = vadd.f32 %v3818, %v6266
    %v6395 = vadd.f32 %v3819, %v6267
    %v6396 = vadd.f32 %v3820, %v6268
    %v6397 = vadd.f32 %v3821, %v6269
    %v6398 = vadd.f32 %v3822, %v6270
    %v6399 = vadd.f32 %v3823, %v6271
    %v6400 = vadd.f32 %v3824, %v6272
    %v6401 = vadd.f32 %v3825, %v6273
    %v6402 = vadd.f32 %v3826, %v6274
    %v6403 = vadd.f32 %v3827, %v6275
    %v6404 = vadd.f32 %v3828, %v6276
    %v6405 = vadd.f32 %v3829, %v6277
    %v6406 = vadd.f32 %v3830, %v6278
    %v6407 = vadd.f32 %v3831, %v6279
    %v6408 = vadd.f32 %v3832, %v6280
    %v6409 = vadd.f32 %v3833, %v6281
    %v6410 = vadd.f32 %v3834, %v6282
    %v6411 = vadd.f32 %v3835, %v6283
    %v6412 = vadd.f32 %v3836, %v6284
    %v6413 = vadd.f32 %v3837, %v6285
    %v6414 = vadd.f32 %v3838, %v6286
    %v6415 = vadd.f32 %v3839, %v6287
    %v6416 = vadd.f32 %v3840, %v6288
    %v6417 = vadd.f32 %v3841, %v6289
    %v6418 = vadd.f32 %v3842, %v6290
    %v6419 = vadd.f32 %v3843, %v6291
    %v6420 = vadd.f32 %v3844, %v6292
    %v6421 = vadd.f32 %v3845, %v6293
    %v6422 = vadd.f32 %v3846, %v6294
    %v6423 = vadd.f32 %v3847, %v6295
    %v6424 = vadd.f32 %v3848, %v6296
    %v6425 = vadd.f32 %v3849, %v6297
    %v6426 = vadd.f32 %v3850, %v6298
    %v6427 = vadd.f32 %v3851, %v6299
    %v6428 = vadd.f32 %v3852, %v6300
    %v6429 = vadd.f32 %v3853, %v6301
    %v6430 = vadd.f32 %v3854, %v6302
    %v6431 = vadd.f32 %v3855, %v6303
    %v6432 = vadd.f32 %v3856, %v6304
    %v6433 = vadd.f32 %v3857, %v6305
    %v6434 = vadd.f32 %v3858, %v6306
    %v6435 = vadd.f32 %v3859, %v6307
    %v6436 = vadd.f32 %v3860, %v6308
    %v6437 = vadd.f32 %v3861, %v6309
    %v6438 = vadd.f32 %v3862, %v6310
    %v6439 = vadd.f32 %v3863, %v6311
    %v6440 = vadd.f32 %v3864, %v6312
    %v6441 = vadd.f32 %v3865, %v6313
    %v6442 = vadd.f32 %v3866, %v6314
    %v6443 = vadd.f32 %v3867, %v6315
    %v6444 = vadd.f32 %v3868, %v6316
    %v6445 = vadd.f32 %v3869, %v6317
    %v6446 = vadd.f32 %v3870, %v6318
    %v6447 = vadd.f32 %v3871, %v6319
    %v6448 = vadd.f32 %v3872, %v6320
    %v6449 = vadd.f32 %v3873, %v6321
    %v6450 = vadd.f32 %v3874, %v6322
    %v6451 = vadd.f32 %v3875, %v6323
    %v6452 = vadd.f32 %v3876, %v6324
    %v6453 = vadd.f32 %v3877, %v6325
    %v6454 = vadd.f32 %v3878, %v6326
    %v6455 = vadd.f32 %v3879, %v6327
    %v6456 = vadd.f32 %v3880, %v6328
    %v6457 = vadd.f32 %v3881, %v6329
    %v6458 = vadd.f32 %v3882, %v6330
    %v6459 = vadd.f32 %v3883, %v6331
    %v6460 = vadd.f32 %v3884, %v6332
    %v6461 = vadd.f32 %v3885, %v6333
    %v6462 = vadd.f32 %v3886, %v6334
    %v6463 = vadd.f32 %v3887, %v6335
    %v6464 = vadd.f32 %v3888, %v6336
    %v6465 = vadd.f32 %v3889, %v6337
    %v6466 = vadd.f32 %v3890, %v6338
    %v6467 = vadd.f32 %v3891, %v6339
    %v6468 = vadd.f32 %v3892, %v6340
    %v6469 = vadd.f32 %v3893, %v6341
    %v6470 = vadd.f32 %v3894, %v6342
    %v6471 = vadd.f32 %v3895, %v6343
    %v6472 = vadd.f32 %v3896, %v6344
    %v6473 = vadd.f32 %v3897, %v6345
    %v6474 = vadd.f32 %v3898, %v6346
    %v6475 = vadd.f32 %v3899, %v6347
    %v6476 = vadd.f32 %v3900, %v6348
    %v6477 = vadd.f32 %v3901, %v6349
    %v6478 = vadd.f32 %v3902, %v6350
    %v6479 = vadd.f32 %v3903, %v6351
    %v6480 = vadd.f32 %v3904, %v6352
    %v6481 = vadd.f32 %v3905, %v6353
    %v6482 = vadd.f32 %v3906, %v6354
    %v6483 = vadd.f32 %v3907, %v6355
    %v6484 = vadd.f32 %v3908, %v6356
    %v6485 = vadd.f32 %v3909, %v6357
    %v6486 = vadd.f32 %v3910, %v6358
    %v6487 = vadd.f32 %v3911, %v6359
    %v6488 = vadd.f32 %v3912, %v6360
    %v6489 = vadd.f32 %v3913, %v6361
    %v6490 = vadd.f32 %v3914, %v6362
    %v6491 = vadd.f32 %v3915, %v6363
    %v6492 = vadd.f32 %v3916, %v6364
    %v6493 = vadd.f32 %v3917, %v6365
    %v6494 = vadd.f32 %v3918, %v6366
    %v6495 = vadd.f32 %v3919, %v6367
    %v6496 = vadd.f32 %v3920, %v6368
    %v6497 = vadd.f32 %v3921, %v6369
    %v6498 = vadd.f32 %v3922, %v6370
    %v6499 = vadd.f32 %v3923, %v6371
    %v6500 = vadd.f32 %v3924, %v6372
    %v6501 = vadd.f32 %v3925, %v6373
    %v6502 = vadd.f32 %v3926, %v6374
    %v6503 = vadd.f32 %v3927, %v6375
    %v6504 = vadd.f32 %v3928, %v6376
    %v6505 = vadd.f32 %v3929, %v6377
    %v6506 = vadd.f32 %v3930, %v6378
    %v6511 = vcombine.high %v5770, %v5770
    %v6513 = vunpack.c.l.s4 1966171168
    %v6514 = vunpack.c.0.s8 %v6513
    %v6515 = vlaneseq
    %v6516 = vshrl.u32 %v6515, 7
    %v6517 = vsub.s32 %v6514, %v6516
    %v6518 = vrot.slane %v5770, %v6517
    %v6520 = vunpack.c.l.s4 1966171168
    %v6521 = vunpack.c.0.s8 %v6520
    %v6522 = vlaneseq
    %v6523 = vshrl.u32 %v6522, 7
    %v6524 = vsub.s32 %v6521, %v6523
    %v6525 = vrot.slane %v6511, %v6524
    %v6526 = vcombine.high %v6518, %v6518
    %v6527 = vcombine.high %v6525, %v6525
    %v6529 = vunpack.c.l.s4 1966171168
    %v6530 = vunpack.c.0.s8 %v6529
    %v6531 = vlaneseq
    %v6532 = vshrl.u32 %v6531, 7
    %v6533 = vsub.s32 %v6530, %v6532
    %v6534 = vrot.slane %v6518, %v6533
    %v6536 = vunpack.c.l.s4 1966171168
    %v6537 = vunpack.c.0.s8 %v6536
    %v6538 = vlaneseq
    %v6539 = vshrl.u32 %v6538, 7
    %v6540 = vsub.s32 %v6537, %v6539
    %v6541 = vrot.slane %v6525, %v6540
    %v6543 = vunpack.c.l.s4 1966171168
    %v6544 = vunpack.c.0.s8 %v6543
    %v6545 = vlaneseq
    %v6546 = vshrl.u32 %v6545, 7
    %v6547 = vsub.s32 %v6544, %v6546
    %v6548 = vrot.slane %v6526, %v6547
    %v6550 = vunpack.c.l.s4 1966171168
    %v6551 = vunpack.c.0.s8 %v6550
    %v6552 = vlaneseq
    %v6553 = vshrl.u32 %v6552, 7
    %v6554 = vsub.s32 %v6551, %v6553
    %v6555 = vrot.slane %v6527, %v6554
    %v6556 = vcombine.high %v6534, %v6534
    %v6557 = vcombine.high %v6541, %v6541
    %v6558 = vcombine.high %v6548, %v6548
    %v6559 = vcombine.high %v6555, %v6555
    %v6560 = vcombine.high %v5801, %v5801
    %v6562 = vunpack.c.l.s4 1966171168
    %v6563 = vunpack.c.0.s8 %v6562
    %v6564 = vlaneseq
    %v6565 = vshrl.u32 %v6564, 7
    %v6566 = vsub.s32 %v6563, %v6565
    %v6567 = vrot.slane %v5801, %v6566
    %v6569 = vunpack.c.l.s4 1966171168
    %v6570 = vunpack.c.0.s8 %v6569
    %v6571 = vlaneseq
    %v6572 = vshrl.u32 %v6571, 7
    %v6573 = vsub.s32 %v6570, %v6572
    %v6574 = vrot.slane %v6560, %v6573
    %v6575 = vcombine.high %v6567, %v6567
    %v6576 = vcombine.high %v6574, %v6574
    %v6578 = vunpack.c.l.s4 1966171168
    %v6579 = vunpack.c.0.s8 %v6578
    %v6580 = vlaneseq
    %v6581 = vshrl.u32 %v6580, 7
    %v6582 = vsub.s32 %v6579, %v6581
    %v6583 = vrot.slane %v6567, %v6582
    %v6585 = vunpack.c.l.s4 1966171168
    %v6586 = vunpack.c.0.s8 %v6585
    %v6587 = vlaneseq
    %v6588 = vshrl.u32 %v6587, 7
    %v6589 = vsub.s32 %v6586, %v6588
    %v6590 = vrot.slane %v6574, %v6589
    %v6592 = vunpack.c.l.s4 1966171168
    %v6593 = vunpack.c.0.s8 %v6592
    %v6594 = vlaneseq
    %v6595 = vshrl.u32 %v6594, 7
    %v6596 = vsub.s32 %v6593, %v6595
    %v6597 = vrot.slane %v6575, %v6596
    %v6599 = vunpack.c.l.s4 1966171168
    %v6600 = vunpack.c.0.s8 %v6599
    %v6601 = vlaneseq
    %v6602 = vshrl.u32 %v6601, 7
    %v6603 = vsub.s32 %v6600, %v6602
    %v6604 = vrot.slane %v6576, %v6603
    %v6605 = vcombine.high %v6583, %v6583
    %v6606 = vcombine.high %v6590, %v6590
    %v6607 = vcombine.high %v6597, %v6597
    %v6608 = vcombine.high %v6604, %v6604
    %v6609 = vcombine.high %v5832, %v5832
    %v6611 = vunpack.c.l.s4 1966171168
    %v6612 = vunpack.c.0.s8 %v6611
    %v6613 = vlaneseq
    %v6614 = vshrl.u32 %v6613, 7
    %v6615 = vsub.s32 %v6612, %v6614
    %v6616 = vrot.slane %v5832, %v6615
    %v6618 = vunpack.c.l.s4 1966171168
    %v6619 = vunpack.c.0.s8 %v6618
    %v6620 = vlaneseq
    %v6621 = vshrl.u32 %v6620, 7
    %v6622 = vsub.s32 %v6619, %v6621
    %v6623 = vrot.slane %v6609, %v6622
    %v6624 = vcombine.high %v6616, %v6616
    %v6625 = vcombine.high %v6623, %v6623
    %v6627 = vunpack.c.l.s4 1966171168
    %v6628 = vunpack.c.0.s8 %v6627
    %v6629 = vlaneseq
    %v6630 = vshrl.u32 %v6629, 7
    %v6631 = vsub.s32 %v6628, %v6630
    %v6632 = vrot.slane %v6616, %v6631
    %v6634 = vunpack.c.l.s4 1966171168
    %v6635 = vunpack.c.0.s8 %v6634
    %v6636 = vlaneseq
    %v6637 = vshrl.u32 %v6636, 7
    %v6638 = vsub.s32 %v6635, %v6637
    %v6639 = vrot.slane %v6623, %v6638
    %v6641 = vunpack.c.l.s4 1966171168
    %v6642 = vunpack.c.0.s8 %v6641
    %v6643 = vlaneseq
    %v6644 = vshrl.u32 %v6643, 7
    %v6645 = vsub.s32 %v6642, %v6644
    %v6646 = vrot.slane %v6624, %v6645
    %v6648 = vunpack.c.l.s4 1966171168
    %v6649 = vunpack.c.0.s8 %v6648
    %v6650 = vlaneseq
    %v6651 = vshrl.u32 %v6650, 7
    %v6652 = vsub.s32 %v6649, %v6651
    %v6653 = vrot.slane %v6625, %v6652
    %v6654 = vcombine.high %v6632, %v6632
    %v6655 = vcombine.high %v6639, %v6639
    %v6656 = vcombine.high %v6646, %v6646
    %v6657 = vcombine.high %v6653, %v6653
    %v6658 = vcombine.high %v5863, %v5863
    %v6660 = vunpack.c.l.s4 1966171168
    %v6661 = vunpack.c.0.s8 %v6660
    %v6662 = vlaneseq
    %v6663 = vshrl.u32 %v6662, 7
    %v6664 = vsub.s32 %v6661, %v6663
    %v6665 = vrot.slane %v5863, %v6664
    %v6667 = vunpack.c.l.s4 1966171168
    %v6668 = vunpack.c.0.s8 %v6667
    %v6669 = vlaneseq
    %v6670 = vshrl.u32 %v6669, 7
    %v6671 = vsub.s32 %v6668, %v6670
    %v6672 = vrot.slane %v6658, %v6671
    %v6673 = vcombine.high %v6665, %v6665
    %v6674 = vcombine.high %v6672, %v6672
    %v6676 = vunpack.c.l.s4 1966171168
    %v6677 = vunpack.c.0.s8 %v6676
    %v6678 = vlaneseq
    %v6679 = vshrl.u32 %v6678, 7
    %v6680 = vsub.s32 %v6677, %v6679
    %v6681 = vrot.slane %v6665, %v6680
    %v6683 = vunpack.c.l.s4 1966171168
    %v6684 = vunpack.c.0.s8 %v6683
    %v6685 = vlaneseq
    %v6686 = vshrl.u32 %v6685, 7
    %v6687 = vsub.s32 %v6684, %v6686
    %v6688 = vrot.slane %v6672, %v6687
    %v6690 = vunpack.c.l.s4 1966171168
    %v6691 = vunpack.c.0.s8 %v6690
    %v6692 = vlaneseq
    %v6693 = vshrl.u32 %v6692, 7
    %v6694 = vsub.s32 %v6691, %v6693
    %v6695 = vrot.slane %v6673, %v6694
    %v6697 = vunpack.c.l.s4 1966171168
    %v6698 = vunpack.c.0.s8 %v6697
    %v6699 = vlaneseq
    %v6700 = vshrl.u32 %v6699, 7
    %v6701 = vsub.s32 %v6698, %v6700
    %v6702 = vrot.slane %v6674, %v6701
    %v6703 = vcombine.high %v6681, %v6681
    %v6704 = vcombine.high %v6688, %v6688
    %v6705 = vcombine.high %v6695, %v6695
    %v6706 = vcombine.high %v6702, %v6702
    %v6707 = vlaneseq
    %v6708 = vshrl.u32 %v6707, 7
    %v6709 = vsub.s32 0, %v6708
    %v6710 = vrot.slane %v6534, %v6709
    %v6711 = vlaneseq
    %v6712 = vshrl.u32 %v6711, 7
    %v6713 = vsub.s32 0, %v6712
    %v6714 = vrot.slane %v6548, %v6713
    %v6715 = vlaneseq
    %v6716 = vshrl.u32 %v6715, 7
    %v6717 = vsub.s32 0, %v6716
    %v6718 = vrot.slane %v6556, %v6717
    %v6719 = vlaneseq
    %v6720 = vshrl.u32 %v6719, 7
    %v6721 = vsub.s32 0, %v6720
    %v6722 = vrot.slane %v6558, %v6721
    %v6723 = vlaneseq
    %v6724 = vshrl.u32 %v6723, 7
    %v6725 = vsub.s32 0, %v6724
    %v6726 = vrot.slane %v6541, %v6725
    %v6727 = vlaneseq
    %v6728 = vshrl.u32 %v6727, 7
    %v6729 = vsub.s32 0, %v6728
    %v6730 = vrot.slane %v6555, %v6729
    %v6731 = vlaneseq
    %v6732 = vshrl.u32 %v6731, 7
    %v6733 = vsub.s32 0, %v6732
    %v6734 = vrot.slane %v6557, %v6733
    %v6735 = vlaneseq
    %v6736 = vshrl.u32 %v6735, 7
    %v6737 = vsub.s32 0, %v6736
    %v6738 = vrot.slane %v6559, %v6737
    %v6739 = vlaneseq
    %v6740 = vshrl.u32 %v6739, 7
    %v6741 = vsub.s32 0, %v6740
    %v6742 = vrot.slane %v6583, %v6741
    %v6743 = vlaneseq
    %v6744 = vshrl.u32 %v6743, 7
    %v6745 = vsub.s32 0, %v6744
    %v6746 = vrot.slane %v6597, %v6745
    %v6747 = vlaneseq
    %v6748 = vshrl.u32 %v6747, 7
    %v6749 = vsub.s32 0, %v6748
    %v6750 = vrot.slane %v6605, %v6749
    %v6751 = vlaneseq
    %v6752 = vshrl.u32 %v6751, 7
    %v6753 = vsub.s32 0, %v6752
    %v6754 = vrot.slane %v6607, %v6753
    %v6755 = vlaneseq
    %v6756 = vshrl.u32 %v6755, 7
    %v6757 = vsub.s32 0, %v6756
    %v6758 = vrot.slane %v6590, %v6757
    %v6759 = vlaneseq
    %v6760 = vshrl.u32 %v6759, 7
    %v6761 = vsub.s32 0, %v6760
    %v6762 = vrot.slane %v6604, %v6761
    %v6763 = vlaneseq
    %v6764 = vshrl.u32 %v6763, 7
    %v6765 = vsub.s32 0, %v6764
    %v6766 = vrot.slane %v6606, %v6765
    %v6767 = vlaneseq
    %v6768 = vshrl.u32 %v6767, 7
    %v6769 = vsub.s32 0, %v6768
    %v6770 = vrot.slane %v6608, %v6769
    %v6771 = vlaneseq
    %v6772 = vshrl.u32 %v6771, 7
    %v6773 = vsub.s32 0, %v6772
    %v6774 = vrot.slane %v6632, %v6773
    %v6775 = vlaneseq
    %v6776 = vshrl.u32 %v6775, 7
    %v6777 = vsub.s32 0, %v6776
    %v6778 = vrot.slane %v6646, %v6777
    %v6779 = vlaneseq
    %v6780 = vshrl.u32 %v6779, 7
    %v6781 = vsub.s32 0, %v6780
    %v6782 = vrot.slane %v6654, %v6781
    %v6783 = vlaneseq
    %v6784 = vshrl.u32 %v6783, 7
    %v6785 = vsub.s32 0, %v6784
    %v6786 = vrot.slane %v6656, %v6785
    %v6787 = vlaneseq
    %v6788 = vshrl.u32 %v6787, 7
    %v6789 = vsub.s32 0, %v6788
    %v6790 = vrot.slane %v6639, %v6789
    %v6791 = vlaneseq
    %v6792 = vshrl.u32 %v6791, 7
    %v6793 = vsub.s32 0, %v6792
    %v6794 = vrot.slane %v6653, %v6793
    %v6795 = vlaneseq
    %v6796 = vshrl.u32 %v6795, 7
    %v6797 = vsub.s32 0, %v6796
    %v6798 = vrot.slane %v6655, %v6797
    %v6799 = vlaneseq
    %v6800 = vshrl.u32 %v6799, 7
    %v6801 = vsub.s32 0, %v6800
    %v6802 = vrot.slane %v6657, %v6801
    %v6803 = vlaneseq
    %v6804 = vshrl.u32 %v6803, 7
    %v6805 = vsub.s32 0, %v6804
    %v6806 = vrot.slane %v6681, %v6805
    %v6807 = vlaneseq
    %v6808 = vshrl.u32 %v6807, 7
    %v6809 = vsub.s32 0, %v6808
    %v6810 = vrot.slane %v6695, %v6809
    %v6811 = vlaneseq
    %v6812 = vshrl.u32 %v6811, 7
    %v6813 = vsub.s32 0, %v6812
    %v6814 = vrot.slane %v6703, %v6813
    %v6815 = vlaneseq
    %v6816 = vshrl.u32 %v6815, 7
    %v6817 = vsub.s32 0, %v6816
    %v6818 = vrot.slane %v6705, %v6817
    %v6819 = vlaneseq
    %v6820 = vshrl.u32 %v6819, 7
    %v6821 = vsub.s32 0, %v6820
    %v6822 = vrot.slane %v6688, %v6821
    %v6823 = vlaneseq
    %v6824 = vshrl.u32 %v6823, 7
    %v6825 = vsub.s32 0, %v6824
    %v6826 = vrot.slane %v6702, %v6825
    %v6827 = vlaneseq
    %v6828 = vshrl.u32 %v6827, 7
    %v6829 = vsub.s32 0, %v6828
    %v6830 = vrot.slane %v6704, %v6829
    %v6831 = vlaneseq
    %v6832 = vshrl.u32 %v6831, 7
    %v6833 = vsub.s32 0, %v6832
    %v6834 = vrot.slane %v6706, %v6833
    %v6867 = vmul.f32 %v6710, %v5878
    %v6868 = vmul.f32 %v6710, %v5879
    %v6869 = vmul.f32 %v6710, %v5880
    %v6870 = vmul.f32 %v6710, %v5881
    %v6871 = vmul.f32 %v6714, %v5878
    %v6872 = vmul.f32 %v6714, %v5879
    %v6873 = vmul.f32 %v6714, %v5880
    %v6874 = vmul.f32 %v6714, %v5881
    %v6875 = vmul.f32 %v6718, %v5878
    %v6876 = vmul.f32 %v6718, %v5879
    %v6877 = vmul.f32 %v6718, %v5880
    %v6878 = vmul.f32 %v6718, %v5881
    %v6879 = vmul.f32 %v6722, %v5878
    %v6880 = vmul.f32 %v6722, %v5879
    %v6881 = vmul.f32 %v6722, %v5880
    %v6882 = vmul.f32 %v6722, %v5881
    %v6883 = vmul.f32 %v6726, %v5878
    %v6884 = vmul.f32 %v6726, %v5879
    %v6885 = vmul.f32 %v6726, %v5880
    %v6886 = vmul.f32 %v6726, %v5881
    %v6887 = vmul.f32 %v6730, %v5878
    %v6888 = vmul.f32 %v6730, %v5879
    %v6889 = vmul.f32 %v6730, %v5880
    %v6890 = vmul.f32 %v6730, %v5881
    %v6891 = vmul.f32 %v6734, %v5878
    %v6892 = vmul.f32 %v6734, %v5879
    %v6893 = vmul.f32 %v6734, %v5880
    %v6894 = vmul.f32 %v6734, %v5881
    %v6895 = vmul.f32 %v6738, %v5878
    %v6896 = vmul.f32 %v6738, %v5879
    %v6897 = vmul.f32 %v6738, %v5880
    %v6898 = vmul.f32 %v6738, %v5881
    %v6899 = vmul.f32 %v6742, %v5878
    %v6900 = vmul.f32 %v6742, %v5879
    %v6901 = vmul.f32 %v6742, %v5880
    %v6902 = vmul.f32 %v6742, %v5881
    %v6903 = vmul.f32 %v6746, %v5878
    %v6904 = vmul.f32 %v6746, %v5879
    %v6905 = vmul.f32 %v6746, %v5880
    %v6906 = vmul.f32 %v6746, %v5881
    %v6907 = vmul.f32 %v6750, %v5878
    %v6908 = vmul.f32 %v6750, %v5879
    %v6909 = vmul.f32 %v6750, %v5880
    %v6910 = vmul.f32 %v6750, %v5881
    %v6911 = vmul.f32 %v6754, %v5878
    %v6912 = vmul.f32 %v6754, %v5879
    %v6913 = vmul.f32 %v6754, %v5880
    %v6914 = vmul.f32 %v6754, %v5881
    %v6915 = vmul.f32 %v6758, %v5878
    %v6916 = vmul.f32 %v6758, %v5879
    %v6917 = vmul.f32 %v6758, %v5880
    %v6918 = vmul.f32 %v6758, %v5881
    %v6919 = vmul.f32 %v6762, %v5878
    %v6920 = vmul.f32 %v6762, %v5879
    %v6921 = vmul.f32 %v6762, %v5880
    %v6922 = vmul.f32 %v6762, %v5881
    %v6923 = vmul.f32 %v6766, %v5878
    %v6924 = vmul.f32 %v6766, %v5879
    %v6925 = vmul.f32 %v6766, %v5880
    %v6926 = vmul.f32 %v6766, %v5881
    %v6927 = vmul.f32 %v6770, %v5878
    %v6928 = vmul.f32 %v6770, %v5879
    %v6929 = vmul.f32 %v6770, %v5880
    %v6930 = vmul.f32 %v6770, %v5881
    %v6931 = vmul.f32 %v6774, %v5878
    %v6932 = vmul.f32 %v6774, %v5879
    %v6933 = vmul.f32 %v6774, %v5880
    %v6934 = vmul.f32 %v6774, %v5881
    %v6935 = vmul.f32 %v6778, %v5878
    %v6936 = vmul.f32 %v6778, %v5879
    %v6937 = vmul.f32 %v6778, %v5880
    %v6938 = vmul.f32 %v6778, %v5881
    %v6939 = vmul.f32 %v6782, %v5878
    %v6940 = vmul.f32 %v6782, %v5879
    %v6941 = vmul.f32 %v6782, %v5880
    %v6942 = vmul.f32 %v6782, %v5881
    %v6943 = vmul.f32 %v6786, %v5878
    %v6944 = vmul.f32 %v6786, %v5879
    %v6945 = vmul.f32 %v6786, %v5880
    %v6946 = vmul.f32 %v6786, %v5881
    %v6947 = vmul.f32 %v6790, %v5878
    %v6948 = vmul.f32 %v6790, %v5879
    %v6949 = vmul.f32 %v6790, %v5880
    %v6950 = vmul.f32 %v6790, %v5881
    %v6951 = vmul.f32 %v6794, %v5878
    %v6952 = vmul.f32 %v6794, %v5879
    %v6953 = vmul.f32 %v6794, %v5880
    %v6954 = vmul.f32 %v6794, %v5881
    %v6955 = vmul.f32 %v6798, %v5878
    %v6956 = vmul.f32 %v6798, %v5879
    %v6957 = vmul.f32 %v6798, %v5880
    %v6958 = vmul.f32 %v6798, %v5881
    %v6959 = vmul.f32 %v6802, %v5878
    %v6960 = vmul.f32 %v6802, %v5879
    %v6961 = vmul.f32 %v6802, %v5880
    %v6962 = vmul.f32 %v6802, %v5881
    %v6963 = vmul.f32 %v6806, %v5878
    %v6964 = vmul.f32 %v6806, %v5879
    %v6965 = vmul.f32 %v6806, %v5880
    %v6966 = vmul.f32 %v6806, %v5881
    %v6967 = vmul.f32 %v6810, %v5878
    %v6968 = vmul.f32 %v6810, %v5879
    %v6969 = vmul.f32 %v6810, %v5880
    %v6970 = vmul.f32 %v6810, %v5881
    %v6971 = vmul.f32 %v6814, %v5878
    %v6972 = vmul.f32 %v6814, %v5879
    %v6973 = vmul.f32 %v6814, %v5880
    %v6974 = vmul.f32 %v6814, %v5881
    %v6975 = vmul.f32 %v6818, %v5878
    %v6976 = vmul.f32 %v6818, %v5879
    %v6977 = vmul.f32 %v6818, %v5880
    %v6978 = vmul.f32 %v6818, %v5881
    %v6979 = vmul.f32 %v6822, %v5878
    %v6980 = vmul.f32 %v6822, %v5879
    %v6981 = vmul.f32 %v6822, %v5880
    %v6982 = vmul.f32 %v6822, %v5881
    %v6983 = vmul.f32 %v6826, %v5878
    %v6984 = vmul.f32 %v6826, %v5879
    %v6985 = vmul.f32 %v6826, %v5880
    %v6986 = vmul.f32 %v6826, %v5881
    %v6987 = vmul.f32 %v6830, %v5878
    %v6988 = vmul.f32 %v6830, %v5879
    %v6989 = vmul.f32 %v6830, %v5880
    %v6990 = vmul.f32 %v6830, %v5881
    %v6991 = vmul.f32 %v6834, %v5878
    %v6992 = vmul.f32 %v6834, %v5879
    %v6993 = vmul.f32 %v6834, %v5880
    %v6994 = vmul.f32 %v6834, %v5881
    %v6995 = vsub.f32 %v6379, %v6867
    %v6996 = vsub.f32 %v6380, %v6868
    %v6997 = vsub.f32 %v6381, %v6869
    %v6998 = vsub.f32 %v6382, %v6870
    %v6999 = vsub.f32 %v6383, %v6871
    %v7000 = vsub.f32 %v6384, %v6872
    %v7001 = vsub.f32 %v6385, %v6873
    %v7002 = vsub.f32 %v6386, %v6874
    %v7003 = vsub.f32 %v6387, %v6875
    %v7004 = vsub.f32 %v6388, %v6876
    %v7005 = vsub.f32 %v6389, %v6877
    %v7006 = vsub.f32 %v6390, %v6878
    %v7007 = vsub.f32 %v6391, %v6879
    %v7008 = vsub.f32 %v6392, %v6880
    %v7009 = vsub.f32 %v6393, %v6881
    %v7010 = vsub.f32 %v6394, %v6882
    %v7011 = vsub.f32 %v6395, %v6883
    %v7012 = vsub.f32 %v6396, %v6884
    %v7013 = vsub.f32 %v6397, %v6885
    %v7014 = vsub.f32 %v6398, %v6886
    %v7015 = vsub.f32 %v6399, %v6887
    %v7016 = vsub.f32 %v6400, %v6888
    %v7017 = vsub.f32 %v6401, %v6889
    %v7018 = vsub.f32 %v6402, %v6890
    %v7019 = vsub.f32 %v6403, %v6891
    %v7020 = vsub.f32 %v6404, %v6892
    %v7021 = vsub.f32 %v6405, %v6893
    %v7022 = vsub.f32 %v6406, %v6894
    %v7023 = vsub.f32 %v6407, %v6895
    %v7024 = vsub.f32 %v6408, %v6896
    %v7025 = vsub.f32 %v6409, %v6897
    %v7026 = vsub.f32 %v6410, %v6898
    %v7027 = vsub.f32 %v6411, %v6899
    %v7028 = vsub.f32 %v6412, %v6900
    %v7029 = vsub.f32 %v6413, %v6901
    %v7030 = vsub.f32 %v6414, %v6902
    %v7031 = vsub.f32 %v6415, %v6903
    %v7032 = vsub.f32 %v6416, %v6904
    %v7033 = vsub.f32 %v6417, %v6905
    %v7034 = vsub.f32 %v6418, %v6906
    %v7035 = vsub.f32 %v6419, %v6907
    %v7036 = vsub.f32 %v6420, %v6908
    %v7037 = vsub.f32 %v6421, %v6909
    %v7038 = vsub.f32 %v6422, %v6910
    %v7039 = vsub.f32 %v6423, %v6911
    %v7040 = vsub.f32 %v6424, %v6912
    %v7041 = vsub.f32 %v6425, %v6913
    %v7042 = vsub.f32 %v6426, %v6914
    %v7043 = vsub.f32 %v6427, %v6915
    %v7044 = vsub.f32 %v6428, %v6916
    %v7045 = vsub.f32 %v6429, %v6917
    %v7046 = vsub.f32 %v6430, %v6918
    %v7047 = vsub.f32 %v6431, %v6919
    %v7048 = vsub.f32 %v6432, %v6920
    %v7049 = vsub.f32 %v6433, %v6921
    %v7050 = vsub.f32 %v6434, %v6922
    %v7051 = vsub.f32 %v6435, %v6923
    %v7052 = vsub.f32 %v6436, %v6924
    %v7053 = vsub.f32 %v6437, %v6925
    %v7054 = vsub.f32 %v6438, %v6926
    %v7055 = vsub.f32 %v6439, %v6927
    %v7056 = vsub.f32 %v6440, %v6928
    %v7057 = vsub.f32 %v6441, %v6929
    %v7058 = vsub.f32 %v6442, %v6930
    %v7059 = vsub.f32 %v6443, %v6931
    %v7060 = vsub.f32 %v6444, %v6932
    %v7061 = vsub.f32 %v6445, %v6933
    %v7062 = vsub.f32 %v6446, %v6934
    %v7063 = vsub.f32 %v6447, %v6935
    %v7064 = vsub.f32 %v6448, %v6936
    %v7065 = vsub.f32 %v6449, %v6937
    %v7066 = vsub.f32 %v6450, %v6938
    %v7067 = vsub.f32 %v6451, %v6939
    %v7068 = vsub.f32 %v6452, %v6940
    %v7069 = vsub.f32 %v6453, %v6941
    %v7070 = vsub.f32 %v6454, %v6942
    %v7071 = vsub.f32 %v6455, %v6943
    %v7072 = vsub.f32 %v6456, %v6944
    %v7073 = vsub.f32 %v6457, %v6945
    %v7074 = vsub.f32 %v6458, %v6946
    %v7075 = vsub.f32 %v6459, %v6947
    %v7076 = vsub.f32 %v6460, %v6948
    %v7077 = vsub.f32 %v6461, %v6949
    %v7078 = vsub.f32 %v6462, %v6950
    %v7079 = vsub.f32 %v6463, %v6951
    %v7080 = vsub.f32 %v6464, %v6952
    %v7081 = vsub.f32 %v6465, %v6953
    %v7082 = vsub.f32 %v6466, %v6954
    %v7083 = vsub.f32 %v6467, %v6955
    %v7084 = vsub.f32 %v6468, %v6956
    %v7085 = vsub.f32 %v6469, %v6957
    %v7086 = vsub.f32 %v6470, %v6958
    %v7087 = vsub.f32 %v6471, %v6959
    %v7088 = vsub.f32 %v6472, %v6960
    %v7089 = vsub.f32 %v6473, %v6961
    %v7090 = vsub.f32 %v6474, %v6962
    %v7091 = vsub.f32 %v6475, %v6963
    %v7092 = vsub.f32 %v6476, %v6964
    %v7093 = vsub.f32 %v6477, %v6965
    %v7094 = vsub.f32 %v6478, %v6966
    %v7095 = vsub.f32 %v6479, %v6967
    %v7096 = vsub.f32 %v6480, %v6968
    %v7097 = vsub.f32 %v6481, %v6969
    %v7098 = vsub.f32 %v6482, %v6970
    %v7099 = vsub.f32 %v6483, %v6971
    %v7100 = vsub.f32 %v6484, %v6972
    %v7101 = vsub.f32 %v6485, %v6973
    %v7102 = vsub.f32 %v6486, %v6974
    %v7103 = vsub.f32 %v6487, %v6975
    %v7104 = vsub.f32 %v6488, %v6976
    %v7105 = vsub.f32 %v6489, %v6977
    %v7106 = vsub.f32 %v6490, %v6978
    %v7107 = vsub.f32 %v6491, %v6979
    %v7108 = vsub.f32 %v6492, %v6980
    %v7109 = vsub.f32 %v6493, %v6981
    %v7110 = vsub.f32 %v6494, %v6982
    %v7111 = vsub.f32 %v6495, %v6983
    %v7112 = vsub.f32 %v6496, %v6984
    %v7113 = vsub.f32 %v6497, %v6985
    %v7114 = vsub.f32 %v6498, %v6986
    %v7115 = vsub.f32 %v6499, %v6987
    %v7116 = vsub.f32 %v6500, %v6988
    %v7117 = vsub.f32 %v6501, %v6989
    %v7118 = vsub.f32 %v6502, %v6990
    %v7119 = vsub.f32 %v6503, %v6991
    %v7120 = vsub.f32 %v6504, %v6992
    %v7121 = vsub.f32 %v6505, %v6993
    %v7122 = vsub.f32 %v6506, %v6994
    %vm7123 = vcmp.gt.f32.partialorder %v3931, 0.5
    %v7124 = vsel %vm7123, 1, 0
    %v7125 = vlaneseq
    %v7126 = vshrl.u32 %v7125, 7
    %v7127 = vsub.s32 0, %v7126
    %v7128 = vrot.slane %v7124, %v7127
    %vm7129 = vcmp.eq.s32.totalorder %v7128, 1
    %v7130 = vsel %vm7129, %v5220, %v3795
    %v7131 = vsel %vm7129, %v5221, %v3796
    %v7132 = vsel %vm7129, %v5222, %v3797
    %v7133 = vsel %vm7129, %v5223, %v3798
    %v7134 = vsel %vm7129, %v5228, %v3799
    %v7135 = vsel %vm7129, %v5229, %v3800
    %v7136 = vsel %vm7129, %v5230, %v3801
    %v7137 = vsel %vm7129, %v5231, %v3802
    %v7138 = vmul.f32 %v7134, %v7134
    %v7139 = vmul.f32 %v7135, %v7135
    %v7140 = vmul.f32 %v7136, %v7136
    %v7141 = vmul.f32 %v7137, %v7137
    %v7142 = vadd.f32 %v7138, %v7139
    %v7143 = vadd.f32 %v7142, %v7140
    %v7144 = vadd.f32 %v7143, %v7141
    %v7145 = vrot.slane %v7144, 4
    %v7146 = vadd.f32 %v7144, %v7145
    %v7147 = vrot.slane %v7146, 2
    %v7148 = vadd.f32 %v7146, %v7147
    %v7149 = vrot.slane %v7148, 1
    %v7150 = vadd.f32 %v7148, %v7149
    %vm7151 = vcmp.gt.f32.partialorder %v7150, 1e-06
    %vm7152 = vmand %vm7123, %vm7151
    %v7153 = vsel %vm7152, 1.0, 0.0
    %7154 = vst [vmem:[%s3] sm:$0xff] %v7130
    %7155 = vst [vmem:[%s3 + $0x8] sm:$0xff] %v7131
    %7156 = vst [vmem:[%s3 + $0x10] sm:$0xff] %v7132
    %7157 = vst [vmem:[%s3 + $0x18] sm:$0xff] %v7133
    %7158 = vst [vmem:[#allocation2] sm:$0xff] %v7134
    %7159 = vst [vmem:[#allocation2 + $0x8] sm:$0xff] %v7135
    %7160 = vst [vmem:[#allocation2 + $0x10] sm:$0xff] %v7136
    %7161 = vst [vmem:[#allocation2 + $0x18] sm:$0xff] %v7137
    %7162 = vst [vmem:[#allocation3] sm:$0xff] %v6995
    %7163 = vst [vmem:[#allocation3 + $0x8] sm:$0xff] %v6996
    %7164 = vst [vmem:[#allocation3 + $0x10] sm:$0xff] %v6997
    %7165 = vst [vmem:[#allocation3 + $0x18] sm:$0xff] %v6998
    %7166 = vst [vmem:[#allocation3 + $0x20] sm:$0xff] %v6999
    %7167 = vst [vmem:[#allocation3 + $0x28] sm:$0xff] %v7000
    %7168 = vst [vmem:[#allocation3 + $0x30] sm:$0xff] %v7001
    %7169 = vst [vmem:[#allocation3 + $0x38] sm:$0xff] %v7002
    %7170 = vst [vmem:[#allocation3 + $0x40] sm:$0xff] %v7003
    %7171 = vst [vmem:[#allocation3 + $0x48] sm:$0xff] %v7004
    %7172 = vst [vmem:[#allocation3 + $0x50] sm:$0xff] %v7005
    %7173 = vst [vmem:[#allocation3 + $0x58] sm:$0xff] %v7006
    %7174 = vst [vmem:[#allocation3 + $0x60] sm:$0xff] %v7007
    %7175 = vst [vmem:[#allocation3 + $0x68] sm:$0xff] %v7008
    %7176 = vst [vmem:[#allocation3 + $0x70] sm:$0xff] %v7009
    %7177 = vst [vmem:[#allocation3 + $0x78] sm:$0xff] %v7010
    %7178 = vst [vmem:[#allocation3 + $0x80] sm:$0xff] %v7011
    %7179 = vst [vmem:[#allocation3 + $0x88] sm:$0xff] %v7012
    %7180 = vst [vmem:[#allocation3 + $0x90] sm:$0xff] %v7013
    %7181 = vst [vmem:[#allocation3 + $0x98] sm:$0xff] %v7014
    %7182 = vst [vmem:[#allocation3 + $0xa0] sm:$0xff] %v7015
    %7183 = vst [vmem:[#allocation3 + $0xa8] sm:$0xff] %v7016
    %7184 = vst [vmem:[#allocation3 + $0xb0] sm:$0xff] %v7017
    %7185 = vst [vmem:[#allocation3 + $0xb8] sm:$0xff] %v7018
    %7186 = vst [vmem:[#allocation3 + $0xc0] sm:$0xff] %v7019
    %7187 = vst [vmem:[#allocation3 + $0xc8] sm:$0xff] %v7020
    %7188 = vst [vmem:[#allocation3 + $0xd0] sm:$0xff] %v7021
    %7189 = vst [vmem:[#allocation3 + $0xd8] sm:$0xff] %v7022
    %7190 = vst [vmem:[#allocation3 + $0xe0] sm:$0xff] %v7023
    %7191 = vst [vmem:[#allocation3 + $0xe8] sm:$0xff] %v7024
    %7192 = vst [vmem:[#allocation3 + $0xf0] sm:$0xff] %v7025
    %7193 = vst [vmem:[#allocation3 + $0xf8] sm:$0xff] %v7026
    %7194 = vst [vmem:[#allocation3 + $0x100] sm:$0xff] %v7027
    %7195 = vst [vmem:[#allocation3 + $0x108] sm:$0xff] %v7028
    %7196 = vst [vmem:[#allocation3 + $0x110] sm:$0xff] %v7029
    %7197 = vst [vmem:[#allocation3 + $0x118] sm:$0xff] %v7030
    %7198 = vst [vmem:[#allocation3 + $0x120] sm:$0xff] %v7031
    %7199 = vst [vmem:[#allocation3 + $0x128] sm:$0xff] %v7032
    %7200 = vst [vmem:[#allocation3 + $0x130] sm:$0xff] %v7033
    %7201 = vst [vmem:[#allocation3 + $0x138] sm:$0xff] %v7034
    %7202 = vst [vmem:[#allocation3 + $0x140] sm:$0xff] %v7035
    %7203 = vst [vmem:[#allocation3 + $0x148] sm:$0xff] %v7036
    %7204 = vst [vmem:[#allocation3 + $0x150] sm:$0xff] %v7037
    %7205 = vst [vmem:[#allocation3 + $0x158] sm:$0xff] %v7038
    %7206 = vst [vmem:[#allocation3 + $0x160] sm:$0xff] %v7039
    %7207 = vst [vmem:[#allocation3 + $0x168] sm:$0xff] %v7040
    %7208 = vst [vmem:[#allocation3 + $0x170] sm:$0xff] %v7041
    %7209 = vst [vmem:[#allocation3 + $0x178] sm:$0xff] %v7042
    %7210 = vst [vmem:[#allocation3 + $0x180] sm:$0xff] %v7043
    %7211 = vst [vmem:[#allocation3 + $0x188] sm:$0xff] %v7044
    %7212 = vst [vmem:[#allocation3 + $0x190] sm:$0xff] %v7045
    %7213 = vst [vmem:[#allocation3 + $0x198] sm:$0xff] %v7046
    %7214 = vst [vmem:[#allocation3 + $0x1a0] sm:$0xff] %v7047
    %7215 = vst [vmem:[#allocation3 + $0x1a8] sm:$0xff] %v7048
    %7216 = vst [vmem:[#allocation3 + $0x1b0] sm:$0xff] %v7049
    %7217 = vst [vmem:[#allocation3 + $0x1b8] sm:$0xff] %v7050
    %7218 = vst [vmem:[#allocation3 + $0x1c0] sm:$0xff] %v7051
    %7219 = vst [vmem:[#allocation3 + $0x1c8] sm:$0xff] %v7052
    %7220 = vst [vmem:[#allocation3 + $0x1d0] sm:$0xff] %v7053
    %7221 = vst [vmem:[#allocation3 + $0x1d8] sm:$0xff] %v7054
    %7222 = vst [vmem:[#allocation3 + $0x1e0] sm:$0xff] %v7055
    %7223 = vst [vmem:[#allocation3 + $0x1e8] sm:$0xff] %v7056
    %7224 = vst [vmem:[#allocation3 + $0x1f0] sm:$0xff] %v7057
    %7225 = vst [vmem:[#allocation3 + $0x1f8] sm:$0xff] %v7058
    %7226 = vst [vmem:[#allocation3 + $0x200] sm:$0xff] %v7059
    %7227 = vst [vmem:[#allocation3 + $0x208] sm:$0xff] %v7060
    %7228 = vst [vmem:[#allocation3 + $0x210] sm:$0xff] %v7061
    %7229 = vst [vmem:[#allocation3 + $0x218] sm:$0xff] %v7062
    %7230 = vst [vmem:[#allocation3 + $0x220] sm:$0xff] %v7063
    %7231 = vst [vmem:[#allocation3 + $0x228] sm:$0xff] %v7064
    %7232 = vst [vmem:[#allocation3 + $0x230] sm:$0xff] %v7065
    %7233 = vst [vmem:[#allocation3 + $0x238] sm:$0xff] %v7066
    %7234 = vst [vmem:[#allocation3 + $0x240] sm:$0xff] %v7067
    %7235 = vst [vmem:[#allocation3 + $0x248] sm:$0xff] %v7068
    %7236 = vst [vmem:[#allocation3 + $0x250] sm:$0xff] %v7069
    %7237 = vst [vmem:[#allocation3 + $0x258] sm:$0xff] %v7070
    %7238 = vst [vmem:[#allocation3 + $0x260] sm:$0xff] %v7071
    %7239 = vst [vmem:[#allocation3 + $0x268] sm:$0xff] %v7072
    %7240 = vst [vmem:[#allocation3 + $0x270] sm:$0xff] %v7073
    %7241 = vst [vmem:[#allocation3 + $0x278] sm:$0xff] %v7074
    %7242 = vst [vmem:[#allocation3 + $0x280] sm:$0xff] %v7075
    %7243 = vst [vmem:[#allocation3 + $0x288] sm:$0xff] %v7076
    %7244 = vst [vmem:[#allocation3 + $0x290] sm:$0xff] %v7077
    %7245 = vst [vmem:[#allocation3 + $0x298] sm:$0xff] %v7078
    %7246 = vst [vmem:[#allocation3 + $0x2a0] sm:$0xff] %v7079
    %7247 = vst [vmem:[#allocation3 + $0x2a8] sm:$0xff] %v7080
    %7248 = vst [vmem:[#allocation3 + $0x2b0] sm:$0xff] %v7081
    %7249 = vst [vmem:[#allocation3 + $0x2b8] sm:$0xff] %v7082
    %7250 = vst [vmem:[#allocation3 + $0x2c0] sm:$0xff] %v7083
    %7251 = vst [vmem:[#allocation3 + $0x2c8] sm:$0xff] %v7084
    %7252 = vst [vmem:[#allocation3 + $0x2d0] sm:$0xff] %v7085
    %7253 = vst [vmem:[#allocation3 + $0x2d8] sm:$0xff] %v7086
    %7254 = vst [vmem:[#allocation3 + $0x2e0] sm:$0xff] %v7087
    %7255 = vst [vmem:[#allocation3 + $0x2e8] sm:$0xff] %v7088
    %7256 = vst [vmem:[#allocation3 + $0x2f0] sm:$0xff] %v7089
    %7257 = vst [vmem:[#allocation3 + $0x2f8] sm:$0xff] %v7090
    %7258 = vst [vmem:[#allocation3 + $0x300] sm:$0xff] %v7091
    %7259 = vst [vmem:[#allocation3 + $0x308] sm:$0xff] %v7092
    %7260 = vst [vmem:[#allocation3 + $0x310] sm:$0xff] %v7093
    %7261 = vst [vmem:[#allocation3 + $0x318] sm:$0xff] %v7094
    %7262 = vst [vmem:[#allocation3 + $0x320] sm:$0xff] %v7095
    %7263 = vst [vmem:[#allocation3 + $0x328] sm:$0xff] %v7096
    %7264 = vst [vmem:[#allocation3 + $0x330] sm:$0xff] %v7097
    %7265 = vst [vmem:[#allocation3 + $0x338] sm:$0xff] %v7098
    %7266 = vst [vmem:[#allocation3 + $0x340] sm:$0xff] %v7099
    %7267 = vst [vmem:[#allocation3 + $0x348] sm:$0xff] %v7100
    %7268 = vst [vmem:[#allocation3 + $0x350] sm:$0xff] %v7101
    %7269 = vst [vmem:[#allocation3 + $0x358] sm:$0xff] %v7102
    %7270 = vst [vmem:[#allocation3 + $0x360] sm:$0xff] %v7103
    %7271 = vst [vmem:[#allocation3 + $0x368] sm:$0xff] %v7104
    %7272 = vst [vmem:[#allocation3 + $0x370] sm:$0xff] %v7105
    %7273 = vst [vmem:[#allocation3 + $0x378] sm:$0xff] %v7106
    %7274 = vst [vmem:[#allocation3 + $0x380] sm:$0xff] %v7107
    %7275 = vst [vmem:[#allocation3 + $0x388] sm:$0xff] %v7108
    %7276 = vst [vmem:[#allocation3 + $0x390] sm:$0xff] %v7109
    %7277 = vst [vmem:[#allocation3 + $0x398] sm:$0xff] %v7110
    %7278 = vst [vmem:[#allocation3 + $0x3a0] sm:$0xff] %v7111
    %7279 = vst [vmem:[#allocation3 + $0x3a8] sm:$0xff] %v7112
    %7280 = vst [vmem:[#allocation3 + $0x3b0] sm:$0xff] %v7113
    %7281 = vst [vmem:[#allocation3 + $0x3b8] sm:$0xff] %v7114
    %7282 = vst [vmem:[#allocation3 + $0x3c0] sm:$0xff] %v7115
    %7283 = vst [vmem:[#allocation3 + $0x3c8] sm:$0xff] %v7116
    %7284 = vst [vmem:[#allocation3 + $0x3d0] sm:$0xff] %v7117
    %7285 = vst [vmem:[#allocation3 + $0x3d8] sm:$0xff] %v7118
    %7286 = vst [vmem:[#allocation3 + $0x3e0] sm:$0xff] %v7119
    %7287 = vst [vmem:[#allocation3 + $0x3e8] sm:$0xff] %v7120
    %7288 = vst [vmem:[#allocation3 + $0x3f0] sm:$0xff] %v7121
    %7289 = vst [vmem:[#allocation3 + $0x3f8] sm:$0xff] %v7122
    %7290 = vst [vmem:[#allocation4] sm:$0x1] %v7153
    %7291 = vst [vmem:[%s4] sm:$0x1] %v7150
  $region18: #{_solve_impl.1} parent=0 // loop_footer
    %s3794 = sadd.s32 1, %s3790
  $region19: #{_solve_impl.1} parent=0 // loop_footer_branch
    %3789 = sbr.rel target = $region15
  $region20: #{_solve_impl.1} parent=0 // loop_exit
    _
  // Predicated region
  $region21: #{_solve_impl.1} parent=0 // pred_check
    _
  $region22: #{_solve_impl.1} parent=0 // pred_check_branch
    %7293 = sbr.rel (0) target = $region24
  $region23: #{_solve_impl.1} parent=0 // pred_region
    _
  $region24: #{_solve_impl.1} parent=0 // pred_fallthru
    _
  // Predicated region
  $region25: #{_solve_impl.1} parent=0 // pred_check
    _
  $region26: #{_solve_impl.1} parent=0 // pred_check_branch
    %7295 = sbr.rel (0) target = $region28
  $region27: #{_solve_impl.1} parent=0 // pred_region
    _
  $region28: #{_solve_impl.1} parent=0 // pred_fallthru
    _
  // Predicated region
  $region29: #{_solve_impl.1} parent=0 // pred_check
    _
  $region30: #{_solve_impl.1} parent=0 // pred_check_branch
    %7297 = sbr.rel (0) target = $region32
  $region31: #{_solve_impl.1} parent=0 // pred_region
    _
  $region32: #{_solve_impl.1} parent=0 // pred_fallthru
    _
  // Predicated region
  $region33: #{_solve_impl.1} parent=0 // pred_check
    _
  $region34: #{_solve_impl.1} parent=0 // pred_check_branch
    %7299 = sbr.rel (0) target = $region36
  $region35: #{_solve_impl.1} parent=0 // pred_region
    _
  $region36: #{_solve_impl.1} parent=0 // pred_fallthru
    _

</llo_original>
